<compile_context>
chip_gen: v7x
topology: tpu7x:2x2x1
jax: 0.10.0
libtpu: 0.0.40
codegen_flags: <defaults>
</compile_context>

<pallas_src>
import functools
import math

import jax
import jax.numpy as jnp
from jax.experimental import pallas as pl
from jax.experimental.pallas import tpu as pltpu


NEG_INF = -1e10
LSPAD = 128  # lane-dense width for the attention-probability writeback


# ----------------------------------------------------------------------------
# In-kernel helpers (operate on values, traced inside the Pallas kernel)
# ----------------------------------------------------------------------------
def _layer_norm(x, g, b):
    """LayerNorm over last dim. x: [M, D] f32, g/b: [1, D] f32."""
    mu = jnp.mean(x, axis=-1, keepdims=True)
    var = jnp.mean((x - mu) ** 2, axis=-1, keepdims=True)
    return (x - mu) * jax.lax.rsqrt(var + 1e-5) * g + b


def _dense(x, w, b, relu=False):
    """x [M, K] f32, w [K, N] bf16, b [1, N] f32 -> [M, N] f32 (bf16 MXU, f32 acc)."""
    y = jnp.dot(x.astype(jnp.bfloat16), w, preferred_element_type=jnp.float32) + b
    if relu:
        y = jnp.maximum(y, 0.0)
    return y


def _attention(q, k, v, mask, n_heads, *, want_probs):
    """Multi-head attention context for one batch element.

    q [Lq, D] f32, k/v [Lk, D] f32, mask bool broadcastable to [Lq, Lk].
    Returns ([Lq, D] f32 concat-of-heads context, list of per-head probs).
    Fully-masked rows degrade to a uniform distribution (matches the -1e10
    masked PyTorch reference, no NaNs).
    """
    D = q.shape[-1]
    dh = D // n_heads
    inv_scale = 1.0 / math.sqrt(dh)
    ctxs, probs = [], []
    for h in range(n_heads):
        sl = slice(h * dh, (h + 1) * dh)
        qh = q[:, sl].astype(jnp.bfloat16)
        kh = k[:, sl].astype(jnp.bfloat16)
        vh = v[:, sl].astype(jnp.bfloat16)
        # contraction expressed directly to the MXU -- no explicit K transpose
        e = jax.lax.dot_general(qh, kh, (((1,), (1,)), ((), ())),
                                preferred_element_type=jnp.float32) * inv_scale
        e = jnp.where(mask, e, NEG_INF)
        p = jnp.exp(e - jnp.max(e, axis=-1, keepdims=True))
        s = jnp.sum(p, axis=-1, keepdims=True)
        # EUP approx reciprocal when probs are discarded; exact division when returned
        attn = p / s if want_probs else p * pl.reciprocal(s, approx=True)
        if want_probs:
            probs.append(attn)
        ctxs.append(jnp.dot(attn.astype(jnp.bfloat16), vh,
                            preferred_element_type=jnp.float32))
    return jnp.concatenate(ctxs, axis=-1), probs


# ----------------------------------------------------------------------------
# Fused encoder+decoder stack kernel: grid=(nl_enc + nl_dec,)
# ----------------------------------------------------------------------------
def _seq2seq_kernel(xs_ref, xt_ref, skeep_ref, tkeep_ref,
                    # encoder per-layer weights
                    e_wqkv, e_bqkv, e_wo, e_bo, e_g1, e_b1,
                    e_w1, e_bb1, e_w2, e_bb2, e_g2, e_b2,
                    # decoder per-layer weights
                    d_wqkv, d_bqkv, d_wos, d_bos, d_g1, d_b1,
                    d_wqc, d_bqc, d_wkvc, d_bkvc, d_woc, d_boc, d_g2, d_b2,
                    d_w1, d_bb1, d_w2, d_bb2, d_g3, d_b3,
                    # final vocab projection (lane-dense padded)
                    wfc_ref, bfc_ref,
                    # outputs
                    logits_ref, attn_ref,
                    # persistent VMEM carries
                    enc_vmem, dec_vmem, *, n_heads, nl_enc):
    B, Ls, D = xs_ref.shape
    Lt = xt_ref.shape[1]
    layer = pl.program_id(0)
    n_total = pl.num_programs(0)

    # ------------------------------ encoder phase ------------------------------
    @pl.when(layer < nl_enc)
    def _encoder_layer():
        @pl.when(layer == 0)
        def _():
            enc_vmem[...] = xs_ref[...].reshape(B * Ls, D)

        skeep = skeep_ref[...]                             # [B, Ls]
        wqkv, bqkv = e_wqkv[0], e_bqkv[0]
        wo, bo = e_wo[0], e_bo[0]
        g1, b1 = e_g1[0], e_b1[0]
        w1, bb1 = e_w1[0], e_bb1[0]
        w2, bb2 = e_w2[0], e_bb2[0]
        g2, b2 = e_g2[0], e_b2[0]

        x = enc_vmem[...]                                  # [B*Ls, D]  flat carry
        qkv = _dense(x, wqkv, bqkv)                        # fused Q|K|V, batch-flattened
        ctxs = []
        for bi in range(B):
            r = slice(bi * Ls, (bi + 1) * Ls)
            key_mask = skeep[bi:bi + 1, :] != 0            # [1, Ls] key-pad mask
            ctx, _ = _attention(qkv[r, :D], qkv[r, D:2 * D], qkv[r, 2 * D:],
                                key_mask, n_heads, want_probs=False)
            ctxs.append(ctx)
        sa = _dense(jnp.concatenate(ctxs, axis=0), wo, bo)  # single fused out-proj
        x = _layer_norm(x + sa, g1, b1)
        ff = _dense(_dense(x, w1, bb1, relu=True), w2, bb2)
        enc_vmem[...] = _layer_norm(x + ff, g2, b2)

    # ------------------------------ decoder phase ------------------------------
    @pl.when(layer >= nl_enc)
    def _decoder_layer():
        @pl.when(layer == nl_enc)
        def _():
            dec_vmem[...] = xt_ref[...].reshape(B * Lt, D)

        tkeep = tkeep_ref[...]                             # [B, Lt]
        skeep = skeep_ref[...]                             # [B, Ls]
        row = jax.lax.broadcasted_iota(jnp.int32, (Lt, Lt), 0)
        col = jax.lax.broadcasted_iota(jnp.int32, (Lt, Lt), 1)
        causal = col <= row                                # built in-kernel, no mask DMA

        wqkv, bqkv = d_wqkv[0], d_bqkv[0]
        wos, bos = d_wos[0], d_bos[0]
        g1, b1 = d_g1[0], d_b1[0]
        wqc, bqc = d_wqc[0], d_bqc[0]
        wkvc, bkvc = d_wkvc[0], d_bkvc[0]
        woc, boc = d_woc[0], d_boc[0]
        g2, b2 = d_g2[0], d_b2[0]
        w1, bb1 = d_w1[0], d_bb1[0]
        w2, bb2 = d_w2[0], d_bb2[0]
        g3, b3 = d_g3[0], d_b3[0]

        x = dec_vmem[...]                                  # [B*Lt, D]
        enc = enc_vmem[...]                                # [B*Ls, D]  resident encoder output

        # masked causal self-attention
        qkv = _dense(x, wqkv, bqkv)
        ctxs = []
        for bi in range(B):
            r = slice(bi * Lt, (bi + 1) * Lt)
            m = (tkeep[bi:bi + 1, :] != 0) & causal        # [Lt, Lt]
            ctx, _ = _attention(qkv[r, :D], qkv[r, D:2 * D], qkv[r, 2 * D:],
                                m, n_heads, want_probs=False)
            ctxs.append(ctx)
        sa = _dense(jnp.concatenate(ctxs, axis=0), wos, bos)
        x = _layer_norm(x + sa, g1, b1)

        # cross-attention over the encoder output (Q from trg, fused K|V from enc)
        q = _dense(x, wqc, bqc)                            # [B*Lt, D]
        kv = _dense(enc, wkvc, bkvc)                       # [B*Ls, 2D]
        ctxs, probs_all = [], []
        for bi in range(B):
            rq = slice(bi * Lt, (bi + 1) * Lt)
            rk = slice(bi * Ls, (bi + 1) * Ls)
            m = skeep[bi:bi + 1, :] != 0                   # [1, Ls]
            ctx, probs = _attention(q[rq], kv[rk, :D], kv[rk, D:],
                                    m, n_heads, want_probs=True)
            ctxs.append(ctx)
            probs_all.append(probs)
        ca = _dense(jnp.concatenate(ctxs, axis=0), woc, boc)
        x = _layer_norm(x + ca, g2, b2)

        # position-wise feed-forward
        ff = _dense(_dense(x, w1, bb1, relu=True), w2, bb2)
        x = _layer_norm(x + ff, g3, b3)
        dec_vmem[...] = x

        # outputs: written only at the last layer (last-layer-wins == reference),
        # lane-dense padded, single HBM writeback after the grid ends.
        @pl.when(layer == n_total - 1)
        def _():
            pad = jnp.zeros((Lt, attn_ref.shape[-1] - Ls), jnp.float32)
            for bi in range(B):
                for h in range(n_heads):
                    attn_ref[bi, h] = jnp.concatenate([probs_all[bi][h], pad], axis=-1)
            logits = _dense(x, wfc_ref[...], bfc_ref[...])  # [B*Lt, Vpad]
            logits_ref[...] = logits.reshape(B, Lt, -1)


# ----------------------------------------------------------------------------
# Wrapper
# ----------------------------------------------------------------------------
def seq2seq_forward(packed, src, trg, *, src_pad_idx, trg_pad_idx,
                    n_heads, hid_dim, output_dim):
    pe, pd = packed["encoder"], packed["decoder"]
    B, Ls = src.shape
    Lt = trg.shape[1]
    D = hid_dim
    nle, _, pf_e = pe["w1"].shape
    nld, _, pf_d = pd["w1"].shape
    vpad = pd["wfc"].shape[-1]

    src_keep = (src != src_pad_idx).astype(jnp.int32)      # [B, Ls] key-pad mask
    trg_keep = (trg != trg_pad_idx).astype(jnp.int32)      # [B, Lt] key-pad mask

    # embedding gathers in plain JAX (XLA gather), then one fused Pallas call
    xs = (pe["tok_emb"][src] * math.sqrt(D)
          + pe["pos_emb"][:Ls][None, :, :]).astype(jnp.float32)
    xt = (pd["tok_emb"][trg] * math.sqrt(D)
          + pd["pos_emb"][:Lt][None, :, :]).astype(jnp.float32)

    # per-layer weight blocks picked by the (clamped) layer grid index:
    # encoder blocks stop re-DMA'ing once the decoder phase starts and vice versa.
    def enc_spec(*shape):
        return pl.BlockSpec((1,) + shape,
                            lambda l: (jnp.minimum(l, nle - 1),) + (0,) * len(shape))

    def dec_spec(*shape):
        return pl.BlockSpec((1,) + shape,
                            lambda l: (jnp.maximum(l - nle, 0),) + (0,) * len(shape))

    def full_spec(*shape):  # resident block (constant index map)
        return pl.BlockSpec(shape, lambda l: (0,) * len(shape))

    logits, attn = pl.pallas_call(
        functools.partial(_seq2seq_kernel, n_heads=n_heads, nl_enc=nle),
        out_shape=(jax.ShapeDtypeStruct((B, Lt, vpad), jnp.float32),
                   jax.ShapeDtypeStruct((B, n_heads, Lt, LSPAD), jnp.float32)),
        grid=(nle + nld,),
        in_specs=[
            full_spec(B, Ls, D), full_spec(B, Lt, D),
            full_spec(B, Ls), full_spec(B, Lt),
            # encoder layer weights
            enc_spec(D, 3 * D), enc_spec(1, 3 * D),
            enc_spec(D, D), enc_spec(1, D),
            enc_spec(1, D), enc_spec(1, D),
            enc_spec(D, pf_e), enc_spec(1, pf_e),
            enc_spec(pf_e, D), enc_spec(1, D),
            enc_spec(1, D), enc_spec(1, D),
            # decoder layer weights
            dec_spec(D, 3 * D), dec_spec(1, 3 * D),
            dec_spec(D, D), dec_spec(1, D),
            dec_spec(1, D), dec_spec(1, D),
            dec_spec(D, D), dec_spec(1, D),
            dec_spec(D, 2 * D), dec_spec(1, 2 * D),
            dec_spec(D, D), dec_spec(1, D),
            dec_spec(1, D), dec_spec(1, D),
            dec_spec(D, pf_d), dec_spec(1, pf_d),
            dec_spec(pf_d, D), dec_spec(1, D),
            dec_spec(1, D), dec_spec(1, D),
            # final vocab projection (lane-dense padded)
            full_spec(D, vpad), full_spec(1, vpad),
        ],
        out_specs=(full_spec(B, Lt, vpad),
                   full_spec(B, n_heads, Lt, LSPAD)),
        scratch_shapes=[pltpu.VMEM((B * Ls, D), jnp.float32),   # encoder carry
                        pltpu.VMEM((B * Lt, D), jnp.float32)],  # decoder carry
        compiler_params=pltpu.CompilerParams(
            dimension_semantics=("arbitrary",),
            vmem_limit_bytes=32 * 1024 * 1024),
    )(xs, xt, src_keep, trg_keep,
      pe["wqkv"], pe["bqkv"], pe["wo"], pe["bo"], pe["ln1_g"], pe["ln1_b"],
      pe["w1"], pe["b1"], pe["w2"], pe["b2"], pe["ln2_g"], pe["ln2_b"],
      pd["wqkv"], pd["bqkv"], pd["wo_s"], pd["bo_s"], pd["ln1_g"], pd["ln1_b"],
      pd["wq_c"], pd["bq_c"], pd["wkv_c"], pd["bkv_c"], pd["wo_c"], pd["bo_c"],
      pd["ln2_g"], pd["ln2_b"],
      pd["w1"], pd["b1"], pd["w2"], pd["b2"], pd["ln3_g"], pd["ln3_b"],
      pd["wfc"], pd["bfc"])

    # un-pad the lane-dense vocab and attention-key dims
    return logits[..., :output_dim], attn[..., :Ls]


# ----------------------------------------------------------------------------
# Deterministic parameter init (per-layer, f32) + one-time packing for the kernel
# ----------------------------------------------------------------------------
def _dense_params(key, din, dout):
    w = 0.02 * jax.random.normal(key, (din, dout), jnp.float32)
    b = jnp.zeros((dout,), jnp.float32)
    return w, b


def _mha_params(key, hid):
    ks = jax.random.split(key, 4)
    wq, bq = _dense_params(ks[0], hid, hid)
    wk, bk = _dense_params(ks[1], hid, hid)
    wv, bv = _dense_params(ks[2], hid, hid)
    wo, bo = _dense_params(ks[3], hid, hid)
    return dict(wq=wq, bq=bq, wk=wk, bk=bk, wv=wv, bv=bv, wo=wo, bo=bo)


def _ffn_params(key, hid, pf):
    k1, k2 = jax.random.split(key)
    w1, b1 = _dense_params(k1, hid, pf)
    w2, b2 = _dense_params(k2, pf, hid)
    return dict(w1=w1, b1=b1, w2=w2, b2=b2)


def _enc_layer_params(key, hid, pf):
    k1, k2 = jax.random.split(key)
    return dict(self_attn=_mha_params(k1, hid), ffn=_ffn_params(k2, hid, pf),
                ln1_g=jnp.ones((hid,)), ln1_b=jnp.zeros((hid,)),
                ln2_g=jnp.ones((hid,)), ln2_b=jnp.zeros((hid,)))


def _dec_layer_params(key, hid, pf):
    k1, k2, k3 = jax.random.split(key, 3)
    return dict(self_attn=_mha_params(k1, hid), enc_attn=_mha_params(k2, hid),
                ffn=_ffn_params(k3, hid, pf),
                ln1_g=jnp.ones((hid,)), ln1_b=jnp.zeros((hid,)),
                ln2_g=jnp.ones((hid,)), ln2_b=jnp.zeros((hid,)),
                ln3_g=jnp.ones((hid,)), ln3_b=jnp.zeros((hid,)))


def init_params(key, input_dim, output_dim, hid, pf, n_layers, max_len):
    ke, kd = jax.random.split(key)
    ke = jax.random.split(ke, n_layers + 2)
    kd = jax.random.split(kd, n_layers + 3)
    encoder = dict(
        tok_emb=0.02 * jax.random.normal(ke[0], (input_dim, hid), jnp.float32),
        pos_emb=0.02 * jax.random.normal(ke[1], (max_len, hid), jnp.float32),
        layers=[_enc_layer_params(ke[2 + i], hid, pf) for i in range(n_layers)],
    )
    fc_w, fc_b = _dense_params(kd[2], hid, output_dim)
    decoder = dict(
        tok_emb=0.02 * jax.random.normal(kd[0], (output_dim, hid), jnp.float32),
        pos_emb=0.02 * jax.random.normal(kd[1], (max_len, hid), jnp.float32),
        fc_out_w=fc_w, fc_out_b=fc_b,
        layers=[_dec_layer_params(kd[3 + i], hid, pf) for i in range(n_layers)],
    )
    return dict(encoder=encoder, decoder=decoder)


def _stack_w(ws):  # matmul weights -> [n_layers, din, dout] bf16 (MXU inputs)
    return jnp.stack(ws).astype(jnp.bfloat16)


def _stack_v(vs):  # biases / LN params -> [n_layers, 1, n] f32
    return jnp.stack([v.reshape(1, -1) for v in vs]).astype(jnp.float32)


def pack_params(params, output_dim):
    """Fuse Q|K|V (and K|V) weights, stack layers, cast matmul weights to bf16,
    zero-pad fc_out to a lane-dense (multiple-of-128) output width."""
    enc_l = params["encoder"]["layers"]
    dec_l = params["decoder"]["layers"]

    def wqkv(a): return jnp.concatenate([a["wq"], a["wk"], a["wv"]], axis=1)
    def bqkv(a): return jnp.concatenate([a["bq"], a["bk"], a["bv"]], axis=0)
    def wkv(a): return jnp.concatenate([a["wk"], a["wv"]], axis=1)
    def bkv(a): return jnp.concatenate([a["bk"], a["bv"]], axis=0)

    encoder = dict(
        tok_emb=params["encoder"]["tok_emb"],
        pos_emb=params["encoder"]["pos_emb"],
        wqkv=_stack_w([wqkv(l["self_attn"]) for l in enc_l]),
        bqkv=_stack_v([bqkv(l["self_attn"]) for l in enc_l]),
        wo=_stack_w([l["self_attn"]["wo"] for l in enc_l]),
        bo=_stack_v([l["self_attn"]["bo"] for l in enc_l]),
        ln1_g=_stack_v([l["ln1_g"] for l in enc_l]),
        ln1_b=_stack_v([l["ln1_b"] for l in enc_l]),
        w1=_stack_w([l["ffn"]["w1"] for l in enc_l]),
        b1=_stack_v([l["ffn"]["b1"] for l in enc_l]),
        w2=_stack_w([l["ffn"]["w2"] for l in enc_l]),
        b2=_stack_v([l["ffn"]["b2"] for l in enc_l]),
        ln2_g=_stack_v([l["ln2_g"] for l in enc_l]),
        ln2_b=_stack_v([l["ln2_b"] for l in enc_l]),
    )

    hid = params["decoder"]["fc_out_w"].shape[0]
    vpad = ((output_dim + 127) // 128) * 128
    wfc = jnp.zeros((hid, vpad), jnp.float32).at[:, :output_dim].set(
        params["decoder"]["fc_out_w"])
    bfc = jnp.zeros((1, vpad), jnp.float32).at[0, :output_dim].set(
        params["decoder"]["fc_out_b"])

    decoder = dict(
        tok_emb=params["decoder"]["tok_emb"],
        pos_emb=params["decoder"]["pos_emb"],
        wqkv=_stack_w([wqkv(l["self_attn"]) for l in dec_l]),
        bqkv=_stack_v([bqkv(l["self_attn"]) for l in dec_l]),
        wo_s=_stack_w([l["self_attn"]["wo"] for l in dec_l]),
        bo_s=_stack_v([l["self_attn"]["bo"] for l in dec_l]),
        ln1_g=_stack_v([l["ln1_g"] for l in dec_l]),
        ln1_b=_stack_v([l["ln1_b"] for l in dec_l]),
        wq_c=_stack_w([l["enc_attn"]["wq"] for l in dec_l]),
        bq_c=_stack_v([l["enc_attn"]["bq"] for l in dec_l]),
        wkv_c=_stack_w([wkv(l["enc_attn"]) for l in dec_l]),
        bkv_c=_stack_v([bkv(l["enc_attn"]) for l in dec_l]),
        wo_c=_stack_w([l["enc_attn"]["wo"] for l in dec_l]),
        bo_c=_stack_v([l["enc_attn"]["bo"] for l in dec_l]),
        ln2_g=_stack_v([l["ln2_g"] for l in dec_l]),
        ln2_b=_stack_v([l["ln2_b"] for l in dec_l]),
        w1=_stack_w([l["ffn"]["w1"] for l in dec_l]),
        b1=_stack_v([l["ffn"]["b1"] for l in dec_l]),
        w2=_stack_w([l["ffn"]["w2"] for l in dec_l]),
        b2=_stack_v([l["ffn"]["b2"] for l in dec_l]),
        ln3_g=_stack_v([l["ln3_g"] for l in dec_l]),
        ln3_b=_stack_v([l["ln3_b"] for l in dec_l]),
        wfc=wfc.astype(jnp.bfloat16),
        bfc=bfc,
    )
    return dict(encoder=encoder, decoder=decoder)


# ----------------------------------------------------------------------------
if __name__ == "__main__":
    INPUT_DIM, OUTPUT_DIM = 50, 60
    HID_DIM, PF_DIM = 32, 64
    N_LAYERS, N_HEADS = 2, 2
    MAX_LEN = 16
    SRC_PAD_IDX, TRG_PAD_IDX = 0, 0
    B, SRC_LEN, TRG_LEN = 2, 8, 6

    key = jax.random.PRNGKey(0)
    kp, ks, kt = jax.random.split(key, 3)
    params = init_params(kp, INPUT_DIM, OUTPUT_DIM, HID_DIM, PF_DIM, N_LAYERS, MAX_LEN)
    packed = pack_params(params, OUTPUT_DIM)     # one-time weight fusion/stacking (outside jit)

    src = jax.random.randint(ks, (B, SRC_LEN), 1, INPUT_DIM, dtype=jnp.int32)
    trg = jax.random.randint(kt, (B, TRG_LEN), 1, OUTPUT_DIM, dtype=jnp.int32)
    src = src.at[0, 6:].set(SRC_PAD_IDX)   # exercise src padding mask
    trg = trg.at[1, 4:].set(TRG_PAD_IDX)   # exercise trg padding mask

    fwd = jax.jit(functools.partial(
        seq2seq_forward,
        src_pad_idx=SRC_PAD_IDX, trg_pad_idx=TRG_PAD_IDX,
        n_heads=N_HEADS, hid_dim=HID_DIM, output_dim=OUTPUT_DIM))

    output, attention = fwd(packed, src, trg)
    output = jax.block_until_ready(output)
    attention = jax.block_until_ready(attention)

    assert output.shape == (B, TRG_LEN, OUTPUT_DIM), output.shape
    assert attention.shape == (B, N_HEADS, TRG_LEN, SRC_LEN), attention.shape
    assert bool(jnp.all(jnp.isfinite(output))) and bool(jnp.all(jnp.isfinite(attention)))
    # attention rows are softmax distributions (exact division path)
    assert bool(jnp.allclose(attention.sum(-1), 1.0, atol=1e-4))
    # padded src keys (batch 0, positions 6:) must receive ~zero cross-attention
    assert float(jnp.max(attention[0, :, :, 6:])) < 1e-6

    print("KERNEL_OK")
</pallas_src>

<mosaic_0001>
module attributes {stable_mosaic.version = 11 : i64} {
  func.func @_seq2seq_kernel(%arg0: i32, %arg1: memref<2x8x32xf32, #tpu.memory_space<vmem>>, %arg2: memref<2x6x32xf32, #tpu.memory_space<vmem>>, %arg3: memref<2x8xi32, #tpu.memory_space<vmem>>, %arg4: memref<2x6xi32, #tpu.memory_space<vmem>>, %arg5: memref<1x32x96xbf16, #tpu.memory_space<vmem>>, %arg6: memref<1x1x96xf32, #tpu.memory_space<vmem>>, %arg7: memref<1x32x32xbf16, #tpu.memory_space<vmem>>, %arg8: memref<1x1x32xf32, #tpu.memory_space<vmem>>, %arg9: memref<1x1x32xf32, #tpu.memory_space<vmem>>, %arg10: memref<1x1x32xf32, #tpu.memory_space<vmem>>, %arg11: memref<1x32x64xbf16, #tpu.memory_space<vmem>>, %arg12: memref<1x1x64xf32, #tpu.memory_space<vmem>>, %arg13: memref<1x64x32xbf16, #tpu.memory_space<vmem>>, %arg14: memref<1x1x32xf32, #tpu.memory_space<vmem>>, %arg15: memref<1x1x32xf32, #tpu.memory_space<vmem>>, %arg16: memref<1x1x32xf32, #tpu.memory_space<vmem>>, %arg17: memref<1x32x96xbf16, #tpu.memory_space<vmem>>, %arg18: memref<1x1x96xf32, #tpu.memory_space<vmem>>, %arg19: memref<1x32x32xbf16, #tpu.memory_space<vmem>>, %arg20: memref<1x1x32xf32, #tpu.memory_space<vmem>>, %arg21: memref<1x1x32xf32, #tpu.memory_space<vmem>>, %arg22: memref<1x1x32xf32, #tpu.memory_space<vmem>>, %arg23: memref<1x32x32xbf16, #tpu.memory_space<vmem>>, %arg24: memref<1x1x32xf32, #tpu.memory_space<vmem>>, %arg25: memref<1x32x64xbf16, #tpu.memory_space<vmem>>, %arg26: memref<1x1x64xf32, #tpu.memory_space<vmem>>, %arg27: memref<1x32x32xbf16, #tpu.memory_space<vmem>>, %arg28: memref<1x1x32xf32, #tpu.memory_space<vmem>>, %arg29: memref<1x1x32xf32, #tpu.memory_space<vmem>>, %arg30: memref<1x1x32xf32, #tpu.memory_space<vmem>>, %arg31: memref<1x32x64xbf16, #tpu.memory_space<vmem>>, %arg32: memref<1x1x64xf32, #tpu.memory_space<vmem>>, %arg33: memref<1x64x32xbf16, #tpu.memory_space<vmem>>, %arg34: memref<1x1x32xf32, #tpu.memory_space<vmem>>, %arg35: memref<1x1x32xf32, #tpu.memory_space<vmem>>, %arg36: memref<1x1x32xf32, #tpu.memory_space<vmem>>, %arg37: memref<32x128xbf16, #tpu.memory_space<vmem>>, %arg38: memref<1x128xf32, #tpu.memory_space<vmem>>, %arg39: memref<2x6x128xf32, #tpu.memory_space<vmem>>, %arg40: memref<2x2x6x128xf32, #tpu.memory_space<vmem>>, %arg41: memref<16x32xf32, #tpu.memory_space<vmem>>, %arg42: memref<12x32xf32, #tpu.memory_space<vmem>>) attributes {dimension_semantics = [#tpu.dimension_semantics<arbitrary>], iteration_bounds = array<i64: 4>, scalar_prefetch = 0 : i64, scratch_operands = 2 : i64, tpu.core_type = #tpu.core_type<tc>, window_params = [{pipeline_mode = #tpu.pipeline_mode<synchronous>, transform_indices = @transform_0, window_bounds = array<i64: 2, 8, 32>}, {pipeline_mode = #tpu.pipeline_mode<synchronous>, transform_indices = @transform_1, window_bounds = array<i64: 2, 6, 32>}, {pipeline_mode = #tpu.pipeline_mode<synchronous>, transform_indices = @transform_2, window_bounds = array<i64: 2, 8>}, {pipeline_mode = #tpu.pipeline_mode<synchronous>, transform_indices = @transform_3, window_bounds = array<i64: 2, 6>}, {transform_indices = @transform_4, window_bounds = array<i64: 1, 32, 96>}, {transform_indices = @transform_5, window_bounds = array<i64: 1, 1, 96>}, {transform_indices = @transform_6, window_bounds = array<i64: 1, 32, 32>}, {transform_indices = @transform_7, window_bounds = array<i64: 1, 1, 32>}, {transform_indices = @transform_8, window_bounds = array<i64: 1, 1, 32>}, {transform_indices = @transform_9, window_bounds = array<i64: 1, 1, 32>}, {transform_indices = @transform_10, window_bounds = array<i64: 1, 32, 64>}, {transform_indices = @transform_11, window_bounds = array<i64: 1, 1, 64>}, {transform_indices = @transform_12, window_bounds = array<i64: 1, 64, 32>}, {transform_indices = @transform_13, window_bounds = array<i64: 1, 1, 32>}, {transform_indices = @transform_14, window_bounds = array<i64: 1, 1, 32>}, {transform_indices = @transform_15, window_bounds = array<i64: 1, 1, 32>}, {transform_indices = @transform_16, window_bounds = array<i64: 1, 32, 96>}, {transform_indices = @transform_17, window_bounds = array<i64: 1, 1, 96>}, {transform_indices = @transform_18, window_bounds = array<i64: 1, 32, 32>}, {transform_indices = @transform_19, window_bounds = array<i64: 1, 1, 32>}, {transform_indices = @transform_20, window_bounds = array<i64: 1, 1, 32>}, {transform_indices = @transform_21, window_bounds = array<i64: 1, 1, 32>}, {transform_indices = @transform_22, window_bounds = array<i64: 1, 32, 32>}, {transform_indices = @transform_23, window_bounds = array<i64: 1, 1, 32>}, {transform_indices = @transform_24, window_bounds = array<i64: 1, 32, 64>}, {transform_indices = @transform_25, window_bounds = array<i64: 1, 1, 64>}, {transform_indices = @transform_26, window_bounds = array<i64: 1, 32, 32>}, {transform_indices = @transform_27, window_bounds = array<i64: 1, 1, 32>}, {transform_indices = @transform_28, window_bounds = array<i64: 1, 1, 32>}, {transform_indices = @transform_29, window_bounds = array<i64: 1, 1, 32>}, {transform_indices = @transform_30, window_bounds = array<i64: 1, 32, 64>}, {transform_indices = @transform_31, window_bounds = array<i64: 1, 1, 64>}, {transform_indices = @transform_32, window_bounds = array<i64: 1, 64, 32>}, {transform_indices = @transform_33, window_bounds = array<i64: 1, 1, 32>}, {transform_indices = @transform_34, window_bounds = array<i64: 1, 1, 32>}, {transform_indices = @transform_35, window_bounds = array<i64: 1, 1, 32>}, {pipeline_mode = #tpu.pipeline_mode<synchronous>, transform_indices = @transform_36, window_bounds = array<i64: 32, 128>}, {pipeline_mode = #tpu.pipeline_mode<synchronous>, transform_indices = @transform_37, window_bounds = array<i64: 1, 128>}, {pipeline_mode = #tpu.pipeline_mode<synchronous>, transform_indices = @transform_38, window_bounds = array<i64: 2, 6, 128>}, {pipeline_mode = #tpu.pipeline_mode<synchronous>, transform_indices = @transform_39, window_bounds = array<i64: 2, 2, 6, 128>}]} {
    %c2_i32 = arith.constant 2 : i32
    %0 = arith.cmpi slt, %arg0, %c2_i32 : i32
    %1 = arith.extui %0 : i1 to i32
    %c0_i32 = arith.constant 0 : i32
    %2 = arith.cmpi ne, %1, %c0_i32 : i32
    scf.if %2 {
      %c0_i32_2 = arith.constant 0 : i32
      %6 = arith.cmpi eq, %arg0, %c0_i32_2 : i32
      %7 = arith.extui %6 : i1 to i32
      %c0_i32_3 = arith.constant 0 : i32
      %8 = arith.cmpi ne, %7, %c0_i32_3 : i32
      scf.if %8 {
        %c0_85 = arith.constant 0 : index
        %c0_86 = arith.constant 0 : index
        %c0_87 = arith.constant 0 : index
        %215 = vector.load %arg1[%c0_85, %c0_86, %c0_87] : memref<2x8x32xf32, #tpu.memory_space<vmem>>, vector<2x8x32xf32>
        %216 = vector.shape_cast %215 : vector<2x8x32xf32> to vector<16x32xf32>
        %c0_88 = arith.constant 0 : index
        %c0_89 = arith.constant 0 : index
        %217 = vector.load %arg41[%c0_88, %c0_89] : memref<16x32xf32, #tpu.memory_space<vmem>>, vector<16x32xf32>
        tpu.vector_store %arg41[%c0_88, %c0_89], %216 {strides = array<i32>} : memref<16x32xf32, #tpu.memory_space<vmem>>, vector<16x32xf32>,
      } else {
      }
      %c0 = arith.constant 0 : index
      %c0_4 = arith.constant 0 : index
      %9 = vector.load %arg3[%c0, %c0_4] : memref<2x8xi32, #tpu.memory_space<vmem>>, vector<2x8xi32>
      %c0_5 = arith.constant 0 : index
      %c0_6 = arith.constant 0 : index
      %c0_7 = arith.constant 0 : index
      %10 = vector.load %arg5[%c0_5, %c0_6, %c0_7] : memref<1x32x96xbf16, #tpu.memory_space<vmem>>, vector<1x32x96xbf16>
      %11 = vector.shape_cast %10 : vector<1x32x96xbf16> to vector<32x96xbf16>
      %c0_8 = arith.constant 0 : index
      %c0_9 = arith.constant 0 : index
      %c0_10 = arith.constant 0 : index
      %12 = vector.load %arg6[%c0_8, %c0_9, %c0_10] : memref<1x1x96xf32, #tpu.memory_space<vmem>>, vector<1x1x96xf32>
      %13 = vector.shape_cast %12 : vector<1x1x96xf32> to vector<1x96xf32>
      %c0_11 = arith.constant 0 : index
      %c0_12 = arith.constant 0 : index
      %c0_13 = arith.constant 0 : index
      %14 = vector.load %arg7[%c0_11, %c0_12, %c0_13] : memref<1x32x32xbf16, #tpu.memory_space<vmem>>, vector<1x32x32xbf16>
      %15 = vector.shape_cast %14 : vector<1x32x32xbf16> to vector<32x32xbf16>
      %c0_14 = arith.constant 0 : index
      %c0_15 = arith.constant 0 : index
      %c0_16 = arith.constant 0 : index
      %16 = vector.load %arg8[%c0_14, %c0_15, %c0_16] : memref<1x1x32xf32, #tpu.memory_space<vmem>>, vector<1x1x32xf32>
      %17 = vector.shape_cast %16 : vector<1x1x32xf32> to vector<1x32xf32>
      %c0_17 = arith.constant 0 : index
      %c0_18 = arith.constant 0 : index
      %c0_19 = arith.constant 0 : index
      %18 = vector.load %arg9[%c0_17, %c0_18, %c0_19] : memref<1x1x32xf32, #tpu.memory_space<vmem>>, vector<1x1x32xf32>
      %19 = vector.shape_cast %18 : vector<1x1x32xf32> to vector<1x32xf32>
      %c0_20 = arith.constant 0 : index
      %c0_21 = arith.constant 0 : index
      %c0_22 = arith.constant 0 : index
      %20 = vector.load %arg10[%c0_20, %c0_21, %c0_22] : memref<1x1x32xf32, #tpu.memory_space<vmem>>, vector<1x1x32xf32>
      %21 = vector.shape_cast %20 : vector<1x1x32xf32> to vector<1x32xf32>
      %c0_23 = arith.constant 0 : index
      %c0_24 = arith.constant 0 : index
      %c0_25 = arith.constant 0 : index
      %22 = vector.load %arg11[%c0_23, %c0_24, %c0_25] : memref<1x32x64xbf16, #tpu.memory_space<vmem>>, vector<1x32x64xbf16>
      %23 = vector.shape_cast %22 : vector<1x32x64xbf16> to vector<32x64xbf16>
      %c0_26 = arith.constant 0 : index
      %c0_27 = arith.constant 0 : index
      %c0_28 = arith.constant 0 : index
      %24 = vector.load %arg12[%c0_26, %c0_27, %c0_28] : memref<1x1x64xf32, #tpu.memory_space<vmem>>, vector<1x1x64xf32>
      %25 = vector.shape_cast %24 : vector<1x1x64xf32> to vector<1x64xf32>
      %c0_29 = arith.constant 0 : index
      %c0_30 = arith.constant 0 : index
      %c0_31 = arith.constant 0 : index
      %26 = vector.load %arg13[%c0_29, %c0_30, %c0_31] : memref<1x64x32xbf16, #tpu.memory_space<vmem>>, vector<1x64x32xbf16>
      %27 = vector.shape_cast %26 : vector<1x64x32xbf16> to vector<64x32xbf16>
      %c0_32 = arith.constant 0 : index
      %c0_33 = arith.constant 0 : index
      %c0_34 = arith.constant 0 : index
      %28 = vector.load %arg14[%c0_32, %c0_33, %c0_34] : memref<1x1x32xf32, #tpu.memory_space<vmem>>, vector<1x1x32xf32>
      %29 = vector.shape_cast %28 : vector<1x1x32xf32> to vector<1x32xf32>
      %c0_35 = arith.constant 0 : index
      %c0_36 = arith.constant 0 : index
      %c0_37 = arith.constant 0 : index
      %30 = vector.load %arg15[%c0_35, %c0_36, %c0_37] : memref<1x1x32xf32, #tpu.memory_space<vmem>>, vector<1x1x32xf32>
      %31 = vector.shape_cast %30 : vector<1x1x32xf32> to vector<1x32xf32>
      %c0_38 = arith.constant 0 : index
      %c0_39 = arith.constant 0 : index
      %c0_40 = arith.constant 0 : index
      %32 = vector.load %arg16[%c0_38, %c0_39, %c0_40] : memref<1x1x32xf32, #tpu.memory_space<vmem>>, vector<1x1x32xf32>
      %33 = vector.shape_cast %32 : vector<1x1x32xf32> to vector<1x32xf32>
      %c0_41 = arith.constant 0 : index
      %c0_42 = arith.constant 0 : index
      %34 = vector.load %arg41[%c0_41, %c0_42] : memref<16x32xf32, #tpu.memory_space<vmem>>, vector<16x32xf32>
      %35 = arith.truncf %34 : vector<16x32xf32> to vector<16x32xbf16>
      %cst = arith.constant dense<0.000000e+00> : vector<16x96xf32>
      %36 = tpu.matmul %35, %11, %cst {dimension_numbers = #tpu.dot_dimension_numbers<[1], [0], [0], [1], [0, 0, 1, 1], [], []>} : vector<16x32xbf16>, vector<32x96xbf16>, vector<16x96xf32> -> vector<16x96xf32>
      %37 = vector.broadcast %13 : vector<1x96xf32> to vector<16x96xf32>
      %38 = arith.addf %36, %37 : vector<16x96xf32>
      %39 = vector.extract_strided_slice %9 {offsets = [0, 0], sizes = [1, 8], strides = [1, 1]} : vector<2x8xi32> to vector<1x8xi32>
      %c0_i32_43 = arith.constant 0 : i32
      %40 = vector.broadcast %c0_i32_43 : i32 to vector<1x8xi32>
      %41 = arith.cmpi ne, %39, %40 : vector<1x8xi32>
      %42 = vector.extract_strided_slice %38 {offsets = [0, 0], sizes = [8, 32], strides = [1, 1]} : vector<16x96xf32> to vector<8x32xf32>
      %43 = vector.extract_strided_slice %38 {offsets = [0, 32], sizes = [8, 32], strides = [1, 1]} : vector<16x96xf32> to vector<8x32xf32>
      %44 = vector.extract_strided_slice %38 {offsets = [0, 64], sizes = [8, 32], strides = [1, 1]} : vector<16x96xf32> to vector<8x32xf32>
      %45 = vector.extract_strided_slice %42 {offsets = [0, 0], sizes = [8, 16], strides = [1, 1]} : vector<8x32xf32> to vector<8x16xf32>
      %46 = arith.truncf %45 : vector<8x16xf32> to vector<8x16xbf16>
      %47 = vector.extract_strided_slice %43 {offsets = [0, 0], sizes = [8, 16], strides = [1, 1]} : vector<8x32xf32> to vector<8x16xf32>
      %48 = arith.truncf %47 : vector<8x16xf32> to vector<8x16xbf16>
      %49 = vector.extract_strided_slice %44 {offsets = [0, 0], sizes = [8, 16], strides = [1, 1]} : vector<8x32xf32> to vector<8x16xf32>
      %50 = arith.truncf %49 : vector<8x16xf32> to vector<8x16xbf16>
      %cst_44 = arith.constant dense<0.000000e+00> : vector<8x8xf32>
      %51 = tpu.matmul %46, %48, %cst_44 {dimension_numbers = #tpu.dot_dimension_numbers<[1], [1], [0], [0], [0, 0, 1, 0], [], []>} : vector<8x16xbf16>, vector<8x16xbf16>, vector<8x8xf32> -> vector<8x8xf32>
      %cst_45 = arith.constant 2.500000e-01 : f32
      %52 = vector.broadcast %cst_45 : f32 to vector<8x8xf32>
      %53 = arith.mulf %51, %52 : vector<8x8xf32>
      %cst_46 = arith.constant -1.000000e+10 : f32
      %54 = vector.shape_cast %41 : vector<1x8xi1> to vector<1x8xi1>
      %55 = vector.broadcast %54 : vector<1x8xi1> to vector<8x8xi1>
      %56 = vector.broadcast %cst_46 : f32 to vector<8x8xf32>
      %57 = arith.select %55, %53, %56 : vector<8x8xi1>, vector<8x8xf32>
      %cst_47 = arith.constant dense<0xFF800000> : vector<8xf32>
      %58 = vector.multi_reduction <maximumf>, %57, %cst_47 [1] : vector<8x8xf32> to vector<8xf32>
      %59 = vector.shape_cast %58 : vector<8xf32> to vector<8x1xf32>
      %60 = vector.broadcast %59 : vector<8x1xf32> to vector<8x8xf32>
      %61 = arith.subf %57, %60 : vector<8x8xf32>
      %62 = math.exp %61 : vector<8x8xf32>
      %cst_48 = arith.constant dense<0.000000e+00> : vector<8xf32>
      %63 = vector.multi_reduction <add>, %62, %cst_48 [1] : vector<8x8xf32> to vector<8xf32>
      %64 = vector.shape_cast %63 : vector<8xf32> to vector<8x1xf32>
      %65 = tpu.reciprocal %64 {approx = true} : vector<8x1xf32> -> vector<8x1xf32>
      %66 = vector.broadcast %65 : vector<8x1xf32> to vector<8x8xf32>
      %67 = arith.mulf %62, %66 : vector<8x8xf32>
      %68 = arith.truncf %67 : vector<8x8xf32> to vector<8x8xbf16>
      %cst_49 = arith.constant dense<0.000000e+00> : vector<8x16xf32>
      %69 = tpu.matmul %68, %50, %cst_49 {dimension_numbers = #tpu.dot_dimension_numbers<[1], [0], [0], [1], [0, 0, 1, 1], [], []>} : vector<8x8xbf16>, vector<8x16xbf16>, vector<8x16xf32> -> vector<8x16xf32>
      %70 = vector.extract_strided_slice %42 {offsets = [0, 16], sizes = [8, 16], strides = [1, 1]} : vector<8x32xf32> to vector<8x16xf32>
      %71 = arith.truncf %70 : vector<8x16xf32> to vector<8x16xbf16>
      %72 = vector.extract_strided_slice %43 {offsets = [0, 16], sizes = [8, 16], strides = [1, 1]} : vector<8x32xf32> to vector<8x16xf32>
      %73 = arith.truncf %72 : vector<8x16xf32> to vector<8x16xbf16>
      %74 = vector.extract_strided_slice %44 {offsets = [0, 16], sizes = [8, 16], strides = [1, 1]} : vector<8x32xf32> to vector<8x16xf32>
      %75 = arith.truncf %74 : vector<8x16xf32> to vector<8x16xbf16>
      %cst_50 = arith.constant dense<0.000000e+00> : vector<8x8xf32>
      %76 = tpu.matmul %71, %73, %cst_50 {dimension_numbers = #tpu.dot_dimension_numbers<[1], [1], [0], [0], [0, 0, 1, 0], [], []>} : vector<8x16xbf16>, vector<8x16xbf16>, vector<8x8xf32> -> vector<8x8xf32>
      %cst_51 = arith.constant 2.500000e-01 : f32
      %77 = vector.broadcast %cst_51 : f32 to vector<8x8xf32>
      %78 = arith.mulf %76, %77 : vector<8x8xf32>
      %cst_52 = arith.constant -1.000000e+10 : f32
      %79 = vector.shape_cast %41 : vector<1x8xi1> to vector<1x8xi1>
      %80 = vector.broadcast %79 : vector<1x8xi1> to vector<8x8xi1>
      %81 = vector.broadcast %cst_52 : f32 to vector<8x8xf32>
      %82 = arith.select %80, %78, %81 : vector<8x8xi1>, vector<8x8xf32>
      %cst_53 = arith.constant dense<0xFF800000> : vector<8xf32>
      %83 = vector.multi_reduction <maximumf>, %82, %cst_53 [1] : vector<8x8xf32> to vector<8xf32>
      %84 = vector.shape_cast %83 : vector<8xf32> to vector<8x1xf32>
      %85 = vector.broadcast %84 : vector<8x1xf32> to vector<8x8xf32>
      %86 = arith.subf %82, %85 : vector<8x8xf32>
      %87 = math.exp %86 : vector<8x8xf32>
      %cst_54 = arith.constant dense<0.000000e+00> : vector<8xf32>
      %88 = vector.multi_reduction <add>, %87, %cst_54 [1] : vector<8x8xf32> to vector<8xf32>
      %89 = vector.shape_cast %88 : vector<8xf32> to vector<8x1xf32>
      %90 = tpu.reciprocal %89 {approx = true} : vector<8x1xf32> -> vector<8x1xf32>
      %91 = vector.broadcast %90 : vector<8x1xf32> to vector<8x8xf32>
      %92 = arith.mulf %87, %91 : vector<8x8xf32>
      %93 = arith.truncf %92 : vector<8x8xf32> to vector<8x8xbf16>
      %cst_55 = arith.constant dense<0.000000e+00> : vector<8x16xf32>
      %94 = tpu.matmul %93, %75, %cst_55 {dimension_numbers = #tpu.dot_dimension_numbers<[1], [0], [0], [1], [0, 0, 1, 1], [], []>} : vector<8x8xbf16>, vector<8x16xbf16>, vector<8x16xf32> -> vector<8x16xf32>
      %95 = tpu.concatenate %69, %94 in 1 : vector<8x16xf32>, vector<8x16xf32> -> vector<8x32xf32>
      %96 = vector.extract_strided_slice %9 {offsets = [1, 0], sizes = [1, 8], strides = [1, 1]} : vector<2x8xi32> to vector<1x8xi32>
      %c0_i32_56 = arith.constant 0 : i32
      %97 = vector.broadcast %c0_i32_56 : i32 to vector<1x8xi32>
      %98 = arith.cmpi ne, %96, %97 : vector<1x8xi32>
      %99 = vector.extract_strided_slice %38 {offsets = [8, 0], sizes = [8, 32], strides = [1, 1]} : vector<16x96xf32> to vector<8x32xf32>
      %100 = vector.extract_strided_slice %38 {offsets = [8, 32], sizes = [8, 32], strides = [1, 1]} : vector<16x96xf32> to vector<8x32xf32>
      %101 = vector.extract_strided_slice %38 {offsets = [8, 64], sizes = [8, 32], strides = [1, 1]} : vector<16x96xf32> to vector<8x32xf32>
      %102 = vector.extract_strided_slice %99 {offsets = [0, 0], sizes = [8, 16], strides = [1, 1]} : vector<8x32xf32> to vector<8x16xf32>
      %103 = arith.truncf %102 : vector<8x16xf32> to vector<8x16xbf16>
      %104 = vector.extract_strided_slice %100 {offsets = [0, 0], sizes = [8, 16], strides = [1, 1]} : vector<8x32xf32> to vector<8x16xf32>
      %105 = arith.truncf %104 : vector<8x16xf32> to vector<8x16xbf16>
      %106 = vector.extract_strided_slice %101 {offsets = [0, 0], sizes = [8, 16], strides = [1, 1]} : vector<8x32xf32> to vector<8x16xf32>
      %107 = arith.truncf %106 : vector<8x16xf32> to vector<8x16xbf16>
      %cst_57 = arith.constant dense<0.000000e+00> : vector<8x8xf32>
      %108 = tpu.matmul %103, %105, %cst_57 {dimension_numbers = #tpu.dot_dimension_numbers<[1], [1], [0], [0], [0, 0, 1, 0], [], []>} : vector<8x16xbf16>, vector<8x16xbf16>, vector<8x8xf32> -> vector<8x8xf32>
      %cst_58 = arith.constant 2.500000e-01 : f32
      %109 = vector.broadcast %cst_58 : f32 to vector<8x8xf32>
      %110 = arith.mulf %108, %109 : vector<8x8xf32>
      %cst_59 = arith.constant -1.000000e+10 : f32
      %111 = vector.shape_cast %98 : vector<1x8xi1> to vector<1x8xi1>
      %112 = vector.broadcast %111 : vector<1x8xi1> to vector<8x8xi1>
      %113 = vector.broadcast %cst_59 : f32 to vector<8x8xf32>
      %114 = arith.select %112, %110, %113 : vector<8x8xi1>, vector<8x8xf32>
      %cst_60 = arith.constant dense<0xFF800000> : vector<8xf32>
      %115 = vector.multi_reduction <maximumf>, %114, %cst_60 [1] : vector<8x8xf32> to vector<8xf32>
      %116 = vector.shape_cast %115 : vector<8xf32> to vector<8x1xf32>
      %117 = vector.broadcast %116 : vector<8x1xf32> to vector<8x8xf32>
      %118 = arith.subf %114, %117 : vector<8x8xf32>
      %119 = math.exp %118 : vector<8x8xf32>
      %cst_61 = arith.constant dense<0.000000e+00> : vector<8xf32>
      %120 = vector.multi_reduction <add>, %119, %cst_61 [1] : vector<8x8xf32> to vector<8xf32>
      %121 = vector.shape_cast %120 : vector<8xf32> to vector<8x1xf32>
      %122 = tpu.reciprocal %121 {approx = true} : vector<8x1xf32> -> vector<8x1xf32>
      %123 = vector.broadcast %122 : vector<8x1xf32> to vector<8x8xf32>
      %124 = arith.mulf %119, %123 : vector<8x8xf32>
      %125 = arith.truncf %124 : vector<8x8xf32> to vector<8x8xbf16>
      %cst_62 = arith.constant dense<0.000000e+00> : vector<8x16xf32>
      %126 = tpu.matmul %125, %107, %cst_62 {dimension_numbers = #tpu.dot_dimension_numbers<[1], [0], [0], [1], [0, 0, 1, 1], [], []>} : vector<8x8xbf16>, vector<8x16xbf16>, vector<8x16xf32> -> vector<8x16xf32>
      %127 = vector.extract_strided_slice %99 {offsets = [0, 16], sizes = [8, 16], strides = [1, 1]} : vector<8x32xf32> to vector<8x16xf32>
      %128 = arith.truncf %127 : vector<8x16xf32> to vector<8x16xbf16>
      %129 = vector.extract_strided_slice %100 {offsets = [0, 16], sizes = [8, 16], strides = [1, 1]} : vector<8x32xf32> to vector<8x16xf32>
      %130 = arith.truncf %129 : vector<8x16xf32> to vector<8x16xbf16>
      %131 = vector.extract_strided_slice %101 {offsets = [0, 16], sizes = [8, 16], strides = [1, 1]} : vector<8x32xf32> to vector<8x16xf32>
      %132 = arith.truncf %131 : vector<8x16xf32> to vector<8x16xbf16>
      %cst_63 = arith.constant dense<0.000000e+00> : vector<8x8xf32>
      %133 = tpu.matmul %128, %130, %cst_63 {dimension_numbers = #tpu.dot_dimension_numbers<[1], [1], [0], [0], [0, 0, 1, 0], [], []>} : vector<8x16xbf16>, vector<8x16xbf16>, vector<8x8xf32> -> vector<8x8xf32>
      %cst_64 = arith.constant 2.500000e-01 : f32
      %134 = vector.broadcast %cst_64 : f32 to vector<8x8xf32>
      %135 = arith.mulf %133, %134 : vector<8x8xf32>
      %cst_65 = arith.constant -1.000000e+10 : f32
      %136 = vector.shape_cast %98 : vector<1x8xi1> to vector<1x8xi1>
      %137 = vector.broadcast %136 : vector<1x8xi1> to vector<8x8xi1>
      %138 = vector.broadcast %cst_65 : f32 to vector<8x8xf32>
      %139 = arith.select %137, %135, %138 : vector<8x8xi1>, vector<8x8xf32>
      %cst_66 = arith.constant dense<0xFF800000> : vector<8xf32>
      %140 = vector.multi_reduction <maximumf>, %139, %cst_66 [1] : vector<8x8xf32> to vector<8xf32>
      %141 = vector.shape_cast %140 : vector<8xf32> to vector<8x1xf32>
      %142 = vector.broadcast %141 : vector<8x1xf32> to vector<8x8xf32>
      %143 = arith.subf %139, %142 : vector<8x8xf32>
      %144 = math.exp %143 : vector<8x8xf32>
      %cst_67 = arith.constant dense<0.000000e+00> : vector<8xf32>
      %145 = vector.multi_reduction <add>, %144, %cst_67 [1] : vector<8x8xf32> to vector<8xf32>
      %146 = vector.shape_cast %145 : vector<8xf32> to vector<8x1xf32>
      %147 = tpu.reciprocal %146 {approx = true} : vector<8x1xf32> -> vector<8x1xf32>
      %148 = vector.broadcast %147 : vector<8x1xf32> to vector<8x8xf32>
      %149 = arith.mulf %144, %148 : vector<8x8xf32>
      %150 = arith.truncf %149 : vector<8x8xf32> to vector<8x8xbf16>
      %cst_68 = arith.constant dense<0.000000e+00> : vector<8x16xf32>
      %151 = tpu.matmul %150, %132, %cst_68 {dimension_numbers = #tpu.dot_dimension_numbers<[1], [0], [0], [1], [0, 0, 1, 1], [], []>} : vector<8x8xbf16>, vector<8x16xbf16>, vector<8x16xf32> -> vector<8x16xf32>
      %152 = tpu.concatenate %126, %151 in 1 : vector<8x16xf32>, vector<8x16xf32> -> vector<8x32xf32>
      %153 = tpu.concatenate %95, %152 in 0 : vector<8x32xf32>, vector<8x32xf32> -> vector<16x32xf32>
      %154 = arith.truncf %153 : vector<16x32xf32> to vector<16x32xbf16>
      %cst_69 = arith.constant dense<0.000000e+00> : vector<16x32xf32>
      %155 = tpu.matmul %154, %15, %cst_69 {dimension_numbers = #tpu.dot_dimension_numbers<[1], [0], [0], [1], [0, 0, 1, 1], [], []>} : vector<16x32xbf16>, vector<32x32xbf16>, vector<16x32xf32> -> vector<16x32xf32>
      %156 = vector.broadcast %17 : vector<1x32xf32> to vector<16x32xf32>
      %157 = arith.addf %155, %156 : vector<16x32xf32>
      %158 = arith.addf %34, %157 : vector<16x32xf32>
      %cst_70 = arith.constant dense<0.000000e+00> : vector<16xf32>
      %159 = vector.multi_reduction <add>, %158, %cst_70 [1] : vector<16x32xf32> to vector<16xf32>
      %160 = vector.shape_cast %159 : vector<16xf32> to vector<16x1xf32>
      %cst_71 = arith.constant 3.200000e+01 : f32
      %161 = vector.broadcast %cst_71 : f32 to vector<16x1xf32>
      %162 = arith.divf %160, %161 : vector<16x1xf32>
      %163 = vector.broadcast %162 : vector<16x1xf32> to vector<16x32xf32>
      %164 = arith.subf %158, %163 : vector<16x32xf32>
      %165 = arith.mulf %164, %164 : vector<16x32xf32>
      %cst_72 = arith.constant dense<0.000000e+00> : vector<16xf32>
      %166 = vector.multi_reduction <add>, %165, %cst_72 [1] : vector<16x32xf32> to vector<16xf32>
      %167 = vector.shape_cast %166 : vector<16xf32> to vector<16x1xf32>
      %cst_73 = arith.constant 3.200000e+01 : f32
      %168 = vector.broadcast %cst_73 : f32 to vector<16x1xf32>
      %169 = arith.divf %167, %168 : vector<16x1xf32>
      %170 = vector.broadcast %162 : vector<16x1xf32> to vector<16x32xf32>
      %171 = arith.subf %158, %170 : vector<16x32xf32>
      %cst_74 = arith.constant 9.99999974E-6 : f32
      %172 = vector.broadcast %cst_74 : f32 to vector<16x1xf32>
      %173 = arith.addf %169, %172 : vector<16x1xf32>
      %174 = math.rsqrt %173 : vector<16x1xf32>
      %175 = vector.broadcast %174 : vector<16x1xf32> to vector<16x32xf32>
      %176 = arith.mulf %171, %175 : vector<16x32xf32>
      %177 = vector.broadcast %19 : vector<1x32xf32> to vector<16x32xf32>
      %178 = arith.mulf %176, %177 : vector<16x32xf32>
      %179 = vector.broadcast %21 : vector<1x32xf32> to vector<16x32xf32>
      %180 = arith.addf %178, %179 : vector<16x32xf32>
      %181 = arith.truncf %180 : vector<16x32xf32> to vector<16x32xbf16>
      %cst_75 = arith.constant dense<0.000000e+00> : vector<16x64xf32>
      %182 = tpu.matmul %181, %23, %cst_75 {dimension_numbers = #tpu.dot_dimension_numbers<[1], [0], [0], [1], [0, 0, 1, 1], [], []>} : vector<16x32xbf16>, vector<32x64xbf16>, vector<16x64xf32> -> vector<16x64xf32>
      %183 = vector.broadcast %25 : vector<1x64xf32> to vector<16x64xf32>
      %184 = arith.addf %182, %183 : vector<16x64xf32>
      %cst_76 = arith.constant 0.000000e+00 : f32
      %185 = vector.broadcast %cst_76 : f32 to vector<16x64xf32>
      %186 = arith.maximumf %184, %185 : vector<16x64xf32>
      %187 = arith.truncf %186 : vector<16x64xf32> to vector<16x64xbf16>
      %cst_77 = arith.constant dense<0.000000e+00> : vector<16x32xf32>
      %188 = tpu.matmul %187, %27, %cst_77 {dimension_numbers = #tpu.dot_dimension_numbers<[1], [0], [0], [1], [0, 0, 1, 1], [], []>} : vector<16x64xbf16>, vector<64x32xbf16>, vector<16x32xf32> -> vector<16x32xf32>
      %189 = vector.broadcast %29 : vector<1x32xf32> to vector<16x32xf32>
      %190 = arith.addf %188, %189 : vector<16x32xf32>
      %191 = arith.addf %180, %190 : vector<16x32xf32>
      %cst_78 = arith.constant dense<0.000000e+00> : vector<16xf32>
      %192 = vector.multi_reduction <add>, %191, %cst_78 [1] : vector<16x32xf32> to vector<16xf32>
      %193 = vector.shape_cast %192 : vector<16xf32> to vector<16x1xf32>
      %cst_79 = arith.constant 3.200000e+01 : f32
      %194 = vector.broadcast %cst_79 : f32 to vector<16x1xf32>
      %195 = arith.divf %193, %194 : vector<16x1xf32>
      %196 = vector.broadcast %195 : vector<16x1xf32> to vector<16x32xf32>
      %197 = arith.subf %191, %196 : vector<16x32xf32>
      %198 = arith.mulf %197, %197 : vector<16x32xf32>
      %cst_80 = arith.constant dense<0.000000e+00> : vector<16xf32>
      %199 = vector.multi_reduction <add>, %198, %cst_80 [1] : vector<16x32xf32> to vector<16xf32>
      %200 = vector.shape_cast %199 : vector<16xf32> to vector<16x1xf32>
      %cst_81 = arith.constant 3.200000e+01 : f32
      %201 = vector.broadcast %cst_81 : f32 to vector<16x1xf32>
      %202 = arith.divf %200, %201 : vector<16x1xf32>
      %203 = vector.broadcast %195 : vector<16x1xf32> to vector<16x32xf32>
      %204 = arith.subf %191, %203 : vector<16x32xf32>
      %cst_82 = arith.constant 9.99999974E-6 : f32
      %205 = vector.broadcast %cst_82 : f32 to vector<16x1xf32>
      %206 = arith.addf %202, %205 : vector<16x1xf32>
      %207 = math.rsqrt %206 : vector<16x1xf32>
      %208 = vector.broadcast %207 : vector<16x1xf32> to vector<16x32xf32>
      %209 = arith.mulf %204, %208 : vector<16x32xf32>
      %210 = vector.broadcast %31 : vector<1x32xf32> to vector<16x32xf32>
      %211 = arith.mulf %209, %210 : vector<16x32xf32>
      %212 = vector.broadcast %33 : vector<1x32xf32> to vector<16x32xf32>
      %213 = arith.addf %211, %212 : vector<16x32xf32>
      %c0_83 = arith.constant 0 : index
      %c0_84 = arith.constant 0 : index
      %214 = vector.load %arg41[%c0_83, %c0_84] : memref<16x32xf32, #tpu.memory_space<vmem>>, vector<16x32xf32>
      tpu.vector_store %arg41[%c0_83, %c0_84], %213 {strides = array<i32>} : memref<16x32xf32, #tpu.memory_space<vmem>>, vector<16x32xf32>,
    } else {
    }
    %c2_i32_0 = arith.constant 2 : i32
    %3 = arith.cmpi sge, %arg0, %c2_i32_0 : i32
    %4 = arith.extui %3 : i1 to i32
    %c0_i32_1 = arith.constant 0 : i32
    %5 = arith.cmpi ne, %4, %c0_i32_1 : i32
    scf.if %5 {
      %c2_i32_2 = arith.constant 2 : i32
      %6 = arith.cmpi eq, %arg0, %c2_i32_2 : i32
      %7 = arith.extui %6 : i1 to i32
      %c0_i32_3 = arith.constant 0 : i32
      %8 = arith.cmpi ne, %7, %c0_i32_3 : i32
      scf.if %8 {
        %c0_148 = arith.constant 0 : index
        %c0_149 = arith.constant 0 : index
        %c0_150 = arith.constant 0 : index
        %381 = vector.load %arg2[%c0_148, %c0_149, %c0_150] : memref<2x6x32xf32, #tpu.memory_space<vmem>>, vector<2x6x32xf32>
        %382 = vector.shape_cast %381 : vector<2x6x32xf32> to vector<12x32xf32>
        %c0_151 = arith.constant 0 : index
        %c0_152 = arith.constant 0 : index
        %383 = vector.load %arg42[%c0_151, %c0_152] : memref<12x32xf32, #tpu.memory_space<vmem>>, vector<12x32xf32>
        tpu.vector_store %arg42[%c0_151, %c0_152], %382 {strides = array<i32>} : memref<12x32xf32, #tpu.memory_space<vmem>>, vector<12x32xf32>,
      } else {
      }
      %c0 = arith.constant 0 : index
      %c0_4 = arith.constant 0 : index
      %9 = vector.load %arg4[%c0, %c0_4] : memref<2x6xi32, #tpu.memory_space<vmem>>, vector<2x6xi32>
      %c0_5 = arith.constant 0 : index
      %c0_6 = arith.constant 0 : index
      %10 = vector.load %arg3[%c0_5, %c0_6] : memref<2x8xi32, #tpu.memory_space<vmem>>, vector<2x8xi32>
      %11 = tpu.iota {dimensions = array<i32: 0>} : vector<6x6xi32>
      %12 = tpu.iota {dimensions = array<i32: 1>} : vector<6x6xi32>
      %13 = arith.cmpi sle, %12, %11 : vector<6x6xi32>
      %c0_7 = arith.constant 0 : index
      %c0_8 = arith.constant 0 : index
      %c0_9 = arith.constant 0 : index
      %14 = vector.load %arg17[%c0_7, %c0_8, %c0_9] : memref<1x32x96xbf16, #tpu.memory_space<vmem>>, vector<1x32x96xbf16>
      %15 = vector.shape_cast %14 : vector<1x32x96xbf16> to vector<32x96xbf16>
      %c0_10 = arith.constant 0 : index
      %c0_11 = arith.constant 0 : index
      %c0_12 = arith.constant 0 : index
      %16 = vector.load %arg18[%c0_10, %c0_11, %c0_12] : memref<1x1x96xf32, #tpu.memory_space<vmem>>, vector<1x1x96xf32>
      %17 = vector.shape_cast %16 : vector<1x1x96xf32> to vector<1x96xf32>
      %c0_13 = arith.constant 0 : index
      %c0_14 = arith.constant 0 : index
      %c0_15 = arith.constant 0 : index
      %18 = vector.load %arg19[%c0_13, %c0_14, %c0_15] : memref<1x32x32xbf16, #tpu.memory_space<vmem>>, vector<1x32x32xbf16>
      %19 = vector.shape_cast %18 : vector<1x32x32xbf16> to vector<32x32xbf16>
      %c0_16 = arith.constant 0 : index
      %c0_17 = arith.constant 0 : index
      %c0_18 = arith.constant 0 : index
      %20 = vector.load %arg20[%c0_16, %c0_17, %c0_18] : memref<1x1x32xf32, #tpu.memory_space<vmem>>, vector<1x1x32xf32>
      %21 = vector.shape_cast %20 : vector<1x1x32xf32> to vector<1x32xf32>
      %c0_19 = arith.constant 0 : index
      %c0_20 = arith.constant 0 : index
      %c0_21 = arith.constant 0 : index
      %22 = vector.load %arg21[%c0_19, %c0_20, %c0_21] : memref<1x1x32xf32, #tpu.memory_space<vmem>>, vector<1x1x32xf32>
      %23 = vector.shape_cast %22 : vector<1x1x32xf32> to vector<1x32xf32>
      %c0_22 = arith.constant 0 : index
      %c0_23 = arith.constant 0 : index
      %c0_24 = arith.constant 0 : index
      %24 = vector.load %arg22[%c0_22, %c0_23, %c0_24] : memref<1x1x32xf32, #tpu.memory_space<vmem>>, vector<1x1x32xf32>
      %25 = vector.shape_cast %24 : vector<1x1x32xf32> to vector<1x32xf32>
      %c0_25 = arith.constant 0 : index
      %c0_26 = arith.constant 0 : index
      %c0_27 = arith.constant 0 : index
      %26 = vector.load %arg23[%c0_25, %c0_26, %c0_27] : memref<1x32x32xbf16, #tpu.memory_space<vmem>>, vector<1x32x32xbf16>
      %27 = vector.shape_cast %26 : vector<1x32x32xbf16> to vector<32x32xbf16>
      %c0_28 = arith.constant 0 : index
      %c0_29 = arith.constant 0 : index
      %c0_30 = arith.constant 0 : index
      %28 = vector.load %arg24[%c0_28, %c0_29, %c0_30] : memref<1x1x32xf32, #tpu.memory_space<vmem>>, vector<1x1x32xf32>
      %29 = vector.shape_cast %28 : vector<1x1x32xf32> to vector<1x32xf32>
      %c0_31 = arith.constant 0 : index
      %c0_32 = arith.constant 0 : index
      %c0_33 = arith.constant 0 : index
      %30 = vector.load %arg25[%c0_31, %c0_32, %c0_33] : memref<1x32x64xbf16, #tpu.memory_space<vmem>>, vector<1x32x64xbf16>
      %31 = vector.shape_cast %30 : vector<1x32x64xbf16> to vector<32x64xbf16>
      %c0_34 = arith.constant 0 : index
      %c0_35 = arith.constant 0 : index
      %c0_36 = arith.constant 0 : index
      %32 = vector.load %arg26[%c0_34, %c0_35, %c0_36] : memref<1x1x64xf32, #tpu.memory_space<vmem>>, vector<1x1x64xf32>
      %33 = vector.shape_cast %32 : vector<1x1x64xf32> to vector<1x64xf32>
      %c0_37 = arith.constant 0 : index
      %c0_38 = arith.constant 0 : index
      %c0_39 = arith.constant 0 : index
      %34 = vector.load %arg27[%c0_37, %c0_38, %c0_39] : memref<1x32x32xbf16, #tpu.memory_space<vmem>>, vector<1x32x32xbf16>
      %35 = vector.shape_cast %34 : vector<1x32x32xbf16> to vector<32x32xbf16>
      %c0_40 = arith.constant 0 : index
      %c0_41 = arith.constant 0 : index
      %c0_42 = arith.constant 0 : index
      %36 = vector.load %arg28[%c0_40, %c0_41, %c0_42] : memref<1x1x32xf32, #tpu.memory_space<vmem>>, vector<1x1x32xf32>
      %37 = vector.shape_cast %36 : vector<1x1x32xf32> to vector<1x32xf32>
      %c0_43 = arith.constant 0 : index
      %c0_44 = arith.constant 0 : index
      %c0_45 = arith.constant 0 : index
      %38 = vector.load %arg29[%c0_43, %c0_44, %c0_45] : memref<1x1x32xf32, #tpu.memory_space<vmem>>, vector<1x1x32xf32>
      %39 = vector.shape_cast %38 : vector<1x1x32xf32> to vector<1x32xf32>
      %c0_46 = arith.constant 0 : index
      %c0_47 = arith.constant 0 : index
      %c0_48 = arith.constant 0 : index
      %40 = vector.load %arg30[%c0_46, %c0_47, %c0_48] : memref<1x1x32xf32, #tpu.memory_space<vmem>>, vector<1x1x32xf32>
      %41 = vector.shape_cast %40 : vector<1x1x32xf32> to vector<1x32xf32>
      %c0_49 = arith.constant 0 : index
      %c0_50 = arith.constant 0 : index
      %c0_51 = arith.constant 0 : index
      %42 = vector.load %arg31[%c0_49, %c0_50, %c0_51] : memref<1x32x64xbf16, #tpu.memory_space<vmem>>, vector<1x32x64xbf16>
      %43 = vector.shape_cast %42 : vector<1x32x64xbf16> to vector<32x64xbf16>
      %c0_52 = arith.constant 0 : index
      %c0_53 = arith.constant 0 : index
      %c0_54 = arith.constant 0 : index
      %44 = vector.load %arg32[%c0_52, %c0_53, %c0_54] : memref<1x1x64xf32, #tpu.memory_space<vmem>>, vector<1x1x64xf32>
      %45 = vector.shape_cast %44 : vector<1x1x64xf32> to vector<1x64xf32>
      %c0_55 = arith.constant 0 : index
      %c0_56 = arith.constant 0 : index
      %c0_57 = arith.constant 0 : index
      %46 = vector.load %arg33[%c0_55, %c0_56, %c0_57] : memref<1x64x32xbf16, #tpu.memory_space<vmem>>, vector<1x64x32xbf16>
      %47 = vector.shape_cast %46 : vector<1x64x32xbf16> to vector<64x32xbf16>
      %c0_58 = arith.constant 0 : index
      %c0_59 = arith.constant 0 : index
      %c0_60 = arith.constant 0 : index
      %48 = vector.load %arg34[%c0_58, %c0_59, %c0_60] : memref<1x1x32xf32, #tpu.memory_space<vmem>>, vector<1x1x32xf32>
      %49 = vector.shape_cast %48 : vector<1x1x32xf32> to vector<1x32xf32>
      %c0_61 = arith.constant 0 : index
      %c0_62 = arith.constant 0 : index
      %c0_63 = arith.constant 0 : index
      %50 = vector.load %arg35[%c0_61, %c0_62, %c0_63] : memref<1x1x32xf32, #tpu.memory_space<vmem>>, vector<1x1x32xf32>
      %51 = vector.shape_cast %50 : vector<1x1x32xf32> to vector<1x32xf32>
      %c0_64 = arith.constant 0 : index
      %c0_65 = arith.constant 0 : index
      %c0_66 = arith.constant 0 : index
      %52 = vector.load %arg36[%c0_64, %c0_65, %c0_66] : memref<1x1x32xf32, #tpu.memory_space<vmem>>, vector<1x1x32xf32>
      %53 = vector.shape_cast %52 : vector<1x1x32xf32> to vector<1x32xf32>
      %c0_67 = arith.constant 0 : index
      %c0_68 = arith.constant 0 : index
      %54 = vector.load %arg42[%c0_67, %c0_68] : memref<12x32xf32, #tpu.memory_space<vmem>>, vector<12x32xf32>
      %c0_69 = arith.constant 0 : index
      %c0_70 = arith.constant 0 : index
      %55 = vector.load %arg41[%c0_69, %c0_70] : memref<16x32xf32, #tpu.memory_space<vmem>>, vector<16x32xf32>
      %56 = arith.truncf %54 : vector<12x32xf32> to vector<12x32xbf16>
      %cst = arith.constant dense<0.000000e+00> : vector<12x96xf32>
      %57 = tpu.matmul %56, %15, %cst {dimension_numbers = #tpu.dot_dimension_numbers<[1], [0], [0], [1], [0, 0, 1, 1], [], []>} : vector<12x32xbf16>, vector<32x96xbf16>, vector<12x96xf32> -> vector<12x96xf32>
      %58 = vector.broadcast %17 : vector<1x96xf32> to vector<12x96xf32>
      %59 = arith.addf %57, %58 : vector<12x96xf32>
      %60 = vector.extract_strided_slice %9 {offsets = [0, 0], sizes = [1, 6], strides = [1, 1]} : vector<2x6xi32> to vector<1x6xi32>
      %c0_i32_71 = arith.constant 0 : i32
      %61 = vector.broadcast %c0_i32_71 : i32 to vector<1x6xi32>
      %62 = arith.cmpi ne, %60, %61 : vector<1x6xi32>
      %63 = vector.broadcast %62 : vector<1x6xi1> to vector<6x6xi1>
      %64 = arith.andi %63, %13 : vector<6x6xi1>
      %65 = vector.extract_strided_slice %59 {offsets = [0, 0], sizes = [6, 32], strides = [1, 1]} : vector<12x96xf32> to vector<6x32xf32>
      %66 = vector.extract_strided_slice %59 {offsets = [0, 32], sizes = [6, 32], strides = [1, 1]} : vector<12x96xf32> to vector<6x32xf32>
      %67 = vector.extract_strided_slice %59 {offsets = [0, 64], sizes = [6, 32], strides = [1, 1]} : vector<12x96xf32> to vector<6x32xf32>
      %68 = vector.extract_strided_slice %65 {offsets = [0, 0], sizes = [6, 16], strides = [1, 1]} : vector<6x32xf32> to vector<6x16xf32>
      %69 = arith.truncf %68 : vector<6x16xf32> to vector<6x16xbf16>
      %70 = vector.extract_strided_slice %66 {offsets = [0, 0], sizes = [6, 16], strides = [1, 1]} : vector<6x32xf32> to vector<6x16xf32>
      %71 = arith.truncf %70 : vector<6x16xf32> to vector<6x16xbf16>
      %72 = vector.extract_strided_slice %67 {offsets = [0, 0], sizes = [6, 16], strides = [1, 1]} : vector<6x32xf32> to vector<6x16xf32>
      %73 = arith.truncf %72 : vector<6x16xf32> to vector<6x16xbf16>
      %cst_72 = arith.constant dense<0.000000e+00> : vector<6x6xf32>
      %74 = tpu.matmul %69, %71, %cst_72 {dimension_numbers = #tpu.dot_dimension_numbers<[1], [1], [0], [0], [0, 0, 1, 0], [], []>} : vector<6x16xbf16>, vector<6x16xbf16>, vector<6x6xf32> -> vector<6x6xf32>
      %cst_73 = arith.constant 2.500000e-01 : f32
      %75 = vector.broadcast %cst_73 : f32 to vector<6x6xf32>
      %76 = arith.mulf %74, %75 : vector<6x6xf32>
      %cst_74 = arith.constant -1.000000e+10 : f32
      %77 = vector.broadcast %cst_74 : f32 to vector<6x6xf32>
      %78 = arith.select %64, %76, %77 : vector<6x6xi1>, vector<6x6xf32>
      %cst_75 = arith.constant dense<0xFF800000> : vector<6xf32>
      %79 = vector.multi_reduction <maximumf>, %78, %cst_75 [1] : vector<6x6xf32> to vector<6xf32>
      %80 = vector.shape_cast %79 : vector<6xf32> to vector<6x1xf32>
      %81 = vector.broadcast %80 : vector<6x1xf32> to vector<6x6xf32>
      %82 = arith.subf %78, %81 : vector<6x6xf32>
      %83 = math.exp %82 : vector<6x6xf32>
      %cst_76 = arith.constant dense<0.000000e+00> : vector<6xf32>
      %84 = vector.multi_reduction <add>, %83, %cst_76 [1] : vector<6x6xf32> to vector<6xf32>
      %85 = vector.shape_cast %84 : vector<6xf32> to vector<6x1xf32>
      %86 = tpu.reciprocal %85 {approx = true} : vector<6x1xf32> -> vector<6x1xf32>
      %87 = vector.broadcast %86 : vector<6x1xf32> to vector<6x6xf32>
      %88 = arith.mulf %83, %87 : vector<6x6xf32>
      %89 = arith.truncf %88 : vector<6x6xf32> to vector<6x6xbf16>
      %cst_77 = arith.constant dense<0.000000e+00> : vector<6x16xf32>
      %90 = tpu.matmul %89, %73, %cst_77 {dimension_numbers = #tpu.dot_dimension_numbers<[1], [0], [0], [1], [0, 0, 1, 1], [], []>} : vector<6x6xbf16>, vector<6x16xbf16>, vector<6x16xf32> -> vector<6x16xf32>
      %91 = vector.extract_strided_slice %65 {offsets = [0, 16], sizes = [6, 16], strides = [1, 1]} : vector<6x32xf32> to vector<6x16xf32>
      %92 = arith.truncf %91 : vector<6x16xf32> to vector<6x16xbf16>
      %93 = vector.extract_strided_slice %66 {offsets = [0, 16], sizes = [6, 16], strides = [1, 1]} : vector<6x32xf32> to vector<6x16xf32>
      %94 = arith.truncf %93 : vector<6x16xf32> to vector<6x16xbf16>
      %95 = vector.extract_strided_slice %67 {offsets = [0, 16], sizes = [6, 16], strides = [1, 1]} : vector<6x32xf32> to vector<6x16xf32>
      %96 = arith.truncf %95 : vector<6x16xf32> to vector<6x16xbf16>
      %cst_78 = arith.constant dense<0.000000e+00> : vector<6x6xf32>
      %97 = tpu.matmul %92, %94, %cst_78 {dimension_numbers = #tpu.dot_dimension_numbers<[1], [1], [0], [0], [0, 0, 1, 0], [], []>} : vector<6x16xbf16>, vector<6x16xbf16>, vector<6x6xf32> -> vector<6x6xf32>
      %cst_79 = arith.constant 2.500000e-01 : f32
      %98 = vector.broadcast %cst_79 : f32 to vector<6x6xf32>
      %99 = arith.mulf %97, %98 : vector<6x6xf32>
      %cst_80 = arith.constant -1.000000e+10 : f32
      %100 = vector.broadcast %cst_80 : f32 to vector<6x6xf32>
      %101 = arith.select %64, %99, %100 : vector<6x6xi1>, vector<6x6xf32>
      %cst_81 = arith.constant dense<0xFF800000> : vector<6xf32>
      %102 = vector.multi_reduction <maximumf>, %101, %cst_81 [1] : vector<6x6xf32> to vector<6xf32>
      %103 = vector.shape_cast %102 : vector<6xf32> to vector<6x1xf32>
      %104 = vector.broadcast %103 : vector<6x1xf32> to vector<6x6xf32>
      %105 = arith.subf %101, %104 : vector<6x6xf32>
      %106 = math.exp %105 : vector<6x6xf32>
      %cst_82 = arith.constant dense<0.000000e+00> : vector<6xf32>
      %107 = vector.multi_reduction <add>, %106, %cst_82 [1] : vector<6x6xf32> to vector<6xf32>
      %108 = vector.shape_cast %107 : vector<6xf32> to vector<6x1xf32>
      %109 = tpu.reciprocal %108 {approx = true} : vector<6x1xf32> -> vector<6x1xf32>
      %110 = vector.broadcast %109 : vector<6x1xf32> to vector<6x6xf32>
      %111 = arith.mulf %106, %110 : vector<6x6xf32>
      %112 = arith.truncf %111 : vector<6x6xf32> to vector<6x6xbf16>
      %cst_83 = arith.constant dense<0.000000e+00> : vector<6x16xf32>
      %113 = tpu.matmul %112, %96, %cst_83 {dimension_numbers = #tpu.dot_dimension_numbers<[1], [0], [0], [1], [0, 0, 1, 1], [], []>} : vector<6x6xbf16>, vector<6x16xbf16>, vector<6x16xf32> -> vector<6x16xf32>
      %114 = tpu.concatenate %90, %113 in 1 : vector<6x16xf32>, vector<6x16xf32> -> vector<6x32xf32>
      %115 = vector.extract_strided_slice %9 {offsets = [1, 0], sizes = [1, 6], strides = [1, 1]} : vector<2x6xi32> to vector<1x6xi32>
      %c0_i32_84 = arith.constant 0 : i32
      %116 = vector.broadcast %c0_i32_84 : i32 to vector<1x6xi32>
      %117 = arith.cmpi ne, %115, %116 : vector<1x6xi32>
      %118 = vector.broadcast %117 : vector<1x6xi1> to vector<6x6xi1>
      %119 = arith.andi %118, %13 : vector<6x6xi1>
      %120 = vector.extract_strided_slice %59 {offsets = [6, 0], sizes = [6, 32], strides = [1, 1]} : vector<12x96xf32> to vector<6x32xf32>
      %121 = vector.extract_strided_slice %59 {offsets = [6, 32], sizes = [6, 32], strides = [1, 1]} : vector<12x96xf32> to vector<6x32xf32>
      %122 = vector.extract_strided_slice %59 {offsets = [6, 64], sizes = [6, 32], strides = [1, 1]} : vector<12x96xf32> to vector<6x32xf32>
      %123 = vector.extract_strided_slice %120 {offsets = [0, 0], sizes = [6, 16], strides = [1, 1]} : vector<6x32xf32> to vector<6x16xf32>
      %124 = arith.truncf %123 : vector<6x16xf32> to vector<6x16xbf16>
      %125 = vector.extract_strided_slice %121 {offsets = [0, 0], sizes = [6, 16], strides = [1, 1]} : vector<6x32xf32> to vector<6x16xf32>
      %126 = arith.truncf %125 : vector<6x16xf32> to vector<6x16xbf16>
      %127 = vector.extract_strided_slice %122 {offsets = [0, 0], sizes = [6, 16], strides = [1, 1]} : vector<6x32xf32> to vector<6x16xf32>
      %128 = arith.truncf %127 : vector<6x16xf32> to vector<6x16xbf16>
      %cst_85 = arith.constant dense<0.000000e+00> : vector<6x6xf32>
      %129 = tpu.matmul %124, %126, %cst_85 {dimension_numbers = #tpu.dot_dimension_numbers<[1], [1], [0], [0], [0, 0, 1, 0], [], []>} : vector<6x16xbf16>, vector<6x16xbf16>, vector<6x6xf32> -> vector<6x6xf32>
      %cst_86 = arith.constant 2.500000e-01 : f32
      %130 = vector.broadcast %cst_86 : f32 to vector<6x6xf32>
      %131 = arith.mulf %129, %130 : vector<6x6xf32>
      %cst_87 = arith.constant -1.000000e+10 : f32
      %132 = vector.broadcast %cst_87 : f32 to vector<6x6xf32>
      %133 = arith.select %119, %131, %132 : vector<6x6xi1>, vector<6x6xf32>
      %cst_88 = arith.constant dense<0xFF800000> : vector<6xf32>
      %134 = vector.multi_reduction <maximumf>, %133, %cst_88 [1] : vector<6x6xf32> to vector<6xf32>
      %135 = vector.shape_cast %134 : vector<6xf32> to vector<6x1xf32>
      %136 = vector.broadcast %135 : vector<6x1xf32> to vector<6x6xf32>
      %137 = arith.subf %133, %136 : vector<6x6xf32>
      %138 = math.exp %137 : vector<6x6xf32>
      %cst_89 = arith.constant dense<0.000000e+00> : vector<6xf32>
      %139 = vector.multi_reduction <add>, %138, %cst_89 [1] : vector<6x6xf32> to vector<6xf32>
      %140 = vector.shape_cast %139 : vector<6xf32> to vector<6x1xf32>
      %141 = tpu.reciprocal %140 {approx = true} : vector<6x1xf32> -> vector<6x1xf32>
      %142 = vector.broadcast %141 : vector<6x1xf32> to vector<6x6xf32>
      %143 = arith.mulf %138, %142 : vector<6x6xf32>
      %144 = arith.truncf %143 : vector<6x6xf32> to vector<6x6xbf16>
      %cst_90 = arith.constant dense<0.000000e+00> : vector<6x16xf32>
      %145 = tpu.matmul %144, %128, %cst_90 {dimension_numbers = #tpu.dot_dimension_numbers<[1], [0], [0], [1], [0, 0, 1, 1], [], []>} : vector<6x6xbf16>, vector<6x16xbf16>, vector<6x16xf32> -> vector<6x16xf32>
      %146 = vector.extract_strided_slice %120 {offsets = [0, 16], sizes = [6, 16], strides = [1, 1]} : vector<6x32xf32> to vector<6x16xf32>
      %147 = arith.truncf %146 : vector<6x16xf32> to vector<6x16xbf16>
      %148 = vector.extract_strided_slice %121 {offsets = [0, 16], sizes = [6, 16], strides = [1, 1]} : vector<6x32xf32> to vector<6x16xf32>
      %149 = arith.truncf %148 : vector<6x16xf32> to vector<6x16xbf16>
      %150 = vector.extract_strided_slice %122 {offsets = [0, 16], sizes = [6, 16], strides = [1, 1]} : vector<6x32xf32> to vector<6x16xf32>
      %151 = arith.truncf %150 : vector<6x16xf32> to vector<6x16xbf16>
      %cst_91 = arith.constant dense<0.000000e+00> : vector<6x6xf32>
      %152 = tpu.matmul %147, %149, %cst_91 {dimension_numbers = #tpu.dot_dimension_numbers<[1], [1], [0], [0], [0, 0, 1, 0], [], []>} : vector<6x16xbf16>, vector<6x16xbf16>, vector<6x6xf32> -> vector<6x6xf32>
      %cst_92 = arith.constant 2.500000e-01 : f32
      %153 = vector.broadcast %cst_92 : f32 to vector<6x6xf32>
      %154 = arith.mulf %152, %153 : vector<6x6xf32>
      %cst_93 = arith.constant -1.000000e+10 : f32
      %155 = vector.broadcast %cst_93 : f32 to vector<6x6xf32>
      %156 = arith.select %119, %154, %155 : vector<6x6xi1>, vector<6x6xf32>
      %cst_94 = arith.constant dense<0xFF800000> : vector<6xf32>
      %157 = vector.multi_reduction <maximumf>, %156, %cst_94 [1] : vector<6x6xf32> to vector<6xf32>
      %158 = vector.shape_cast %157 : vector<6xf32> to vector<6x1xf32>
      %159 = vector.broadcast %158 : vector<6x1xf32> to vector<6x6xf32>
      %160 = arith.subf %156, %159 : vector<6x6xf32>
      %161 = math.exp %160 : vector<6x6xf32>
      %cst_95 = arith.constant dense<0.000000e+00> : vector<6xf32>
      %162 = vector.multi_reduction <add>, %161, %cst_95 [1] : vector<6x6xf32> to vector<6xf32>
      %163 = vector.shape_cast %162 : vector<6xf32> to vector<6x1xf32>
      %164 = tpu.reciprocal %163 {approx = true} : vector<6x1xf32> -> vector<6x1xf32>
      %165 = vector.broadcast %164 : vector<6x1xf32> to vector<6x6xf32>
      %166 = arith.mulf %161, %165 : vector<6x6xf32>
      %167 = arith.truncf %166 : vector<6x6xf32> to vector<6x6xbf16>
      %cst_96 = arith.constant dense<0.000000e+00> : vector<6x16xf32>
      %168 = tpu.matmul %167, %151, %cst_96 {dimension_numbers = #tpu.dot_dimension_numbers<[1], [0], [0], [1], [0, 0, 1, 1], [], []>} : vector<6x6xbf16>, vector<6x16xbf16>, vector<6x16xf32> -> vector<6x16xf32>
      %169 = tpu.concatenate %145, %168 in 1 : vector<6x16xf32>, vector<6x16xf32> -> vector<6x32xf32>
      %170 = tpu.concatenate %114, %169 in 0 : vector<6x32xf32>, vector<6x32xf32> -> vector<12x32xf32>
      %171 = arith.truncf %170 : vector<12x32xf32> to vector<12x32xbf16>
      %cst_97 = arith.constant dense<0.000000e+00> : vector<12x32xf32>
      %172 = tpu.matmul %171, %19, %cst_97 {dimension_numbers = #tpu.dot_dimension_numbers<[1], [0], [0], [1], [0, 0, 1, 1], [], []>} : vector<12x32xbf16>, vector<32x32xbf16>, vector<12x32xf32> -> vector<12x32xf32>
      %173 = vector.broadcast %21 : vector<1x32xf32> to vector<12x32xf32>
      %174 = arith.addf %172, %173 : vector<12x32xf32>
      %175 = arith.addf %54, %174 : vector<12x32xf32>
      %cst_98 = arith.constant dense<0.000000e+00> : vector<12xf32>
      %176 = vector.multi_reduction <add>, %175, %cst_98 [1] : vector<12x32xf32> to vector<12xf32>
      %177 = vector.shape_cast %176 : vector<12xf32> to vector<12x1xf32>
      %cst_99 = arith.constant 3.200000e+01 : f32
      %178 = vector.broadcast %cst_99 : f32 to vector<12x1xf32>
      %179 = arith.divf %177, %178 : vector<12x1xf32>
      %180 = vector.broadcast %179 : vector<12x1xf32> to vector<12x32xf32>
      %181 = arith.subf %175, %180 : vector<12x32xf32>
      %182 = arith.mulf %181, %181 : vector<12x32xf32>
      %cst_100 = arith.constant dense<0.000000e+00> : vector<12xf32>
      %183 = vector.multi_reduction <add>, %182, %cst_100 [1] : vector<12x32xf32> to vector<12xf32>
      %184 = vector.shape_cast %183 : vector<12xf32> to vector<12x1xf32>
      %cst_101 = arith.constant 3.200000e+01 : f32
      %185 = vector.broadcast %cst_101 : f32 to vector<12x1xf32>
      %186 = arith.divf %184, %185 : vector<12x1xf32>
      %187 = vector.broadcast %179 : vector<12x1xf32> to vector<12x32xf32>
      %188 = arith.subf %175, %187 : vector<12x32xf32>
      %cst_102 = arith.constant 9.99999974E-6 : f32
      %189 = vector.broadcast %cst_102 : f32 to vector<12x1xf32>
      %190 = arith.addf %186, %189 : vector<12x1xf32>
      %191 = math.rsqrt %190 : vector<12x1xf32>
      %192 = vector.broadcast %191 : vector<12x1xf32> to vector<12x32xf32>
      %193 = arith.mulf %188, %192 : vector<12x32xf32>
      %194 = vector.broadcast %23 : vector<1x32xf32> to vector<12x32xf32>
      %195 = arith.mulf %193, %194 : vector<12x32xf32>
      %196 = vector.broadcast %25 : vector<1x32xf32> to vector<12x32xf32>
      %197 = arith.addf %195, %196 : vector<12x32xf32>
      %198 = arith.truncf %197 : vector<12x32xf32> to vector<12x32xbf16>
      %cst_103 = arith.constant dense<0.000000e+00> : vector<12x32xf32>
      %199 = tpu.matmul %198, %27, %cst_103 {dimension_numbers = #tpu.dot_dimension_numbers<[1], [0], [0], [1], [0, 0, 1, 1], [], []>} : vector<12x32xbf16>, vector<32x32xbf16>, vector<12x32xf32> -> vector<12x32xf32>
      %200 = vector.broadcast %29 : vector<1x32xf32> to vector<12x32xf32>
      %201 = arith.addf %199, %200 : vector<12x32xf32>
      %202 = arith.truncf %55 : vector<16x32xf32> to vector<16x32xbf16>
      %cst_104 = arith.constant dense<0.000000e+00> : vector<16x64xf32>
      %203 = tpu.matmul %202, %31, %cst_104 {dimension_numbers = #tpu.dot_dimension_numbers<[1], [0], [0], [1], [0, 0, 1, 1], [], []>} : vector<16x32xbf16>, vector<32x64xbf16>, vector<16x64xf32> -> vector<16x64xf32>
      %204 = vector.broadcast %33 : vector<1x64xf32> to vector<16x64xf32>
      %205 = arith.addf %203, %204 : vector<16x64xf32>
      %206 = vector.extract_strided_slice %10 {offsets = [0, 0], sizes = [1, 8], strides = [1, 1]} : vector<2x8xi32> to vector<1x8xi32>
      %c0_i32_105 = arith.constant 0 : i32
      %207 = vector.broadcast %c0_i32_105 : i32 to vector<1x8xi32>
      %208 = arith.cmpi ne, %206, %207 : vector<1x8xi32>
      %209 = vector.extract_strided_slice %201 {offsets = [0, 0], sizes = [6, 32], strides = [1, 1]} : vector<12x32xf32> to vector<6x32xf32>
      %210 = vector.extract_strided_slice %205 {offsets = [0, 0], sizes = [8, 32], strides = [1, 1]} : vector<16x64xf32> to vector<8x32xf32>
      %211 = vector.extract_strided_slice %205 {offsets = [0, 32], sizes = [8, 32], strides = [1, 1]} : vector<16x64xf32> to vector<8x32xf32>
      %212 = vector.extract_strided_slice %209 {offsets = [0, 0], sizes = [6, 16], strides = [1, 1]} : vector<6x32xf32> to vector<6x16xf32>
      %213 = arith.truncf %212 : vector<6x16xf32> to vector<6x16xbf16>
      %214 = vector.extract_strided_slice %210 {offsets = [0, 0], sizes = [8, 16], strides = [1, 1]} : vector<8x32xf32> to vector<8x16xf32>
      %215 = arith.truncf %214 : vector<8x16xf32> to vector<8x16xbf16>
      %216 = vector.extract_strided_slice %211 {offsets = [0, 0], sizes = [8, 16], strides = [1, 1]} : vector<8x32xf32> to vector<8x16xf32>
      %217 = arith.truncf %216 : vector<8x16xf32> to vector<8x16xbf16>
      %cst_106 = arith.constant dense<0.000000e+00> : vector<6x8xf32>
      %218 = tpu.matmul %213, %215, %cst_106 {dimension_numbers = #tpu.dot_dimension_numbers<[1], [1], [0], [0], [0, 0, 1, 0], [], []>} : vector<6x16xbf16>, vector<8x16xbf16>, vector<6x8xf32> -> vector<6x8xf32>
      %cst_107 = arith.constant 2.500000e-01 : f32
      %219 = vector.broadcast %cst_107 : f32 to vector<6x8xf32>
      %220 = arith.mulf %218, %219 : vector<6x8xf32>
      %cst_108 = arith.constant -1.000000e+10 : f32
      %221 = vector.shape_cast %208 : vector<1x8xi1> to vector<1x8xi1>
      %222 = vector.broadcast %221 : vector<1x8xi1> to vector<6x8xi1>
      %223 = vector.broadcast %cst_108 : f32 to vector<6x8xf32>
      %224 = arith.select %222, %220, %223 : vector<6x8xi1>, vector<6x8xf32>
      %cst_109 = arith.constant dense<0xFF800000> : vector<6xf32>
      %225 = vector.multi_reduction <maximumf>, %224, %cst_109 [1] : vector<6x8xf32> to vector<6xf32>
      %226 = vector.shape_cast %225 : vector<6xf32> to vector<6x1xf32>
      %227 = vector.broadcast %226 : vector<6x1xf32> to vector<6x8xf32>
      %228 = arith.subf %224, %227 : vector<6x8xf32>
      %229 = math.exp %228 : vector<6x8xf32>
      %cst_110 = arith.constant dense<0.000000e+00> : vector<6xf32>
      %230 = vector.multi_reduction <add>, %229, %cst_110 [1] : vector<6x8xf32> to vector<6xf32>
      %231 = vector.shape_cast %230 : vector<6xf32> to vector<6x1xf32>
      %232 = vector.broadcast %231 : vector<6x1xf32> to vector<6x8xf32>
      %233 = arith.divf %229, %232 : vector<6x8xf32>
      %234 = arith.truncf %233 : vector<6x8xf32> to vector<6x8xbf16>
      %cst_111 = arith.constant dense<0.000000e+00> : vector<6x16xf32>
      %235 = tpu.matmul %234, %217, %cst_111 {dimension_numbers = #tpu.dot_dimension_numbers<[1], [0], [0], [1], [0, 0, 1, 1], [], []>} : vector<6x8xbf16>, vector<8x16xbf16>, vector<6x16xf32> -> vector<6x16xf32>
      %236 = vector.extract_strided_slice %209 {offsets = [0, 16], sizes = [6, 16], strides = [1, 1]} : vector<6x32xf32> to vector<6x16xf32>
      %237 = arith.truncf %236 : vector<6x16xf32> to vector<6x16xbf16>
      %238 = vector.extract_strided_slice %210 {offsets = [0, 16], sizes = [8, 16], strides = [1, 1]} : vector<8x32xf32> to vector<8x16xf32>
      %239 = arith.truncf %238 : vector<8x16xf32> to vector<8x16xbf16>
      %240 = vector.extract_strided_slice %211 {offsets = [0, 16], sizes = [8, 16], strides = [1, 1]} : vector<8x32xf32> to vector<8x16xf32>
      %241 = arith.truncf %240 : vector<8x16xf32> to vector<8x16xbf16>
      %cst_112 = arith.constant dense<0.000000e+00> : vector<6x8xf32>
      %242 = tpu.matmul %237, %239, %cst_112 {dimension_numbers = #tpu.dot_dimension_numbers<[1], [1], [0], [0], [0, 0, 1, 0], [], []>} : vector<6x16xbf16>, vector<8x16xbf16>, vector<6x8xf32> -> vector<6x8xf32>
      %cst_113 = arith.constant 2.500000e-01 : f32
      %243 = vector.broadcast %cst_113 : f32 to vector<6x8xf32>
      %244 = arith.mulf %242, %243 : vector<6x8xf32>
      %cst_114 = arith.constant -1.000000e+10 : f32
      %245 = vector.shape_cast %208 : vector<1x8xi1> to vector<1x8xi1>
      %246 = vector.broadcast %245 : vector<1x8xi1> to vector<6x8xi1>
      %247 = vector.broadcast %cst_114 : f32 to vector<6x8xf32>
      %248 = arith.select %246, %244, %247 : vector<6x8xi1>, vector<6x8xf32>
      %cst_115 = arith.constant dense<0xFF800000> : vector<6xf32>
      %249 = vector.multi_reduction <maximumf>, %248, %cst_115 [1] : vector<6x8xf32> to vector<6xf32>
      %250 = vector.shape_cast %249 : vector<6xf32> to vector<6x1xf32>
      %251 = vector.broadcast %250 : vector<6x1xf32> to vector<6x8xf32>
      %252 = arith.subf %248, %251 : vector<6x8xf32>
      %253 = math.exp %252 : vector<6x8xf32>
      %cst_116 = arith.constant dense<0.000000e+00> : vector<6xf32>
      %254 = vector.multi_reduction <add>, %253, %cst_116 [1] : vector<6x8xf32> to vector<6xf32>
      %255 = vector.shape_cast %254 : vector<6xf32> to vector<6x1xf32>
      %256 = vector.broadcast %255 : vector<6x1xf32> to vector<6x8xf32>
      %257 = arith.divf %253, %256 : vector<6x8xf32>
      %258 = arith.truncf %257 : vector<6x8xf32> to vector<6x8xbf16>
      %cst_117 = arith.constant dense<0.000000e+00> : vector<6x16xf32>
      %259 = tpu.matmul %258, %241, %cst_117 {dimension_numbers = #tpu.dot_dimension_numbers<[1], [0], [0], [1], [0, 0, 1, 1], [], []>} : vector<6x8xbf16>, vector<8x16xbf16>, vector<6x16xf32> -> vector<6x16xf32>
      %260 = tpu.concatenate %235, %259 in 1 : vector<6x16xf32>, vector<6x16xf32> -> vector<6x32xf32>
      %261 = vector.extract_strided_slice %10 {offsets = [1, 0], sizes = [1, 8], strides = [1, 1]} : vector<2x8xi32> to vector<1x8xi32>
      %c0_i32_118 = arith.constant 0 : i32
      %262 = vector.broadcast %c0_i32_118 : i32 to vector<1x8xi32>
      %263 = arith.cmpi ne, %261, %262 : vector<1x8xi32>
      %264 = vector.extract_strided_slice %201 {offsets = [6, 0], sizes = [6, 32], strides = [1, 1]} : vector<12x32xf32> to vector<6x32xf32>
      %265 = vector.extract_strided_slice %205 {offsets = [8, 0], sizes = [8, 32], strides = [1, 1]} : vector<16x64xf32> to vector<8x32xf32>
      %266 = vector.extract_strided_slice %205 {offsets = [8, 32], sizes = [8, 32], strides = [1, 1]} : vector<16x64xf32> to vector<8x32xf32>
      %267 = vector.extract_strided_slice %264 {offsets = [0, 0], sizes = [6, 16], strides = [1, 1]} : vector<6x32xf32> to vector<6x16xf32>
      %268 = arith.truncf %267 : vector<6x16xf32> to vector<6x16xbf16>
      %269 = vector.extract_strided_slice %265 {offsets = [0, 0], sizes = [8, 16], strides = [1, 1]} : vector<8x32xf32> to vector<8x16xf32>
      %270 = arith.truncf %269 : vector<8x16xf32> to vector<8x16xbf16>
      %271 = vector.extract_strided_slice %266 {offsets = [0, 0], sizes = [8, 16], strides = [1, 1]} : vector<8x32xf32> to vector<8x16xf32>
      %272 = arith.truncf %271 : vector<8x16xf32> to vector<8x16xbf16>
      %cst_119 = arith.constant dense<0.000000e+00> : vector<6x8xf32>
      %273 = tpu.matmul %268, %270, %cst_119 {dimension_numbers = #tpu.dot_dimension_numbers<[1], [1], [0], [0], [0, 0, 1, 0], [], []>} : vector<6x16xbf16>, vector<8x16xbf16>, vector<6x8xf32> -> vector<6x8xf32>
      %cst_120 = arith.constant 2.500000e-01 : f32
      %274 = vector.broadcast %cst_120 : f32 to vector<6x8xf32>
      %275 = arith.mulf %273, %274 : vector<6x8xf32>
      %cst_121 = arith.constant -1.000000e+10 : f32
      %276 = vector.shape_cast %263 : vector<1x8xi1> to vector<1x8xi1>
      %277 = vector.broadcast %276 : vector<1x8xi1> to vector<6x8xi1>
      %278 = vector.broadcast %cst_121 : f32 to vector<6x8xf32>
      %279 = arith.select %277, %275, %278 : vector<6x8xi1>, vector<6x8xf32>
      %cst_122 = arith.constant dense<0xFF800000> : vector<6xf32>
      %280 = vector.multi_reduction <maximumf>, %279, %cst_122 [1] : vector<6x8xf32> to vector<6xf32>
      %281 = vector.shape_cast %280 : vector<6xf32> to vector<6x1xf32>
      %282 = vector.broadcast %281 : vector<6x1xf32> to vector<6x8xf32>
      %283 = arith.subf %279, %282 : vector<6x8xf32>
      %284 = math.exp %283 : vector<6x8xf32>
      %cst_123 = arith.constant dense<0.000000e+00> : vector<6xf32>
      %285 = vector.multi_reduction <add>, %284, %cst_123 [1] : vector<6x8xf32> to vector<6xf32>
      %286 = vector.shape_cast %285 : vector<6xf32> to vector<6x1xf32>
      %287 = vector.broadcast %286 : vector<6x1xf32> to vector<6x8xf32>
      %288 = arith.divf %284, %287 : vector<6x8xf32>
      %289 = arith.truncf %288 : vector<6x8xf32> to vector<6x8xbf16>
      %cst_124 = arith.constant dense<0.000000e+00> : vector<6x16xf32>
      %290 = tpu.matmul %289, %272, %cst_124 {dimension_numbers = #tpu.dot_dimension_numbers<[1], [0], [0], [1], [0, 0, 1, 1], [], []>} : vector<6x8xbf16>, vector<8x16xbf16>, vector<6x16xf32> -> vector<6x16xf32>
      %291 = vector.extract_strided_slice %264 {offsets = [0, 16], sizes = [6, 16], strides = [1, 1]} : vector<6x32xf32> to vector<6x16xf32>
      %292 = arith.truncf %291 : vector<6x16xf32> to vector<6x16xbf16>
      %293 = vector.extract_strided_slice %265 {offsets = [0, 16], sizes = [8, 16], strides = [1, 1]} : vector<8x32xf32> to vector<8x16xf32>
      %294 = arith.truncf %293 : vector<8x16xf32> to vector<8x16xbf16>
      %295 = vector.extract_strided_slice %266 {offsets = [0, 16], sizes = [8, 16], strides = [1, 1]} : vector<8x32xf32> to vector<8x16xf32>
      %296 = arith.truncf %295 : vector<8x16xf32> to vector<8x16xbf16>
      %cst_125 = arith.constant dense<0.000000e+00> : vector<6x8xf32>
      %297 = tpu.matmul %292, %294, %cst_125 {dimension_numbers = #tpu.dot_dimension_numbers<[1], [1], [0], [0], [0, 0, 1, 0], [], []>} : vector<6x16xbf16>, vector<8x16xbf16>, vector<6x8xf32> -> vector<6x8xf32>
      %cst_126 = arith.constant 2.500000e-01 : f32
      %298 = vector.broadcast %cst_126 : f32 to vector<6x8xf32>
      %299 = arith.mulf %297, %298 : vector<6x8xf32>
      %cst_127 = arith.constant -1.000000e+10 : f32
      %300 = vector.shape_cast %263 : vector<1x8xi1> to vector<1x8xi1>
      %301 = vector.broadcast %300 : vector<1x8xi1> to vector<6x8xi1>
      %302 = vector.broadcast %cst_127 : f32 to vector<6x8xf32>
      %303 = arith.select %301, %299, %302 : vector<6x8xi1>, vector<6x8xf32>
      %cst_128 = arith.constant dense<0xFF800000> : vector<6xf32>
      %304 = vector.multi_reduction <maximumf>, %303, %cst_128 [1] : vector<6x8xf32> to vector<6xf32>
      %305 = vector.shape_cast %304 : vector<6xf32> to vector<6x1xf32>
      %306 = vector.broadcast %305 : vector<6x1xf32> to vector<6x8xf32>
      %307 = arith.subf %303, %306 : vector<6x8xf32>
      %308 = math.exp %307 : vector<6x8xf32>
      %cst_129 = arith.constant dense<0.000000e+00> : vector<6xf32>
      %309 = vector.multi_reduction <add>, %308, %cst_129 [1] : vector<6x8xf32> to vector<6xf32>
      %310 = vector.shape_cast %309 : vector<6xf32> to vector<6x1xf32>
      %311 = vector.broadcast %310 : vector<6x1xf32> to vector<6x8xf32>
      %312 = arith.divf %308, %311 : vector<6x8xf32>
      %313 = arith.truncf %312 : vector<6x8xf32> to vector<6x8xbf16>
      %cst_130 = arith.constant dense<0.000000e+00> : vector<6x16xf32>
      %314 = tpu.matmul %313, %296, %cst_130 {dimension_numbers = #tpu.dot_dimension_numbers<[1], [0], [0], [1], [0, 0, 1, 1], [], []>} : vector<6x8xbf16>, vector<8x16xbf16>, vector<6x16xf32> -> vector<6x16xf32>
      %315 = tpu.concatenate %290, %314 in 1 : vector<6x16xf32>, vector<6x16xf32> -> vector<6x32xf32>
      %316 = tpu.concatenate %260, %315 in 0 : vector<6x32xf32>, vector<6x32xf32> -> vector<12x32xf32>
      %317 = arith.truncf %316 : vector<12x32xf32> to vector<12x32xbf16>
      %cst_131 = arith.constant dense<0.000000e+00> : vector<12x32xf32>
      %318 = tpu.matmul %317, %35, %cst_131 {dimension_numbers = #tpu.dot_dimension_numbers<[1], [0], [0], [1], [0, 0, 1, 1], [], []>} : vector<12x32xbf16>, vector<32x32xbf16>, vector<12x32xf32> -> vector<12x32xf32>
      %319 = vector.broadcast %37 : vector<1x32xf32> to vector<12x32xf32>
      %320 = arith.addf %318, %319 : vector<12x32xf32>
      %321 = arith.addf %197, %320 : vector<12x32xf32>
      %cst_132 = arith.constant dense<0.000000e+00> : vector<12xf32>
      %322 = vector.multi_reduction <add>, %321, %cst_132 [1] : vector<12x32xf32> to vector<12xf32>
      %323 = vector.shape_cast %322 : vector<12xf32> to vector<12x1xf32>
      %cst_133 = arith.constant 3.200000e+01 : f32
      %324 = vector.broadcast %cst_133 : f32 to vector<12x1xf32>
      %325 = arith.divf %323, %324 : vector<12x1xf32>
      %326 = vector.broadcast %325 : vector<12x1xf32> to vector<12x32xf32>
      %327 = arith.subf %321, %326 : vector<12x32xf32>
      %328 = arith.mulf %327, %327 : vector<12x32xf32>
      %cst_134 = arith.constant dense<0.000000e+00> : vector<12xf32>
      %329 = vector.multi_reduction <add>, %328, %cst_134 [1] : vector<12x32xf32> to vector<12xf32>
      %330 = vector.shape_cast %329 : vector<12xf32> to vector<12x1xf32>
      %cst_135 = arith.constant 3.200000e+01 : f32
      %331 = vector.broadcast %cst_135 : f32 to vector<12x1xf32>
      %332 = arith.divf %330, %331 : vector<12x1xf32>
      %333 = vector.broadcast %325 : vector<12x1xf32> to vector<12x32xf32>
      %334 = arith.subf %321, %333 : vector<12x32xf32>
      %cst_136 = arith.constant 9.99999974E-6 : f32
      %335 = vector.broadcast %cst_136 : f32 to vector<12x1xf32>
      %336 = arith.addf %332, %335 : vector<12x1xf32>
      %337 = math.rsqrt %336 : vector<12x1xf32>
      %338 = vector.broadcast %337 : vector<12x1xf32> to vector<12x32xf32>
      %339 = arith.mulf %334, %338 : vector<12x32xf32>
      %340 = vector.broadcast %39 : vector<1x32xf32> to vector<12x32xf32>
      %341 = arith.mulf %339, %340 : vector<12x32xf32>
      %342 = vector.broadcast %41 : vector<1x32xf32> to vector<12x32xf32>
      %343 = arith.addf %341, %342 : vector<12x32xf32>
      %344 = arith.truncf %343 : vector<12x32xf32> to vector<12x32xbf16>
      %cst_137 = arith.constant dense<0.000000e+00> : vector<12x64xf32>
      %345 = tpu.matmul %344, %43, %cst_137 {dimension_numbers = #tpu.dot_dimension_numbers<[1], [0], [0], [1], [0, 0, 1, 1], [], []>} : vector<12x32xbf16>, vector<32x64xbf16>, vector<12x64xf32> -> vector<12x64xf32>
      %346 = vector.broadcast %45 : vector<1x64xf32> to vector<12x64xf32>
      %347 = arith.addf %345, %346 : vector<12x64xf32>
      %cst_138 = arith.constant 0.000000e+00 : f32
      %348 = vector.broadcast %cst_138 : f32 to vector<12x64xf32>
      %349 = arith.maximumf %347, %348 : vector<12x64xf32>
      %350 = arith.truncf %349 : vector<12x64xf32> to vector<12x64xbf16>
      %cst_139 = arith.constant dense<0.000000e+00> : vector<12x32xf32>
      %351 = tpu.matmul %350, %47, %cst_139 {dimension_numbers = #tpu.dot_dimension_numbers<[1], [0], [0], [1], [0, 0, 1, 1], [], []>} : vector<12x64xbf16>, vector<64x32xbf16>, vector<12x32xf32> -> vector<12x32xf32>
      %352 = vector.broadcast %49 : vector<1x32xf32> to vector<12x32xf32>
      %353 = arith.addf %351, %352 : vector<12x32xf32>
      %354 = arith.addf %343, %353 : vector<12x32xf32>
      %cst_140 = arith.constant dense<0.000000e+00> : vector<12xf32>
      %355 = vector.multi_reduction <add>, %354, %cst_140 [1] : vector<12x32xf32> to vector<12xf32>
      %356 = vector.shape_cast %355 : vector<12xf32> to vector<12x1xf32>
      %cst_141 = arith.constant 3.200000e+01 : f32
      %357 = vector.broadcast %cst_141 : f32 to vector<12x1xf32>
      %358 = arith.divf %356, %357 : vector<12x1xf32>
      %359 = vector.broadcast %358 : vector<12x1xf32> to vector<12x32xf32>
      %360 = arith.subf %354, %359 : vector<12x32xf32>
      %361 = arith.mulf %360, %360 : vector<12x32xf32>
      %cst_142 = arith.constant dense<0.000000e+00> : vector<12xf32>
      %362 = vector.multi_reduction <add>, %361, %cst_142 [1] : vector<12x32xf32> to vector<12xf32>
      %363 = vector.shape_cast %362 : vector<12xf32> to vector<12x1xf32>
      %cst_143 = arith.constant 3.200000e+01 : f32
      %364 = vector.broadcast %cst_143 : f32 to vector<12x1xf32>
      %365 = arith.divf %363, %364 : vector<12x1xf32>
      %366 = vector.broadcast %358 : vector<12x1xf32> to vector<12x32xf32>
      %367 = arith.subf %354, %366 : vector<12x32xf32>
      %cst_144 = arith.constant 9.99999974E-6 : f32
      %368 = vector.broadcast %cst_144 : f32 to vector<12x1xf32>
      %369 = arith.addf %365, %368 : vector<12x1xf32>
      %370 = math.rsqrt %369 : vector<12x1xf32>
      %371 = vector.broadcast %370 : vector<12x1xf32> to vector<12x32xf32>
      %372 = arith.mulf %367, %371 : vector<12x32xf32>
      %373 = vector.broadcast %51 : vector<1x32xf32> to vector<12x32xf32>
      %374 = arith.mulf %372, %373 : vector<12x32xf32>
      %375 = vector.broadcast %53 : vector<1x32xf32> to vector<12x32xf32>
      %376 = arith.addf %374, %375 : vector<12x32xf32>
      %c0_145 = arith.constant 0 : index
      %c0_146 = arith.constant 0 : index
      %377 = vector.load %arg42[%c0_145, %c0_146] : memref<12x32xf32, #tpu.memory_space<vmem>>, vector<12x32xf32>
      tpu.vector_store %arg42[%c0_145, %c0_146], %376 {strides = array<i32>} : memref<12x32xf32, #tpu.memory_space<vmem>>, vector<12x32xf32>,
      %c3_i32 = arith.constant 3 : i32
      %378 = arith.cmpi eq, %arg0, %c3_i32 : i32
      %379 = arith.extui %378 : i1 to i32
      %c0_i32_147 = arith.constant 0 : i32
      %380 = arith.cmpi ne, %379, %c0_i32_147 : i32
      scf.if %380 {
        %cst_148 = arith.constant 0.000000e+00 : f32
        %381 = vector.broadcast %cst_148 : f32 to vector<6x120xf32>
        %382 = tpu.concatenate %233, %381 in 1 : vector<6x8xf32>, vector<6x120xf32> -> vector<6x128xf32>
        %c0_149 = arith.constant 0 : index
        %c0_150 = arith.constant 0 : index
        %c0_151 = arith.constant 0 : index
        %c0_152 = arith.constant 0 : index
        %383 = vector.load %arg40[%c0_149, %c0_150, %c0_151, %c0_152] : memref<2x2x6x128xf32, #tpu.memory_space<vmem>>, vector<1x1x6x128xf32>
        %384 = vector.shape_cast %383 : vector<1x1x6x128xf32> to vector<6x128xf32>
        %385 = vector.shape_cast %382 : vector<6x128xf32> to vector<1x1x6x128xf32>
        tpu.vector_store %arg40[%c0_149, %c0_150, %c0_151, %c0_152], %385 {strides = array<i32>} : memref<2x2x6x128xf32, #tpu.memory_space<vmem>>, vector<1x1x6x128xf32>,
        %386 = tpu.concatenate %257, %381 in 1 : vector<6x8xf32>, vector<6x120xf32> -> vector<6x128xf32>
        %c0_153 = arith.constant 0 : index
        %c1 = arith.constant 1 : index
        %c0_154 = arith.constant 0 : index
        %c0_155 = arith.constant 0 : index
        %387 = vector.load %arg40[%c0_153, %c1, %c0_154, %c0_155] : memref<2x2x6x128xf32, #tpu.memory_space<vmem>>, vector<1x1x6x128xf32>
        %388 = vector.shape_cast %387 : vector<1x1x6x128xf32> to vector<6x128xf32>
        %389 = vector.shape_cast %386 : vector<6x128xf32> to vector<1x1x6x128xf32>
        tpu.vector_store %arg40[%c0_153, %c1, %c0_154, %c0_155], %389 {strides = array<i32>} : memref<2x2x6x128xf32, #tpu.memory_space<vmem>>, vector<1x1x6x128xf32>,
        %390 = tpu.concatenate %288, %381 in 1 : vector<6x8xf32>, vector<6x120xf32> -> vector<6x128xf32>
        %c1_156 = arith.constant 1 : index
        %c0_157 = arith.constant 0 : index
        %c0_158 = arith.constant 0 : index
        %c0_159 = arith.constant 0 : index
        %391 = vector.load %arg40[%c1_156, %c0_157, %c0_158, %c0_159] : memref<2x2x6x128xf32, #tpu.memory_space<vmem>>, vector<1x1x6x128xf32>
        %392 = vector.shape_cast %391 : vector<1x1x6x128xf32> to vector<6x128xf32>
        %393 = vector.shape_cast %390 : vector<6x128xf32> to vector<1x1x6x128xf32>
        tpu.vector_store %arg40[%c1_156, %c0_157, %c0_158, %c0_159], %393 {strides = array<i32>} : memref<2x2x6x128xf32, #tpu.memory_space<vmem>>, vector<1x1x6x128xf32>,
        %394 = tpu.concatenate %312, %381 in 1 : vector<6x8xf32>, vector<6x120xf32> -> vector<6x128xf32>
        %c1_160 = arith.constant 1 : index
        %c1_161 = arith.constant 1 : index
        %c0_162 = arith.constant 0 : index
        %c0_163 = arith.constant 0 : index
        %395 = vector.load %arg40[%c1_160, %c1_161, %c0_162, %c0_163] : memref<2x2x6x128xf32, #tpu.memory_space<vmem>>, vector<1x1x6x128xf32>
        %396 = vector.shape_cast %395 : vector<1x1x6x128xf32> to vector<6x128xf32>
        %397 = vector.shape_cast %394 : vector<6x128xf32> to vector<1x1x6x128xf32>
        tpu.vector_store %arg40[%c1_160, %c1_161, %c0_162, %c0_163], %397 {strides = array<i32>} : memref<2x2x6x128xf32, #tpu.memory_space<vmem>>, vector<1x1x6x128xf32>,
        %c0_164 = arith.constant 0 : index
        %c0_165 = arith.constant 0 : index
        %398 = vector.load %arg37[%c0_164, %c0_165] : memref<32x128xbf16, #tpu.memory_space<vmem>>, vector<32x128xbf16>
        %c0_166 = arith.constant 0 : index
        %c0_167 = arith.constant 0 : index
        %399 = vector.load %arg38[%c0_166, %c0_167] : memref<1x128xf32, #tpu.memory_space<vmem>>, vector<1x128xf32>
        %400 = arith.truncf %376 : vector<12x32xf32> to vector<12x32xbf16>
        %cst_168 = arith.constant dense<0.000000e+00> : vector<12x128xf32>
        %401 = tpu.matmul %400, %398, %cst_168 {dimension_numbers = #tpu.dot_dimension_numbers<[1], [0], [0], [1], [0, 0, 1, 1], [], []>} : vector<12x32xbf16>, vector<32x128xbf16>, vector<12x128xf32> -> vector<12x128xf32>
        %402 = vector.broadcast %399 : vector<1x128xf32> to vector<12x128xf32>
        %403 = arith.addf %401, %402 : vector<12x128xf32>
        %404 = vector.shape_cast %403 : vector<12x128xf32> to vector<2x6x128xf32>
        %c0_169 = arith.constant 0 : index
        %c0_170 = arith.constant 0 : index
        %c0_171 = arith.constant 0 : index
        %405 = vector.load %arg39[%c0_169, %c0_170, %c0_171] : memref<2x6x128xf32, #tpu.memory_space<vmem>>, vector<2x6x128xf32>
        tpu.vector_store %arg39[%c0_169, %c0_170, %c0_171], %404 {strides = array<i32>} : memref<2x6x128xf32, #tpu.memory_space<vmem>>, vector<2x6x128xf32>,
      } else {
      }
    } else {
    }
    return
  }
  func.func @transform_0(%arg0: i32) -> (i32, i32, i32) {
    %c0_i32 = arith.constant 0 : i32
    %c0_i32_0 = arith.constant 0 : i32
    %c0_i32_1 = arith.constant 0 : i32
    %c0_i32_2 = arith.constant 0 : i32
    return %c0_i32, %c0_i32_0, %c0_i32_1 : i32, i32, i32
  }
  func.func @transform_1(%arg0: i32) -> (i32, i32, i32) {
    %c0_i32 = arith.constant 0 : i32
    %c0_i32_0 = arith.constant 0 : i32
    %c0_i32_1 = arith.constant 0 : i32
    %c0_i32_2 = arith.constant 0 : i32
    return %c0_i32, %c0_i32_0, %c0_i32_1 : i32, i32, i32
  }
  func.func @transform_2(%arg0: i32) -> (i32, i32) {
    %c0_i32 = arith.constant 0 : i32
    %c0_i32_0 = arith.constant 0 : i32
    %c0_i32_1 = arith.constant 0 : i32
    return %c0_i32, %c0_i32_0 : i32, i32
  }
  func.func @transform_3(%arg0: i32) -> (i32, i32) {
    %c0_i32 = arith.constant 0 : i32
    %c0_i32_0 = arith.constant 0 : i32
    %c0_i32_1 = arith.constant 0 : i32
    return %c0_i32, %c0_i32_0 : i32, i32
  }
  func.func @transform_4(%arg0: i32) -> (i32, i32, i32) {
    %c1_i32 = arith.constant 1 : i32
    %0 = arith.minsi %arg0, %c1_i32 : i32
    %c0_i32 = arith.constant 0 : i32
    %c0_i32_0 = arith.constant 0 : i32
    %c0_i32_1 = arith.constant 0 : i32
    return %0, %c0_i32, %c0_i32_0 : i32, i32, i32
  }
  func.func @transform_5(%arg0: i32) -> (i32, i32, i32) {
    %c1_i32 = arith.constant 1 : i32
    %0 = arith.minsi %arg0, %c1_i32 : i32
    %c0_i32 = arith.constant 0 : i32
    %c0_i32_0 = arith.constant 0 : i32
    %c0_i32_1 = arith.constant 0 : i32
    return %0, %c0_i32, %c0_i32_0 : i32, i32, i32
  }
  func.func @transform_6(%arg0: i32) -> (i32, i32, i32) {
    %c1_i32 = arith.constant 1 : i32
    %0 = arith.minsi %arg0, %c1_i32 : i32
    %c0_i32 = arith.constant 0 : i32
    %c0_i32_0 = arith.constant 0 : i32
    %c0_i32_1 = arith.constant 0 : i32
    return %0, %c0_i32, %c0_i32_0 : i32, i32, i32
  }
  func.func @transform_7(%arg0: i32) -> (i32, i32, i32) {
    %c1_i32 = arith.constant 1 : i32
    %0 = arith.minsi %arg0, %c1_i32 : i32
    %c0_i32 = arith.constant 0 : i32
    %c0_i32_0 = arith.constant 0 : i32
    %c0_i32_1 = arith.constant 0 : i32
    return %0, %c0_i32, %c0_i32_0 : i32, i32, i32
  }
  func.func @transform_8(%arg0: i32) -> (i32, i32, i32) {
    %c1_i32 = arith.constant 1 : i32
    %0 = arith.minsi %arg0, %c1_i32 : i32
    %c0_i32 = arith.constant 0 : i32
    %c0_i32_0 = arith.constant 0 : i32
    %c0_i32_1 = arith.constant 0 : i32
    return %0, %c0_i32, %c0_i32_0 : i32, i32, i32
  }
  func.func @transform_9(%arg0: i32) -> (i32, i32, i32) {
    %c1_i32 = arith.constant 1 : i32
    %0 = arith.minsi %arg0, %c1_i32 : i32
    %c0_i32 = arith.constant 0 : i32
    %c0_i32_0 = arith.constant 0 : i32
    %c0_i32_1 = arith.constant 0 : i32
    return %0, %c0_i32, %c0_i32_0 : i32, i32, i32
  }
  func.func @transform_10(%arg0: i32) -> (i32, i32, i32) {
    %c1_i32 = arith.constant 1 : i32
    %0 = arith.minsi %arg0, %c1_i32 : i32
    %c0_i32 = arith.constant 0 : i32
    %c0_i32_0 = arith.constant 0 : i32
    %c0_i32_1 = arith.constant 0 : i32
    return %0, %c0_i32, %c0_i32_0 : i32, i32, i32
  }
  func.func @transform_11(%arg0: i32) -> (i32, i32, i32) {
    %c1_i32 = arith.constant 1 : i32
    %0 = arith.minsi %arg0, %c1_i32 : i32
    %c0_i32 = arith.constant 0 : i32
    %c0_i32_0 = arith.constant 0 : i32
    %c0_i32_1 = arith.constant 0 : i32
    return %0, %c0_i32, %c0_i32_0 : i32, i32, i32
  }
  func.func @transform_12(%arg0: i32) -> (i32, i32, i32) {
    %c1_i32 = arith.constant 1 : i32
    %0 = arith.minsi %arg0, %c1_i32 : i32
    %c0_i32 = arith.constant 0 : i32
    %c0_i32_0 = arith.constant 0 : i32
    %c0_i32_1 = arith.constant 0 : i32
    return %0, %c0_i32, %c0_i32_0 : i32, i32, i32
  }
  func.func @transform_13(%arg0: i32) -> (i32, i32, i32) {
    %c1_i32 = arith.constant 1 : i32
    %0 = arith.minsi %arg0, %c1_i32 : i32
    %c0_i32 = arith.constant 0 : i32
    %c0_i32_0 = arith.constant 0 : i32
    %c0_i32_1 = arith.constant 0 : i32
    return %0, %c0_i32, %c0_i32_0 : i32, i32, i32
  }
  func.func @transform_14(%arg0: i32) -> (i32, i32, i32) {
    %c1_i32 = arith.constant 1 : i32
    %0 = arith.minsi %arg0, %c1_i32 : i32
    %c0_i32 = arith.constant 0 : i32
    %c0_i32_0 = arith.constant 0 : i32
    %c0_i32_1 = arith.constant 0 : i32
    return %0, %c0_i32, %c0_i32_0 : i32, i32, i32
  }
  func.func @transform_15(%arg0: i32) -> (i32, i32, i32) {
    %c1_i32 = arith.constant 1 : i32
    %0 = arith.minsi %arg0, %c1_i32 : i32
    %c0_i32 = arith.constant 0 : i32
    %c0_i32_0 = arith.constant 0 : i32
    %c0_i32_1 = arith.constant 0 : i32
    return %0, %c0_i32, %c0_i32_0 : i32, i32, i32
  }
  func.func @transform_16(%arg0: i32) -> (i32, i32, i32) {
    %c2_i32 = arith.constant 2 : i32
    %0 = arith.subi %arg0, %c2_i32 : i32
    %c0_i32 = arith.constant 0 : i32
    %1 = arith.maxsi %0, %c0_i32 : i32
    %c0_i32_0 = arith.constant 0 : i32
    %c0_i32_1 = arith.constant 0 : i32
    %c0_i32_2 = arith.constant 0 : i32
    return %1, %c0_i32_0, %c0_i32_1 : i32, i32, i32
  }
  func.func @transform_17(%arg0: i32) -> (i32, i32, i32) {
    %c2_i32 = arith.constant 2 : i32
    %0 = arith.subi %arg0, %c2_i32 : i32
    %c0_i32 = arith.constant 0 : i32
    %1 = arith.maxsi %0, %c0_i32 : i32
    %c0_i32_0 = arith.constant 0 : i32
    %c0_i32_1 = arith.constant 0 : i32
    %c0_i32_2 = arith.constant 0 : i32
    return %1, %c0_i32_0, %c0_i32_1 : i32, i32, i32
  }
  func.func @transform_18(%arg0: i32) -> (i32, i32, i32) {
    %c2_i32 = arith.constant 2 : i32
    %0 = arith.subi %arg0, %c2_i32 : i32
    %c0_i32 = arith.constant 0 : i32
    %1 = arith.maxsi %0, %c0_i32 : i32
    %c0_i32_0 = arith.constant 0 : i32
    %c0_i32_1 = arith.constant 0 : i32
    %c0_i32_2 = arith.constant 0 : i32
    return %1, %c0_i32_0, %c0_i32_1 : i32, i32, i32
  }
  func.func @transform_19(%arg0: i32) -> (i32, i32, i32) {
    %c2_i32 = arith.constant 2 : i32
    %0 = arith.subi %arg0, %c2_i32 : i32
    %c0_i32 = arith.constant 0 : i32
    %1 = arith.maxsi %0, %c0_i32 : i32
    %c0_i32_0 = arith.constant 0 : i32
    %c0_i32_1 = arith.constant 0 : i32
    %c0_i32_2 = arith.constant 0 : i32
    return %1, %c0_i32_0, %c0_i32_1 : i32, i32, i32
  }
  func.func @transform_20(%arg0: i32) -> (i32, i32, i32) {
    %c2_i32 = arith.constant 2 : i32
    %0 = arith.subi %arg0, %c2_i32 : i32
    %c0_i32 = arith.constant 0 : i32
    %1 = arith.maxsi %0, %c0_i32 : i32
    %c0_i32_0 = arith.constant 0 : i32
    %c0_i32_1 = arith.constant 0 : i32
    %c0_i32_2 = arith.constant 0 : i32
    return %1, %c0_i32_0, %c0_i32_1 : i32, i32, i32
  }
  func.func @transform_21(%arg0: i32) -> (i32, i32, i32) {
    %c2_i32 = arith.constant 2 : i32
    %0 = arith.subi %arg0, %c2_i32 : i32
    %c0_i32 = arith.constant 0 : i32
    %1 = arith.maxsi %0, %c0_i32 : i32
    %c0_i32_0 = arith.constant 0 : i32
    %c0_i32_1 = arith.constant 0 : i32
    %c0_i32_2 = arith.constant 0 : i32
    return %1, %c0_i32_0, %c0_i32_1 : i32, i32, i32
  }
  func.func @transform_22(%arg0: i32) -> (i32, i32, i32) {
    %c2_i32 = arith.constant 2 : i32
    %0 = arith.subi %arg0, %c2_i32 : i32
    %c0_i32 = arith.constant 0 : i32
    %1 = arith.maxsi %0, %c0_i32 : i32
    %c0_i32_0 = arith.constant 0 : i32
    %c0_i32_1 = arith.constant 0 : i32
    %c0_i32_2 = arith.constant 0 : i32
    return %1, %c0_i32_0, %c0_i32_1 : i32, i32, i32
  }
  func.func @transform_23(%arg0: i32) -> (i32, i32, i32) {
    %c2_i32 = arith.constant 2 : i32
    %0 = arith.subi %arg0, %c2_i32 : i32
    %c0_i32 = arith.constant 0 : i32
    %1 = arith.maxsi %0, %c0_i32 : i32
    %c0_i32_0 = arith.constant 0 : i32
    %c0_i32_1 = arith.constant 0 : i32
    %c0_i32_2 = arith.constant 0 : i32
    return %1, %c0_i32_0, %c0_i32_1 : i32, i32, i32
  }
  func.func @transform_24(%arg0: i32) -> (i32, i32, i32) {
    %c2_i32 = arith.constant 2 : i32
    %0 = arith.subi %arg0, %c2_i32 : i32
    %c0_i32 = arith.constant 0 : i32
    %1 = arith.maxsi %0, %c0_i32 : i32
    %c0_i32_0 = arith.constant 0 : i32
    %c0_i32_1 = arith.constant 0 : i32
    %c0_i32_2 = arith.constant 0 : i32
    return %1, %c0_i32_0, %c0_i32_1 : i32, i32, i32
  }
  func.func @transform_25(%arg0: i32) -> (i32, i32, i32) {
    %c2_i32 = arith.constant 2 : i32
    %0 = arith.subi %arg0, %c2_i32 : i32
    %c0_i32 = arith.constant 0 : i32
    %1 = arith.maxsi %0, %c0_i32 : i32
    %c0_i32_0 = arith.constant 0 : i32
    %c0_i32_1 = arith.constant 0 : i32
    %c0_i32_2 = arith.constant 0 : i32
    return %1, %c0_i32_0, %c0_i32_1 : i32, i32, i32
  }
  func.func @transform_26(%arg0: i32) -> (i32, i32, i32) {
    %c2_i32 = arith.constant 2 : i32
    %0 = arith.subi %arg0, %c2_i32 : i32
    %c0_i32 = arith.constant 0 : i32
    %1 = arith.maxsi %0, %c0_i32 : i32
    %c0_i32_0 = arith.constant 0 : i32
    %c0_i32_1 = arith.constant 0 : i32
    %c0_i32_2 = arith.constant 0 : i32
    return %1, %c0_i32_0, %c0_i32_1 : i32, i32, i32
  }
  func.func @transform_27(%arg0: i32) -> (i32, i32, i32) {
    %c2_i32 = arith.constant 2 : i32
    %0 = arith.subi %arg0, %c2_i32 : i32
    %c0_i32 = arith.constant 0 : i32
    %1 = arith.maxsi %0, %c0_i32 : i32
    %c0_i32_0 = arith.constant 0 : i32
    %c0_i32_1 = arith.constant 0 : i32
    %c0_i32_2 = arith.constant 0 : i32
    return %1, %c0_i32_0, %c0_i32_1 : i32, i32, i32
  }
  func.func @transform_28(%arg0: i32) -> (i32, i32, i32) {
    %c2_i32 = arith.constant 2 : i32
    %0 = arith.subi %arg0, %c2_i32 : i32
    %c0_i32 = arith.constant 0 : i32
    %1 = arith.maxsi %0, %c0_i32 : i32
    %c0_i32_0 = arith.constant 0 : i32
    %c0_i32_1 = arith.constant 0 : i32
    %c0_i32_2 = arith.constant 0 : i32
    return %1, %c0_i32_0, %c0_i32_1 : i32, i32, i32
  }
  func.func @transform_29(%arg0: i32) -> (i32, i32, i32) {
    %c2_i32 = arith.constant 2 : i32
    %0 = arith.subi %arg0, %c2_i32 : i32
    %c0_i32 = arith.constant 0 : i32
    %1 = arith.maxsi %0, %c0_i32 : i32
    %c0_i32_0 = arith.constant 0 : i32
    %c0_i32_1 = arith.constant 0 : i32
    %c0_i32_2 = arith.constant 0 : i32
    return %1, %c0_i32_0, %c0_i32_1 : i32, i32, i32
  }
  func.func @transform_30(%arg0: i32) -> (i32, i32, i32) {
    %c2_i32 = arith.constant 2 : i32
    %0 = arith.subi %arg0, %c2_i32 : i32
    %c0_i32 = arith.constant 0 : i32
    %1 = arith.maxsi %0, %c0_i32 : i32
    %c0_i32_0 = arith.constant 0 : i32
    %c0_i32_1 = arith.constant 0 : i32
    %c0_i32_2 = arith.constant 0 : i32
    return %1, %c0_i32_0, %c0_i32_1 : i32, i32, i32
  }
  func.func @transform_31(%arg0: i32) -> (i32, i32, i32) {
    %c2_i32 = arith.constant 2 : i32
    %0 = arith.subi %arg0, %c2_i32 : i32
    %c0_i32 = arith.constant 0 : i32
    %1 = arith.maxsi %0, %c0_i32 : i32
    %c0_i32_0 = arith.constant 0 : i32
    %c0_i32_1 = arith.constant 0 : i32
    %c0_i32_2 = arith.constant 0 : i32
    return %1, %c0_i32_0, %c0_i32_1 : i32, i32, i32
  }
  func.func @transform_32(%arg0: i32) -> (i32, i32, i32) {
    %c2_i32 = arith.constant 2 : i32
    %0 = arith.subi %arg0, %c2_i32 : i32
    %c0_i32 = arith.constant 0 : i32
    %1 = arith.maxsi %0, %c0_i32 : i32
    %c0_i32_0 = arith.constant 0 : i32
    %c0_i32_1 = arith.constant 0 : i32
    %c0_i32_2 = arith.constant 0 : i32
    return %1, %c0_i32_0, %c0_i32_1 : i32, i32, i32
  }
  func.func @transform_33(%arg0: i32) -> (i32, i32, i32) {
    %c2_i32 = arith.constant 2 : i32
    %0 = arith.subi %arg0, %c2_i32 : i32
    %c0_i32 = arith.constant 0 : i32
    %1 = arith.maxsi %0, %c0_i32 : i32
    %c0_i32_0 = arith.constant 0 : i32
    %c0_i32_1 = arith.constant 0 : i32
    %c0_i32_2 = arith.constant 0 : i32
    return %1, %c0_i32_0, %c0_i32_1 : i32, i32, i32
  }
  func.func @transform_34(%arg0: i32) -> (i32, i32, i32) {
    %c2_i32 = arith.constant 2 : i32
    %0 = arith.subi %arg0, %c2_i32 : i32
    %c0_i32 = arith.constant 0 : i32
    %1 = arith.maxsi %0, %c0_i32 : i32
    %c0_i32_0 = arith.constant 0 : i32
    %c0_i32_1 = arith.constant 0 : i32
    %c0_i32_2 = arith.constant 0 : i32
    return %1, %c0_i32_0, %c0_i32_1 : i32, i32, i32
  }
  func.func @transform_35(%arg0: i32) -> (i32, i32, i32) {
    %c2_i32 = arith.constant 2 : i32
    %0 = arith.subi %arg0, %c2_i32 : i32
    %c0_i32 = arith.constant 0 : i32
    %1 = arith.maxsi %0, %c0_i32 : i32
    %c0_i32_0 = arith.constant 0 : i32
    %c0_i32_1 = arith.constant 0 : i32
    %c0_i32_2 = arith.constant 0 : i32
    return %1, %c0_i32_0, %c0_i32_1 : i32, i32, i32
  }
  func.func @transform_36(%arg0: i32) -> (i32, i32) {
    %c0_i32 = arith.constant 0 : i32
    %c0_i32_0 = arith.constant 0 : i32
    %c0_i32_1 = arith.constant 0 : i32
    return %c0_i32, %c0_i32_0 : i32, i32
  }
  func.func @transform_37(%arg0: i32) -> (i32, i32) {
    %c0_i32 = arith.constant 0 : i32
    %c0_i32_0 = arith.constant 0 : i32
    %c0_i32_1 = arith.constant 0 : i32
    return %c0_i32, %c0_i32_0 : i32, i32
  }
  func.func @transform_38(%arg0: i32) -> (i32, i32, i32) {
    %c0_i32 = arith.constant 0 : i32
    %c0_i32_0 = arith.constant 0 : i32
    %c0_i32_1 = arith.constant 0 : i32
    %c0_i32_2 = arith.constant 0 : i32
    return %c0_i32, %c0_i32_0, %c0_i32_1 : i32, i32, i32
  }
  func.func @transform_39(%arg0: i32) -> (i32, i32, i32, i32) {
    %c0_i32 = arith.constant 0 : i32
    %c0_i32_0 = arith.constant 0 : i32
    %c0_i32_1 = arith.constant 0 : i32
    %c0_i32_2 = arith.constant 0 : i32
    %c0_i32_3 = arith.constant 0 : i32
    return %c0_i32, %c0_i32_0, %c0_i32_1, %c0_i32_2 : i32, i32, i32, i32
  }
}

</mosaic_0001>

<llo_original>
// kernel: seq2seq_forward.1
$region0: #{seq2seq_forward.1}
  #allocation0 [shape = 'u32[]', space=smem, size = 0x4, offset = 0x4, fixed_abs, tag = 'smem constant byte address 0x4 - core index']
  #allocation1 [shape = 'u32[144,128]{1,0:T(1,128)}', space=vmem, size = 0x12000, scoped, tag = 'internal scratch']
  #allocation2 [shape = 'f32[16,32]{1,0:T(8,128)}', space=vmem, size = 0x2000, scoped, tag = 'scratch operand']
  #allocation3 [shape = 'f32[12,32]{1,0:T(8,128)}', space=vmem, size = 0x2000, scoped, tag = 'scratch operand']
  %s0 = inlined_call_operand.smem [shape: u32[40], index: -1, kind: input, shape index: {}]
  %s1 = sld [smem:[%s0]]
  %s2 = scalar_lea.smem %s0, 1
  %s3 = sld [smem:[%s2]]
  %s4 = scalar_lea.smem %s0, 2
  %s5 = sld [smem:[%s4]]
  %s6 = scalar_lea.smem %s0, 3
  %s7 = sld [smem:[%s6]]
  %s8 = scalar_lea.smem %s0, 4
  %s9 = sld [smem:[%s8]]
  %s10 = scalar_lea.smem %s0, 5
  %s11 = sld [smem:[%s10]]
  %s12 = scalar_lea.smem %s0, 6
  %s13 = sld [smem:[%s12]]
  %s14 = scalar_lea.smem %s0, 7
  %s15 = sld [smem:[%s14]]
  %s16 = scalar_lea.smem %s0, 8
  %s17 = sld [smem:[%s16]]
  %s18 = scalar_lea.smem %s0, 9
  %s19 = sld [smem:[%s18]]
  %s20 = scalar_lea.smem %s0, 10
  %s21 = sld [smem:[%s20]]
  %s22 = scalar_lea.smem %s0, 11
  %s23 = sld [smem:[%s22]]
  %s24 = scalar_lea.smem %s0, 12
  %s25 = sld [smem:[%s24]]
  %s26 = scalar_lea.smem %s0, 13
  %s27 = sld [smem:[%s26]]
  %s28 = scalar_lea.smem %s0, 14
  %s29 = sld [smem:[%s28]]
  %s30 = scalar_lea.smem %s0, 15
  %s31 = sld [smem:[%s30]]
  %s32 = scalar_lea.smem %s0, 16
  %s33 = sld [smem:[%s32]]
  %s34 = scalar_lea.smem %s0, 17
  %s35 = sld [smem:[%s34]]
  %s36 = scalar_lea.smem %s0, 18
  %s37 = sld [smem:[%s36]]
  %s38 = scalar_lea.smem %s0, 19
  %s39 = sld [smem:[%s38]]
  %s40 = scalar_lea.smem %s0, 20
  %s41 = sld [smem:[%s40]]
  %s42 = scalar_lea.smem %s0, 21
  %s43 = sld [smem:[%s42]]
  %s44 = scalar_lea.smem %s0, 22
  %s45 = sld [smem:[%s44]]
  %s46 = scalar_lea.smem %s0, 23
  %s47 = sld [smem:[%s46]]
  %s48 = scalar_lea.smem %s0, 24
  %s49 = sld [smem:[%s48]]
  %s50 = scalar_lea.smem %s0, 25
  %s51 = sld [smem:[%s50]]
  %s52 = scalar_lea.smem %s0, 26
  %s53 = sld [smem:[%s52]]
  %s54 = scalar_lea.smem %s0, 27
  %s55 = sld [smem:[%s54]]
  %s56 = scalar_lea.smem %s0, 28
  %s57 = sld [smem:[%s56]]
  %s58 = scalar_lea.smem %s0, 29
  %s59 = sld [smem:[%s58]]
  %s60 = scalar_lea.smem %s0, 30
  %s61 = sld [smem:[%s60]]
  %s62 = scalar_lea.smem %s0, 31
  %s63 = sld [smem:[%s62]]
  %s64 = scalar_lea.smem %s0, 32
  %s65 = sld [smem:[%s64]]
  %s66 = scalar_lea.smem %s0, 33
  %s67 = sld [smem:[%s66]]
  %s68 = scalar_lea.smem %s0, 34
  %s69 = sld [smem:[%s68]]
  %s70 = scalar_lea.smem %s0, 35
  %s71 = sld [smem:[%s70]]
  %s72 = scalar_lea.smem %s0, 36
  %s73 = sld [smem:[%s72]]
  %s74 = scalar_lea.smem %s0, 37
  %s75 = sld [smem:[%s74]]
  %s76 = scalar_lea.smem %s0, 38
  %s77 = sld [smem:[%s76]]
  %s78 = scalar_lea.smem %s0, 39
  %s79 = sld [smem:[%s78]]
  %80 = xla_tuple %s77, %s79
  %s81 = sld [smem:[#allocation0]]
  $region213: #{seq2seq_forward.1} parent=0
    _
  %s83 = ssub.s32 1, %s81
  %s84 = scalar_select 0, %s83, %s81
  loop: start=0, step=1, limit=6
  $region2: #{seq2seq_forward.1} parent=0 // loop_pre_header
    _
  $region3: #{seq2seq_forward.1} parent=0 // loop_header
    %s86 = sphi 0, %s90
    %p87 = scmp.ge.s32.totalorder %s86, 6
    %s94 = sphi 0, %s94
    %s96 = sphi 0, %s94
    %s97 = sphi 0, %s96
    %s111 = sphi 0, %s97
    %s115 = sphi 0, %s115
    %s117 = sphi 0, %s115
    %s118 = sphi 0, %s117
    %s132 = sphi 0, %s118
    %s136 = sphi 0, %s136
    %s138 = sphi 0, %s136
    %s139 = sphi 0, %s138
    %s153 = sphi 0, %s139
    %s157 = sphi 0, %s157
    %s159 = sphi 0, %s157
    %s160 = sphi 0, %s159
    %s174 = sphi 0, %s160
    %s184 = sphi 0, %s186
    %s187 = sphi 0, %s184
    %s188 = sphi 0, %s187
    %s204 = sphi 0, %s188
    %s214 = sphi 0, %s216
    %s217 = sphi 0, %s214
    %s218 = sphi 0, %s217
    %s234 = sphi 0, %s218
    %s244 = sphi 0, %s246
    %s247 = sphi 0, %s244
    %s248 = sphi 0, %s247
    %s264 = sphi 0, %s248
    %s274 = sphi 0, %s276
    %s277 = sphi 0, %s274
    %s278 = sphi 0, %s277
    %s294 = sphi 0, %s278
    %s304 = sphi 0, %s306
    %s307 = sphi 0, %s304
    %s308 = sphi 0, %s307
    %s324 = sphi 0, %s308
    %s334 = sphi 0, %s336
    %s337 = sphi 0, %s334
    %s338 = sphi 0, %s337
    %s354 = sphi 0, %s338
    %s364 = sphi 0, %s366
    %s367 = sphi 0, %s364
    %s368 = sphi 0, %s367
    %s384 = sphi 0, %s368
    %s394 = sphi 0, %s396
    %s397 = sphi 0, %s394
    %s398 = sphi 0, %s397
    %s414 = sphi 0, %s398
    %s424 = sphi 0, %s426
    %s427 = sphi 0, %s424
    %s428 = sphi 0, %s427
    %s444 = sphi 0, %s428
    %s454 = sphi 0, %s456
    %s457 = sphi 0, %s454
    %s458 = sphi 0, %s457
    %s474 = sphi 0, %s458
    %s484 = sphi 0, %s486
    %s487 = sphi 0, %s484
    %s488 = sphi 0, %s487
    %s504 = sphi 0, %s488
    %s514 = sphi 0, %s516
    %s517 = sphi 0, %s514
    %s518 = sphi 0, %s517
    %s534 = sphi 0, %s518
    %s546 = sphi 0, %s548
    %s549 = sphi 0, %s546
    %s550 = sphi 0, %s549
    %s566 = sphi 0, %s550
    %s578 = sphi 0, %s580
    %s581 = sphi 0, %s578
    %s582 = sphi 0, %s581
    %s598 = sphi 0, %s582
    %s610 = sphi 0, %s612
    %s613 = sphi 0, %s610
    %s614 = sphi 0, %s613
    %s630 = sphi 0, %s614
    %s642 = sphi 0, %s644
    %s645 = sphi 0, %s642
    %s646 = sphi 0, %s645
    %s662 = sphi 0, %s646
    %s674 = sphi 0, %s676
    %s677 = sphi 0, %s674
    %s678 = sphi 0, %s677
    %s694 = sphi 0, %s678
    %s706 = sphi 0, %s708
    %s709 = sphi 0, %s706
    %s710 = sphi 0, %s709
    %s726 = sphi 0, %s710
    %s738 = sphi 0, %s740
    %s741 = sphi 0, %s738
    %s742 = sphi 0, %s741
    %s758 = sphi 0, %s742
    %s770 = sphi 0, %s772
    %s773 = sphi 0, %s770
    %s774 = sphi 0, %s773
    %s790 = sphi 0, %s774
    %s802 = sphi 0, %s804
    %s805 = sphi 0, %s802
    %s806 = sphi 0, %s805
    %s822 = sphi 0, %s806
    %s834 = sphi 0, %s836
    %s837 = sphi 0, %s834
    %s838 = sphi 0, %s837
    %s854 = sphi 0, %s838
    %s866 = sphi 0, %s868
    %s869 = sphi 0, %s866
    %s870 = sphi 0, %s869
    %s886 = sphi 0, %s870
    %s898 = sphi 0, %s900
    %s901 = sphi 0, %s898
    %s902 = sphi 0, %s901
    %s918 = sphi 0, %s902
    %s930 = sphi 0, %s932
    %s933 = sphi 0, %s930
    %s934 = sphi 0, %s933
    %s950 = sphi 0, %s934
    %s962 = sphi 0, %s964
    %s965 = sphi 0, %s962
    %s966 = sphi 0, %s965
    %s982 = sphi 0, %s966
    %s994 = sphi 0, %s996
    %s997 = sphi 0, %s994
    %s998 = sphi 0, %s997
    %s1014 = sphi 0, %s998
    %s1026 = sphi 0, %s1028
    %s1029 = sphi 0, %s1026
    %s1030 = sphi 0, %s1029
    %s1046 = sphi 0, %s1030
    %s1058 = sphi 0, %s1060
    %s1061 = sphi 0, %s1058
    %s1062 = sphi 0, %s1061
    %s1078 = sphi 0, %s1062
    %s1090 = sphi 0, %s1092
    %s1093 = sphi 0, %s1090
    %s1094 = sphi 0, %s1093
    %s1110 = sphi 0, %s1094
    %s1122 = sphi 0, %s1124
    %s1125 = sphi 0, %s1122
    %s1126 = sphi 0, %s1125
    %s1142 = sphi 0, %s1126
    %s1154 = sphi 0, %s1156
    %s1157 = sphi 0, %s1154
    %s1158 = sphi 0, %s1157
    %s1174 = sphi 0, %s1158
    %s1178 = sphi 0, %s1178
    %s1180 = sphi 0, %s1178
    %s1181 = sphi 0, %s1180
    %s1195 = sphi 0, %s1181
    %s1199 = sphi 0, %s1199
    %s1201 = sphi 0, %s1199
    %s1202 = sphi 0, %s1201
    %s1216 = sphi 0, %s1202
    %s1220 = sphi 0, %s1220
    %s1222 = sphi 0, %s1220
    %s1223 = sphi 0, %s1222
    %s1237 = sphi 0, %s1223
    %s1241 = sphi 0, %s1241
    %s1243 = sphi 0, %s1241
    %s1244 = sphi 0, %s1243
    %s1258 = sphi 0, %s1244
  $region4: #{seq2seq_forward.1} parent=0 // loop_header_branch
    %89 = sbr.rel (%p87) target = $region8
  $region5: #{seq2seq_forward.1} parent=0 // loop_body
    %s91 = ssub.s32 %s86, 1
    %s92 = ssub.s32 %s86, 2
    %s93 = sadd.s32 %s86, 1
    %s95 = sadd.s32 %s94, 1
    %p98 = scmp.eq.s32.totalorder %s86, 3
    %p99 = scmp.ne.s32.totalorder %s94, %s96
    %p100 = scmp.eq.s32.totalorder %s86, 0
    %p101 = por %p99, %p100
    %p102 = scmp.ne.s32.totalorder %s94, %s96
    %p103 = scmp.eq.s32.totalorder %s91, 3
    %p104 = por %p102, %p103
    %p105 = scmp.ne.s32.totalorder %s96, %s97
    %p106 = scmp.eq.s32.totalorder %s91, 0
    %p107 = por %p105, %p106
    %p108 = scmp.ne.s32.totalorder %s96, %s97
    %p109 = scmp.eq.s32.totalorder %s92, 3
    %p110 = por %p108, %p109
    %p112 = scmp.ne.s32.totalorder %s97, %s111
    %p113 = scmp.eq.s32.totalorder %s92, 0
    %p114 = por %p112, %p113
    %s116 = sadd.s32 %s115, 1
    %p119 = scmp.eq.s32.totalorder %s86, 3
    %p120 = scmp.ne.s32.totalorder %s115, %s117
    %p121 = scmp.eq.s32.totalorder %s86, 0
    %p122 = por %p120, %p121
    %p123 = scmp.ne.s32.totalorder %s115, %s117
    %p124 = scmp.eq.s32.totalorder %s91, 3
    %p125 = por %p123, %p124
    %p126 = scmp.ne.s32.totalorder %s117, %s118
    %p127 = scmp.eq.s32.totalorder %s91, 0
    %p128 = por %p126, %p127
    %p129 = scmp.ne.s32.totalorder %s117, %s118
    %p130 = scmp.eq.s32.totalorder %s92, 3
    %p131 = por %p129, %p130
    %p133 = scmp.ne.s32.totalorder %s118, %s132
    %p134 = scmp.eq.s32.totalorder %s92, 0
    %p135 = por %p133, %p134
    %s137 = sadd.s32 %s136, 1
    %p140 = scmp.eq.s32.totalorder %s86, 3
    %p141 = scmp.ne.s32.totalorder %s136, %s138
    %p142 = scmp.eq.s32.totalorder %s86, 0
    %p143 = por %p141, %p142
    %p144 = scmp.ne.s32.totalorder %s136, %s138
    %p145 = scmp.eq.s32.totalorder %s91, 3
    %p146 = por %p144, %p145
    %p147 = scmp.ne.s32.totalorder %s138, %s139
    %p148 = scmp.eq.s32.totalorder %s91, 0
    %p149 = por %p147, %p148
    %p150 = scmp.ne.s32.totalorder %s138, %s139
    %p151 = scmp.eq.s32.totalorder %s92, 3
    %p152 = por %p150, %p151
    %p154 = scmp.ne.s32.totalorder %s139, %s153
    %p155 = scmp.eq.s32.totalorder %s92, 0
    %p156 = por %p154, %p155
    %s158 = sadd.s32 %s157, 1
    %p161 = scmp.eq.s32.totalorder %s86, 3
    %p162 = scmp.ne.s32.totalorder %s157, %s159
    %p163 = scmp.eq.s32.totalorder %s86, 0
    %p164 = por %p162, %p163
    %p165 = scmp.ne.s32.totalorder %s157, %s159
    %p166 = scmp.eq.s32.totalorder %s91, 3
    %p167 = por %p165, %p166
    %p168 = scmp.ne.s32.totalorder %s159, %s160
    %p169 = scmp.eq.s32.totalorder %s91, 0
    %p170 = por %p168, %p169
    %p171 = scmp.ne.s32.totalorder %s159, %s160
    %p172 = scmp.eq.s32.totalorder %s92, 3
    %p173 = por %p171, %p172
    %p175 = scmp.ne.s32.totalorder %s160, %s174
    %p176 = scmp.eq.s32.totalorder %s92, 0
    %p177 = por %p175, %p176
    %p178 = scmp.lt.s32.totalorder %s86, 1
    %s179 = scalar_select %p178, %s86, 1
    %p180 = scmp.lt.s32.totalorder %s93, 1
    %s181 = scalar_select %p180, %s93, 1
    %s182 = ssub.s32 %s179, %s181
    %p183 = scmp.eq.s32.totalorder %s182, 0
    %s185 = sadd.s32 %s184, 1
    %s186 = scalar_select %p183, %s184, %s185
    %p189 = pneg %p183
    %p190 = scmp.eq.s32.totalorder %s86, 3
    %p191 = por %p189, %p190
    %p192 = scmp.ne.s32.totalorder %s184, %s187
    %p193 = scmp.eq.s32.totalorder %s86, 0
    %p194 = por %p192, %p193
    %p195 = scmp.ne.s32.totalorder %s184, %s187
    %p196 = scmp.eq.s32.totalorder %s91, 3
    %p197 = por %p195, %p196
    %p198 = scmp.ne.s32.totalorder %s187, %s188
    %p199 = scmp.eq.s32.totalorder %s91, 0
    %p200 = por %p198, %p199
    %p201 = scmp.ne.s32.totalorder %s187, %s188
    %p202 = scmp.eq.s32.totalorder %s92, 3
    %p203 = por %p201, %p202
    %p205 = scmp.ne.s32.totalorder %s188, %s204
    %p206 = scmp.eq.s32.totalorder %s92, 0
    %p207 = por %p205, %p206
    %p208 = scmp.lt.s32.totalorder %s86, 1
    %s209 = scalar_select %p208, %s86, 1
    %p210 = scmp.lt.s32.totalorder %s93, 1
    %s211 = scalar_select %p210, %s93, 1
    %s212 = ssub.s32 %s209, %s211
    %p213 = scmp.eq.s32.totalorder %s212, 0
    %s215 = sadd.s32 %s214, 1
    %s216 = scalar_select %p213, %s214, %s215
    %p219 = pneg %p213
    %p220 = scmp.eq.s32.totalorder %s86, 3
    %p221 = por %p219, %p220
    %p222 = scmp.ne.s32.totalorder %s214, %s217
    %p223 = scmp.eq.s32.totalorder %s86, 0
    %p224 = por %p222, %p223
    %p225 = scmp.ne.s32.totalorder %s214, %s217
    %p226 = scmp.eq.s32.totalorder %s91, 3
    %p227 = por %p225, %p226
    %p228 = scmp.ne.s32.totalorder %s217, %s218
    %p229 = scmp.eq.s32.totalorder %s91, 0
    %p230 = por %p228, %p229
    %p231 = scmp.ne.s32.totalorder %s217, %s218
    %p232 = scmp.eq.s32.totalorder %s92, 3
    %p233 = por %p231, %p232
    %p235 = scmp.ne.s32.totalorder %s218, %s234
    %p236 = scmp.eq.s32.totalorder %s92, 0
    %p237 = por %p235, %p236
    %p238 = scmp.lt.s32.totalorder %s86, 1
    %s239 = scalar_select %p238, %s86, 1
    %p240 = scmp.lt.s32.totalorder %s93, 1
    %s241 = scalar_select %p240, %s93, 1
    %s242 = ssub.s32 %s239, %s241
    %p243 = scmp.eq.s32.totalorder %s242, 0
    %s245 = sadd.s32 %s244, 1
    %s246 = scalar_select %p243, %s244, %s245
    %p249 = pneg %p243
    %p250 = scmp.eq.s32.totalorder %s86, 3
    %p251 = por %p249, %p250
    %p252 = scmp.ne.s32.totalorder %s244, %s247
    %p253 = scmp.eq.s32.totalorder %s86, 0
    %p254 = por %p252, %p253
    %p255 = scmp.ne.s32.totalorder %s244, %s247
    %p256 = scmp.eq.s32.totalorder %s91, 3
    %p257 = por %p255, %p256
    %p258 = scmp.ne.s32.totalorder %s247, %s248
    %p259 = scmp.eq.s32.totalorder %s91, 0
    %p260 = por %p258, %p259
    %p261 = scmp.ne.s32.totalorder %s247, %s248
    %p262 = scmp.eq.s32.totalorder %s92, 3
    %p263 = por %p261, %p262
    %p265 = scmp.ne.s32.totalorder %s248, %s264
    %p266 = scmp.eq.s32.totalorder %s92, 0
    %p267 = por %p265, %p266
    %p268 = scmp.lt.s32.totalorder %s86, 1
    %s269 = scalar_select %p268, %s86, 1
    %p270 = scmp.lt.s32.totalorder %s93, 1
    %s271 = scalar_select %p270, %s93, 1
    %s272 = ssub.s32 %s269, %s271
    %p273 = scmp.eq.s32.totalorder %s272, 0
    %s275 = sadd.s32 %s274, 1
    %s276 = scalar_select %p273, %s274, %s275
    %p279 = pneg %p273
    %p280 = scmp.eq.s32.totalorder %s86, 3
    %p281 = por %p279, %p280
    %p282 = scmp.ne.s32.totalorder %s274, %s277
    %p283 = scmp.eq.s32.totalorder %s86, 0
    %p284 = por %p282, %p283
    %p285 = scmp.ne.s32.totalorder %s274, %s277
    %p286 = scmp.eq.s32.totalorder %s91, 3
    %p287 = por %p285, %p286
    %p288 = scmp.ne.s32.totalorder %s277, %s278
    %p289 = scmp.eq.s32.totalorder %s91, 0
    %p290 = por %p288, %p289
    %p291 = scmp.ne.s32.totalorder %s277, %s278
    %p292 = scmp.eq.s32.totalorder %s92, 3
    %p293 = por %p291, %p292
    %p295 = scmp.ne.s32.totalorder %s278, %s294
    %p296 = scmp.eq.s32.totalorder %s92, 0
    %p297 = por %p295, %p296
    %p298 = scmp.lt.s32.totalorder %s86, 1
    %s299 = scalar_select %p298, %s86, 1
    %p300 = scmp.lt.s32.totalorder %s93, 1
    %s301 = scalar_select %p300, %s93, 1
    %s302 = ssub.s32 %s299, %s301
    %p303 = scmp.eq.s32.totalorder %s302, 0
    %s305 = sadd.s32 %s304, 1
    %s306 = scalar_select %p303, %s304, %s305
    %p309 = pneg %p303
    %p310 = scmp.eq.s32.totalorder %s86, 3
    %p311 = por %p309, %p310
    %p312 = scmp.ne.s32.totalorder %s304, %s307
    %p313 = scmp.eq.s32.totalorder %s86, 0
    %p314 = por %p312, %p313
    %p315 = scmp.ne.s32.totalorder %s304, %s307
    %p316 = scmp.eq.s32.totalorder %s91, 3
    %p317 = por %p315, %p316
    %p318 = scmp.ne.s32.totalorder %s307, %s308
    %p319 = scmp.eq.s32.totalorder %s91, 0
    %p320 = por %p318, %p319
    %p321 = scmp.ne.s32.totalorder %s307, %s308
    %p322 = scmp.eq.s32.totalorder %s92, 3
    %p323 = por %p321, %p322
    %p325 = scmp.ne.s32.totalorder %s308, %s324
    %p326 = scmp.eq.s32.totalorder %s92, 0
    %p327 = por %p325, %p326
    %p328 = scmp.lt.s32.totalorder %s86, 1
    %s329 = scalar_select %p328, %s86, 1
    %p330 = scmp.lt.s32.totalorder %s93, 1
    %s331 = scalar_select %p330, %s93, 1
    %s332 = ssub.s32 %s329, %s331
    %p333 = scmp.eq.s32.totalorder %s332, 0
    %s335 = sadd.s32 %s334, 1
    %s336 = scalar_select %p333, %s334, %s335
    %p339 = pneg %p333
    %p340 = scmp.eq.s32.totalorder %s86, 3
    %p341 = por %p339, %p340
    %p342 = scmp.ne.s32.totalorder %s334, %s337
    %p343 = scmp.eq.s32.totalorder %s86, 0
    %p344 = por %p342, %p343
    %p345 = scmp.ne.s32.totalorder %s334, %s337
    %p346 = scmp.eq.s32.totalorder %s91, 3
    %p347 = por %p345, %p346
    %p348 = scmp.ne.s32.totalorder %s337, %s338
    %p349 = scmp.eq.s32.totalorder %s91, 0
    %p350 = por %p348, %p349
    %p351 = scmp.ne.s32.totalorder %s337, %s338
    %p352 = scmp.eq.s32.totalorder %s92, 3
    %p353 = por %p351, %p352
    %p355 = scmp.ne.s32.totalorder %s338, %s354
    %p356 = scmp.eq.s32.totalorder %s92, 0
    %p357 = por %p355, %p356
    %p358 = scmp.lt.s32.totalorder %s86, 1
    %s359 = scalar_select %p358, %s86, 1
    %p360 = scmp.lt.s32.totalorder %s93, 1
    %s361 = scalar_select %p360, %s93, 1
    %s362 = ssub.s32 %s359, %s361
    %p363 = scmp.eq.s32.totalorder %s362, 0
    %s365 = sadd.s32 %s364, 1
    %s366 = scalar_select %p363, %s364, %s365
    %p369 = pneg %p363
    %p370 = scmp.eq.s32.totalorder %s86, 3
    %p371 = por %p369, %p370
    %p372 = scmp.ne.s32.totalorder %s364, %s367
    %p373 = scmp.eq.s32.totalorder %s86, 0
    %p374 = por %p372, %p373
    %p375 = scmp.ne.s32.totalorder %s364, %s367
    %p376 = scmp.eq.s32.totalorder %s91, 3
    %p377 = por %p375, %p376
    %p378 = scmp.ne.s32.totalorder %s367, %s368
    %p379 = scmp.eq.s32.totalorder %s91, 0
    %p380 = por %p378, %p379
    %p381 = scmp.ne.s32.totalorder %s367, %s368
    %p382 = scmp.eq.s32.totalorder %s92, 3
    %p383 = por %p381, %p382
    %p385 = scmp.ne.s32.totalorder %s368, %s384
    %p386 = scmp.eq.s32.totalorder %s92, 0
    %p387 = por %p385, %p386
    %p388 = scmp.lt.s32.totalorder %s86, 1
    %s389 = scalar_select %p388, %s86, 1
    %p390 = scmp.lt.s32.totalorder %s93, 1
    %s391 = scalar_select %p390, %s93, 1
    %s392 = ssub.s32 %s389, %s391
    %p393 = scmp.eq.s32.totalorder %s392, 0
    %s395 = sadd.s32 %s394, 1
    %s396 = scalar_select %p393, %s394, %s395
    %p399 = pneg %p393
    %p400 = scmp.eq.s32.totalorder %s86, 3
    %p401 = por %p399, %p400
    %p402 = scmp.ne.s32.totalorder %s394, %s397
    %p403 = scmp.eq.s32.totalorder %s86, 0
    %p404 = por %p402, %p403
    %p405 = scmp.ne.s32.totalorder %s394, %s397
    %p406 = scmp.eq.s32.totalorder %s91, 3
    %p407 = por %p405, %p406
    %p408 = scmp.ne.s32.totalorder %s397, %s398
    %p409 = scmp.eq.s32.totalorder %s91, 0
    %p410 = por %p408, %p409
    %p411 = scmp.ne.s32.totalorder %s397, %s398
    %p412 = scmp.eq.s32.totalorder %s92, 3
    %p413 = por %p411, %p412
    %p415 = scmp.ne.s32.totalorder %s398, %s414
    %p416 = scmp.eq.s32.totalorder %s92, 0
    %p417 = por %p415, %p416
    %p418 = scmp.lt.s32.totalorder %s86, 1
    %s419 = scalar_select %p418, %s86, 1
    %p420 = scmp.lt.s32.totalorder %s93, 1
    %s421 = scalar_select %p420, %s93, 1
    %s422 = ssub.s32 %s419, %s421
    %p423 = scmp.eq.s32.totalorder %s422, 0
    %s425 = sadd.s32 %s424, 1
    %s426 = scalar_select %p423, %s424, %s425
    %p429 = pneg %p423
    %p430 = scmp.eq.s32.totalorder %s86, 3
    %p431 = por %p429, %p430
    %p432 = scmp.ne.s32.totalorder %s424, %s427
    %p433 = scmp.eq.s32.totalorder %s86, 0
    %p434 = por %p432, %p433
    %p435 = scmp.ne.s32.totalorder %s424, %s427
    %p436 = scmp.eq.s32.totalorder %s91, 3
    %p437 = por %p435, %p436
    %p438 = scmp.ne.s32.totalorder %s427, %s428
    %p439 = scmp.eq.s32.totalorder %s91, 0
    %p440 = por %p438, %p439
    %p441 = scmp.ne.s32.totalorder %s427, %s428
    %p442 = scmp.eq.s32.totalorder %s92, 3
    %p443 = por %p441, %p442
    %p445 = scmp.ne.s32.totalorder %s428, %s444
    %p446 = scmp.eq.s32.totalorder %s92, 0
    %p447 = por %p445, %p446
    %p448 = scmp.lt.s32.totalorder %s86, 1
    %s449 = scalar_select %p448, %s86, 1
    %p450 = scmp.lt.s32.totalorder %s93, 1
    %s451 = scalar_select %p450, %s93, 1
    %s452 = ssub.s32 %s449, %s451
    %p453 = scmp.eq.s32.totalorder %s452, 0
    %s455 = sadd.s32 %s454, 1
    %s456 = scalar_select %p453, %s454, %s455
    %p459 = pneg %p453
    %p460 = scmp.eq.s32.totalorder %s86, 3
    %p461 = por %p459, %p460
    %p462 = scmp.ne.s32.totalorder %s454, %s457
    %p463 = scmp.eq.s32.totalorder %s86, 0
    %p464 = por %p462, %p463
    %p465 = scmp.ne.s32.totalorder %s454, %s457
    %p466 = scmp.eq.s32.totalorder %s91, 3
    %p467 = por %p465, %p466
    %p468 = scmp.ne.s32.totalorder %s457, %s458
    %p469 = scmp.eq.s32.totalorder %s91, 0
    %p470 = por %p468, %p469
    %p471 = scmp.ne.s32.totalorder %s457, %s458
    %p472 = scmp.eq.s32.totalorder %s92, 3
    %p473 = por %p471, %p472
    %p475 = scmp.ne.s32.totalorder %s458, %s474
    %p476 = scmp.eq.s32.totalorder %s92, 0
    %p477 = por %p475, %p476
    %p478 = scmp.lt.s32.totalorder %s86, 1
    %s479 = scalar_select %p478, %s86, 1
    %p480 = scmp.lt.s32.totalorder %s93, 1
    %s481 = scalar_select %p480, %s93, 1
    %s482 = ssub.s32 %s479, %s481
    %p483 = scmp.eq.s32.totalorder %s482, 0
    %s485 = sadd.s32 %s484, 1
    %s486 = scalar_select %p483, %s484, %s485
    %p489 = pneg %p483
    %p490 = scmp.eq.s32.totalorder %s86, 3
    %p491 = por %p489, %p490
    %p492 = scmp.ne.s32.totalorder %s484, %s487
    %p493 = scmp.eq.s32.totalorder %s86, 0
    %p494 = por %p492, %p493
    %p495 = scmp.ne.s32.totalorder %s484, %s487
    %p496 = scmp.eq.s32.totalorder %s91, 3
    %p497 = por %p495, %p496
    %p498 = scmp.ne.s32.totalorder %s487, %s488
    %p499 = scmp.eq.s32.totalorder %s91, 0
    %p500 = por %p498, %p499
    %p501 = scmp.ne.s32.totalorder %s487, %s488
    %p502 = scmp.eq.s32.totalorder %s92, 3
    %p503 = por %p501, %p502
    %p505 = scmp.ne.s32.totalorder %s488, %s504
    %p506 = scmp.eq.s32.totalorder %s92, 0
    %p507 = por %p505, %p506
    %p508 = scmp.lt.s32.totalorder %s86, 1
    %s509 = scalar_select %p508, %s86, 1
    %p510 = scmp.lt.s32.totalorder %s93, 1
    %s511 = scalar_select %p510, %s93, 1
    %s512 = ssub.s32 %s509, %s511
    %p513 = scmp.eq.s32.totalorder %s512, 0
    %s515 = sadd.s32 %s514, 1
    %s516 = scalar_select %p513, %s514, %s515
    %p519 = pneg %p513
    %p520 = scmp.eq.s32.totalorder %s86, 3
    %p521 = por %p519, %p520
    %p522 = scmp.ne.s32.totalorder %s514, %s517
    %p523 = scmp.eq.s32.totalorder %s86, 0
    %p524 = por %p522, %p523
    %p525 = scmp.ne.s32.totalorder %s514, %s517
    %p526 = scmp.eq.s32.totalorder %s91, 3
    %p527 = por %p525, %p526
    %p528 = scmp.ne.s32.totalorder %s517, %s518
    %p529 = scmp.eq.s32.totalorder %s91, 0
    %p530 = por %p528, %p529
    %p531 = scmp.ne.s32.totalorder %s517, %s518
    %p532 = scmp.eq.s32.totalorder %s92, 3
    %p533 = por %p531, %p532
    %p535 = scmp.ne.s32.totalorder %s518, %s534
    %p536 = scmp.eq.s32.totalorder %s92, 0
    %p537 = por %p535, %p536
    %s538 = ssub.s32 %s86, 2
    %p539 = scmp.gt.s32.totalorder %s538, 0
    %s540 = scalar_select %p539, %s538, 0
    %s541 = ssub.s32 %s93, 2
    %p542 = scmp.gt.s32.totalorder %s541, 0
    %s543 = scalar_select %p542, %s541, 0
    %s544 = ssub.s32 %s540, %s543
    %p545 = scmp.eq.s32.totalorder %s544, 0
    %s547 = sadd.s32 %s546, 1
    %s548 = scalar_select %p545, %s546, %s547
    %p551 = pneg %p545
    %p552 = scmp.eq.s32.totalorder %s86, 3
    %p553 = por %p551, %p552
    %p554 = scmp.ne.s32.totalorder %s546, %s549
    %p555 = scmp.eq.s32.totalorder %s86, 0
    %p556 = por %p554, %p555
    %p557 = scmp.ne.s32.totalorder %s546, %s549
    %p558 = scmp.eq.s32.totalorder %s91, 3
    %p559 = por %p557, %p558
    %p560 = scmp.ne.s32.totalorder %s549, %s550
    %p561 = scmp.eq.s32.totalorder %s91, 0
    %p562 = por %p560, %p561
    %p563 = scmp.ne.s32.totalorder %s549, %s550
    %p564 = scmp.eq.s32.totalorder %s92, 3
    %p565 = por %p563, %p564
    %p567 = scmp.ne.s32.totalorder %s550, %s566
    %p568 = scmp.eq.s32.totalorder %s92, 0
    %p569 = por %p567, %p568
    %s570 = ssub.s32 %s86, 2
    %p571 = scmp.gt.s32.totalorder %s570, 0
    %s572 = scalar_select %p571, %s570, 0
    %s573 = ssub.s32 %s93, 2
    %p574 = scmp.gt.s32.totalorder %s573, 0
    %s575 = scalar_select %p574, %s573, 0
    %s576 = ssub.s32 %s572, %s575
    %p577 = scmp.eq.s32.totalorder %s576, 0
    %s579 = sadd.s32 %s578, 1
    %s580 = scalar_select %p577, %s578, %s579
    %p583 = pneg %p577
    %p584 = scmp.eq.s32.totalorder %s86, 3
    %p585 = por %p583, %p584
    %p586 = scmp.ne.s32.totalorder %s578, %s581
    %p587 = scmp.eq.s32.totalorder %s86, 0
    %p588 = por %p586, %p587
    %p589 = scmp.ne.s32.totalorder %s578, %s581
    %p590 = scmp.eq.s32.totalorder %s91, 3
    %p591 = por %p589, %p590
    %p592 = scmp.ne.s32.totalorder %s581, %s582
    %p593 = scmp.eq.s32.totalorder %s91, 0
    %p594 = por %p592, %p593
    %p595 = scmp.ne.s32.totalorder %s581, %s582
    %p596 = scmp.eq.s32.totalorder %s92, 3
    %p597 = por %p595, %p596
    %p599 = scmp.ne.s32.totalorder %s582, %s598
    %p600 = scmp.eq.s32.totalorder %s92, 0
    %p601 = por %p599, %p600
    %s602 = ssub.s32 %s86, 2
    %p603 = scmp.gt.s32.totalorder %s602, 0
    %s604 = scalar_select %p603, %s602, 0
    %s605 = ssub.s32 %s93, 2
    %p606 = scmp.gt.s32.totalorder %s605, 0
    %s607 = scalar_select %p606, %s605, 0
    %s608 = ssub.s32 %s604, %s607
    %p609 = scmp.eq.s32.totalorder %s608, 0
    %s611 = sadd.s32 %s610, 1
    %s612 = scalar_select %p609, %s610, %s611
    %p615 = pneg %p609
    %p616 = scmp.eq.s32.totalorder %s86, 3
    %p617 = por %p615, %p616
    %p618 = scmp.ne.s32.totalorder %s610, %s613
    %p619 = scmp.eq.s32.totalorder %s86, 0
    %p620 = por %p618, %p619
    %p621 = scmp.ne.s32.totalorder %s610, %s613
    %p622 = scmp.eq.s32.totalorder %s91, 3
    %p623 = por %p621, %p622
    %p624 = scmp.ne.s32.totalorder %s613, %s614
    %p625 = scmp.eq.s32.totalorder %s91, 0
    %p626 = por %p624, %p625
    %p627 = scmp.ne.s32.totalorder %s613, %s614
    %p628 = scmp.eq.s32.totalorder %s92, 3
    %p629 = por %p627, %p628
    %p631 = scmp.ne.s32.totalorder %s614, %s630
    %p632 = scmp.eq.s32.totalorder %s92, 0
    %p633 = por %p631, %p632
    %s634 = ssub.s32 %s86, 2
    %p635 = scmp.gt.s32.totalorder %s634, 0
    %s636 = scalar_select %p635, %s634, 0
    %s637 = ssub.s32 %s93, 2
    %p638 = scmp.gt.s32.totalorder %s637, 0
    %s639 = scalar_select %p638, %s637, 0
    %s640 = ssub.s32 %s636, %s639
    %p641 = scmp.eq.s32.totalorder %s640, 0
    %s643 = sadd.s32 %s642, 1
    %s644 = scalar_select %p641, %s642, %s643
    %p647 = pneg %p641
    %p648 = scmp.eq.s32.totalorder %s86, 3
    %p649 = por %p647, %p648
    %p650 = scmp.ne.s32.totalorder %s642, %s645
    %p651 = scmp.eq.s32.totalorder %s86, 0
    %p652 = por %p650, %p651
    %p653 = scmp.ne.s32.totalorder %s642, %s645
    %p654 = scmp.eq.s32.totalorder %s91, 3
    %p655 = por %p653, %p654
    %p656 = scmp.ne.s32.totalorder %s645, %s646
    %p657 = scmp.eq.s32.totalorder %s91, 0
    %p658 = por %p656, %p657
    %p659 = scmp.ne.s32.totalorder %s645, %s646
    %p660 = scmp.eq.s32.totalorder %s92, 3
    %p661 = por %p659, %p660
    %p663 = scmp.ne.s32.totalorder %s646, %s662
    %p664 = scmp.eq.s32.totalorder %s92, 0
    %p665 = por %p663, %p664
    %s666 = ssub.s32 %s86, 2
    %p667 = scmp.gt.s32.totalorder %s666, 0
    %s668 = scalar_select %p667, %s666, 0
    %s669 = ssub.s32 %s93, 2
    %p670 = scmp.gt.s32.totalorder %s669, 0
    %s671 = scalar_select %p670, %s669, 0
    %s672 = ssub.s32 %s668, %s671
    %p673 = scmp.eq.s32.totalorder %s672, 0
    %s675 = sadd.s32 %s674, 1
    %s676 = scalar_select %p673, %s674, %s675
    %p679 = pneg %p673
    %p680 = scmp.eq.s32.totalorder %s86, 3
    %p681 = por %p679, %p680
    %p682 = scmp.ne.s32.totalorder %s674, %s677
    %p683 = scmp.eq.s32.totalorder %s86, 0
    %p684 = por %p682, %p683
    %p685 = scmp.ne.s32.totalorder %s674, %s677
    %p686 = scmp.eq.s32.totalorder %s91, 3
    %p687 = por %p685, %p686
    %p688 = scmp.ne.s32.totalorder %s677, %s678
    %p689 = scmp.eq.s32.totalorder %s91, 0
    %p690 = por %p688, %p689
    %p691 = scmp.ne.s32.totalorder %s677, %s678
    %p692 = scmp.eq.s32.totalorder %s92, 3
    %p693 = por %p691, %p692
    %p695 = scmp.ne.s32.totalorder %s678, %s694
    %p696 = scmp.eq.s32.totalorder %s92, 0
    %p697 = por %p695, %p696
    %s698 = ssub.s32 %s86, 2
    %p699 = scmp.gt.s32.totalorder %s698, 0
    %s700 = scalar_select %p699, %s698, 0
    %s701 = ssub.s32 %s93, 2
    %p702 = scmp.gt.s32.totalorder %s701, 0
    %s703 = scalar_select %p702, %s701, 0
    %s704 = ssub.s32 %s700, %s703
    %p705 = scmp.eq.s32.totalorder %s704, 0
    %s707 = sadd.s32 %s706, 1
    %s708 = scalar_select %p705, %s706, %s707
    %p711 = pneg %p705
    %p712 = scmp.eq.s32.totalorder %s86, 3
    %p713 = por %p711, %p712
    %p714 = scmp.ne.s32.totalorder %s706, %s709
    %p715 = scmp.eq.s32.totalorder %s86, 0
    %p716 = por %p714, %p715
    %p717 = scmp.ne.s32.totalorder %s706, %s709
    %p718 = scmp.eq.s32.totalorder %s91, 3
    %p719 = por %p717, %p718
    %p720 = scmp.ne.s32.totalorder %s709, %s710
    %p721 = scmp.eq.s32.totalorder %s91, 0
    %p722 = por %p720, %p721
    %p723 = scmp.ne.s32.totalorder %s709, %s710
    %p724 = scmp.eq.s32.totalorder %s92, 3
    %p725 = por %p723, %p724
    %p727 = scmp.ne.s32.totalorder %s710, %s726
    %p728 = scmp.eq.s32.totalorder %s92, 0
    %p729 = por %p727, %p728
    %s730 = ssub.s32 %s86, 2
    %p731 = scmp.gt.s32.totalorder %s730, 0
    %s732 = scalar_select %p731, %s730, 0
    %s733 = ssub.s32 %s93, 2
    %p734 = scmp.gt.s32.totalorder %s733, 0
    %s735 = scalar_select %p734, %s733, 0
    %s736 = ssub.s32 %s732, %s735
    %p737 = scmp.eq.s32.totalorder %s736, 0
    %s739 = sadd.s32 %s738, 1
    %s740 = scalar_select %p737, %s738, %s739
    %p743 = pneg %p737
    %p744 = scmp.eq.s32.totalorder %s86, 3
    %p745 = por %p743, %p744
    %p746 = scmp.ne.s32.totalorder %s738, %s741
    %p747 = scmp.eq.s32.totalorder %s86, 0
    %p748 = por %p746, %p747
    %p749 = scmp.ne.s32.totalorder %s738, %s741
    %p750 = scmp.eq.s32.totalorder %s91, 3
    %p751 = por %p749, %p750
    %p752 = scmp.ne.s32.totalorder %s741, %s742
    %p753 = scmp.eq.s32.totalorder %s91, 0
    %p754 = por %p752, %p753
    %p755 = scmp.ne.s32.totalorder %s741, %s742
    %p756 = scmp.eq.s32.totalorder %s92, 3
    %p757 = por %p755, %p756
    %p759 = scmp.ne.s32.totalorder %s742, %s758
    %p760 = scmp.eq.s32.totalorder %s92, 0
    %p761 = por %p759, %p760
    %s762 = ssub.s32 %s86, 2
    %p763 = scmp.gt.s32.totalorder %s762, 0
    %s764 = scalar_select %p763, %s762, 0
    %s765 = ssub.s32 %s93, 2
    %p766 = scmp.gt.s32.totalorder %s765, 0
    %s767 = scalar_select %p766, %s765, 0
    %s768 = ssub.s32 %s764, %s767
    %p769 = scmp.eq.s32.totalorder %s768, 0
    %s771 = sadd.s32 %s770, 1
    %s772 = scalar_select %p769, %s770, %s771
    %p775 = pneg %p769
    %p776 = scmp.eq.s32.totalorder %s86, 3
    %p777 = por %p775, %p776
    %p778 = scmp.ne.s32.totalorder %s770, %s773
    %p779 = scmp.eq.s32.totalorder %s86, 0
    %p780 = por %p778, %p779
    %p781 = scmp.ne.s32.totalorder %s770, %s773
    %p782 = scmp.eq.s32.totalorder %s91, 3
    %p783 = por %p781, %p782
    %p784 = scmp.ne.s32.totalorder %s773, %s774
    %p785 = scmp.eq.s32.totalorder %s91, 0
    %p786 = por %p784, %p785
    %p787 = scmp.ne.s32.totalorder %s773, %s774
    %p788 = scmp.eq.s32.totalorder %s92, 3
    %p789 = por %p787, %p788
    %p791 = scmp.ne.s32.totalorder %s774, %s790
    %p792 = scmp.eq.s32.totalorder %s92, 0
    %p793 = por %p791, %p792
    %s794 = ssub.s32 %s86, 2
    %p795 = scmp.gt.s32.totalorder %s794, 0
    %s796 = scalar_select %p795, %s794, 0
    %s797 = ssub.s32 %s93, 2
    %p798 = scmp.gt.s32.totalorder %s797, 0
    %s799 = scalar_select %p798, %s797, 0
    %s800 = ssub.s32 %s796, %s799
    %p801 = scmp.eq.s32.totalorder %s800, 0
    %s803 = sadd.s32 %s802, 1
    %s804 = scalar_select %p801, %s802, %s803
    %p807 = pneg %p801
    %p808 = scmp.eq.s32.totalorder %s86, 3
    %p809 = por %p807, %p808
    %p810 = scmp.ne.s32.totalorder %s802, %s805
    %p811 = scmp.eq.s32.totalorder %s86, 0
    %p812 = por %p810, %p811
    %p813 = scmp.ne.s32.totalorder %s802, %s805
    %p814 = scmp.eq.s32.totalorder %s91, 3
    %p815 = por %p813, %p814
    %p816 = scmp.ne.s32.totalorder %s805, %s806
    %p817 = scmp.eq.s32.totalorder %s91, 0
    %p818 = por %p816, %p817
    %p819 = scmp.ne.s32.totalorder %s805, %s806
    %p820 = scmp.eq.s32.totalorder %s92, 3
    %p821 = por %p819, %p820
    %p823 = scmp.ne.s32.totalorder %s806, %s822
    %p824 = scmp.eq.s32.totalorder %s92, 0
    %p825 = por %p823, %p824
    %s826 = ssub.s32 %s86, 2
    %p827 = scmp.gt.s32.totalorder %s826, 0
    %s828 = scalar_select %p827, %s826, 0
    %s829 = ssub.s32 %s93, 2
    %p830 = scmp.gt.s32.totalorder %s829, 0
    %s831 = scalar_select %p830, %s829, 0
    %s832 = ssub.s32 %s828, %s831
    %p833 = scmp.eq.s32.totalorder %s832, 0
    %s835 = sadd.s32 %s834, 1
    %s836 = scalar_select %p833, %s834, %s835
    %p839 = pneg %p833
    %p840 = scmp.eq.s32.totalorder %s86, 3
    %p841 = por %p839, %p840
    %p842 = scmp.ne.s32.totalorder %s834, %s837
    %p843 = scmp.eq.s32.totalorder %s86, 0
    %p844 = por %p842, %p843
    %p845 = scmp.ne.s32.totalorder %s834, %s837
    %p846 = scmp.eq.s32.totalorder %s91, 3
    %p847 = por %p845, %p846
    %p848 = scmp.ne.s32.totalorder %s837, %s838
    %p849 = scmp.eq.s32.totalorder %s91, 0
    %p850 = por %p848, %p849
    %p851 = scmp.ne.s32.totalorder %s837, %s838
    %p852 = scmp.eq.s32.totalorder %s92, 3
    %p853 = por %p851, %p852
    %p855 = scmp.ne.s32.totalorder %s838, %s854
    %p856 = scmp.eq.s32.totalorder %s92, 0
    %p857 = por %p855, %p856
    %s858 = ssub.s32 %s86, 2
    %p859 = scmp.gt.s32.totalorder %s858, 0
    %s860 = scalar_select %p859, %s858, 0
    %s861 = ssub.s32 %s93, 2
    %p862 = scmp.gt.s32.totalorder %s861, 0
    %s863 = scalar_select %p862, %s861, 0
    %s864 = ssub.s32 %s860, %s863
    %p865 = scmp.eq.s32.totalorder %s864, 0
    %s867 = sadd.s32 %s866, 1
    %s868 = scalar_select %p865, %s866, %s867
    %p871 = pneg %p865
    %p872 = scmp.eq.s32.totalorder %s86, 3
    %p873 = por %p871, %p872
    %p874 = scmp.ne.s32.totalorder %s866, %s869
    %p875 = scmp.eq.s32.totalorder %s86, 0
    %p876 = por %p874, %p875
    %p877 = scmp.ne.s32.totalorder %s866, %s869
    %p878 = scmp.eq.s32.totalorder %s91, 3
    %p879 = por %p877, %p878
    %p880 = scmp.ne.s32.totalorder %s869, %s870
    %p881 = scmp.eq.s32.totalorder %s91, 0
    %p882 = por %p880, %p881
    %p883 = scmp.ne.s32.totalorder %s869, %s870
    %p884 = scmp.eq.s32.totalorder %s92, 3
    %p885 = por %p883, %p884
    %p887 = scmp.ne.s32.totalorder %s870, %s886
    %p888 = scmp.eq.s32.totalorder %s92, 0
    %p889 = por %p887, %p888
    %s890 = ssub.s32 %s86, 2
    %p891 = scmp.gt.s32.totalorder %s890, 0
    %s892 = scalar_select %p891, %s890, 0
    %s893 = ssub.s32 %s93, 2
    %p894 = scmp.gt.s32.totalorder %s893, 0
    %s895 = scalar_select %p894, %s893, 0
    %s896 = ssub.s32 %s892, %s895
    %p897 = scmp.eq.s32.totalorder %s896, 0
    %s899 = sadd.s32 %s898, 1
    %s900 = scalar_select %p897, %s898, %s899
    %p903 = pneg %p897
    %p904 = scmp.eq.s32.totalorder %s86, 3
    %p905 = por %p903, %p904
    %p906 = scmp.ne.s32.totalorder %s898, %s901
    %p907 = scmp.eq.s32.totalorder %s86, 0
    %p908 = por %p906, %p907
    %p909 = scmp.ne.s32.totalorder %s898, %s901
    %p910 = scmp.eq.s32.totalorder %s91, 3
    %p911 = por %p909, %p910
    %p912 = scmp.ne.s32.totalorder %s901, %s902
    %p913 = scmp.eq.s32.totalorder %s91, 0
    %p914 = por %p912, %p913
    %p915 = scmp.ne.s32.totalorder %s901, %s902
    %p916 = scmp.eq.s32.totalorder %s92, 3
    %p917 = por %p915, %p916
    %p919 = scmp.ne.s32.totalorder %s902, %s918
    %p920 = scmp.eq.s32.totalorder %s92, 0
    %p921 = por %p919, %p920
    %s922 = ssub.s32 %s86, 2
    %p923 = scmp.gt.s32.totalorder %s922, 0
    %s924 = scalar_select %p923, %s922, 0
    %s925 = ssub.s32 %s93, 2
    %p926 = scmp.gt.s32.totalorder %s925, 0
    %s927 = scalar_select %p926, %s925, 0
    %s928 = ssub.s32 %s924, %s927
    %p929 = scmp.eq.s32.totalorder %s928, 0
    %s931 = sadd.s32 %s930, 1
    %s932 = scalar_select %p929, %s930, %s931
    %p935 = pneg %p929
    %p936 = scmp.eq.s32.totalorder %s86, 3
    %p937 = por %p935, %p936
    %p938 = scmp.ne.s32.totalorder %s930, %s933
    %p939 = scmp.eq.s32.totalorder %s86, 0
    %p940 = por %p938, %p939
    %p941 = scmp.ne.s32.totalorder %s930, %s933
    %p942 = scmp.eq.s32.totalorder %s91, 3
    %p943 = por %p941, %p942
    %p944 = scmp.ne.s32.totalorder %s933, %s934
    %p945 = scmp.eq.s32.totalorder %s91, 0
    %p946 = por %p944, %p945
    %p947 = scmp.ne.s32.totalorder %s933, %s934
    %p948 = scmp.eq.s32.totalorder %s92, 3
    %p949 = por %p947, %p948
    %p951 = scmp.ne.s32.totalorder %s934, %s950
    %p952 = scmp.eq.s32.totalorder %s92, 0
    %p953 = por %p951, %p952
    %s954 = ssub.s32 %s86, 2
    %p955 = scmp.gt.s32.totalorder %s954, 0
    %s956 = scalar_select %p955, %s954, 0
    %s957 = ssub.s32 %s93, 2
    %p958 = scmp.gt.s32.totalorder %s957, 0
    %s959 = scalar_select %p958, %s957, 0
    %s960 = ssub.s32 %s956, %s959
    %p961 = scmp.eq.s32.totalorder %s960, 0
    %s963 = sadd.s32 %s962, 1
    %s964 = scalar_select %p961, %s962, %s963
    %p967 = pneg %p961
    %p968 = scmp.eq.s32.totalorder %s86, 3
    %p969 = por %p967, %p968
    %p970 = scmp.ne.s32.totalorder %s962, %s965
    %p971 = scmp.eq.s32.totalorder %s86, 0
    %p972 = por %p970, %p971
    %p973 = scmp.ne.s32.totalorder %s962, %s965
    %p974 = scmp.eq.s32.totalorder %s91, 3
    %p975 = por %p973, %p974
    %p976 = scmp.ne.s32.totalorder %s965, %s966
    %p977 = scmp.eq.s32.totalorder %s91, 0
    %p978 = por %p976, %p977
    %p979 = scmp.ne.s32.totalorder %s965, %s966
    %p980 = scmp.eq.s32.totalorder %s92, 3
    %p981 = por %p979, %p980
    %p983 = scmp.ne.s32.totalorder %s966, %s982
    %p984 = scmp.eq.s32.totalorder %s92, 0
    %p985 = por %p983, %p984
    %s986 = ssub.s32 %s86, 2
    %p987 = scmp.gt.s32.totalorder %s986, 0
    %s988 = scalar_select %p987, %s986, 0
    %s989 = ssub.s32 %s93, 2
    %p990 = scmp.gt.s32.totalorder %s989, 0
    %s991 = scalar_select %p990, %s989, 0
    %s992 = ssub.s32 %s988, %s991
    %p993 = scmp.eq.s32.totalorder %s992, 0
    %s995 = sadd.s32 %s994, 1
    %s996 = scalar_select %p993, %s994, %s995
    %p999 = pneg %p993
    %p1000 = scmp.eq.s32.totalorder %s86, 3
    %p1001 = por %p999, %p1000
    %p1002 = scmp.ne.s32.totalorder %s994, %s997
    %p1003 = scmp.eq.s32.totalorder %s86, 0
    %p1004 = por %p1002, %p1003
    %p1005 = scmp.ne.s32.totalorder %s994, %s997
    %p1006 = scmp.eq.s32.totalorder %s91, 3
    %p1007 = por %p1005, %p1006
    %p1008 = scmp.ne.s32.totalorder %s997, %s998
    %p1009 = scmp.eq.s32.totalorder %s91, 0
    %p1010 = por %p1008, %p1009
    %p1011 = scmp.ne.s32.totalorder %s997, %s998
    %p1012 = scmp.eq.s32.totalorder %s92, 3
    %p1013 = por %p1011, %p1012
    %p1015 = scmp.ne.s32.totalorder %s998, %s1014
    %p1016 = scmp.eq.s32.totalorder %s92, 0
    %p1017 = por %p1015, %p1016
    %s1018 = ssub.s32 %s86, 2
    %p1019 = scmp.gt.s32.totalorder %s1018, 0
    %s1020 = scalar_select %p1019, %s1018, 0
    %s1021 = ssub.s32 %s93, 2
    %p1022 = scmp.gt.s32.totalorder %s1021, 0
    %s1023 = scalar_select %p1022, %s1021, 0
    %s1024 = ssub.s32 %s1020, %s1023
    %p1025 = scmp.eq.s32.totalorder %s1024, 0
    %s1027 = sadd.s32 %s1026, 1
    %s1028 = scalar_select %p1025, %s1026, %s1027
    %p1031 = pneg %p1025
    %p1032 = scmp.eq.s32.totalorder %s86, 3
    %p1033 = por %p1031, %p1032
    %p1034 = scmp.ne.s32.totalorder %s1026, %s1029
    %p1035 = scmp.eq.s32.totalorder %s86, 0
    %p1036 = por %p1034, %p1035
    %p1037 = scmp.ne.s32.totalorder %s1026, %s1029
    %p1038 = scmp.eq.s32.totalorder %s91, 3
    %p1039 = por %p1037, %p1038
    %p1040 = scmp.ne.s32.totalorder %s1029, %s1030
    %p1041 = scmp.eq.s32.totalorder %s91, 0
    %p1042 = por %p1040, %p1041
    %p1043 = scmp.ne.s32.totalorder %s1029, %s1030
    %p1044 = scmp.eq.s32.totalorder %s92, 3
    %p1045 = por %p1043, %p1044
    %p1047 = scmp.ne.s32.totalorder %s1030, %s1046
    %p1048 = scmp.eq.s32.totalorder %s92, 0
    %p1049 = por %p1047, %p1048
    %s1050 = ssub.s32 %s86, 2
    %p1051 = scmp.gt.s32.totalorder %s1050, 0
    %s1052 = scalar_select %p1051, %s1050, 0
    %s1053 = ssub.s32 %s93, 2
    %p1054 = scmp.gt.s32.totalorder %s1053, 0
    %s1055 = scalar_select %p1054, %s1053, 0
    %s1056 = ssub.s32 %s1052, %s1055
    %p1057 = scmp.eq.s32.totalorder %s1056, 0
    %s1059 = sadd.s32 %s1058, 1
    %s1060 = scalar_select %p1057, %s1058, %s1059
    %p1063 = pneg %p1057
    %p1064 = scmp.eq.s32.totalorder %s86, 3
    %p1065 = por %p1063, %p1064
    %p1066 = scmp.ne.s32.totalorder %s1058, %s1061
    %p1067 = scmp.eq.s32.totalorder %s86, 0
    %p1068 = por %p1066, %p1067
    %p1069 = scmp.ne.s32.totalorder %s1058, %s1061
    %p1070 = scmp.eq.s32.totalorder %s91, 3
    %p1071 = por %p1069, %p1070
    %p1072 = scmp.ne.s32.totalorder %s1061, %s1062
    %p1073 = scmp.eq.s32.totalorder %s91, 0
    %p1074 = por %p1072, %p1073
    %p1075 = scmp.ne.s32.totalorder %s1061, %s1062
    %p1076 = scmp.eq.s32.totalorder %s92, 3
    %p1077 = por %p1075, %p1076
    %p1079 = scmp.ne.s32.totalorder %s1062, %s1078
    %p1080 = scmp.eq.s32.totalorder %s92, 0
    %p1081 = por %p1079, %p1080
    %s1082 = ssub.s32 %s86, 2
    %p1083 = scmp.gt.s32.totalorder %s1082, 0
    %s1084 = scalar_select %p1083, %s1082, 0
    %s1085 = ssub.s32 %s93, 2
    %p1086 = scmp.gt.s32.totalorder %s1085, 0
    %s1087 = scalar_select %p1086, %s1085, 0
    %s1088 = ssub.s32 %s1084, %s1087
    %p1089 = scmp.eq.s32.totalorder %s1088, 0
    %s1091 = sadd.s32 %s1090, 1
    %s1092 = scalar_select %p1089, %s1090, %s1091
    %p1095 = pneg %p1089
    %p1096 = scmp.eq.s32.totalorder %s86, 3
    %p1097 = por %p1095, %p1096
    %p1098 = scmp.ne.s32.totalorder %s1090, %s1093
    %p1099 = scmp.eq.s32.totalorder %s86, 0
    %p1100 = por %p1098, %p1099
    %p1101 = scmp.ne.s32.totalorder %s1090, %s1093
    %p1102 = scmp.eq.s32.totalorder %s91, 3
    %p1103 = por %p1101, %p1102
    %p1104 = scmp.ne.s32.totalorder %s1093, %s1094
    %p1105 = scmp.eq.s32.totalorder %s91, 0
    %p1106 = por %p1104, %p1105
    %p1107 = scmp.ne.s32.totalorder %s1093, %s1094
    %p1108 = scmp.eq.s32.totalorder %s92, 3
    %p1109 = por %p1107, %p1108
    %p1111 = scmp.ne.s32.totalorder %s1094, %s1110
    %p1112 = scmp.eq.s32.totalorder %s92, 0
    %p1113 = por %p1111, %p1112
    %s1114 = ssub.s32 %s86, 2
    %p1115 = scmp.gt.s32.totalorder %s1114, 0
    %s1116 = scalar_select %p1115, %s1114, 0
    %s1117 = ssub.s32 %s93, 2
    %p1118 = scmp.gt.s32.totalorder %s1117, 0
    %s1119 = scalar_select %p1118, %s1117, 0
    %s1120 = ssub.s32 %s1116, %s1119
    %p1121 = scmp.eq.s32.totalorder %s1120, 0
    %s1123 = sadd.s32 %s1122, 1
    %s1124 = scalar_select %p1121, %s1122, %s1123
    %p1127 = pneg %p1121
    %p1128 = scmp.eq.s32.totalorder %s86, 3
    %p1129 = por %p1127, %p1128
    %p1130 = scmp.ne.s32.totalorder %s1122, %s1125
    %p1131 = scmp.eq.s32.totalorder %s86, 0
    %p1132 = por %p1130, %p1131
    %p1133 = scmp.ne.s32.totalorder %s1122, %s1125
    %p1134 = scmp.eq.s32.totalorder %s91, 3
    %p1135 = por %p1133, %p1134
    %p1136 = scmp.ne.s32.totalorder %s1125, %s1126
    %p1137 = scmp.eq.s32.totalorder %s91, 0
    %p1138 = por %p1136, %p1137
    %p1139 = scmp.ne.s32.totalorder %s1125, %s1126
    %p1140 = scmp.eq.s32.totalorder %s92, 3
    %p1141 = por %p1139, %p1140
    %p1143 = scmp.ne.s32.totalorder %s1126, %s1142
    %p1144 = scmp.eq.s32.totalorder %s92, 0
    %p1145 = por %p1143, %p1144
    %s1146 = ssub.s32 %s86, 2
    %p1147 = scmp.gt.s32.totalorder %s1146, 0
    %s1148 = scalar_select %p1147, %s1146, 0
    %s1149 = ssub.s32 %s93, 2
    %p1150 = scmp.gt.s32.totalorder %s1149, 0
    %s1151 = scalar_select %p1150, %s1149, 0
    %s1152 = ssub.s32 %s1148, %s1151
    %p1153 = scmp.eq.s32.totalorder %s1152, 0
    %s1155 = sadd.s32 %s1154, 1
    %s1156 = scalar_select %p1153, %s1154, %s1155
    %p1159 = pneg %p1153
    %p1160 = scmp.eq.s32.totalorder %s86, 3
    %p1161 = por %p1159, %p1160
    %p1162 = scmp.ne.s32.totalorder %s1154, %s1157
    %p1163 = scmp.eq.s32.totalorder %s86, 0
    %p1164 = por %p1162, %p1163
    %p1165 = scmp.ne.s32.totalorder %s1154, %s1157
    %p1166 = scmp.eq.s32.totalorder %s91, 3
    %p1167 = por %p1165, %p1166
    %p1168 = scmp.ne.s32.totalorder %s1157, %s1158
    %p1169 = scmp.eq.s32.totalorder %s91, 0
    %p1170 = por %p1168, %p1169
    %p1171 = scmp.ne.s32.totalorder %s1157, %s1158
    %p1172 = scmp.eq.s32.totalorder %s92, 3
    %p1173 = por %p1171, %p1172
    %p1175 = scmp.ne.s32.totalorder %s1158, %s1174
    %p1176 = scmp.eq.s32.totalorder %s92, 0
    %p1177 = por %p1175, %p1176
    %s1179 = sadd.s32 %s1178, 1
    %p1182 = scmp.eq.s32.totalorder %s86, 3
    %p1183 = scmp.ne.s32.totalorder %s1178, %s1180
    %p1184 = scmp.eq.s32.totalorder %s86, 0
    %p1185 = por %p1183, %p1184
    %p1186 = scmp.ne.s32.totalorder %s1178, %s1180
    %p1187 = scmp.eq.s32.totalorder %s91, 3
    %p1188 = por %p1186, %p1187
    %p1189 = scmp.ne.s32.totalorder %s1180, %s1181
    %p1190 = scmp.eq.s32.totalorder %s91, 0
    %p1191 = por %p1189, %p1190
    %p1192 = scmp.ne.s32.totalorder %s1180, %s1181
    %p1193 = scmp.eq.s32.totalorder %s92, 3
    %p1194 = por %p1192, %p1193
    %p1196 = scmp.ne.s32.totalorder %s1181, %s1195
    %p1197 = scmp.eq.s32.totalorder %s92, 0
    %p1198 = por %p1196, %p1197
    %s1200 = sadd.s32 %s1199, 1
    %p1203 = scmp.eq.s32.totalorder %s86, 3
    %p1204 = scmp.ne.s32.totalorder %s1199, %s1201
    %p1205 = scmp.eq.s32.totalorder %s86, 0
    %p1206 = por %p1204, %p1205
    %p1207 = scmp.ne.s32.totalorder %s1199, %s1201
    %p1208 = scmp.eq.s32.totalorder %s91, 3
    %p1209 = por %p1207, %p1208
    %p1210 = scmp.ne.s32.totalorder %s1201, %s1202
    %p1211 = scmp.eq.s32.totalorder %s91, 0
    %p1212 = por %p1210, %p1211
    %p1213 = scmp.ne.s32.totalorder %s1201, %s1202
    %p1214 = scmp.eq.s32.totalorder %s92, 3
    %p1215 = por %p1213, %p1214
    %p1217 = scmp.ne.s32.totalorder %s1202, %s1216
    %p1218 = scmp.eq.s32.totalorder %s92, 0
    %p1219 = por %p1217, %p1218
    %s1221 = sadd.s32 %s1220, 1
    %p1224 = scmp.eq.s32.totalorder %s86, 3
    %p1225 = scmp.ne.s32.totalorder %s1220, %s1222
    %p1226 = scmp.eq.s32.totalorder %s86, 0
    %p1227 = por %p1225, %p1226
    %p1228 = scmp.ne.s32.totalorder %s1220, %s1222
    %p1229 = scmp.eq.s32.totalorder %s91, 3
    %p1230 = por %p1228, %p1229
    %p1231 = scmp.ne.s32.totalorder %s1222, %s1223
    %p1232 = scmp.eq.s32.totalorder %s91, 0
    %p1233 = por %p1231, %p1232
    %p1234 = scmp.ne.s32.totalorder %s1222, %s1223
    %p1235 = scmp.eq.s32.totalorder %s92, 3
    %p1236 = por %p1234, %p1235
    %p1238 = scmp.ne.s32.totalorder %s1223, %s1237
    %p1239 = scmp.eq.s32.totalorder %s92, 0
    %p1240 = por %p1238, %p1239
    %s1242 = sadd.s32 %s1241, 1
    %p1245 = scmp.eq.s32.totalorder %s86, 3
    %p1246 = scmp.ne.s32.totalorder %s1241, %s1243
    %p1247 = scmp.eq.s32.totalorder %s86, 0
    %p1248 = por %p1246, %p1247
    %p1249 = scmp.ne.s32.totalorder %s1241, %s1243
    %p1250 = scmp.eq.s32.totalorder %s91, 3
    %p1251 = por %p1249, %p1250
    %p1252 = scmp.ne.s32.totalorder %s1243, %s1244
    %p1253 = scmp.eq.s32.totalorder %s91, 0
    %p1254 = por %p1252, %p1253
    %p1255 = scmp.ne.s32.totalorder %s1243, %s1244
    %p1256 = scmp.eq.s32.totalorder %s92, 3
    %p1257 = por %p1255, %p1256
    %p1259 = scmp.ne.s32.totalorder %s1244, %s1258
    %p1260 = scmp.eq.s32.totalorder %s92, 0
    %p1261 = por %p1259, %p1260
    %p1262 = scmp.le.s32.totalorder 1, %s86
    %p1263 = scmp.lt.s32.totalorder %s86, 5
    %p1264 = pnand %p1262, %p1263
    %p1265 = pneg %p1264
    // Predicated region
    $region9: #{seq2seq_forward.1} parent=5 // pred_check
      _
    $region10: #{seq2seq_forward.1} parent=5 // pred_check_branch
      %1267 = sbr.rel (%p1264) target = $region12
    $region11: #{seq2seq_forward.1} parent=5 // pred_region
      %s1268 = ssub.s32 %s86, 1
      // Predicated region
      $region13: #{seq2seq_forward.1} parent=11 // pred_check
        %p1269 = pneg %p107
      $region14: #{seq2seq_forward.1} parent=11 // pred_check_branch
        %1271 = sbr.rel (%p1269) target = $region16
      $region15: #{seq2seq_forward.1} parent=11 // pred_region
        _
      $region16: #{seq2seq_forward.1} parent=11 // pred_fallthru
        _
      // Predicated region
      $region17: #{seq2seq_forward.1} parent=11 // pred_check
        %p1272 = pneg %p128
      $region18: #{seq2seq_forward.1} parent=11 // pred_check_branch
        %1274 = sbr.rel (%p1272) target = $region20
      $region19: #{seq2seq_forward.1} parent=11 // pred_region
        _
      $region20: #{seq2seq_forward.1} parent=11 // pred_fallthru
        _
      // Predicated region
      $region21: #{seq2seq_forward.1} parent=11 // pred_check
        %p1275 = pneg %p149
      $region22: #{seq2seq_forward.1} parent=11 // pred_check_branch
        %1277 = sbr.rel (%p1275) target = $region24
      $region23: #{seq2seq_forward.1} parent=11 // pred_region
        _
      $region24: #{seq2seq_forward.1} parent=11 // pred_fallthru
        _
      // Predicated region
      $region25: #{seq2seq_forward.1} parent=11 // pred_check
        %p1278 = pneg %p170
      $region26: #{seq2seq_forward.1} parent=11 // pred_check_branch
        %1280 = sbr.rel (%p1278) target = $region28
      $region27: #{seq2seq_forward.1} parent=11 // pred_region
        _
      $region28: #{seq2seq_forward.1} parent=11 // pred_fallthru
        _
      // Predicated region
      $region29: #{seq2seq_forward.1} parent=11 // pred_check
        %p1281 = pneg %p1191
      $region30: #{seq2seq_forward.1} parent=11 // pred_check_branch
        %1283 = sbr.rel (%p1281) target = $region32
      $region31: #{seq2seq_forward.1} parent=11 // pred_region
        _
      $region32: #{seq2seq_forward.1} parent=11 // pred_fallthru
        _
      // Predicated region
      $region33: #{seq2seq_forward.1} parent=11 // pred_check
        %p1284 = pneg %p1212
      $region34: #{seq2seq_forward.1} parent=11 // pred_check_branch
        %1286 = sbr.rel (%p1284) target = $region36
      $region35: #{seq2seq_forward.1} parent=11 // pred_region
        _
      $region36: #{seq2seq_forward.1} parent=11 // pred_fallthru
        _
    $region12: #{seq2seq_forward.1} parent=5 // pred_fallthru
      _
    %p1287 = scmp.lt.s32.totalorder %s86, 4
    // Predicated region
    $region37: #{seq2seq_forward.1} parent=5 // pred_check
      %p1288 = pneg %p1287
    $region38: #{seq2seq_forward.1} parent=5 // pred_check_branch
      %1290 = sbr.rel (%p1288) target = $region40
    $region39: #{seq2seq_forward.1} parent=5 // pred_region
      // Predicated region
      $region41: #{seq2seq_forward.1} parent=39 // pred_check
        %p1291 = pneg %p194
      $region42: #{seq2seq_forward.1} parent=39 // pred_check_branch
        %1293 = sbr.rel (%p1291) target = $region44
      $region43: #{seq2seq_forward.1} parent=39 // pred_region
        %p1294 = scmp.lt.s32.totalorder %s86, 1
        %s1295 = scalar_select %p1294, %s86, 1
        %p1296 = scmp.lt.s32.totalorder %s1295, 1
        %s1297 = scalar_select %p1296, %s1295, 1
        %s1298 = smul.addr %s1297, 4
        %s1299 = smul.addr %s1298, 4
        %s1300 = scalar_lea.vmem %s9, %s1299
        %p1301 = scmp.lt.s32.totalorder %s86, 1
        %s1302 = scalar_select %p1301, %s86, 1
      $region44: #{seq2seq_forward.1} parent=39 // pred_fallthru
        _
      // Predicated region
      $region45: #{seq2seq_forward.1} parent=39 // pred_check
        %p1303 = pneg %p224
      $region46: #{seq2seq_forward.1} parent=39 // pred_check_branch
        %1305 = sbr.rel (%p1303) target = $region48
      $region47: #{seq2seq_forward.1} parent=39 // pred_region
        %p1306 = scmp.lt.s32.totalorder %s86, 1
        %s1307 = scalar_select %p1306, %s86, 1
        %p1308 = scmp.lt.s32.totalorder %s1307, 1
        %s1309 = scalar_select %p1308, %s1307, 1
        %s1310 = scalar_lea.vmem %s11, %s1309
        %p1311 = scmp.lt.s32.totalorder %s86, 1
        %s1312 = scalar_select %p1311, %s86, 1
      $region48: #{seq2seq_forward.1} parent=39 // pred_fallthru
        _
      // Predicated region
      $region49: #{seq2seq_forward.1} parent=39 // pred_check
        %p1313 = pneg %p254
      $region50: #{seq2seq_forward.1} parent=39 // pred_check_branch
        %1315 = sbr.rel (%p1313) target = $region52
      $region51: #{seq2seq_forward.1} parent=39 // pred_region
        %p1316 = scmp.lt.s32.totalorder %s86, 1
        %s1317 = scalar_select %p1316, %s86, 1
        %p1318 = scmp.lt.s32.totalorder %s1317, 1
        %s1319 = scalar_select %p1318, %s1317, 1
        %s1320 = smul.addr %s1319, 4
        %s1321 = smul.addr %s1320, 4
        %s1322 = scalar_lea.vmem %s13, %s1321
        %p1323 = scmp.lt.s32.totalorder %s86, 1
        %s1324 = scalar_select %p1323, %s86, 1
      $region52: #{seq2seq_forward.1} parent=39 // pred_fallthru
        _
      // Predicated region
      $region53: #{seq2seq_forward.1} parent=39 // pred_check
        %p1325 = pneg %p284
      $region54: #{seq2seq_forward.1} parent=39 // pred_check_branch
        %1327 = sbr.rel (%p1325) target = $region56
      $region55: #{seq2seq_forward.1} parent=39 // pred_region
        %p1328 = scmp.lt.s32.totalorder %s86, 1
        %s1329 = scalar_select %p1328, %s86, 1
        %p1330 = scmp.lt.s32.totalorder %s1329, 1
        %s1331 = scalar_select %p1330, %s1329, 1
        %s1332 = scalar_lea.vmem %s15, %s1331
        %p1333 = scmp.lt.s32.totalorder %s86, 1
        %s1334 = scalar_select %p1333, %s86, 1
      $region56: #{seq2seq_forward.1} parent=39 // pred_fallthru
        _
      // Predicated region
      $region57: #{seq2seq_forward.1} parent=39 // pred_check
        %p1335 = pneg %p314
      $region58: #{seq2seq_forward.1} parent=39 // pred_check_branch
        %1337 = sbr.rel (%p1335) target = $region60
      $region59: #{seq2seq_forward.1} parent=39 // pred_region
        %p1338 = scmp.lt.s32.totalorder %s86, 1
        %s1339 = scalar_select %p1338, %s86, 1
        %p1340 = scmp.lt.s32.totalorder %s1339, 1
        %s1341 = scalar_select %p1340, %s1339, 1
        %s1342 = scalar_lea.vmem %s17, %s1341
        %p1343 = scmp.lt.s32.totalorder %s86, 1
        %s1344 = scalar_select %p1343, %s86, 1
      $region60: #{seq2seq_forward.1} parent=39 // pred_fallthru
        _
      // Predicated region
      $region61: #{seq2seq_forward.1} parent=39 // pred_check
        %p1345 = pneg %p344
      $region62: #{seq2seq_forward.1} parent=39 // pred_check_branch
        %1347 = sbr.rel (%p1345) target = $region64
      $region63: #{seq2seq_forward.1} parent=39 // pred_region
        %p1348 = scmp.lt.s32.totalorder %s86, 1
        %s1349 = scalar_select %p1348, %s86, 1
        %p1350 = scmp.lt.s32.totalorder %s1349, 1
        %s1351 = scalar_select %p1350, %s1349, 1
        %s1352 = scalar_lea.vmem %s19, %s1351
        %p1353 = scmp.lt.s32.totalorder %s86, 1
        %s1354 = scalar_select %p1353, %s86, 1
      $region64: #{seq2seq_forward.1} parent=39 // pred_fallthru
        _
      // Predicated region
      $region65: #{seq2seq_forward.1} parent=39 // pred_check
        %p1355 = pneg %p374
      $region66: #{seq2seq_forward.1} parent=39 // pred_check_branch
        %1357 = sbr.rel (%p1355) target = $region68
      $region67: #{seq2seq_forward.1} parent=39 // pred_region
        %p1358 = scmp.lt.s32.totalorder %s86, 1
        %s1359 = scalar_select %p1358, %s86, 1
        %p1360 = scmp.lt.s32.totalorder %s1359, 1
        %s1361 = scalar_select %p1360, %s1359, 1
        %s1362 = smul.addr %s1361, 4
        %s1363 = smul.addr %s1362, 4
        %s1364 = scalar_lea.vmem %s21, %s1363
        %p1365 = scmp.lt.s32.totalorder %s86, 1
        %s1366 = scalar_select %p1365, %s86, 1
      $region68: #{seq2seq_forward.1} parent=39 // pred_fallthru
        _
      // Predicated region
      $region69: #{seq2seq_forward.1} parent=39 // pred_check
        %p1367 = pneg %p404
      $region70: #{seq2seq_forward.1} parent=39 // pred_check_branch
        %1369 = sbr.rel (%p1367) target = $region72
      $region71: #{seq2seq_forward.1} parent=39 // pred_region
        %p1370 = scmp.lt.s32.totalorder %s86, 1
        %s1371 = scalar_select %p1370, %s86, 1
        %p1372 = scmp.lt.s32.totalorder %s1371, 1
        %s1373 = scalar_select %p1372, %s1371, 1
        %s1374 = scalar_lea.vmem %s23, %s1373
        %p1375 = scmp.lt.s32.totalorder %s86, 1
        %s1376 = scalar_select %p1375, %s86, 1
      $region72: #{seq2seq_forward.1} parent=39 // pred_fallthru
        _
      // Predicated region
      $region73: #{seq2seq_forward.1} parent=39 // pred_check
        %p1377 = pneg %p434
      $region74: #{seq2seq_forward.1} parent=39 // pred_check_branch
        %1379 = sbr.rel (%p1377) target = $region76
      $region75: #{seq2seq_forward.1} parent=39 // pred_region
        %p1380 = scmp.lt.s32.totalorder %s86, 1
        %s1381 = scalar_select %p1380, %s86, 1
        %p1382 = scmp.lt.s32.totalorder %s1381, 1
        %s1383 = scalar_select %p1382, %s1381, 1
        %s1384 = smul.addr %s1383, 8
        %s1385 = smul.addr %s1384, 4
        %s1386 = scalar_lea.vmem %s25, %s1385
        %p1387 = scmp.lt.s32.totalorder %s86, 1
        %s1388 = scalar_select %p1387, %s86, 1
      $region76: #{seq2seq_forward.1} parent=39 // pred_fallthru
        _
      // Predicated region
      $region77: #{seq2seq_forward.1} parent=39 // pred_check
        %p1389 = pneg %p464
      $region78: #{seq2seq_forward.1} parent=39 // pred_check_branch
        %1391 = sbr.rel (%p1389) target = $region80
      $region79: #{seq2seq_forward.1} parent=39 // pred_region
        %p1392 = scmp.lt.s32.totalorder %s86, 1
        %s1393 = scalar_select %p1392, %s86, 1
        %p1394 = scmp.lt.s32.totalorder %s1393, 1
        %s1395 = scalar_select %p1394, %s1393, 1
        %s1396 = scalar_lea.vmem %s27, %s1395
        %p1397 = scmp.lt.s32.totalorder %s86, 1
        %s1398 = scalar_select %p1397, %s86, 1
      $region80: #{seq2seq_forward.1} parent=39 // pred_fallthru
        _
      // Predicated region
      $region81: #{seq2seq_forward.1} parent=39 // pred_check
        %p1399 = pneg %p494
      $region82: #{seq2seq_forward.1} parent=39 // pred_check_branch
        %1401 = sbr.rel (%p1399) target = $region84
      $region83: #{seq2seq_forward.1} parent=39 // pred_region
        %p1402 = scmp.lt.s32.totalorder %s86, 1
        %s1403 = scalar_select %p1402, %s86, 1
        %p1404 = scmp.lt.s32.totalorder %s1403, 1
        %s1405 = scalar_select %p1404, %s1403, 1
        %s1406 = scalar_lea.vmem %s29, %s1405
        %p1407 = scmp.lt.s32.totalorder %s86, 1
        %s1408 = scalar_select %p1407, %s86, 1
      $region84: #{seq2seq_forward.1} parent=39 // pred_fallthru
        _
      // Predicated region
      $region85: #{seq2seq_forward.1} parent=39 // pred_check
        %p1409 = pneg %p524
      $region86: #{seq2seq_forward.1} parent=39 // pred_check_branch
        %1411 = sbr.rel (%p1409) target = $region88
      $region87: #{seq2seq_forward.1} parent=39 // pred_region
        %p1412 = scmp.lt.s32.totalorder %s86, 1
        %s1413 = scalar_select %p1412, %s86, 1
        %p1414 = scmp.lt.s32.totalorder %s1413, 1
        %s1415 = scalar_select %p1414, %s1413, 1
        %s1416 = scalar_lea.vmem %s31, %s1415
        %p1417 = scmp.lt.s32.totalorder %s86, 1
        %s1418 = scalar_select %p1417, %s86, 1
      $region88: #{seq2seq_forward.1} parent=39 // pred_fallthru
        _
      // Predicated region
      $region89: #{seq2seq_forward.1} parent=39 // pred_check
        %p1419 = pneg %p556
      $region90: #{seq2seq_forward.1} parent=39 // pred_check_branch
        %1421 = sbr.rel (%p1419) target = $region92
      $region91: #{seq2seq_forward.1} parent=39 // pred_region
        %s1422 = ssub.s32 %s86, 2
        %p1423 = scmp.gt.s32.totalorder %s1422, 0
        %s1424 = scalar_select %p1423, %s1422, 0
        %p1425 = scmp.lt.s32.totalorder %s1424, 1
        %s1426 = scalar_select %p1425, %s1424, 1
        %s1427 = smul.addr %s1426, 4
        %s1428 = smul.addr %s1427, 4
        %s1429 = scalar_lea.vmem %s33, %s1428
        %s1430 = ssub.s32 %s86, 2
        %p1431 = scmp.gt.s32.totalorder %s1430, 0
        %s1432 = scalar_select %p1431, %s1430, 0
      $region92: #{seq2seq_forward.1} parent=39 // pred_fallthru
        _
      // Predicated region
      $region93: #{seq2seq_forward.1} parent=39 // pred_check
        %p1433 = pneg %p588
      $region94: #{seq2seq_forward.1} parent=39 // pred_check_branch
        %1435 = sbr.rel (%p1433) target = $region96
      $region95: #{seq2seq_forward.1} parent=39 // pred_region
        %s1436 = ssub.s32 %s86, 2
        %p1437 = scmp.gt.s32.totalorder %s1436, 0
        %s1438 = scalar_select %p1437, %s1436, 0
        %p1439 = scmp.lt.s32.totalorder %s1438, 1
        %s1440 = scalar_select %p1439, %s1438, 1
        %s1441 = scalar_lea.vmem %s35, %s1440
        %s1442 = ssub.s32 %s86, 2
        %p1443 = scmp.gt.s32.totalorder %s1442, 0
        %s1444 = scalar_select %p1443, %s1442, 0
      $region96: #{seq2seq_forward.1} parent=39 // pred_fallthru
        _
      // Predicated region
      $region97: #{seq2seq_forward.1} parent=39 // pred_check
        %p1445 = pneg %p620
      $region98: #{seq2seq_forward.1} parent=39 // pred_check_branch
        %1447 = sbr.rel (%p1445) target = $region100
      $region99: #{seq2seq_forward.1} parent=39 // pred_region
        %s1448 = ssub.s32 %s86, 2
        %p1449 = scmp.gt.s32.totalorder %s1448, 0
        %s1450 = scalar_select %p1449, %s1448, 0
        %p1451 = scmp.lt.s32.totalorder %s1450, 1
        %s1452 = scalar_select %p1451, %s1450, 1
        %s1453 = smul.addr %s1452, 4
        %s1454 = smul.addr %s1453, 4
        %s1455 = scalar_lea.vmem %s37, %s1454
        %s1456 = ssub.s32 %s86, 2
        %p1457 = scmp.gt.s32.totalorder %s1456, 0
        %s1458 = scalar_select %p1457, %s1456, 0
      $region100: #{seq2seq_forward.1} parent=39 // pred_fallthru
        _
      // Predicated region
      $region101: #{seq2seq_forward.1} parent=39 // pred_check
        %p1459 = pneg %p652
      $region102: #{seq2seq_forward.1} parent=39 // pred_check_branch
        %1461 = sbr.rel (%p1459) target = $region104
      $region103: #{seq2seq_forward.1} parent=39 // pred_region
        %s1462 = ssub.s32 %s86, 2
        %p1463 = scmp.gt.s32.totalorder %s1462, 0
        %s1464 = scalar_select %p1463, %s1462, 0
        %p1465 = scmp.lt.s32.totalorder %s1464, 1
        %s1466 = scalar_select %p1465, %s1464, 1
        %s1467 = scalar_lea.vmem %s39, %s1466
        %s1468 = ssub.s32 %s86, 2
        %p1469 = scmp.gt.s32.totalorder %s1468, 0
        %s1470 = scalar_select %p1469, %s1468, 0
      $region104: #{seq2seq_forward.1} parent=39 // pred_fallthru
        _
      // Predicated region
      $region105: #{seq2seq_forward.1} parent=39 // pred_check
        %p1471 = pneg %p684
      $region106: #{seq2seq_forward.1} parent=39 // pred_check_branch
        %1473 = sbr.rel (%p1471) target = $region108
      $region107: #{seq2seq_forward.1} parent=39 // pred_region
        %s1474 = ssub.s32 %s86, 2
        %p1475 = scmp.gt.s32.totalorder %s1474, 0
        %s1476 = scalar_select %p1475, %s1474, 0
        %p1477 = scmp.lt.s32.totalorder %s1476, 1
        %s1478 = scalar_select %p1477, %s1476, 1
        %s1479 = scalar_lea.vmem %s41, %s1478
        %s1480 = ssub.s32 %s86, 2
        %p1481 = scmp.gt.s32.totalorder %s1480, 0
        %s1482 = scalar_select %p1481, %s1480, 0
      $region108: #{seq2seq_forward.1} parent=39 // pred_fallthru
        _
      // Predicated region
      $region109: #{seq2seq_forward.1} parent=39 // pred_check
        %p1483 = pneg %p716
      $region110: #{seq2seq_forward.1} parent=39 // pred_check_branch
        %1485 = sbr.rel (%p1483) target = $region112
      $region111: #{seq2seq_forward.1} parent=39 // pred_region
        %s1486 = ssub.s32 %s86, 2
        %p1487 = scmp.gt.s32.totalorder %s1486, 0
        %s1488 = scalar_select %p1487, %s1486, 0
        %p1489 = scmp.lt.s32.totalorder %s1488, 1
        %s1490 = scalar_select %p1489, %s1488, 1
        %s1491 = scalar_lea.vmem %s43, %s1490
        %s1492 = ssub.s32 %s86, 2
        %p1493 = scmp.gt.s32.totalorder %s1492, 0
        %s1494 = scalar_select %p1493, %s1492, 0
      $region112: #{seq2seq_forward.1} parent=39 // pred_fallthru
        _
      // Predicated region
      $region113: #{seq2seq_forward.1} parent=39 // pred_check
        %p1495 = pneg %p748
      $region114: #{seq2seq_forward.1} parent=39 // pred_check_branch
        %1497 = sbr.rel (%p1495) target = $region116
      $region115: #{seq2seq_forward.1} parent=39 // pred_region
        %s1498 = ssub.s32 %s86, 2
        %p1499 = scmp.gt.s32.totalorder %s1498, 0
        %s1500 = scalar_select %p1499, %s1498, 0
        %p1501 = scmp.lt.s32.totalorder %s1500, 1
        %s1502 = scalar_select %p1501, %s1500, 1
        %s1503 = smul.addr %s1502, 4
        %s1504 = smul.addr %s1503, 4
        %s1505 = scalar_lea.vmem %s45, %s1504
        %s1506 = ssub.s32 %s86, 2
        %p1507 = scmp.gt.s32.totalorder %s1506, 0
        %s1508 = scalar_select %p1507, %s1506, 0
      $region116: #{seq2seq_forward.1} parent=39 // pred_fallthru
        _
      // Predicated region
      $region117: #{seq2seq_forward.1} parent=39 // pred_check
        %p1509 = pneg %p780
      $region118: #{seq2seq_forward.1} parent=39 // pred_check_branch
        %1511 = sbr.rel (%p1509) target = $region120
      $region119: #{seq2seq_forward.1} parent=39 // pred_region
        %s1512 = ssub.s32 %s86, 2
        %p1513 = scmp.gt.s32.totalorder %s1512, 0
        %s1514 = scalar_select %p1513, %s1512, 0
        %p1515 = scmp.lt.s32.totalorder %s1514, 1
        %s1516 = scalar_select %p1515, %s1514, 1
        %s1517 = scalar_lea.vmem %s47, %s1516
        %s1518 = ssub.s32 %s86, 2
        %p1519 = scmp.gt.s32.totalorder %s1518, 0
        %s1520 = scalar_select %p1519, %s1518, 0
      $region120: #{seq2seq_forward.1} parent=39 // pred_fallthru
        _
      // Predicated region
      $region121: #{seq2seq_forward.1} parent=39 // pred_check
        %p1521 = pneg %p812
      $region122: #{seq2seq_forward.1} parent=39 // pred_check_branch
        %1523 = sbr.rel (%p1521) target = $region124
      $region123: #{seq2seq_forward.1} parent=39 // pred_region
        %s1524 = ssub.s32 %s86, 2
        %p1525 = scmp.gt.s32.totalorder %s1524, 0
        %s1526 = scalar_select %p1525, %s1524, 0
        %p1527 = scmp.lt.s32.totalorder %s1526, 1
        %s1528 = scalar_select %p1527, %s1526, 1
        %s1529 = smul.addr %s1528, 4
        %s1530 = smul.addr %s1529, 4
        %s1531 = scalar_lea.vmem %s49, %s1530
        %s1532 = ssub.s32 %s86, 2
        %p1533 = scmp.gt.s32.totalorder %s1532, 0
        %s1534 = scalar_select %p1533, %s1532, 0
      $region124: #{seq2seq_forward.1} parent=39 // pred_fallthru
        _
      // Predicated region
      $region125: #{seq2seq_forward.1} parent=39 // pred_check
        %p1535 = pneg %p844
      $region126: #{seq2seq_forward.1} parent=39 // pred_check_branch
        %1537 = sbr.rel (%p1535) target = $region128
      $region127: #{seq2seq_forward.1} parent=39 // pred_region
        %s1538 = ssub.s32 %s86, 2
        %p1539 = scmp.gt.s32.totalorder %s1538, 0
        %s1540 = scalar_select %p1539, %s1538, 0
        %p1541 = scmp.lt.s32.totalorder %s1540, 1
        %s1542 = scalar_select %p1541, %s1540, 1
        %s1543 = scalar_lea.vmem %s51, %s1542
        %s1544 = ssub.s32 %s86, 2
        %p1545 = scmp.gt.s32.totalorder %s1544, 0
        %s1546 = scalar_select %p1545, %s1544, 0
      $region128: #{seq2seq_forward.1} parent=39 // pred_fallthru
        _
      // Predicated region
      $region129: #{seq2seq_forward.1} parent=39 // pred_check
        %p1547 = pneg %p876
      $region130: #{seq2seq_forward.1} parent=39 // pred_check_branch
        %1549 = sbr.rel (%p1547) target = $region132
      $region131: #{seq2seq_forward.1} parent=39 // pred_region
        %s1550 = ssub.s32 %s86, 2
        %p1551 = scmp.gt.s32.totalorder %s1550, 0
        %s1552 = scalar_select %p1551, %s1550, 0
        %p1553 = scmp.lt.s32.totalorder %s1552, 1
        %s1554 = scalar_select %p1553, %s1552, 1
        %s1555 = smul.addr %s1554, 4
        %s1556 = smul.addr %s1555, 4
        %s1557 = scalar_lea.vmem %s53, %s1556
        %s1558 = ssub.s32 %s86, 2
        %p1559 = scmp.gt.s32.totalorder %s1558, 0
        %s1560 = scalar_select %p1559, %s1558, 0
      $region132: #{seq2seq_forward.1} parent=39 // pred_fallthru
        _
      // Predicated region
      $region133: #{seq2seq_forward.1} parent=39 // pred_check
        %p1561 = pneg %p908
      $region134: #{seq2seq_forward.1} parent=39 // pred_check_branch
        %1563 = sbr.rel (%p1561) target = $region136
      $region135: #{seq2seq_forward.1} parent=39 // pred_region
        %s1564 = ssub.s32 %s86, 2
        %p1565 = scmp.gt.s32.totalorder %s1564, 0
        %s1566 = scalar_select %p1565, %s1564, 0
        %p1567 = scmp.lt.s32.totalorder %s1566, 1
        %s1568 = scalar_select %p1567, %s1566, 1
        %s1569 = scalar_lea.vmem %s55, %s1568
        %s1570 = ssub.s32 %s86, 2
        %p1571 = scmp.gt.s32.totalorder %s1570, 0
        %s1572 = scalar_select %p1571, %s1570, 0
      $region136: #{seq2seq_forward.1} parent=39 // pred_fallthru
        _
      // Predicated region
      $region137: #{seq2seq_forward.1} parent=39 // pred_check
        %p1573 = pneg %p940
      $region138: #{seq2seq_forward.1} parent=39 // pred_check_branch
        %1575 = sbr.rel (%p1573) target = $region140
      $region139: #{seq2seq_forward.1} parent=39 // pred_region
        %s1576 = ssub.s32 %s86, 2
        %p1577 = scmp.gt.s32.totalorder %s1576, 0
        %s1578 = scalar_select %p1577, %s1576, 0
        %p1579 = scmp.lt.s32.totalorder %s1578, 1
        %s1580 = scalar_select %p1579, %s1578, 1
        %s1581 = scalar_lea.vmem %s57, %s1580
        %s1582 = ssub.s32 %s86, 2
        %p1583 = scmp.gt.s32.totalorder %s1582, 0
        %s1584 = scalar_select %p1583, %s1582, 0
      $region140: #{seq2seq_forward.1} parent=39 // pred_fallthru
        _
      // Predicated region
      $region141: #{seq2seq_forward.1} parent=39 // pred_check
        %p1585 = pneg %p972
      $region142: #{seq2seq_forward.1} parent=39 // pred_check_branch
        %1587 = sbr.rel (%p1585) target = $region144
      $region143: #{seq2seq_forward.1} parent=39 // pred_region
        %s1588 = ssub.s32 %s86, 2
        %p1589 = scmp.gt.s32.totalorder %s1588, 0
        %s1590 = scalar_select %p1589, %s1588, 0
        %p1591 = scmp.lt.s32.totalorder %s1590, 1
        %s1592 = scalar_select %p1591, %s1590, 1
        %s1593 = scalar_lea.vmem %s59, %s1592
        %s1594 = ssub.s32 %s86, 2
        %p1595 = scmp.gt.s32.totalorder %s1594, 0
        %s1596 = scalar_select %p1595, %s1594, 0
      $region144: #{seq2seq_forward.1} parent=39 // pred_fallthru
        _
      // Predicated region
      $region145: #{seq2seq_forward.1} parent=39 // pred_check
        %p1597 = pneg %p1004
      $region146: #{seq2seq_forward.1} parent=39 // pred_check_branch
        %1599 = sbr.rel (%p1597) target = $region148
      $region147: #{seq2seq_forward.1} parent=39 // pred_region
        %s1600 = ssub.s32 %s86, 2
        %p1601 = scmp.gt.s32.totalorder %s1600, 0
        %s1602 = scalar_select %p1601, %s1600, 0
        %p1603 = scmp.lt.s32.totalorder %s1602, 1
        %s1604 = scalar_select %p1603, %s1602, 1
        %s1605 = smul.addr %s1604, 4
        %s1606 = smul.addr %s1605, 4
        %s1607 = scalar_lea.vmem %s61, %s1606
        %s1608 = ssub.s32 %s86, 2
        %p1609 = scmp.gt.s32.totalorder %s1608, 0
        %s1610 = scalar_select %p1609, %s1608, 0
      $region148: #{seq2seq_forward.1} parent=39 // pred_fallthru
        _
      // Predicated region
      $region149: #{seq2seq_forward.1} parent=39 // pred_check
        %p1611 = pneg %p1036
      $region150: #{seq2seq_forward.1} parent=39 // pred_check_branch
        %1613 = sbr.rel (%p1611) target = $region152
      $region151: #{seq2seq_forward.1} parent=39 // pred_region
        %s1614 = ssub.s32 %s86, 2
        %p1615 = scmp.gt.s32.totalorder %s1614, 0
        %s1616 = scalar_select %p1615, %s1614, 0
        %p1617 = scmp.lt.s32.totalorder %s1616, 1
        %s1618 = scalar_select %p1617, %s1616, 1
        %s1619 = scalar_lea.vmem %s63, %s1618
        %s1620 = ssub.s32 %s86, 2
        %p1621 = scmp.gt.s32.totalorder %s1620, 0
        %s1622 = scalar_select %p1621, %s1620, 0
      $region152: #{seq2seq_forward.1} parent=39 // pred_fallthru
        _
      // Predicated region
      $region153: #{seq2seq_forward.1} parent=39 // pred_check
        %p1623 = pneg %p1068
      $region154: #{seq2seq_forward.1} parent=39 // pred_check_branch
        %1625 = sbr.rel (%p1623) target = $region156
      $region155: #{seq2seq_forward.1} parent=39 // pred_region
        %s1626 = ssub.s32 %s86, 2
        %p1627 = scmp.gt.s32.totalorder %s1626, 0
        %s1628 = scalar_select %p1627, %s1626, 0
        %p1629 = scmp.lt.s32.totalorder %s1628, 1
        %s1630 = scalar_select %p1629, %s1628, 1
        %s1631 = smul.addr %s1630, 8
        %s1632 = smul.addr %s1631, 4
        %s1633 = scalar_lea.vmem %s65, %s1632
        %s1634 = ssub.s32 %s86, 2
        %p1635 = scmp.gt.s32.totalorder %s1634, 0
        %s1636 = scalar_select %p1635, %s1634, 0
      $region156: #{seq2seq_forward.1} parent=39 // pred_fallthru
        _
      // Predicated region
      $region157: #{seq2seq_forward.1} parent=39 // pred_check
        %p1637 = pneg %p1100
      $region158: #{seq2seq_forward.1} parent=39 // pred_check_branch
        %1639 = sbr.rel (%p1637) target = $region160
      $region159: #{seq2seq_forward.1} parent=39 // pred_region
        %s1640 = ssub.s32 %s86, 2
        %p1641 = scmp.gt.s32.totalorder %s1640, 0
        %s1642 = scalar_select %p1641, %s1640, 0
        %p1643 = scmp.lt.s32.totalorder %s1642, 1
        %s1644 = scalar_select %p1643, %s1642, 1
        %s1645 = scalar_lea.vmem %s67, %s1644
        %s1646 = ssub.s32 %s86, 2
        %p1647 = scmp.gt.s32.totalorder %s1646, 0
        %s1648 = scalar_select %p1647, %s1646, 0
      $region160: #{seq2seq_forward.1} parent=39 // pred_fallthru
        _
      // Predicated region
      $region161: #{seq2seq_forward.1} parent=39 // pred_check
        %p1649 = pneg %p1132
      $region162: #{seq2seq_forward.1} parent=39 // pred_check_branch
        %1651 = sbr.rel (%p1649) target = $region164
      $region163: #{seq2seq_forward.1} parent=39 // pred_region
        %s1652 = ssub.s32 %s86, 2
        %p1653 = scmp.gt.s32.totalorder %s1652, 0
        %s1654 = scalar_select %p1653, %s1652, 0
        %p1655 = scmp.lt.s32.totalorder %s1654, 1
        %s1656 = scalar_select %p1655, %s1654, 1
        %s1657 = scalar_lea.vmem %s69, %s1656
        %s1658 = ssub.s32 %s86, 2
        %p1659 = scmp.gt.s32.totalorder %s1658, 0
        %s1660 = scalar_select %p1659, %s1658, 0
      $region164: #{seq2seq_forward.1} parent=39 // pred_fallthru
        _
      // Predicated region
      $region165: #{seq2seq_forward.1} parent=39 // pred_check
        %p1661 = pneg %p1164
      $region166: #{seq2seq_forward.1} parent=39 // pred_check_branch
        %1663 = sbr.rel (%p1661) target = $region168
      $region167: #{seq2seq_forward.1} parent=39 // pred_region
        %s1664 = ssub.s32 %s86, 2
        %p1665 = scmp.gt.s32.totalorder %s1664, 0
        %s1666 = scalar_select %p1665, %s1664, 0
        %p1667 = scmp.lt.s32.totalorder %s1666, 1
        %s1668 = scalar_select %p1667, %s1666, 1
        %s1669 = scalar_lea.vmem %s71, %s1668
        %s1670 = ssub.s32 %s86, 2
        %p1671 = scmp.gt.s32.totalorder %s1670, 0
        %s1672 = scalar_select %p1671, %s1670, 0
      $region168: #{seq2seq_forward.1} parent=39 // pred_fallthru
        _
    $region40: #{seq2seq_forward.1} parent=5 // pred_fallthru
      _
    %p1673 = scmp.le.s32.totalorder 1, %s86
    %p1674 = scmp.lt.s32.totalorder %s86, 5
    %p1675 = pnand %p1673, %p1674
    %p1676 = pneg %p1675
    // Predicated region
    $region169: #{seq2seq_forward.1} parent=5 // pred_check
      _
    $region170: #{seq2seq_forward.1} parent=5 // pred_check_branch
      %1678 = sbr.rel (%p1675) target = $region172
    $region171: #{seq2seq_forward.1} parent=5 // pred_region
      %s1679 = ssub.s32 %s86, 1
      %p1680 = pneg %p107
      %p1681 = pneg %p104
      %p1682 = pneg %p128
      %p1683 = pneg %p125
      %p1684 = pneg %p149
      %p1685 = pneg %p146
      %p1686 = pneg %p170
      %p1687 = pneg %p167
      %p1688 = scmp.lt.s32.totalorder %s91, 1
      %s1689 = scalar_select %p1688, %s91, 1
      %p1690 = scmp.lt.s32.totalorder %s1689, 1
      %s1691 = scalar_select %p1690, %s1689, 1
      %s1692 = smul.addr %s1691, 4
      %s1693 = smul.addr %s1692, 4
      %s1694 = scalar_lea.vmem %s9, %s1693
      %p1695 = pneg %p200
      %p1696 = pneg %p197
      %p1697 = scmp.lt.s32.totalorder %s91, 1
      %s1698 = scalar_select %p1697, %s91, 1
      %p1699 = scmp.lt.s32.totalorder %s1698, 1
      %s1700 = scalar_select %p1699, %s1698, 1
      %s1701 = scalar_lea.vmem %s11, %s1700
      %p1702 = pneg %p230
      %p1703 = pneg %p227
      %p1704 = scmp.lt.s32.totalorder %s91, 1
      %s1705 = scalar_select %p1704, %s91, 1
      %p1706 = scmp.lt.s32.totalorder %s1705, 1
      %s1707 = scalar_select %p1706, %s1705, 1
      %s1708 = smul.addr %s1707, 4
      %s1709 = smul.addr %s1708, 4
      %s1710 = scalar_lea.vmem %s13, %s1709
      %p1711 = pneg %p260
      %p1712 = pneg %p257
      %p1713 = scmp.lt.s32.totalorder %s91, 1
      %s1714 = scalar_select %p1713, %s91, 1
      %p1715 = scmp.lt.s32.totalorder %s1714, 1
      %s1716 = scalar_select %p1715, %s1714, 1
      %s1717 = scalar_lea.vmem %s15, %s1716
      %p1718 = pneg %p290
      %p1719 = pneg %p287
      %p1720 = scmp.lt.s32.totalorder %s91, 1
      %s1721 = scalar_select %p1720, %s91, 1
      %p1722 = scmp.lt.s32.totalorder %s1721, 1
      %s1723 = scalar_select %p1722, %s1721, 1
      %s1724 = scalar_lea.vmem %s17, %s1723
      %p1725 = pneg %p320
      %p1726 = pneg %p317
      %p1727 = scmp.lt.s32.totalorder %s91, 1
      %s1728 = scalar_select %p1727, %s91, 1
      %p1729 = scmp.lt.s32.totalorder %s1728, 1
      %s1730 = scalar_select %p1729, %s1728, 1
      %s1731 = scalar_lea.vmem %s19, %s1730
      %p1732 = pneg %p350
      %p1733 = pneg %p347
      %p1734 = scmp.lt.s32.totalorder %s91, 1
      %s1735 = scalar_select %p1734, %s91, 1
      %p1736 = scmp.lt.s32.totalorder %s1735, 1
      %s1737 = scalar_select %p1736, %s1735, 1
      %s1738 = smul.addr %s1737, 4
      %s1739 = smul.addr %s1738, 4
      %s1740 = scalar_lea.vmem %s21, %s1739
      %p1741 = pneg %p380
      %p1742 = pneg %p377
      %p1743 = scmp.lt.s32.totalorder %s91, 1
      %s1744 = scalar_select %p1743, %s91, 1
      %p1745 = scmp.lt.s32.totalorder %s1744, 1
      %s1746 = scalar_select %p1745, %s1744, 1
      %s1747 = scalar_lea.vmem %s23, %s1746
      %p1748 = pneg %p410
      %p1749 = pneg %p407
      %p1750 = scmp.lt.s32.totalorder %s91, 1
      %s1751 = scalar_select %p1750, %s91, 1
      %p1752 = scmp.lt.s32.totalorder %s1751, 1
      %s1753 = scalar_select %p1752, %s1751, 1
      %s1754 = smul.addr %s1753, 8
      %s1755 = smul.addr %s1754, 4
      %s1756 = scalar_lea.vmem %s25, %s1755
      %p1757 = pneg %p440
      %p1758 = pneg %p437
      %p1759 = scmp.lt.s32.totalorder %s91, 1
      %s1760 = scalar_select %p1759, %s91, 1
      %p1761 = scmp.lt.s32.totalorder %s1760, 1
      %s1762 = scalar_select %p1761, %s1760, 1
      %s1763 = scalar_lea.vmem %s27, %s1762
      %p1764 = pneg %p470
      %p1765 = pneg %p467
      %p1766 = scmp.lt.s32.totalorder %s91, 1
      %s1767 = scalar_select %p1766, %s91, 1
      %p1768 = scmp.lt.s32.totalorder %s1767, 1
      %s1769 = scalar_select %p1768, %s1767, 1
      %s1770 = scalar_lea.vmem %s29, %s1769
      %p1771 = pneg %p500
      %p1772 = pneg %p497
      %p1773 = scmp.lt.s32.totalorder %s91, 1
      %s1774 = scalar_select %p1773, %s91, 1
      %p1775 = scmp.lt.s32.totalorder %s1774, 1
      %s1776 = scalar_select %p1775, %s1774, 1
      %s1777 = scalar_lea.vmem %s31, %s1776
      %p1778 = pneg %p530
      %p1779 = pneg %p527
      %s1780 = ssub.s32 %s91, 2
      %p1781 = scmp.gt.s32.totalorder %s1780, 0
      %s1782 = scalar_select %p1781, %s1780, 0
      %p1783 = scmp.lt.s32.totalorder %s1782, 1
      %s1784 = scalar_select %p1783, %s1782, 1
      %s1785 = smul.addr %s1784, 4
      %s1786 = smul.addr %s1785, 4
      %s1787 = scalar_lea.vmem %s33, %s1786
      %p1788 = pneg %p562
      %p1789 = pneg %p559
      %s1790 = ssub.s32 %s91, 2
      %p1791 = scmp.gt.s32.totalorder %s1790, 0
      %s1792 = scalar_select %p1791, %s1790, 0
      %p1793 = scmp.lt.s32.totalorder %s1792, 1
      %s1794 = scalar_select %p1793, %s1792, 1
      %s1795 = scalar_lea.vmem %s35, %s1794
      %p1796 = pneg %p594
      %p1797 = pneg %p591
      %s1798 = ssub.s32 %s91, 2
      %p1799 = scmp.gt.s32.totalorder %s1798, 0
      %s1800 = scalar_select %p1799, %s1798, 0
      %p1801 = scmp.lt.s32.totalorder %s1800, 1
      %s1802 = scalar_select %p1801, %s1800, 1
      %s1803 = smul.addr %s1802, 4
      %s1804 = smul.addr %s1803, 4
      %s1805 = scalar_lea.vmem %s37, %s1804
      %p1806 = pneg %p626
      %p1807 = pneg %p623
      %s1808 = ssub.s32 %s91, 2
      %p1809 = scmp.gt.s32.totalorder %s1808, 0
      %s1810 = scalar_select %p1809, %s1808, 0
      %p1811 = scmp.lt.s32.totalorder %s1810, 1
      %s1812 = scalar_select %p1811, %s1810, 1
      %s1813 = scalar_lea.vmem %s39, %s1812
      %p1814 = pneg %p658
      %p1815 = pneg %p655
      %s1816 = ssub.s32 %s91, 2
      %p1817 = scmp.gt.s32.totalorder %s1816, 0
      %s1818 = scalar_select %p1817, %s1816, 0
      %p1819 = scmp.lt.s32.totalorder %s1818, 1
      %s1820 = scalar_select %p1819, %s1818, 1
      %s1821 = scalar_lea.vmem %s41, %s1820
      %p1822 = pneg %p690
      %p1823 = pneg %p687
      %s1824 = ssub.s32 %s91, 2
      %p1825 = scmp.gt.s32.totalorder %s1824, 0
      %s1826 = scalar_select %p1825, %s1824, 0
      %p1827 = scmp.lt.s32.totalorder %s1826, 1
      %s1828 = scalar_select %p1827, %s1826, 1
      %s1829 = scalar_lea.vmem %s43, %s1828
      %p1830 = pneg %p722
      %p1831 = pneg %p719
      %s1832 = ssub.s32 %s91, 2
      %p1833 = scmp.gt.s32.totalorder %s1832, 0
      %s1834 = scalar_select %p1833, %s1832, 0
      %p1835 = scmp.lt.s32.totalorder %s1834, 1
      %s1836 = scalar_select %p1835, %s1834, 1
      %s1837 = smul.addr %s1836, 4
      %s1838 = smul.addr %s1837, 4
      %s1839 = scalar_lea.vmem %s45, %s1838
      %p1840 = pneg %p754
      %p1841 = pneg %p751
      %s1842 = ssub.s32 %s91, 2
      %p1843 = scmp.gt.s32.totalorder %s1842, 0
      %s1844 = scalar_select %p1843, %s1842, 0
      %p1845 = scmp.lt.s32.totalorder %s1844, 1
      %s1846 = scalar_select %p1845, %s1844, 1
      %s1847 = scalar_lea.vmem %s47, %s1846
      %p1848 = pneg %p786
      %p1849 = pneg %p783
      %s1850 = ssub.s32 %s91, 2
      %p1851 = scmp.gt.s32.totalorder %s1850, 0
      %s1852 = scalar_select %p1851, %s1850, 0
      %p1853 = scmp.lt.s32.totalorder %s1852, 1
      %s1854 = scalar_select %p1853, %s1852, 1
      %s1855 = smul.addr %s1854, 4
      %s1856 = smul.addr %s1855, 4
      %s1857 = scalar_lea.vmem %s49, %s1856
      %p1858 = pneg %p818
      %p1859 = pneg %p815
      %s1860 = ssub.s32 %s91, 2
      %p1861 = scmp.gt.s32.totalorder %s1860, 0
      %s1862 = scalar_select %p1861, %s1860, 0
      %p1863 = scmp.lt.s32.totalorder %s1862, 1
      %s1864 = scalar_select %p1863, %s1862, 1
      %s1865 = scalar_lea.vmem %s51, %s1864
      %p1866 = pneg %p850
      %p1867 = pneg %p847
      %s1868 = ssub.s32 %s91, 2
      %p1869 = scmp.gt.s32.totalorder %s1868, 0
      %s1870 = scalar_select %p1869, %s1868, 0
      %p1871 = scmp.lt.s32.totalorder %s1870, 1
      %s1872 = scalar_select %p1871, %s1870, 1
      %s1873 = smul.addr %s1872, 4
      %s1874 = smul.addr %s1873, 4
      %s1875 = scalar_lea.vmem %s53, %s1874
      %p1876 = pneg %p882
      %p1877 = pneg %p879
      %s1878 = ssub.s32 %s91, 2
      %p1879 = scmp.gt.s32.totalorder %s1878, 0
      %s1880 = scalar_select %p1879, %s1878, 0
      %p1881 = scmp.lt.s32.totalorder %s1880, 1
      %s1882 = scalar_select %p1881, %s1880, 1
      %s1883 = scalar_lea.vmem %s55, %s1882
      %p1884 = pneg %p914
      %p1885 = pneg %p911
      %s1886 = ssub.s32 %s91, 2
      %p1887 = scmp.gt.s32.totalorder %s1886, 0
      %s1888 = scalar_select %p1887, %s1886, 0
      %p1889 = scmp.lt.s32.totalorder %s1888, 1
      %s1890 = scalar_select %p1889, %s1888, 1
      %s1891 = scalar_lea.vmem %s57, %s1890
      %p1892 = pneg %p946
      %p1893 = pneg %p943
      %s1894 = ssub.s32 %s91, 2
      %p1895 = scmp.gt.s32.totalorder %s1894, 0
      %s1896 = scalar_select %p1895, %s1894, 0
      %p1897 = scmp.lt.s32.totalorder %s1896, 1
      %s1898 = scalar_select %p1897, %s1896, 1
      %s1899 = scalar_lea.vmem %s59, %s1898
      %p1900 = pneg %p978
      %p1901 = pneg %p975
      %s1902 = ssub.s32 %s91, 2
      %p1903 = scmp.gt.s32.totalorder %s1902, 0
      %s1904 = scalar_select %p1903, %s1902, 0
      %p1905 = scmp.lt.s32.totalorder %s1904, 1
      %s1906 = scalar_select %p1905, %s1904, 1
      %s1907 = smul.addr %s1906, 4
      %s1908 = smul.addr %s1907, 4
      %s1909 = scalar_lea.vmem %s61, %s1908
      %p1910 = pneg %p1010
      %p1911 = pneg %p1007
      %s1912 = ssub.s32 %s91, 2
      %p1913 = scmp.gt.s32.totalorder %s1912, 0
      %s1914 = scalar_select %p1913, %s1912, 0
      %p1915 = scmp.lt.s32.totalorder %s1914, 1
      %s1916 = scalar_select %p1915, %s1914, 1
      %s1917 = scalar_lea.vmem %s63, %s1916
      %p1918 = pneg %p1042
      %p1919 = pneg %p1039
      %s1920 = ssub.s32 %s91, 2
      %p1921 = scmp.gt.s32.totalorder %s1920, 0
      %s1922 = scalar_select %p1921, %s1920, 0
      %p1923 = scmp.lt.s32.totalorder %s1922, 1
      %s1924 = scalar_select %p1923, %s1922, 1
      %s1925 = smul.addr %s1924, 8
      %s1926 = smul.addr %s1925, 4
      %s1927 = scalar_lea.vmem %s65, %s1926
      %p1928 = pneg %p1074
      %p1929 = pneg %p1071
      %s1930 = ssub.s32 %s91, 2
      %p1931 = scmp.gt.s32.totalorder %s1930, 0
      %s1932 = scalar_select %p1931, %s1930, 0
      %p1933 = scmp.lt.s32.totalorder %s1932, 1
      %s1934 = scalar_select %p1933, %s1932, 1
      %s1935 = scalar_lea.vmem %s67, %s1934
      %p1936 = pneg %p1106
      %p1937 = pneg %p1103
      %s1938 = ssub.s32 %s91, 2
      %p1939 = scmp.gt.s32.totalorder %s1938, 0
      %s1940 = scalar_select %p1939, %s1938, 0
      %p1941 = scmp.lt.s32.totalorder %s1940, 1
      %s1942 = scalar_select %p1941, %s1940, 1
      %s1943 = scalar_lea.vmem %s69, %s1942
      %p1944 = pneg %p1138
      %p1945 = pneg %p1135
      %s1946 = ssub.s32 %s91, 2
      %p1947 = scmp.gt.s32.totalorder %s1946, 0
      %s1948 = scalar_select %p1947, %s1946, 0
      %p1949 = scmp.lt.s32.totalorder %s1948, 1
      %s1950 = scalar_select %p1949, %s1948, 1
      %s1951 = scalar_lea.vmem %s71, %s1950
      %p1952 = pneg %p1170
      %p1953 = pneg %p1167
      %p1954 = pneg %p1191
      %p1955 = pneg %p1188
      %p1956 = pneg %p1212
      %p1957 = pneg %p1209
      %p1958 = pneg %p1233
      %p1959 = pneg %p1230
      %p1960 = pneg %p1254
      %p1961 = pneg %p1251
      %p1962 = scmp.lt.s32.totalorder %s91, 1
      %s1963 = scalar_select %p1962, %s91, 1
      %p1964 = scmp.lt.s32.totalorder %s1963, 1
      %s1965 = scalar_select %p1964, %s1963, 1
      %s1966 = smul.addr %s1965, 4
      %s1967 = smul.addr %s1966, 4
      %s1968 = scalar_lea.vmem %s9, %s1967
      %p1969 = scmp.lt.s32.totalorder %s91, 1
      %s1970 = scalar_select %p1969, %s91, 1
      %p1971 = scmp.lt.s32.totalorder %s91, 1
      %s1972 = scalar_select %p1971, %s91, 1
      %p1973 = scmp.lt.s32.totalorder %s1972, 1
      %s1974 = scalar_select %p1973, %s1972, 1
      %s1975 = scalar_lea.vmem %s11, %s1974
      %p1976 = scmp.lt.s32.totalorder %s91, 1
      %s1977 = scalar_select %p1976, %s91, 1
      %p1978 = scmp.lt.s32.totalorder %s91, 1
      %s1979 = scalar_select %p1978, %s91, 1
      %p1980 = scmp.lt.s32.totalorder %s1979, 1
      %s1981 = scalar_select %p1980, %s1979, 1
      %s1982 = smul.addr %s1981, 4
      %s1983 = smul.addr %s1982, 4
      %s1984 = scalar_lea.vmem %s13, %s1983
      %p1985 = scmp.lt.s32.totalorder %s91, 1
      %s1986 = scalar_select %p1985, %s91, 1
      %p1987 = scmp.lt.s32.totalorder %s91, 1
      %s1988 = scalar_select %p1987, %s91, 1
      %p1989 = scmp.lt.s32.totalorder %s1988, 1
      %s1990 = scalar_select %p1989, %s1988, 1
      %s1991 = scalar_lea.vmem %s15, %s1990
      %p1992 = scmp.lt.s32.totalorder %s91, 1
      %s1993 = scalar_select %p1992, %s91, 1
      %p1994 = scmp.lt.s32.totalorder %s91, 1
      %s1995 = scalar_select %p1994, %s91, 1
      %p1996 = scmp.lt.s32.totalorder %s1995, 1
      %s1997 = scalar_select %p1996, %s1995, 1
      %s1998 = scalar_lea.vmem %s17, %s1997
      %p1999 = scmp.lt.s32.totalorder %s91, 1
      %s2000 = scalar_select %p1999, %s91, 1
      %p2001 = scmp.lt.s32.totalorder %s91, 1
      %s2002 = scalar_select %p2001, %s91, 1
      %p2003 = scmp.lt.s32.totalorder %s2002, 1
      %s2004 = scalar_select %p2003, %s2002, 1
      %s2005 = scalar_lea.vmem %s19, %s2004
      %p2006 = scmp.lt.s32.totalorder %s91, 1
      %s2007 = scalar_select %p2006, %s91, 1
      %p2008 = scmp.lt.s32.totalorder %s91, 1
      %s2009 = scalar_select %p2008, %s91, 1
      %p2010 = scmp.lt.s32.totalorder %s2009, 1
      %s2011 = scalar_select %p2010, %s2009, 1
      %s2012 = smul.addr %s2011, 4
      %s2013 = smul.addr %s2012, 4
      %s2014 = scalar_lea.vmem %s21, %s2013
      %p2015 = scmp.lt.s32.totalorder %s91, 1
      %s2016 = scalar_select %p2015, %s91, 1
      %p2017 = scmp.lt.s32.totalorder %s91, 1
      %s2018 = scalar_select %p2017, %s91, 1
      %p2019 = scmp.lt.s32.totalorder %s2018, 1
      %s2020 = scalar_select %p2019, %s2018, 1
      %s2021 = scalar_lea.vmem %s23, %s2020
      %p2022 = scmp.lt.s32.totalorder %s91, 1
      %s2023 = scalar_select %p2022, %s91, 1
      %p2024 = scmp.lt.s32.totalorder %s91, 1
      %s2025 = scalar_select %p2024, %s91, 1
      %p2026 = scmp.lt.s32.totalorder %s2025, 1
      %s2027 = scalar_select %p2026, %s2025, 1
      %s2028 = smul.addr %s2027, 8
      %s2029 = smul.addr %s2028, 4
      %s2030 = scalar_lea.vmem %s25, %s2029
      %p2031 = scmp.lt.s32.totalorder %s91, 1
      %s2032 = scalar_select %p2031, %s91, 1
      %p2033 = scmp.lt.s32.totalorder %s91, 1
      %s2034 = scalar_select %p2033, %s91, 1
      %p2035 = scmp.lt.s32.totalorder %s2034, 1
      %s2036 = scalar_select %p2035, %s2034, 1
      %s2037 = scalar_lea.vmem %s27, %s2036
      %p2038 = scmp.lt.s32.totalorder %s91, 1
      %s2039 = scalar_select %p2038, %s91, 1
      %p2040 = scmp.lt.s32.totalorder %s91, 1
      %s2041 = scalar_select %p2040, %s91, 1
      %p2042 = scmp.lt.s32.totalorder %s2041, 1
      %s2043 = scalar_select %p2042, %s2041, 1
      %s2044 = scalar_lea.vmem %s29, %s2043
      %p2045 = scmp.lt.s32.totalorder %s91, 1
      %s2046 = scalar_select %p2045, %s91, 1
      %p2047 = scmp.lt.s32.totalorder %s91, 1
      %s2048 = scalar_select %p2047, %s91, 1
      %p2049 = scmp.lt.s32.totalorder %s2048, 1
      %s2050 = scalar_select %p2049, %s2048, 1
      %s2051 = scalar_lea.vmem %s31, %s2050
      %p2052 = scmp.lt.s32.totalorder %s91, 1
      %s2053 = scalar_select %p2052, %s91, 1
      %s2054 = ssub.s32 %s91, 2
      %p2055 = scmp.gt.s32.totalorder %s2054, 0
      %s2056 = scalar_select %p2055, %s2054, 0
      %p2057 = scmp.lt.s32.totalorder %s2056, 1
      %s2058 = scalar_select %p2057, %s2056, 1
      %s2059 = smul.addr %s2058, 4
      %s2060 = smul.addr %s2059, 4
      %s2061 = scalar_lea.vmem %s33, %s2060
      %s2062 = ssub.s32 %s91, 2
      %p2063 = scmp.gt.s32.totalorder %s2062, 0
      %s2064 = scalar_select %p2063, %s2062, 0
      %s2065 = ssub.s32 %s91, 2
      %p2066 = scmp.gt.s32.totalorder %s2065, 0
      %s2067 = scalar_select %p2066, %s2065, 0
      %p2068 = scmp.lt.s32.totalorder %s2067, 1
      %s2069 = scalar_select %p2068, %s2067, 1
      %s2070 = scalar_lea.vmem %s35, %s2069
      %s2071 = ssub.s32 %s91, 2
      %p2072 = scmp.gt.s32.totalorder %s2071, 0
      %s2073 = scalar_select %p2072, %s2071, 0
      %s2074 = ssub.s32 %s91, 2
      %p2075 = scmp.gt.s32.totalorder %s2074, 0
      %s2076 = scalar_select %p2075, %s2074, 0
      %p2077 = scmp.lt.s32.totalorder %s2076, 1
      %s2078 = scalar_select %p2077, %s2076, 1
      %s2079 = smul.addr %s2078, 4
      %s2080 = smul.addr %s2079, 4
      %s2081 = scalar_lea.vmem %s37, %s2080
      %s2082 = ssub.s32 %s91, 2
      %p2083 = scmp.gt.s32.totalorder %s2082, 0
      %s2084 = scalar_select %p2083, %s2082, 0
      %s2085 = ssub.s32 %s91, 2
      %p2086 = scmp.gt.s32.totalorder %s2085, 0
      %s2087 = scalar_select %p2086, %s2085, 0
      %p2088 = scmp.lt.s32.totalorder %s2087, 1
      %s2089 = scalar_select %p2088, %s2087, 1
      %s2090 = scalar_lea.vmem %s39, %s2089
      %s2091 = ssub.s32 %s91, 2
      %p2092 = scmp.gt.s32.totalorder %s2091, 0
      %s2093 = scalar_select %p2092, %s2091, 0
      %s2094 = ssub.s32 %s91, 2
      %p2095 = scmp.gt.s32.totalorder %s2094, 0
      %s2096 = scalar_select %p2095, %s2094, 0
      %p2097 = scmp.lt.s32.totalorder %s2096, 1
      %s2098 = scalar_select %p2097, %s2096, 1
      %s2099 = scalar_lea.vmem %s41, %s2098
      %s2100 = ssub.s32 %s91, 2
      %p2101 = scmp.gt.s32.totalorder %s2100, 0
      %s2102 = scalar_select %p2101, %s2100, 0
      %s2103 = ssub.s32 %s91, 2
      %p2104 = scmp.gt.s32.totalorder %s2103, 0
      %s2105 = scalar_select %p2104, %s2103, 0
      %p2106 = scmp.lt.s32.totalorder %s2105, 1
      %s2107 = scalar_select %p2106, %s2105, 1
      %s2108 = scalar_lea.vmem %s43, %s2107
      %s2109 = ssub.s32 %s91, 2
      %p2110 = scmp.gt.s32.totalorder %s2109, 0
      %s2111 = scalar_select %p2110, %s2109, 0
      %s2112 = ssub.s32 %s91, 2
      %p2113 = scmp.gt.s32.totalorder %s2112, 0
      %s2114 = scalar_select %p2113, %s2112, 0
      %p2115 = scmp.lt.s32.totalorder %s2114, 1
      %s2116 = scalar_select %p2115, %s2114, 1
      %s2117 = smul.addr %s2116, 4
      %s2118 = smul.addr %s2117, 4
      %s2119 = scalar_lea.vmem %s45, %s2118
      %s2120 = ssub.s32 %s91, 2
      %p2121 = scmp.gt.s32.totalorder %s2120, 0
      %s2122 = scalar_select %p2121, %s2120, 0
      %s2123 = ssub.s32 %s91, 2
      %p2124 = scmp.gt.s32.totalorder %s2123, 0
      %s2125 = scalar_select %p2124, %s2123, 0
      %p2126 = scmp.lt.s32.totalorder %s2125, 1
      %s2127 = scalar_select %p2126, %s2125, 1
      %s2128 = scalar_lea.vmem %s47, %s2127
      %s2129 = ssub.s32 %s91, 2
      %p2130 = scmp.gt.s32.totalorder %s2129, 0
      %s2131 = scalar_select %p2130, %s2129, 0
      %s2132 = ssub.s32 %s91, 2
      %p2133 = scmp.gt.s32.totalorder %s2132, 0
      %s2134 = scalar_select %p2133, %s2132, 0
      %p2135 = scmp.lt.s32.totalorder %s2134, 1
      %s2136 = scalar_select %p2135, %s2134, 1
      %s2137 = smul.addr %s2136, 4
      %s2138 = smul.addr %s2137, 4
      %s2139 = scalar_lea.vmem %s49, %s2138
      %s2140 = ssub.s32 %s91, 2
      %p2141 = scmp.gt.s32.totalorder %s2140, 0
      %s2142 = scalar_select %p2141, %s2140, 0
      %s2143 = ssub.s32 %s91, 2
      %p2144 = scmp.gt.s32.totalorder %s2143, 0
      %s2145 = scalar_select %p2144, %s2143, 0
      %p2146 = scmp.lt.s32.totalorder %s2145, 1
      %s2147 = scalar_select %p2146, %s2145, 1
      %s2148 = scalar_lea.vmem %s51, %s2147
      %s2149 = ssub.s32 %s91, 2
      %p2150 = scmp.gt.s32.totalorder %s2149, 0
      %s2151 = scalar_select %p2150, %s2149, 0
      %s2152 = ssub.s32 %s91, 2
      %p2153 = scmp.gt.s32.totalorder %s2152, 0
      %s2154 = scalar_select %p2153, %s2152, 0
      %p2155 = scmp.lt.s32.totalorder %s2154, 1
      %s2156 = scalar_select %p2155, %s2154, 1
      %s2157 = smul.addr %s2156, 4
      %s2158 = smul.addr %s2157, 4
      %s2159 = scalar_lea.vmem %s53, %s2158
      %s2160 = ssub.s32 %s91, 2
      %p2161 = scmp.gt.s32.totalorder %s2160, 0
      %s2162 = scalar_select %p2161, %s2160, 0
      %s2163 = ssub.s32 %s91, 2
      %p2164 = scmp.gt.s32.totalorder %s2163, 0
      %s2165 = scalar_select %p2164, %s2163, 0
      %p2166 = scmp.lt.s32.totalorder %s2165, 1
      %s2167 = scalar_select %p2166, %s2165, 1
      %s2168 = scalar_lea.vmem %s55, %s2167
      %s2169 = ssub.s32 %s91, 2
      %p2170 = scmp.gt.s32.totalorder %s2169, 0
      %s2171 = scalar_select %p2170, %s2169, 0
      %s2172 = ssub.s32 %s91, 2
      %p2173 = scmp.gt.s32.totalorder %s2172, 0
      %s2174 = scalar_select %p2173, %s2172, 0
      %p2175 = scmp.lt.s32.totalorder %s2174, 1
      %s2176 = scalar_select %p2175, %s2174, 1
      %s2177 = scalar_lea.vmem %s57, %s2176
      %s2178 = ssub.s32 %s91, 2
      %p2179 = scmp.gt.s32.totalorder %s2178, 0
      %s2180 = scalar_select %p2179, %s2178, 0
      %s2181 = ssub.s32 %s91, 2
      %p2182 = scmp.gt.s32.totalorder %s2181, 0
      %s2183 = scalar_select %p2182, %s2181, 0
      %p2184 = scmp.lt.s32.totalorder %s2183, 1
      %s2185 = scalar_select %p2184, %s2183, 1
      %s2186 = scalar_lea.vmem %s59, %s2185
      %s2187 = ssub.s32 %s91, 2
      %p2188 = scmp.gt.s32.totalorder %s2187, 0
      %s2189 = scalar_select %p2188, %s2187, 0
      %s2190 = ssub.s32 %s91, 2
      %p2191 = scmp.gt.s32.totalorder %s2190, 0
      %s2192 = scalar_select %p2191, %s2190, 0
      %p2193 = scmp.lt.s32.totalorder %s2192, 1
      %s2194 = scalar_select %p2193, %s2192, 1
      %s2195 = smul.addr %s2194, 4
      %s2196 = smul.addr %s2195, 4
      %s2197 = scalar_lea.vmem %s61, %s2196
      %s2198 = ssub.s32 %s91, 2
      %p2199 = scmp.gt.s32.totalorder %s2198, 0
      %s2200 = scalar_select %p2199, %s2198, 0
      %s2201 = ssub.s32 %s91, 2
      %p2202 = scmp.gt.s32.totalorder %s2201, 0
      %s2203 = scalar_select %p2202, %s2201, 0
      %p2204 = scmp.lt.s32.totalorder %s2203, 1
      %s2205 = scalar_select %p2204, %s2203, 1
      %s2206 = scalar_lea.vmem %s63, %s2205
      %s2207 = ssub.s32 %s91, 2
      %p2208 = scmp.gt.s32.totalorder %s2207, 0
      %s2209 = scalar_select %p2208, %s2207, 0
      %s2210 = ssub.s32 %s91, 2
      %p2211 = scmp.gt.s32.totalorder %s2210, 0
      %s2212 = scalar_select %p2211, %s2210, 0
      %p2213 = scmp.lt.s32.totalorder %s2212, 1
      %s2214 = scalar_select %p2213, %s2212, 1
      %s2215 = smul.addr %s2214, 8
      %s2216 = smul.addr %s2215, 4
      %s2217 = scalar_lea.vmem %s65, %s2216
      %s2218 = ssub.s32 %s91, 2
      %p2219 = scmp.gt.s32.totalorder %s2218, 0
      %s2220 = scalar_select %p2219, %s2218, 0
      %s2221 = ssub.s32 %s91, 2
      %p2222 = scmp.gt.s32.totalorder %s2221, 0
      %s2223 = scalar_select %p2222, %s2221, 0
      %p2224 = scmp.lt.s32.totalorder %s2223, 1
      %s2225 = scalar_select %p2224, %s2223, 1
      %s2226 = scalar_lea.vmem %s67, %s2225
      %s2227 = ssub.s32 %s91, 2
      %p2228 = scmp.gt.s32.totalorder %s2227, 0
      %s2229 = scalar_select %p2228, %s2227, 0
      %s2230 = ssub.s32 %s91, 2
      %p2231 = scmp.gt.s32.totalorder %s2230, 0
      %s2232 = scalar_select %p2231, %s2230, 0
      %p2233 = scmp.lt.s32.totalorder %s2232, 1
      %s2234 = scalar_select %p2233, %s2232, 1
      %s2235 = scalar_lea.vmem %s69, %s2234
      %s2236 = ssub.s32 %s91, 2
      %p2237 = scmp.gt.s32.totalorder %s2236, 0
      %s2238 = scalar_select %p2237, %s2236, 0
      %s2239 = ssub.s32 %s91, 2
      %p2240 = scmp.gt.s32.totalorder %s2239, 0
      %s2241 = scalar_select %p2240, %s2239, 0
      %p2242 = scmp.lt.s32.totalorder %s2241, 1
      %s2243 = scalar_select %p2242, %s2241, 1
      %s2244 = scalar_lea.vmem %s71, %s2243
      %s2245 = ssub.s32 %s91, 2
      %p2246 = scmp.gt.s32.totalorder %s2245, 0
      %s2247 = scalar_select %p2246, %s2245, 0
      %p2249 = scmp.lt.s32.totalorder %s91, 2
      // Predicated region
      $region173: #{seq2seq_forward.1} parent=171 // pred_check
        %p2250 = pneg %p2249
      $region174: #{seq2seq_forward.1} parent=171 // pred_check_branch
        %2252 = sbr.rel (%p2250) target = $region176
      $region175: #{seq2seq_forward.1} parent=171 // pred_region
        %p2253 = scmp.eq.s32.totalorder %s91, 0
        // Predicated region
        $region177: #{seq2seq_forward.1} parent=175 // pred_check
          %p2254 = pneg %p2253
        $region178: #{seq2seq_forward.1} parent=175 // pred_check_branch
          %2256 = sbr.rel (%p2254) target = $region180
        $region179: #{seq2seq_forward.1} parent=175 // pred_region
          %v2257 = vld [vmem:[%s1] sm:$0xff]
          %v2258 = vld [vmem:[%s1 + $0x8] sm:$0xff]
          %vm2259 = vcmask 261120
          %2260 = vst.msk [vmem:[#allocation2] sm:$0xff] %vm2259, %v2257
          %2261 = vst.msk [vmem:[#allocation2 + $0x8] sm:$0xff] %vm2259, %v2258
        $region180: #{seq2seq_forward.1} parent=175 // pred_fallthru
          _
        %v2262 = vld [vmem:[%s5] sm:$0x3]
        %v2263 = vld [vmem:[%s1968] sm:$0xf]
        %v2264 = vld [vmem:[%s1968 + $0x4] sm:$0xf]
        %v2265 = vld [vmem:[%s1968 + $0x8] sm:$0xf]
        %v2266 = vld [vmem:[%s1968 + $0xc] sm:$0xf]
        %v2267 = vld [vmem:[%s1975] sm:$0x1]
        %v2268 = vld [vmem:[%s1984] sm:$0xf]
        %v2269 = vld [vmem:[%s1984 + $0x4] sm:$0xf]
        %v2270 = vld [vmem:[%s1984 + $0x8] sm:$0xf]
        %v2271 = vld [vmem:[%s1984 + $0xc] sm:$0xf]
        %v2272 = vld [vmem:[%s1991] sm:$0x1]
        %v2273 = vld [vmem:[%s1998] sm:$0x1]
        %v2274 = vld [vmem:[%s2005] sm:$0x1]
        %v2275 = vld [vmem:[%s2014] sm:$0xf]
        %v2276 = vld [vmem:[%s2014 + $0x4] sm:$0xf]
        %v2277 = vld [vmem:[%s2014 + $0x8] sm:$0xf]
        %v2278 = vld [vmem:[%s2014 + $0xc] sm:$0xf]
        %v2279 = vld [vmem:[%s2021] sm:$0x1]
        %v2280 = vld [vmem:[%s2030] sm:$0xf]
        %v2281 = vld [vmem:[%s2030 + $0x4] sm:$0xf]
        %v2282 = vld [vmem:[%s2030 + $0x8] sm:$0xf]
        %v2283 = vld [vmem:[%s2030 + $0xc] sm:$0xf]
        %v2284 = vld [vmem:[%s2030 + $0x10] sm:$0xf]
        %v2285 = vld [vmem:[%s2030 + $0x14] sm:$0xf]
        %v2286 = vld [vmem:[%s2030 + $0x18] sm:$0xf]
        %v2287 = vld [vmem:[%s2030 + $0x1c] sm:$0xf]
        %v2288 = vld [vmem:[%s2037] sm:$0x1]
        %v2289 = vld [vmem:[%s2044] sm:$0x1]
        %v2290 = vld [vmem:[%s2051] sm:$0x1]
        %v2291 = vld [vmem:[#allocation2] sm:$0xff]
        %v2292 = vld [vmem:[#allocation2 + $0x8] sm:$0xff]
        %v2293 = vpack.c.bf16 %v2292, %v2291
        %v2295 = vlaneseq
        %v2296 = vshrl.u32 %v2295, 7
        %v2297 = vsub.s32 0, %v2296
        %v2298 = vrot.slane %v2267, %v2297
        %v2304 = vunpack.c.l.b16 %v2263
        %v2305 = vunpack.c.l.b16 %v2264
        %v2306 = vunpack.c.l.b16 %v2265
        %v2307 = vunpack.c.l.b16 %v2266
        %v2308 = vpack.c.b16 %v2305, %v2304
        %v2309 = vpack.c.b16 %v2307, %v2306
        %vm2312 = vcmask 261120
        %v2314 = vsel %vm2312, %v2293, 0
        %2316 = vmatprep.subr.bf16.mxu0 0
        %2317 = vmatpush1.bf16.msra.mxu0 %v2308
        %2318 = vmatprep.subr.bf16.mxu0 0
        %2319 = vmatpush1.bf16.msra.mxu0 %v2309
        %2320 = vmatprep.subr.bf16.mxu0 0
        %2321 = vmatpush1.bf16.msra.mxu0 0
        %2322 = vmatprep.subr.bf16.mxu0 0
        %2323 = vmatpush1.bf16.msra.mxu0 0
        %2324 = vmatprep.subr.bf16.mxu0 0
        %2325 = vmatpush1.bf16.msra.mxu0 0
        %2326 = vmatprep.subr.bf16.mxu0 0
        %2327 = vmatpush1.bf16.msra.mxu0 0
        %2328 = vmatprep.subr.bf16.mxu0 0
        %2329 = vmatpush1.bf16.msra.mxu0 0
        %2330 = vmatprep.subr.bf16.mxu0 0
        %2331 = vmatpush1.bf16.msra.mxu0 0
        %2332 = vmatprep.subr.bf16.mxu0 0
        %2333 = vmatpush1.bf16.msra.mxu0 0
        %2334 = vmatprep.subr.bf16.mxu0 0
        %2335 = vmatpush1.bf16.msra.mxu0 0
        %2336 = vmatprep.subr.bf16.mxu0 0
        %2337 = vmatpush1.bf16.msra.mxu0 0
        %2338 = vmatprep.subr.bf16.mxu0 0
        %2339 = vmatpush1.bf16.msra.mxu0 0
        %2340 = vmatprep.subr.bf16.mxu0 0
        %2341 = vmatpush1.bf16.msra.mxu0 0
        %2342 = vmatprep.subr.bf16.mxu0 0
        %2343 = vmatpush1.bf16.msra.mxu0 0
        %2344 = vmatprep.subr.bf16.mxu0 0
        %2345 = vmatpush1.bf16.msra.mxu0 0
        %2346 = vmatprep.subr.bf16.mxu0 0
        %2347 = vmatpush1.bf16.msra.mxu0 0
        %2348 = vmatprep.mubr.bf16.mxu0 0
        %2349 = vmatmul.mubr.bf16.gmra.mrb[0].mxu0 %v2314
        %v2350 = vpop.f32.mrb[0].mxu0
        %v2351 = vadd.f32 %v2298, %v2350
        %v2352 = vpop.f32.mrb[0].mxu0
        %v2353 = vpop.f32.mrb[0].mxu0
        %v2354 = vadd.f32 %v2298, %v2353
        %v2355 = vpop.f32.mrb[0].mxu0
        %2356 = vdwg.mxu0
        %vm2357 = vcmp.ne.s32.totalorder %v2262, 0
        %v2358 = vpack.c.bf16 %v2351, %v2351
        %2360 = vrot.lane.b32.xlu0 %v2358, 96
        %v2361 = vpop.permute.xlu0 %2360
        %vm2362 = vcmask 130048
        %v2364 = vsel %vm2362, %v2358, 0
        %v2367 = vsel %vm2362, %v2361, 0
        %2369 = vmatprep.subr.bf16.mxu0 0
        %2370 = vmatpush1.bf16.xpose.msra.mxu0 %v2367
        %2371 = vmatprep.subr.bf16.mxu0 0
        %2372 = vmatpush1.bf16.xpose.msra.mxu0 0
        %2373 = vmatprep.subr.bf16.mxu0 0
        %2374 = vmatpush1.bf16.xpose.msra.mxu0 0
        %2375 = vmatprep.subr.bf16.mxu0 0
        %2376 = vmatpush1.bf16.xpose.msra.mxu0 0
        %2377 = vmatprep.subr.bf16.mxu0 0
        %2378 = vmatpush1.bf16.xpose.msra.mxu0 0
        %2379 = vmatprep.subr.bf16.mxu0 0
        %2380 = vmatpush1.bf16.xpose.msra.mxu0 0
        %2381 = vmatprep.subr.bf16.mxu0 0
        %2382 = vmatpush1.bf16.xpose.msra.mxu0 0
        %2383 = vmatprep.subr.bf16.mxu0 0
        %2384 = vmatpush1.bf16.xpose.msra.mxu0 0
        %2385 = vmatprep.subr.bf16.mxu0 0
        %2386 = vmatpush1.bf16.xpose.msra.mxu0 0
        %2387 = vmatprep.subr.bf16.mxu0 0
        %2388 = vmatpush1.bf16.xpose.msra.mxu0 0
        %2389 = vmatprep.subr.bf16.mxu0 0
        %2390 = vmatpush1.bf16.xpose.msra.mxu0 0
        %2391 = vmatprep.subr.bf16.mxu0 0
        %2392 = vmatpush1.bf16.xpose.msra.mxu0 0
        %2393 = vmatprep.subr.bf16.mxu0 0
        %2394 = vmatpush1.bf16.xpose.msra.mxu0 0
        %2395 = vmatprep.subr.bf16.mxu0 0
        %2396 = vmatpush1.bf16.xpose.msra.mxu0 0
        %2397 = vmatprep.subr.bf16.mxu0 0
        %2398 = vmatpush1.bf16.xpose.msra.mxu0 0
        %2399 = vmatprep.subr.bf16.mxu0 0
        %2400 = vmatpush1.bf16.xpose.msra.mxu0 0
        %2401 = vmatprep.mubr.bf16.mxu0 0
        %2402 = vmatmul.mubr.bf16.gmra.mrb[0].mxu0 %v2364
        %v2403 = vpop.f32.mrb[0].mxu0
        %v2404 = vadd.f32 0.0, %v2403
        %v2405 = vpop.f32.mrb[0].mxu0
        %v2406 = vpop.f32.mrb[0].mxu0
        %v2407 = vpop.f32.mrb[0].mxu0
        %2408 = vdwg.mxu0
        %v2409 = vmul.f32 %v2404, 0.25
        %v2410 = vsel %vm2357, 1, 0
        %v2411 = vlaneseq
        %v2412 = vshrl.u32 %v2411, 7
        %v2413 = vsub.s32 0, %v2412
        %v2414 = vrot.slane %v2410, %v2413
        %vm2415 = vcmp.eq.s32.totalorder %v2414, 1
        %v2416 = vsel %vm2415, %v2409, -1e+10
        %vm2417 = vcmask 64512
        %v2418 = vsel %vm2417, %v2416, -inf
        %2419 = vmax.xlane.f32.xlu0 %v2418
        %v2420 = vpop.xlane.xlu0 %2419
        %v2421 = vsub.f32 %v2416, %v2420
        %v2422 = vmul.f32 %v2421, 1.442695
        %v2423 = vpow.pop %v2422
        %v2424 = vsel %vm2417, %v2423, 0.0
        %2425 = vadd.xlane.f32.xlu0 %v2424
        %v2426 = vpop.xlane.xlu0 %2425
        %v2427 = vrcp.pop %v2426
        %v2428 = vmul.f32 %v2423, %v2427
        %v2429 = vpack.c.bf16 %v2428, %v2428
        %2430 = vrot.lane.b32.xlu0 %v2358, 64
        %v2431 = vpop.permute.xlu0 %2430
        %v2433 = vsel %vm2417, %v2429, 0
        %vm2435 = vcmask 1043456
        %v2437 = vsel %vm2435, %v2431, 0
        %2439 = vmatprep.subr.bf16.mxu0 0
        %2440 = vmatpush1.bf16.msra.mxu0 %v2437
        %2441 = vmatprep.subr.bf16.mxu0 0
        %2442 = vmatpush1.bf16.msra.mxu0 0
        %2443 = vmatprep.subr.bf16.mxu0 0
        %2444 = vmatpush1.bf16.msra.mxu0 0
        %2445 = vmatprep.subr.bf16.mxu0 0
        %2446 = vmatpush1.bf16.msra.mxu0 0
        %2447 = vmatprep.subr.bf16.mxu0 0
        %2448 = vmatpush1.bf16.msra.mxu0 0
        %2449 = vmatprep.subr.bf16.mxu0 0
        %2450 = vmatpush1.bf16.msra.mxu0 0
        %2451 = vmatprep.subr.bf16.mxu0 0
        %2452 = vmatpush1.bf16.msra.mxu0 0
        %2453 = vmatprep.subr.bf16.mxu0 0
        %2454 = vmatpush1.bf16.msra.mxu0 0
        %2455 = vmatprep.subr.bf16.mxu0 0
        %2456 = vmatpush1.bf16.msra.mxu0 0
        %2457 = vmatprep.subr.bf16.mxu0 0
        %2458 = vmatpush1.bf16.msra.mxu0 0
        %2459 = vmatprep.subr.bf16.mxu0 0
        %2460 = vmatpush1.bf16.msra.mxu0 0
        %2461 = vmatprep.subr.bf16.mxu0 0
        %2462 = vmatpush1.bf16.msra.mxu0 0
        %2463 = vmatprep.subr.bf16.mxu0 0
        %2464 = vmatpush1.bf16.msra.mxu0 0
        %2465 = vmatprep.subr.bf16.mxu0 0
        %2466 = vmatpush1.bf16.msra.mxu0 0
        %2467 = vmatprep.subr.bf16.mxu0 0
        %2468 = vmatpush1.bf16.msra.mxu0 0
        %2469 = vmatprep.subr.bf16.mxu0 0
        %2470 = vmatpush1.bf16.msra.mxu0 0
        %2471 = vmatprep.mubr.bf16.mxu0 0
        %2472 = vmatmul.mubr.bf16.gmra.mrb[0].mxu0 %v2433
        %v2473 = vpop.f32.mrb[0].mxu0
        %v2474 = vadd.f32 0.0, %v2473
        %v2475 = vpop.f32.mrb[0].mxu0
        %v2476 = vpop.f32.mrb[0].mxu0
        %v2477 = vpop.f32.mrb[0].mxu0
        %2478 = vdwg.mxu0
        %2479 = vrot.lane.b32.xlu0 %v2358, 112
        %v2480 = vpop.permute.xlu0 %2479
        %2481 = vrot.lane.b32.xlu0 %v2358, 80
        %v2482 = vpop.permute.xlu0 %2481
        %v2484 = vsel %vm2362, %v2480, 0
        %v2487 = vsel %vm2362, %v2482, 0
        %2489 = vmatprep.subr.bf16.mxu0 0
        %2490 = vmatpush1.bf16.xpose.msra.mxu0 %v2487
        %2491 = vmatprep.subr.bf16.mxu0 0
        %2492 = vmatpush1.bf16.xpose.msra.mxu0 0
        %2493 = vmatprep.subr.bf16.mxu0 0
        %2494 = vmatpush1.bf16.xpose.msra.mxu0 0
        %2495 = vmatprep.subr.bf16.mxu0 0
        %2496 = vmatpush1.bf16.xpose.msra.mxu0 0
        %2497 = vmatprep.subr.bf16.mxu0 0
        %2498 = vmatpush1.bf16.xpose.msra.mxu0 0
        %2499 = vmatprep.subr.bf16.mxu0 0
        %2500 = vmatpush1.bf16.xpose.msra.mxu0 0
        %2501 = vmatprep.subr.bf16.mxu0 0
        %2502 = vmatpush1.bf16.xpose.msra.mxu0 0
        %2503 = vmatprep.subr.bf16.mxu0 0
        %2504 = vmatpush1.bf16.xpose.msra.mxu0 0
        %2505 = vmatprep.subr.bf16.mxu0 0
        %2506 = vmatpush1.bf16.xpose.msra.mxu0 0
        %2507 = vmatprep.subr.bf16.mxu0 0
        %2508 = vmatpush1.bf16.xpose.msra.mxu0 0
        %2509 = vmatprep.subr.bf16.mxu0 0
        %2510 = vmatpush1.bf16.xpose.msra.mxu0 0
        %2511 = vmatprep.subr.bf16.mxu0 0
        %2512 = vmatpush1.bf16.xpose.msra.mxu0 0
        %2513 = vmatprep.subr.bf16.mxu0 0
        %2514 = vmatpush1.bf16.xpose.msra.mxu0 0
        %2515 = vmatprep.subr.bf16.mxu0 0
        %2516 = vmatpush1.bf16.xpose.msra.mxu0 0
        %2517 = vmatprep.subr.bf16.mxu0 0
        %2518 = vmatpush1.bf16.xpose.msra.mxu0 0
        %2519 = vmatprep.subr.bf16.mxu0 0
        %2520 = vmatpush1.bf16.xpose.msra.mxu0 0
        %2521 = vmatprep.mubr.bf16.mxu0 0
        %2522 = vmatmul.mubr.bf16.gmra.mrb[0].mxu0 %v2484
        %v2523 = vpop.f32.mrb[0].mxu0
        %v2524 = vadd.f32 0.0, %v2523
        %v2525 = vpop.f32.mrb[0].mxu0
        %v2526 = vpop.f32.mrb[0].mxu0
        %v2527 = vpop.f32.mrb[0].mxu0
        %2528 = vdwg.mxu0
        %v2529 = vmul.f32 %v2524, 0.25
        %v2530 = vsel %vm2415, %v2529, -1e+10
        %v2531 = vsel %vm2417, %v2530, -inf
        %2532 = vmax.xlane.f32.xlu0 %v2531
        %v2533 = vpop.xlane.xlu0 %2532
        %v2534 = vsub.f32 %v2530, %v2533
        %v2535 = vmul.f32 %v2534, 1.442695
        %v2536 = vpow.pop %v2535
        %v2537 = vsel %vm2417, %v2536, 0.0
        %2538 = vadd.xlane.f32.xlu0 %v2537
        %v2539 = vpop.xlane.xlu0 %2538
        %v2540 = vrcp.pop %v2539
        %v2541 = vmul.f32 %v2536, %v2540
        %v2542 = vpack.c.bf16 %v2541, %v2541
        %2543 = vrot.lane.b32.xlu0 %v2358, 48
        %v2544 = vpop.permute.xlu0 %2543
        %v2546 = vsel %vm2417, %v2542, 0
        %v2549 = vsel %vm2435, %v2544, 0
        %2551 = vmatprep.subr.bf16.mxu0 0
        %2552 = vmatpush1.bf16.msra.mxu0 %v2549
        %2553 = vmatprep.subr.bf16.mxu0 0
        %2554 = vmatpush1.bf16.msra.mxu0 0
        %2555 = vmatprep.subr.bf16.mxu0 0
        %2556 = vmatpush1.bf16.msra.mxu0 0
        %2557 = vmatprep.subr.bf16.mxu0 0
        %2558 = vmatpush1.bf16.msra.mxu0 0
        %2559 = vmatprep.subr.bf16.mxu0 0
        %2560 = vmatpush1.bf16.msra.mxu0 0
        %2561 = vmatprep.subr.bf16.mxu0 0
        %2562 = vmatpush1.bf16.msra.mxu0 0
        %2563 = vmatprep.subr.bf16.mxu0 0
        %2564 = vmatpush1.bf16.msra.mxu0 0
        %2565 = vmatprep.subr.bf16.mxu0 0
        %2566 = vmatpush1.bf16.msra.mxu0 0
        %2567 = vmatprep.subr.bf16.mxu0 0
        %2568 = vmatpush1.bf16.msra.mxu0 0
        %2569 = vmatprep.subr.bf16.mxu0 0
        %2570 = vmatpush1.bf16.msra.mxu0 0
        %2571 = vmatprep.subr.bf16.mxu0 0
        %2572 = vmatpush1.bf16.msra.mxu0 0
        %2573 = vmatprep.subr.bf16.mxu0 0
        %2574 = vmatpush1.bf16.msra.mxu0 0
        %2575 = vmatprep.subr.bf16.mxu0 0
        %2576 = vmatpush1.bf16.msra.mxu0 0
        %2577 = vmatprep.subr.bf16.mxu0 0
        %2578 = vmatpush1.bf16.msra.mxu0 0
        %2579 = vmatprep.subr.bf16.mxu0 0
        %2580 = vmatpush1.bf16.msra.mxu0 0
        %2581 = vmatprep.subr.bf16.mxu0 0
        %2582 = vmatpush1.bf16.msra.mxu0 0
        %2583 = vmatprep.mubr.bf16.mxu0 0
        %2584 = vmatmul.mubr.bf16.gmra.mrb[0].mxu0 %v2546
        %v2585 = vpop.f32.mrb[0].mxu0
        %v2586 = vadd.f32 0.0, %v2585
        %v2587 = vpop.f32.mrb[0].mxu0
        %v2588 = vpop.f32.mrb[0].mxu0
        %v2589 = vpop.f32.mrb[0].mxu0
        %2590 = vdwg.mxu0
        %2592 = vrot.lane.b32.xlu0 %v2586, 16
        %v2593 = vpop.permute.xlu0 %2592
        %v2595 = vsel %vm2362, %v2474, %v2593
        %v2596 = vpack.c.bf16 %v2354, %v2354
        %2598 = vrot.lane.b32.xlu0 %v2596, 96
        %v2599 = vpop.permute.xlu0 %2598
        %v2601 = vsel %vm2362, %v2596, 0
        %v2604 = vsel %vm2362, %v2599, 0
        %2606 = vmatprep.subr.bf16.mxu0 0
        %2607 = vmatpush1.bf16.xpose.msra.mxu0 %v2604
        %2608 = vmatprep.subr.bf16.mxu0 0
        %2609 = vmatpush1.bf16.xpose.msra.mxu0 0
        %2610 = vmatprep.subr.bf16.mxu0 0
        %2611 = vmatpush1.bf16.xpose.msra.mxu0 0
        %2612 = vmatprep.subr.bf16.mxu0 0
        %2613 = vmatpush1.bf16.xpose.msra.mxu0 0
        %2614 = vmatprep.subr.bf16.mxu0 0
        %2615 = vmatpush1.bf16.xpose.msra.mxu0 0
        %2616 = vmatprep.subr.bf16.mxu0 0
        %2617 = vmatpush1.bf16.xpose.msra.mxu0 0
        %2618 = vmatprep.subr.bf16.mxu0 0
        %2619 = vmatpush1.bf16.xpose.msra.mxu0 0
        %2620 = vmatprep.subr.bf16.mxu0 0
        %2621 = vmatpush1.bf16.xpose.msra.mxu0 0
        %2622 = vmatprep.subr.bf16.mxu0 0
        %2623 = vmatpush1.bf16.xpose.msra.mxu0 0
        %2624 = vmatprep.subr.bf16.mxu0 0
        %2625 = vmatpush1.bf16.xpose.msra.mxu0 0
        %2626 = vmatprep.subr.bf16.mxu0 0
        %2627 = vmatpush1.bf16.xpose.msra.mxu0 0
        %2628 = vmatprep.subr.bf16.mxu0 0
        %2629 = vmatpush1.bf16.xpose.msra.mxu0 0
        %2630 = vmatprep.subr.bf16.mxu0 0
        %2631 = vmatpush1.bf16.xpose.msra.mxu0 0
        %2632 = vmatprep.subr.bf16.mxu0 0
        %2633 = vmatpush1.bf16.xpose.msra.mxu0 0
        %2634 = vmatprep.subr.bf16.mxu0 0
        %2635 = vmatpush1.bf16.xpose.msra.mxu0 0
        %2636 = vmatprep.subr.bf16.mxu0 0
        %2637 = vmatpush1.bf16.xpose.msra.mxu0 0
        %2638 = vmatprep.mubr.bf16.mxu0 0
        %2639 = vmatmul.mubr.bf16.gmra.mrb[0].mxu0 %v2601
        %v2640 = vpop.f32.mrb[0].mxu0
        %v2641 = vadd.f32 0.0, %v2640
        %v2642 = vpop.f32.mrb[0].mxu0
        %v2643 = vpop.f32.mrb[0].mxu0
        %v2644 = vpop.f32.mrb[0].mxu0
        %2645 = vdwg.mxu0
        %v2646 = vmul.f32 %v2641, 0.25
        %v2647 = vlaneseq
        %v2648 = vshrl.u32 %v2647, 7
        %v2649 = vsub.s32 1, %v2648
        %v2650 = vrot.slane %v2410, %v2649
        %vm2651 = vcmp.eq.s32.totalorder %v2650, 1
        %v2652 = vsel %vm2651, %v2646, -1e+10
        %v2653 = vsel %vm2417, %v2652, -inf
        %2654 = vmax.xlane.f32.xlu0 %v2653
        %v2655 = vpop.xlane.xlu0 %2654
        %v2656 = vsub.f32 %v2652, %v2655
        %v2657 = vmul.f32 %v2656, 1.442695
        %v2658 = vpow.pop %v2657
        %v2659 = vsel %vm2417, %v2658, 0.0
        %2660 = vadd.xlane.f32.xlu0 %v2659
        %v2661 = vpop.xlane.xlu0 %2660
        %v2662 = vrcp.pop %v2661
        %v2663 = vmul.f32 %v2658, %v2662
        %v2664 = vpack.c.bf16 %v2663, %v2663
        %2665 = vrot.lane.b32.xlu0 %v2596, 64
        %v2666 = vpop.permute.xlu0 %2665
        %v2668 = vsel %vm2417, %v2664, 0
        %v2671 = vsel %vm2435, %v2666, 0
        %2673 = vmatprep.subr.bf16.mxu0 0
        %2674 = vmatpush1.bf16.msra.mxu0 %v2671
        %2675 = vmatprep.subr.bf16.mxu0 0
        %2676 = vmatpush1.bf16.msra.mxu0 0
        %2677 = vmatprep.subr.bf16.mxu0 0
        %2678 = vmatpush1.bf16.msra.mxu0 0
        %2679 = vmatprep.subr.bf16.mxu0 0
        %2680 = vmatpush1.bf16.msra.mxu0 0
        %2681 = vmatprep.subr.bf16.mxu0 0
        %2682 = vmatpush1.bf16.msra.mxu0 0
        %2683 = vmatprep.subr.bf16.mxu0 0
        %2684 = vmatpush1.bf16.msra.mxu0 0
        %2685 = vmatprep.subr.bf16.mxu0 0
        %2686 = vmatpush1.bf16.msra.mxu0 0
        %2687 = vmatprep.subr.bf16.mxu0 0
        %2688 = vmatpush1.bf16.msra.mxu0 0
        %2689 = vmatprep.subr.bf16.mxu0 0
        %2690 = vmatpush1.bf16.msra.mxu0 0
        %2691 = vmatprep.subr.bf16.mxu0 0
        %2692 = vmatpush1.bf16.msra.mxu0 0
        %2693 = vmatprep.subr.bf16.mxu0 0
        %2694 = vmatpush1.bf16.msra.mxu0 0
        %2695 = vmatprep.subr.bf16.mxu0 0
        %2696 = vmatpush1.bf16.msra.mxu0 0
        %2697 = vmatprep.subr.bf16.mxu0 0
        %2698 = vmatpush1.bf16.msra.mxu0 0
        %2699 = vmatprep.subr.bf16.mxu0 0
        %2700 = vmatpush1.bf16.msra.mxu0 0
        %2701 = vmatprep.subr.bf16.mxu0 0
        %2702 = vmatpush1.bf16.msra.mxu0 0
        %2703 = vmatprep.subr.bf16.mxu0 0
        %2704 = vmatpush1.bf16.msra.mxu0 0
        %2705 = vmatprep.mubr.bf16.mxu0 0
        %2706 = vmatmul.mubr.bf16.gmra.mrb[0].mxu0 %v2668
        %v2707 = vpop.f32.mrb[0].mxu0
        %v2708 = vadd.f32 0.0, %v2707
        %v2709 = vpop.f32.mrb[0].mxu0
        %v2710 = vpop.f32.mrb[0].mxu0
        %v2711 = vpop.f32.mrb[0].mxu0
        %2712 = vdwg.mxu0
        %2713 = vrot.lane.b32.xlu0 %v2596, 112
        %v2714 = vpop.permute.xlu0 %2713
        %2715 = vrot.lane.b32.xlu0 %v2596, 80
        %v2716 = vpop.permute.xlu0 %2715
        %v2718 = vsel %vm2362, %v2714, 0
        %v2721 = vsel %vm2362, %v2716, 0
        %2723 = vmatprep.subr.bf16.mxu0 0
        %2724 = vmatpush1.bf16.xpose.msra.mxu0 %v2721
        %2725 = vmatprep.subr.bf16.mxu0 0
        %2726 = vmatpush1.bf16.xpose.msra.mxu0 0
        %2727 = vmatprep.subr.bf16.mxu0 0
        %2728 = vmatpush1.bf16.xpose.msra.mxu0 0
        %2729 = vmatprep.subr.bf16.mxu0 0
        %2730 = vmatpush1.bf16.xpose.msra.mxu0 0
        %2731 = vmatprep.subr.bf16.mxu0 0
        %2732 = vmatpush1.bf16.xpose.msra.mxu0 0
        %2733 = vmatprep.subr.bf16.mxu0 0
        %2734 = vmatpush1.bf16.xpose.msra.mxu0 0
        %2735 = vmatprep.subr.bf16.mxu0 0
        %2736 = vmatpush1.bf16.xpose.msra.mxu0 0
        %2737 = vmatprep.subr.bf16.mxu0 0
        %2738 = vmatpush1.bf16.xpose.msra.mxu0 0
        %2739 = vmatprep.subr.bf16.mxu0 0
        %2740 = vmatpush1.bf16.xpose.msra.mxu0 0
        %2741 = vmatprep.subr.bf16.mxu0 0
        %2742 = vmatpush1.bf16.xpose.msra.mxu0 0
        %2743 = vmatprep.subr.bf16.mxu0 0
        %2744 = vmatpush1.bf16.xpose.msra.mxu0 0
        %2745 = vmatprep.subr.bf16.mxu0 0
        %2746 = vmatpush1.bf16.xpose.msra.mxu0 0
        %2747 = vmatprep.subr.bf16.mxu0 0
        %2748 = vmatpush1.bf16.xpose.msra.mxu0 0
        %2749 = vmatprep.subr.bf16.mxu0 0
        %2750 = vmatpush1.bf16.xpose.msra.mxu0 0
        %2751 = vmatprep.subr.bf16.mxu0 0
        %2752 = vmatpush1.bf16.xpose.msra.mxu0 0
        %2753 = vmatprep.subr.bf16.mxu0 0
        %2754 = vmatpush1.bf16.xpose.msra.mxu0 0
        %2755 = vmatprep.mubr.bf16.mxu0 0
        %2756 = vmatmul.mubr.bf16.gmra.mrb[0].mxu0 %v2718
        %v2757 = vpop.f32.mrb[0].mxu0
        %v2758 = vadd.f32 0.0, %v2757
        %v2759 = vpop.f32.mrb[0].mxu0
        %v2760 = vpop.f32.mrb[0].mxu0
        %v2761 = vpop.f32.mrb[0].mxu0
        %2762 = vdwg.mxu0
        %v2763 = vmul.f32 %v2758, 0.25
        %v2764 = vsel %vm2651, %v2763, -1e+10
        %v2765 = vsel %vm2417, %v2764, -inf
        %2766 = vmax.xlane.f32.xlu0 %v2765
        %v2767 = vpop.xlane.xlu0 %2766
        %v2768 = vsub.f32 %v2764, %v2767
        %v2769 = vmul.f32 %v2768, 1.442695
        %v2770 = vpow.pop %v2769
        %v2771 = vsel %vm2417, %v2770, 0.0
        %2772 = vadd.xlane.f32.xlu0 %v2771
        %v2773 = vpop.xlane.xlu0 %2772
        %v2774 = vrcp.pop %v2773
        %v2775 = vmul.f32 %v2770, %v2774
        %v2776 = vpack.c.bf16 %v2775, %v2775
        %2777 = vrot.lane.b32.xlu0 %v2596, 48
        %v2778 = vpop.permute.xlu0 %2777
        %v2780 = vsel %vm2417, %v2776, 0
        %v2783 = vsel %vm2435, %v2778, 0
        %2785 = vmatprep.subr.bf16.mxu0 0
        %2786 = vmatpush1.bf16.msra.mxu0 %v2783
        %2787 = vmatprep.subr.bf16.mxu0 0
        %2788 = vmatpush1.bf16.msra.mxu0 0
        %2789 = vmatprep.subr.bf16.mxu0 0
        %2790 = vmatpush1.bf16.msra.mxu0 0
        %2791 = vmatprep.subr.bf16.mxu0 0
        %2792 = vmatpush1.bf16.msra.mxu0 0
        %2793 = vmatprep.subr.bf16.mxu0 0
        %2794 = vmatpush1.bf16.msra.mxu0 0
        %2795 = vmatprep.subr.bf16.mxu0 0
        %2796 = vmatpush1.bf16.msra.mxu0 0
        %2797 = vmatprep.subr.bf16.mxu0 0
        %2798 = vmatpush1.bf16.msra.mxu0 0
        %2799 = vmatprep.subr.bf16.mxu0 0
        %2800 = vmatpush1.bf16.msra.mxu0 0
        %2801 = vmatprep.subr.bf16.mxu0 0
        %2802 = vmatpush1.bf16.msra.mxu0 0
        %2803 = vmatprep.subr.bf16.mxu0 0
        %2804 = vmatpush1.bf16.msra.mxu0 0
        %2805 = vmatprep.subr.bf16.mxu0 0
        %2806 = vmatpush1.bf16.msra.mxu0 0
        %2807 = vmatprep.subr.bf16.mxu0 0
        %2808 = vmatpush1.bf16.msra.mxu0 0
        %2809 = vmatprep.subr.bf16.mxu0 0
        %2810 = vmatpush1.bf16.msra.mxu0 0
        %2811 = vmatprep.subr.bf16.mxu0 0
        %2812 = vmatpush1.bf16.msra.mxu0 0
        %2813 = vmatprep.subr.bf16.mxu0 0
        %2814 = vmatpush1.bf16.msra.mxu0 0
        %2815 = vmatprep.subr.bf16.mxu0 0
        %2816 = vmatpush1.bf16.msra.mxu0 0
        %2817 = vmatprep.mubr.bf16.mxu0 0
        %2818 = vmatmul.mubr.bf16.gmra.mrb[0].mxu0 %v2780
        %v2819 = vpop.f32.mrb[0].mxu0
        %v2820 = vadd.f32 0.0, %v2819
        %v2821 = vpop.f32.mrb[0].mxu0
        %v2822 = vpop.f32.mrb[0].mxu0
        %v2823 = vpop.f32.mrb[0].mxu0
        %2824 = vdwg.mxu0
        %2826 = vrot.lane.b32.xlu0 %v2820, 16
        %v2827 = vpop.permute.xlu0 %2826
        %v2829 = vsel %vm2362, %v2708, %v2827
        %v2830 = vpack.c.bf16 %v2829, %v2595
        %v2832 = vlaneseq
        %v2833 = vshrl.u32 %v2832, 7
        %v2834 = vsub.s32 0, %v2833
        %v2835 = vrot.slane %v2272, %v2834
        %v2841 = vunpack.c.l.b16 %v2268
        %v2842 = vunpack.c.l.b16 %v2269
        %v2843 = vunpack.c.l.b16 %v2270
        %v2844 = vunpack.c.l.b16 %v2271
        %v2845 = vpack.c.b16 %v2842, %v2841
        %v2846 = vpack.c.b16 %v2844, %v2843
        %v2850 = vsel %vm2312, %v2830, 0
        %2852 = vmatprep.subr.bf16.mxu0 0
        %2853 = vmatpush1.bf16.msra.mxu0 %v2845
        %2854 = vmatprep.subr.bf16.mxu0 0
        %2855 = vmatpush1.bf16.msra.mxu0 %v2846
        %2856 = vmatprep.subr.bf16.mxu0 0
        %2857 = vmatpush1.bf16.msra.mxu0 0
        %2858 = vmatprep.subr.bf16.mxu0 0
        %2859 = vmatpush1.bf16.msra.mxu0 0
        %2860 = vmatprep.subr.bf16.mxu0 0
        %2861 = vmatpush1.bf16.msra.mxu0 0
        %2862 = vmatprep.subr.bf16.mxu0 0
        %2863 = vmatpush1.bf16.msra.mxu0 0
        %2864 = vmatprep.subr.bf16.mxu0 0
        %2865 = vmatpush1.bf16.msra.mxu0 0
        %2866 = vmatprep.subr.bf16.mxu0 0
        %2867 = vmatpush1.bf16.msra.mxu0 0
        %2868 = vmatprep.subr.bf16.mxu0 0
        %2869 = vmatpush1.bf16.msra.mxu0 0
        %2870 = vmatprep.subr.bf16.mxu0 0
        %2871 = vmatpush1.bf16.msra.mxu0 0
        %2872 = vmatprep.subr.bf16.mxu0 0
        %2873 = vmatpush1.bf16.msra.mxu0 0
        %2874 = vmatprep.subr.bf16.mxu0 0
        %2875 = vmatpush1.bf16.msra.mxu0 0
        %2876 = vmatprep.subr.bf16.mxu0 0
        %2877 = vmatpush1.bf16.msra.mxu0 0
        %2878 = vmatprep.subr.bf16.mxu0 0
        %2879 = vmatpush1.bf16.msra.mxu0 0
        %2880 = vmatprep.subr.bf16.mxu0 0
        %2881 = vmatpush1.bf16.msra.mxu0 0
        %2882 = vmatprep.subr.bf16.mxu0 0
        %2883 = vmatpush1.bf16.msra.mxu0 0
        %2884 = vmatprep.mubr.bf16.mxu0 0
        %2885 = vmatmul.mubr.bf16.gmra.mrb[0].mxu0 %v2850
        %v2886 = vpop.f32.mrb[0].mxu0
        %v2887 = vadd.f32 %v2835, %v2886
        %v2888 = vpop.f32.mrb[0].mxu0
        %v2889 = vpop.f32.mrb[0].mxu0
        %v2890 = vadd.f32 %v2835, %v2889
        %v2891 = vpop.f32.mrb[0].mxu0
        %2892 = vdwg.mxu0
        %v2893 = vadd.f32 %v2291, %v2887
        %v2894 = vadd.f32 %v2292, %v2890
        %v2895 = vsel %vm2312, %v2893, 0.0
        %2896 = vadd.xlane.f32.xlu0 %v2895
        %v2897 = vpop.xlane.xlu0 %2896
        %v2898 = vsel %vm2312, %v2894, 0.0
        %2899 = vadd.xlane.f32.xlu0 %v2898
        %v2900 = vpop.xlane.xlu0 %2899
        %v2901 = vrcp.pop 32.0
        %v2902 = vmul.f32 %v2897, %v2901
        %v2903 = vmul.f32 %v2900, %v2901
        %v2904 = vsub.f32 %v2893, %v2902
        %v2905 = vsub.f32 %v2894, %v2903
        %v2906 = vmul.f32 %v2904, %v2904
        %v2907 = vmul.f32 %v2905, %v2905
        %v2908 = vsel %vm2312, %v2906, 0.0
        %2909 = vadd.xlane.f32.xlu0 %v2908
        %v2910 = vpop.xlane.xlu0 %2909
        %v2911 = vsel %vm2312, %v2907, 0.0
        %2912 = vadd.xlane.f32.xlu0 %v2911
        %v2913 = vpop.xlane.xlu0 %2912
        %v2914 = vmul.f32 %v2910, %v2901
        %v2915 = vmul.f32 %v2913, %v2901
        %v2916 = vadd.f32 %v2914, 1e-05
        %v2917 = vadd.f32 %v2915, 1e-05
        %v2918 = vrsqrt.pop %v2916
        %v2919 = vrsqrt.pop %v2917
        %v2920 = vmul.f32 %v2904, %v2918
        %v2921 = vmul.f32 %v2905, %v2919
        %v2923 = vlaneseq
        %v2924 = vshrl.u32 %v2923, 7
        %v2925 = vsub.s32 0, %v2924
        %v2926 = vrot.slane %v2273, %v2925
        %v2928 = vmul.f32 %v2920, %v2926
        %v2929 = vmul.f32 %v2921, %v2926
        %v2931 = vlaneseq
        %v2932 = vshrl.u32 %v2931, 7
        %v2933 = vsub.s32 0, %v2932
        %v2934 = vrot.slane %v2274, %v2933
        %v2936 = vadd.f32 %v2928, %v2934
        %v2937 = vadd.f32 %v2929, %v2934
        %v2938 = vpack.c.bf16 %v2937, %v2936
        %v2940 = vlaneseq
        %v2941 = vshrl.u32 %v2940, 7
        %v2942 = vsub.s32 0, %v2941
        %v2943 = vrot.slane %v2279, %v2942
        %v2949 = vunpack.c.l.b16 %v2275
        %v2950 = vunpack.c.l.b16 %v2276
        %v2951 = vunpack.c.l.b16 %v2277
        %v2952 = vunpack.c.l.b16 %v2278
        %v2953 = vpack.c.b16 %v2950, %v2949
        %v2954 = vpack.c.b16 %v2952, %v2951
        %v2958 = vsel %vm2312, %v2938, 0
        %2960 = vmatprep.subr.bf16.mxu0 0
        %2961 = vmatpush1.bf16.msra.mxu0 %v2953
        %2962 = vmatprep.subr.bf16.mxu0 0
        %2963 = vmatpush1.bf16.msra.mxu0 %v2954
        %2964 = vmatprep.subr.bf16.mxu0 0
        %2965 = vmatpush1.bf16.msra.mxu0 0
        %2966 = vmatprep.subr.bf16.mxu0 0
        %2967 = vmatpush1.bf16.msra.mxu0 0
        %2968 = vmatprep.subr.bf16.mxu0 0
        %2969 = vmatpush1.bf16.msra.mxu0 0
        %2970 = vmatprep.subr.bf16.mxu0 0
        %2971 = vmatpush1.bf16.msra.mxu0 0
        %2972 = vmatprep.subr.bf16.mxu0 0
        %2973 = vmatpush1.bf16.msra.mxu0 0
        %2974 = vmatprep.subr.bf16.mxu0 0
        %2975 = vmatpush1.bf16.msra.mxu0 0
        %2976 = vmatprep.subr.bf16.mxu0 0
        %2977 = vmatpush1.bf16.msra.mxu0 0
        %2978 = vmatprep.subr.bf16.mxu0 0
        %2979 = vmatpush1.bf16.msra.mxu0 0
        %2980 = vmatprep.subr.bf16.mxu0 0
        %2981 = vmatpush1.bf16.msra.mxu0 0
        %2982 = vmatprep.subr.bf16.mxu0 0
        %2983 = vmatpush1.bf16.msra.mxu0 0
        %2984 = vmatprep.subr.bf16.mxu0 0
        %2985 = vmatpush1.bf16.msra.mxu0 0
        %2986 = vmatprep.subr.bf16.mxu0 0
        %2987 = vmatpush1.bf16.msra.mxu0 0
        %2988 = vmatprep.subr.bf16.mxu0 0
        %2989 = vmatpush1.bf16.msra.mxu0 0
        %2990 = vmatprep.subr.bf16.mxu0 0
        %2991 = vmatpush1.bf16.msra.mxu0 0
        %2992 = vmatprep.mubr.bf16.mxu0 0
        %2993 = vmatmul.mubr.bf16.gmra.mrb[0].mxu0 %v2958
        %v2994 = vpop.f32.mrb[0].mxu0
        %v2995 = vadd.f32 %v2943, %v2994
        %v2996 = vpop.f32.mrb[0].mxu0
        %v2997 = vpop.f32.mrb[0].mxu0
        %v2998 = vadd.f32 %v2943, %v2997
        %v2999 = vpop.f32.mrb[0].mxu0
        %3000 = vdwg.mxu0
        %v3001 = vmax.f32 %v2995, 0.0
        %v3002 = vmax.f32 %v2998, 0.0
        %v3003 = vpack.c.bf16 %v3002, %v3001
        %v3005 = vlaneseq
        %v3006 = vshrl.u32 %v3005, 7
        %v3007 = vsub.s32 0, %v3006
        %v3008 = vrot.slane %v2288, %v3007
        %v3018 = vunpack.c.l.b16 %v2280
        %v3019 = vunpack.c.l.b16 %v2281
        %v3020 = vunpack.c.l.b16 %v2282
        %v3021 = vunpack.c.l.b16 %v2283
        %v3022 = vunpack.c.l.b16 %v2284
        %v3023 = vunpack.c.l.b16 %v2285
        %v3024 = vunpack.c.l.b16 %v2286
        %v3025 = vunpack.c.l.b16 %v2287
        %v3026 = vpack.c.b16 %v3019, %v3018
        %v3027 = vpack.c.b16 %v3021, %v3020
        %v3028 = vpack.c.b16 %v3023, %v3022
        %v3029 = vpack.c.b16 %v3025, %v3024
        %vm3034 = vcmask 523264
        %v3036 = vsel %vm3034, %v3003, 0
        %3038 = vmatprep.subr.bf16.mxu0 0
        %3039 = vmatpush1.bf16.msra.mxu0 %v3026
        %3040 = vmatprep.subr.bf16.mxu0 0
        %3041 = vmatpush1.bf16.msra.mxu0 %v3027
        %3042 = vmatprep.subr.bf16.mxu0 0
        %3043 = vmatpush1.bf16.msra.mxu0 %v3028
        %3044 = vmatprep.subr.bf16.mxu0 0
        %3045 = vmatpush1.bf16.msra.mxu0 %v3029
        %3046 = vmatprep.subr.bf16.mxu0 0
        %3047 = vmatpush1.bf16.msra.mxu0 0
        %3048 = vmatprep.subr.bf16.mxu0 0
        %3049 = vmatpush1.bf16.msra.mxu0 0
        %3050 = vmatprep.subr.bf16.mxu0 0
        %3051 = vmatpush1.bf16.msra.mxu0 0
        %3052 = vmatprep.subr.bf16.mxu0 0
        %3053 = vmatpush1.bf16.msra.mxu0 0
        %3054 = vmatprep.subr.bf16.mxu0 0
        %3055 = vmatpush1.bf16.msra.mxu0 0
        %3056 = vmatprep.subr.bf16.mxu0 0
        %3057 = vmatpush1.bf16.msra.mxu0 0
        %3058 = vmatprep.subr.bf16.mxu0 0
        %3059 = vmatpush1.bf16.msra.mxu0 0
        %3060 = vmatprep.subr.bf16.mxu0 0
        %3061 = vmatpush1.bf16.msra.mxu0 0
        %3062 = vmatprep.subr.bf16.mxu0 0
        %3063 = vmatpush1.bf16.msra.mxu0 0
        %3064 = vmatprep.subr.bf16.mxu0 0
        %3065 = vmatpush1.bf16.msra.mxu0 0
        %3066 = vmatprep.subr.bf16.mxu0 0
        %3067 = vmatpush1.bf16.msra.mxu0 0
        %3068 = vmatprep.subr.bf16.mxu0 0
        %3069 = vmatpush1.bf16.msra.mxu0 0
        %3070 = vmatprep.mubr.bf16.mxu0 0
        %3071 = vmatmul.mubr.bf16.gmra.mrb[0].mxu0 %v3036
        %v3072 = vpop.f32.mrb[0].mxu0
        %v3073 = vadd.f32 %v3008, %v3072
        %v3074 = vpop.f32.mrb[0].mxu0
        %v3075 = vpop.f32.mrb[0].mxu0
        %v3076 = vadd.f32 %v3008, %v3075
        %v3077 = vpop.f32.mrb[0].mxu0
        %3078 = vdwg.mxu0
        %v3079 = vadd.f32 %v2936, %v3073
        %v3080 = vadd.f32 %v2937, %v3076
        %v3081 = vsel %vm2312, %v3079, 0.0
        %3082 = vadd.xlane.f32.xlu0 %v3081
        %v3083 = vpop.xlane.xlu0 %3082
        %v3084 = vsel %vm2312, %v3080, 0.0
        %3085 = vadd.xlane.f32.xlu0 %v3084
        %v3086 = vpop.xlane.xlu0 %3085
        %v3087 = vmul.f32 %v3083, %v2901
        %v3088 = vmul.f32 %v3086, %v2901
        %v3089 = vsub.f32 %v3079, %v3087
        %v3090 = vsub.f32 %v3080, %v3088
        %v3091 = vmul.f32 %v3089, %v3089
        %v3092 = vmul.f32 %v3090, %v3090
        %v3093 = vsel %vm2312, %v3091, 0.0
        %3094 = vadd.xlane.f32.xlu0 %v3093
        %v3095 = vpop.xlane.xlu0 %3094
        %v3096 = vsel %vm2312, %v3092, 0.0
        %3097 = vadd.xlane.f32.xlu0 %v3096
        %v3098 = vpop.xlane.xlu0 %3097
        %v3099 = vmul.f32 %v3095, %v2901
        %v3100 = vmul.f32 %v3098, %v2901
        %v3101 = vadd.f32 %v3099, 1e-05
        %v3102 = vadd.f32 %v3100, 1e-05
        %v3103 = vrsqrt.pop %v3101
        %v3104 = vrsqrt.pop %v3102
        %v3105 = vmul.f32 %v3089, %v3103
        %v3106 = vmul.f32 %v3090, %v3104
        %v3108 = vlaneseq
        %v3109 = vshrl.u32 %v3108, 7
        %v3110 = vsub.s32 0, %v3109
        %v3111 = vrot.slane %v2289, %v3110
        %v3113 = vmul.f32 %v3105, %v3111
        %v3114 = vmul.f32 %v3106, %v3111
        %v3116 = vlaneseq
        %v3117 = vshrl.u32 %v3116, 7
        %v3118 = vsub.s32 0, %v3117
        %v3119 = vrot.slane %v2290, %v3118
        %v3121 = vadd.f32 %v3113, %v3119
        %v3122 = vadd.f32 %v3114, %v3119
        %3123 = vst.msk [vmem:[#allocation2] sm:$0xff] %vm2312, %v3121
        %3124 = vst.msk [vmem:[#allocation2 + $0x8] sm:$0xff] %vm2312, %v3122
      $region176: #{seq2seq_forward.1} parent=171 // pred_fallthru
        _
      %p3125 = scmp.ge.s32.totalorder %s91, 2
      // Predicated region
      $region181: #{seq2seq_forward.1} parent=171 // pred_check
        %p3126 = pneg %p3125
      $region182: #{seq2seq_forward.1} parent=171 // pred_check_branch
        %3128 = sbr.rel (%p3126) target = $region184
      $region183: #{seq2seq_forward.1} parent=171 // pred_region
        %p3129 = scmp.eq.s32.totalorder %s91, 2
        // Predicated region
        $region185: #{seq2seq_forward.1} parent=183 // pred_check
          %p3130 = pneg %p3129
        $region186: #{seq2seq_forward.1} parent=183 // pred_check_branch
          %3132 = sbr.rel (%p3130) target = $region188
        $region187: #{seq2seq_forward.1} parent=183 // pred_region
          %v3133 = vld [vmem:[%s3] sm:$0x3f]
          %v3134 = vld [vmem:[%s3 + $0x8] sm:$0x3f]
          %v3137 = vcombine.high %v3133, %v3133
          %v3139 = vunpack.c.l.s4 1983009808
          %v3140 = vunpack.c.0.s8 %v3139
          %v3141 = vlaneseq
          %v3142 = vshrl.u32 %v3141, 7
          %v3143 = vsub.s32 %v3140, %v3142
          %v3144 = vrot.slane %v3133, %v3143
          %v3146 = vunpack.c.l.s4 1983009808
          %v3147 = vunpack.c.0.s8 %v3146
          %v3148 = vlaneseq
          %v3149 = vshrl.u32 %v3148, 7
          %v3150 = vsub.s32 %v3147, %v3149
          %v3151 = vrot.slane %v3137, %v3150
          %v3152 = vcombine.high %v3144, %v3144
          %v3153 = vcombine.high %v3134, %v3134
          %v3155 = vunpack.c.l.s4 1983009808
          %v3156 = vunpack.c.0.s8 %v3155
          %v3157 = vlaneseq
          %v3158 = vshrl.u32 %v3157, 7
          %v3159 = vsub.s32 %v3156, %v3158
          %v3160 = vrot.slane %v3134, %v3159
          %v3162 = vunpack.c.l.s4 1983009808
          %v3163 = vunpack.c.0.s8 %v3162
          %v3164 = vlaneseq
          %v3165 = vshrl.u32 %v3164, 7
          %v3166 = vsub.s32 %v3163, %v3165
          %v3167 = vrot.slane %v3153, %v3166
          %v3168 = vcombine.high %v3160, %v3160
          %v3169 = vcombine.low %v3144, %v3152
          %v3170 = vcombine.low %v3151, %v3160
          %v3172 = vunpack.c.l.s4 1983009808
          %v3173 = vunpack.c.0.s8 %v3172
          %v3174 = vlaneseq
          %v3175 = vshrl.u32 %v3174, 7
          %v3176 = vsub.s32 %v3173, %v3175
          %v3177 = vrot.slane %v3169, %v3176
          %v3179 = vunpack.c.l.s4 1983009808
          %v3180 = vunpack.c.0.s8 %v3179
          %v3181 = vlaneseq
          %v3182 = vshrl.u32 %v3181, 7
          %v3183 = vsub.s32 %v3180, %v3182
          %v3184 = vrot.slane %v3170, %v3183
          %v3185 = vcombine.low %v3177, %v3184
          %v3186 = vcombine.low %v3168, %v3167
          %v3188 = vunpack.c.l.s4 1983009808
          %v3189 = vunpack.c.0.s8 %v3188
          %v3190 = vlaneseq
          %v3191 = vshrl.u32 %v3190, 7
          %v3192 = vsub.s32 %v3189, %v3191
          %v3193 = vrot.slane %v3186, %v3192
          %vm3196 = vcmask 261120
          %3197 = vst.msk [vmem:[#allocation3] sm:$0xff] %vm3196, %v3185
          %vm3198 = vcmask 257024
          %3199 = vst.msk [vmem:[#allocation3 + $0x8] sm:$0xf] %vm3198, %v3193
        $region188: #{seq2seq_forward.1} parent=183 // pred_fallthru
          _
        %v3200 = vld [vmem:[%s7] sm:$0x3]
        %v3201 = vld [vmem:[%s5] sm:$0x3]
        %v3202 = vlaneseq
        %v3203 = vshrl.u32 %v3202, 7
        %v3204 = vlaneseq
        %v3205 = vand.u32 %v3204, 127
        %vm3206 = vcmp.le.s32.totalorder %v3205, %v3203
        %v3207 = vld [vmem:[%s2061] sm:$0xf]
        %v3208 = vld [vmem:[%s2061 + $0x4] sm:$0xf]
        %v3209 = vld [vmem:[%s2061 + $0x8] sm:$0xf]
        %v3210 = vld [vmem:[%s2061 + $0xc] sm:$0xf]
        %v3211 = vld [vmem:[%s2070] sm:$0x1]
        %v3212 = vld [vmem:[%s2081] sm:$0xf]
        %v3213 = vld [vmem:[%s2081 + $0x4] sm:$0xf]
        %v3214 = vld [vmem:[%s2081 + $0x8] sm:$0xf]
        %v3215 = vld [vmem:[%s2081 + $0xc] sm:$0xf]
        %v3216 = vld [vmem:[%s2090] sm:$0x1]
        %v3217 = vld [vmem:[%s2099] sm:$0x1]
        %v3218 = vld [vmem:[%s2108] sm:$0x1]
        %v3219 = vld [vmem:[%s2119] sm:$0xf]
        %v3220 = vld [vmem:[%s2119 + $0x4] sm:$0xf]
        %v3221 = vld [vmem:[%s2119 + $0x8] sm:$0xf]
        %v3222 = vld [vmem:[%s2119 + $0xc] sm:$0xf]
        %v3223 = vld [vmem:[%s2128] sm:$0x1]
        %v3224 = vld [vmem:[%s2139] sm:$0xf]
        %v3225 = vld [vmem:[%s2139 + $0x4] sm:$0xf]
        %v3226 = vld [vmem:[%s2139 + $0x8] sm:$0xf]
        %v3227 = vld [vmem:[%s2139 + $0xc] sm:$0xf]
        %v3228 = vld [vmem:[%s2148] sm:$0x1]
        %v3229 = vld [vmem:[%s2159] sm:$0xf]
        %v3230 = vld [vmem:[%s2159 + $0x4] sm:$0xf]
        %v3231 = vld [vmem:[%s2159 + $0x8] sm:$0xf]
        %v3232 = vld [vmem:[%s2159 + $0xc] sm:$0xf]
        %v3233 = vld [vmem:[%s2168] sm:$0x1]
        %v3234 = vld [vmem:[%s2177] sm:$0x1]
        %v3235 = vld [vmem:[%s2186] sm:$0x1]
        %v3236 = vld [vmem:[%s2197] sm:$0xf]
        %v3237 = vld [vmem:[%s2197 + $0x4] sm:$0xf]
        %v3238 = vld [vmem:[%s2197 + $0x8] sm:$0xf]
        %v3239 = vld [vmem:[%s2197 + $0xc] sm:$0xf]
        %v3240 = vld [vmem:[%s2206] sm:$0x1]
        %v3241 = vld [vmem:[%s2217] sm:$0xf]
        %v3242 = vld [vmem:[%s2217 + $0x4] sm:$0xf]
        %v3243 = vld [vmem:[%s2217 + $0x8] sm:$0xf]
        %v3244 = vld [vmem:[%s2217 + $0xc] sm:$0xf]
        %v3245 = vld [vmem:[%s2217 + $0x10] sm:$0xf]
        %v3246 = vld [vmem:[%s2217 + $0x14] sm:$0xf]
        %v3247 = vld [vmem:[%s2217 + $0x18] sm:$0xf]
        %v3248 = vld [vmem:[%s2217 + $0x1c] sm:$0xf]
        %v3249 = vld [vmem:[%s2226] sm:$0x1]
        %v3250 = vld [vmem:[%s2235] sm:$0x1]
        %v3251 = vld [vmem:[%s2244] sm:$0x1]
        %v3252 = vld [vmem:[#allocation3] sm:$0xff]
        %v3253 = vld [vmem:[#allocation3 + $0x8] sm:$0xf]
        %v3254 = vld [vmem:[#allocation2] sm:$0xff]
        %v3255 = vld [vmem:[#allocation2 + $0x8] sm:$0xff]
        %v3256 = vpack.c.bf16 %v3253, %v3252
        %v3258 = vlaneseq
        %v3259 = vshrl.u32 %v3258, 7
        %v3260 = vsub.s32 0, %v3259
        %v3261 = vrot.slane %v3211, %v3260
        %v3267 = vunpack.c.l.b16 %v3207
        %v3268 = vunpack.c.l.b16 %v3208
        %v3269 = vunpack.c.l.b16 %v3209
        %v3270 = vunpack.c.l.b16 %v3210
        %v3271 = vpack.c.b16 %v3268, %v3267
        %v3272 = vpack.c.b16 %v3270, %v3269
        %vm3275 = vcmask 261120
        %v3277 = vsel %vm3275, %v3256, 0
        %3279 = vmatprep.subr.bf16.mxu0 0
        %3280 = vmatpush1.bf16.msra.mxu0 %v3271
        %3281 = vmatprep.subr.bf16.mxu0 0
        %3282 = vmatpush1.bf16.msra.mxu0 %v3272
        %3283 = vmatprep.subr.bf16.mxu0 0
        %3284 = vmatpush1.bf16.msra.mxu0 0
        %3285 = vmatprep.subr.bf16.mxu0 0
        %3286 = vmatpush1.bf16.msra.mxu0 0
        %3287 = vmatprep.subr.bf16.mxu0 0
        %3288 = vmatpush1.bf16.msra.mxu0 0
        %3289 = vmatprep.subr.bf16.mxu0 0
        %3290 = vmatpush1.bf16.msra.mxu0 0
        %3291 = vmatprep.subr.bf16.mxu0 0
        %3292 = vmatpush1.bf16.msra.mxu0 0
        %3293 = vmatprep.subr.bf16.mxu0 0
        %3294 = vmatpush1.bf16.msra.mxu0 0
        %3295 = vmatprep.subr.bf16.mxu0 0
        %3296 = vmatpush1.bf16.msra.mxu0 0
        %3297 = vmatprep.subr.bf16.mxu0 0
        %3298 = vmatpush1.bf16.msra.mxu0 0
        %3299 = vmatprep.subr.bf16.mxu0 0
        %3300 = vmatpush1.bf16.msra.mxu0 0
        %3301 = vmatprep.subr.bf16.mxu0 0
        %3302 = vmatpush1.bf16.msra.mxu0 0
        %3303 = vmatprep.subr.bf16.mxu0 0
        %3304 = vmatpush1.bf16.msra.mxu0 0
        %3305 = vmatprep.subr.bf16.mxu0 0
        %3306 = vmatpush1.bf16.msra.mxu0 0
        %3307 = vmatprep.subr.bf16.mxu0 0
        %3308 = vmatpush1.bf16.msra.mxu0 0
        %3309 = vmatprep.subr.bf16.mxu0 0
        %3310 = vmatpush1.bf16.msra.mxu0 0
        %3311 = vmatprep.mubr.bf16.mxu0 0
        %3312 = vmatmul.mubr.bf16.gmra.mrb[0].mxu0 %v3277
        %v3313 = vpop.f32.mrb[0].mxu0
        %v3314 = vadd.f32 %v3261, %v3313
        %v3315 = vpop.f32.mrb[0].mxu0
        %v3316 = vpop.f32.mrb[0].mxu0
        %v3317 = vadd.f32 %v3261, %v3316
        %v3318 = vpop.f32.mrb[0].mxu0
        %3319 = vdwg.mxu0
        %vm3320 = vcmp.ne.s32.totalorder %v3200, 0
        %v3321 = vsel %vm3320, 1, 0
        %v3322 = vlaneseq
        %v3323 = vshrl.u32 %v3322, 7
        %v3324 = vsub.s32 0, %v3323
        %v3325 = vrot.slane %v3321, %v3324
        %vm3326 = vcmp.eq.s32.totalorder %v3325, 1
        %vm3327 = vmand %vm3326, %vm3206
        %v3328 = vpack.c.bf16 %v3314, %v3314
        %3330 = vrot.lane.b32.xlu0 %v3328, 96
        %v3331 = vpop.permute.xlu0 %3330
        %vm3332 = vcmask 130048
        %v3334 = vsel %vm3332, %v3328, 0
        %v3337 = vsel %vm3332, %v3331, 0
        %3339 = vmatprep.subr.bf16.mxu0 0
        %3340 = vmatpush1.bf16.xpose.msra.mxu0 %v3337
        %3341 = vmatprep.subr.bf16.mxu0 0
        %3342 = vmatpush1.bf16.xpose.msra.mxu0 0
        %3343 = vmatprep.subr.bf16.mxu0 0
        %3344 = vmatpush1.bf16.xpose.msra.mxu0 0
        %3345 = vmatprep.subr.bf16.mxu0 0
        %3346 = vmatpush1.bf16.xpose.msra.mxu0 0
        %3347 = vmatprep.subr.bf16.mxu0 0
        %3348 = vmatpush1.bf16.xpose.msra.mxu0 0
        %3349 = vmatprep.subr.bf16.mxu0 0
        %3350 = vmatpush1.bf16.xpose.msra.mxu0 0
        %3351 = vmatprep.subr.bf16.mxu0 0
        %3352 = vmatpush1.bf16.xpose.msra.mxu0 0
        %3353 = vmatprep.subr.bf16.mxu0 0
        %3354 = vmatpush1.bf16.xpose.msra.mxu0 0
        %3355 = vmatprep.subr.bf16.mxu0 0
        %3356 = vmatpush1.bf16.xpose.msra.mxu0 0
        %3357 = vmatprep.subr.bf16.mxu0 0
        %3358 = vmatpush1.bf16.xpose.msra.mxu0 0
        %3359 = vmatprep.subr.bf16.mxu0 0
        %3360 = vmatpush1.bf16.xpose.msra.mxu0 0
        %3361 = vmatprep.subr.bf16.mxu0 0
        %3362 = vmatpush1.bf16.xpose.msra.mxu0 0
        %3363 = vmatprep.subr.bf16.mxu0 0
        %3364 = vmatpush1.bf16.xpose.msra.mxu0 0
        %3365 = vmatprep.subr.bf16.mxu0 0
        %3366 = vmatpush1.bf16.xpose.msra.mxu0 0
        %3367 = vmatprep.subr.bf16.mxu0 0
        %3368 = vmatpush1.bf16.xpose.msra.mxu0 0
        %3369 = vmatprep.subr.bf16.mxu0 0
        %3370 = vmatpush1.bf16.xpose.msra.mxu0 0
        %3371 = vmatprep.mubr.bf16.mxu0 0
        %3372 = vmatmul.mubr.bf16.gmra.mrb[0].mxu0 %v3334
        %v3373 = vpop.f32.mrb[0].mxu0
        %v3374 = vadd.f32 0.0, %v3373
        %v3375 = vpop.f32.mrb[0].mxu0
        %v3376 = vpop.f32.mrb[0].mxu0
        %v3377 = vpop.f32.mrb[0].mxu0
        %3378 = vdwg.mxu0
        %v3379 = vmul.f32 %v3374, 0.25
        %v3380 = vsel %vm3327, %v3379, -1e+10
        %vm3381 = vcmask 46080
        %v3382 = vsel %vm3381, %v3380, -inf
        %3383 = vmax.xlane.f32.xlu0 %v3382
        %v3384 = vpop.xlane.xlu0 %3383
        %v3385 = vsub.f32 %v3380, %v3384
        %v3386 = vmul.f32 %v3385, 1.442695
        %v3387 = vpow.pop %v3386
        %v3388 = vsel %vm3381, %v3387, 0.0
        %3389 = vadd.xlane.f32.xlu0 %v3388
        %v3390 = vpop.xlane.xlu0 %3389
        %v3391 = vrcp.pop %v3390
        %v3392 = vmul.f32 %v3387, %v3391
        %v3393 = vpack.c.bf16 %v3392, %v3392
        %3394 = vrot.lane.b32.xlu0 %v3328, 64
        %v3395 = vpop.permute.xlu0 %3394
        %vm3396 = vcmask 48128
        %v3398 = vsel %vm3396, %v3393, 0
        %vm3400 = vcmask 1042432
        %v3402 = vsel %vm3400, %v3395, 0
        %3404 = vmatprep.subr.bf16.mxu0 0
        %3405 = vmatpush1.bf16.msra.mxu0 %v3402
        %3406 = vmatprep.subr.bf16.mxu0 0
        %3407 = vmatpush1.bf16.msra.mxu0 0
        %3408 = vmatprep.subr.bf16.mxu0 0
        %3409 = vmatpush1.bf16.msra.mxu0 0
        %3410 = vmatprep.subr.bf16.mxu0 0
        %3411 = vmatpush1.bf16.msra.mxu0 0
        %3412 = vmatprep.subr.bf16.mxu0 0
        %3413 = vmatpush1.bf16.msra.mxu0 0
        %3414 = vmatprep.subr.bf16.mxu0 0
        %3415 = vmatpush1.bf16.msra.mxu0 0
        %3416 = vmatprep.subr.bf16.mxu0 0
        %3417 = vmatpush1.bf16.msra.mxu0 0
        %3418 = vmatprep.subr.bf16.mxu0 0
        %3419 = vmatpush1.bf16.msra.mxu0 0
        %3420 = vmatprep.subr.bf16.mxu0 0
        %3421 = vmatpush1.bf16.msra.mxu0 0
        %3422 = vmatprep.subr.bf16.mxu0 0
        %3423 = vmatpush1.bf16.msra.mxu0 0
        %3424 = vmatprep.subr.bf16.mxu0 0
        %3425 = vmatpush1.bf16.msra.mxu0 0
        %3426 = vmatprep.subr.bf16.mxu0 0
        %3427 = vmatpush1.bf16.msra.mxu0 0
        %3428 = vmatprep.subr.bf16.mxu0 0
        %3429 = vmatpush1.bf16.msra.mxu0 0
        %3430 = vmatprep.subr.bf16.mxu0 0
        %3431 = vmatpush1.bf16.msra.mxu0 0
        %3432 = vmatprep.subr.bf16.mxu0 0
        %3433 = vmatpush1.bf16.msra.mxu0 0
        %3434 = vmatprep.subr.bf16.mxu0 0
        %3435 = vmatpush1.bf16.msra.mxu0 0
        %3436 = vmatprep.mubr.bf16.mxu0 0
        %3437 = vmatmul.mubr.bf16.gmra.mrb[0].mxu0 %v3398
        %v3438 = vpop.f32.mrb[0].mxu0
        %v3439 = vadd.f32 0.0, %v3438
        %v3440 = vpop.f32.mrb[0].mxu0
        %v3441 = vpop.f32.mrb[0].mxu0
        %v3442 = vpop.f32.mrb[0].mxu0
        %3443 = vdwg.mxu0
        %3444 = vrot.lane.b32.xlu0 %v3328, 112
        %v3445 = vpop.permute.xlu0 %3444
        %3446 = vrot.lane.b32.xlu0 %v3328, 80
        %v3447 = vpop.permute.xlu0 %3446
        %v3449 = vsel %vm3332, %v3445, 0
        %v3452 = vsel %vm3332, %v3447, 0
        %3454 = vmatprep.subr.bf16.mxu0 0
        %3455 = vmatpush1.bf16.xpose.msra.mxu0 %v3452
        %3456 = vmatprep.subr.bf16.mxu0 0
        %3457 = vmatpush1.bf16.xpose.msra.mxu0 0
        %3458 = vmatprep.subr.bf16.mxu0 0
        %3459 = vmatpush1.bf16.xpose.msra.mxu0 0
        %3460 = vmatprep.subr.bf16.mxu0 0
        %3461 = vmatpush1.bf16.xpose.msra.mxu0 0
        %3462 = vmatprep.subr.bf16.mxu0 0
        %3463 = vmatpush1.bf16.xpose.msra.mxu0 0
        %3464 = vmatprep.subr.bf16.mxu0 0
        %3465 = vmatpush1.bf16.xpose.msra.mxu0 0
        %3466 = vmatprep.subr.bf16.mxu0 0
        %3467 = vmatpush1.bf16.xpose.msra.mxu0 0
        %3468 = vmatprep.subr.bf16.mxu0 0
        %3469 = vmatpush1.bf16.xpose.msra.mxu0 0
        %3470 = vmatprep.subr.bf16.mxu0 0
        %3471 = vmatpush1.bf16.xpose.msra.mxu0 0
        %3472 = vmatprep.subr.bf16.mxu0 0
        %3473 = vmatpush1.bf16.xpose.msra.mxu0 0
        %3474 = vmatprep.subr.bf16.mxu0 0
        %3475 = vmatpush1.bf16.xpose.msra.mxu0 0
        %3476 = vmatprep.subr.bf16.mxu0 0
        %3477 = vmatpush1.bf16.xpose.msra.mxu0 0
        %3478 = vmatprep.subr.bf16.mxu0 0
        %3479 = vmatpush1.bf16.xpose.msra.mxu0 0
        %3480 = vmatprep.subr.bf16.mxu0 0
        %3481 = vmatpush1.bf16.xpose.msra.mxu0 0
        %3482 = vmatprep.subr.bf16.mxu0 0
        %3483 = vmatpush1.bf16.xpose.msra.mxu0 0
        %3484 = vmatprep.subr.bf16.mxu0 0
        %3485 = vmatpush1.bf16.xpose.msra.mxu0 0
        %3486 = vmatprep.mubr.bf16.mxu0 0
        %3487 = vmatmul.mubr.bf16.gmra.mrb[0].mxu0 %v3449
        %v3488 = vpop.f32.mrb[0].mxu0
        %v3489 = vadd.f32 0.0, %v3488
        %v3490 = vpop.f32.mrb[0].mxu0
        %v3491 = vpop.f32.mrb[0].mxu0
        %v3492 = vpop.f32.mrb[0].mxu0
        %3493 = vdwg.mxu0
        %v3494 = vmul.f32 %v3489, 0.25
        %v3495 = vsel %vm3327, %v3494, -1e+10
        %v3496 = vsel %vm3381, %v3495, -inf
        %3497 = vmax.xlane.f32.xlu0 %v3496
        %v3498 = vpop.xlane.xlu0 %3497
        %v3499 = vsub.f32 %v3495, %v3498
        %v3500 = vmul.f32 %v3499, 1.442695
        %v3501 = vpow.pop %v3500
        %v3502 = vsel %vm3381, %v3501, 0.0
        %3503 = vadd.xlane.f32.xlu0 %v3502
        %v3504 = vpop.xlane.xlu0 %3503
        %v3505 = vrcp.pop %v3504
        %v3506 = vmul.f32 %v3501, %v3505
        %v3507 = vpack.c.bf16 %v3506, %v3506
        %3508 = vrot.lane.b32.xlu0 %v3328, 48
        %v3509 = vpop.permute.xlu0 %3508
        %v3511 = vsel %vm3396, %v3507, 0
        %v3514 = vsel %vm3400, %v3509, 0
        %3516 = vmatprep.subr.bf16.mxu0 0
        %3517 = vmatpush1.bf16.msra.mxu0 %v3514
        %3518 = vmatprep.subr.bf16.mxu0 0
        %3519 = vmatpush1.bf16.msra.mxu0 0
        %3520 = vmatprep.subr.bf16.mxu0 0
        %3521 = vmatpush1.bf16.msra.mxu0 0
        %3522 = vmatprep.subr.bf16.mxu0 0
        %3523 = vmatpush1.bf16.msra.mxu0 0
        %3524 = vmatprep.subr.bf16.mxu0 0
        %3525 = vmatpush1.bf16.msra.mxu0 0
        %3526 = vmatprep.subr.bf16.mxu0 0
        %3527 = vmatpush1.bf16.msra.mxu0 0
        %3528 = vmatprep.subr.bf16.mxu0 0
        %3529 = vmatpush1.bf16.msra.mxu0 0
        %3530 = vmatprep.subr.bf16.mxu0 0
        %3531 = vmatpush1.bf16.msra.mxu0 0
        %3532 = vmatprep.subr.bf16.mxu0 0
        %3533 = vmatpush1.bf16.msra.mxu0 0
        %3534 = vmatprep.subr.bf16.mxu0 0
        %3535 = vmatpush1.bf16.msra.mxu0 0
        %3536 = vmatprep.subr.bf16.mxu0 0
        %3537 = vmatpush1.bf16.msra.mxu0 0
        %3538 = vmatprep.subr.bf16.mxu0 0
        %3539 = vmatpush1.bf16.msra.mxu0 0
        %3540 = vmatprep.subr.bf16.mxu0 0
        %3541 = vmatpush1.bf16.msra.mxu0 0
        %3542 = vmatprep.subr.bf16.mxu0 0
        %3543 = vmatpush1.bf16.msra.mxu0 0
        %3544 = vmatprep.subr.bf16.mxu0 0
        %3545 = vmatpush1.bf16.msra.mxu0 0
        %3546 = vmatprep.subr.bf16.mxu0 0
        %3547 = vmatpush1.bf16.msra.mxu0 0
        %3548 = vmatprep.mubr.bf16.mxu0 0
        %3549 = vmatmul.mubr.bf16.gmra.mrb[0].mxu0 %v3511
        %v3550 = vpop.f32.mrb[0].mxu0
        %v3551 = vadd.f32 0.0, %v3550
        %v3552 = vpop.f32.mrb[0].mxu0
        %v3553 = vpop.f32.mrb[0].mxu0
        %v3554 = vpop.f32.mrb[0].mxu0
        %3555 = vdwg.mxu0
        %3557 = vrot.lane.b32.xlu0 %v3551, 16
        %v3558 = vpop.permute.xlu0 %3557
        %v3560 = vsel %vm3332, %v3439, %v3558
        %v3561 = vlaneseq
        %v3562 = vshrl.u32 %v3561, 7
        %v3563 = vsub.s32 1, %v3562
        %v3564 = vrot.slane %v3321, %v3563
        %vm3565 = vcmp.eq.s32.totalorder %v3564, 1
        %vm3566 = vmand %vm3565, %vm3206
        %v3567 = vpack.c.bf16 %v3317, %v3314
        %v3569 = vrot.slane %v3567, 3
        %3570 = vrot.lane.b32.xlu0 %v3569, 96
        %v3571 = vpop.permute.xlu0 %3570
        %v3573 = vsel %vm3332, %v3569, 0
        %v3576 = vsel %vm3332, %v3571, 0
        %3578 = vmatprep.subr.bf16.mxu0 0
        %3579 = vmatpush1.bf16.xpose.msra.mxu0 %v3576
        %3580 = vmatprep.subr.bf16.mxu0 0
        %3581 = vmatpush1.bf16.xpose.msra.mxu0 0
        %3582 = vmatprep.subr.bf16.mxu0 0
        %3583 = vmatpush1.bf16.xpose.msra.mxu0 0
        %3584 = vmatprep.subr.bf16.mxu0 0
        %3585 = vmatpush1.bf16.xpose.msra.mxu0 0
        %3586 = vmatprep.subr.bf16.mxu0 0
        %3587 = vmatpush1.bf16.xpose.msra.mxu0 0
        %3588 = vmatprep.subr.bf16.mxu0 0
        %3589 = vmatpush1.bf16.xpose.msra.mxu0 0
        %3590 = vmatprep.subr.bf16.mxu0 0
        %3591 = vmatpush1.bf16.xpose.msra.mxu0 0
        %3592 = vmatprep.subr.bf16.mxu0 0
        %3593 = vmatpush1.bf16.xpose.msra.mxu0 0
        %3594 = vmatprep.subr.bf16.mxu0 0
        %3595 = vmatpush1.bf16.xpose.msra.mxu0 0
        %3596 = vmatprep.subr.bf16.mxu0 0
        %3597 = vmatpush1.bf16.xpose.msra.mxu0 0
        %3598 = vmatprep.subr.bf16.mxu0 0
        %3599 = vmatpush1.bf16.xpose.msra.mxu0 0
        %3600 = vmatprep.subr.bf16.mxu0 0
        %3601 = vmatpush1.bf16.xpose.msra.mxu0 0
        %3602 = vmatprep.subr.bf16.mxu0 0
        %3603 = vmatpush1.bf16.xpose.msra.mxu0 0
        %3604 = vmatprep.subr.bf16.mxu0 0
        %3605 = vmatpush1.bf16.xpose.msra.mxu0 0
        %3606 = vmatprep.subr.bf16.mxu0 0
        %3607 = vmatpush1.bf16.xpose.msra.mxu0 0
        %3608 = vmatprep.subr.bf16.mxu0 0
        %3609 = vmatpush1.bf16.xpose.msra.mxu0 0
        %3610 = vmatprep.mubr.bf16.mxu0 0
        %3611 = vmatmul.mubr.bf16.gmra.mrb[0].mxu0 %v3573
        %v3612 = vpop.f32.mrb[0].mxu0
        %v3613 = vadd.f32 0.0, %v3612
        %v3614 = vpop.f32.mrb[0].mxu0
        %v3615 = vpop.f32.mrb[0].mxu0
        %v3616 = vpop.f32.mrb[0].mxu0
        %3617 = vdwg.mxu0
        %v3618 = vmul.f32 %v3613, 0.25
        %v3619 = vsel %vm3566, %v3618, -1e+10
        %v3620 = vsel %vm3381, %v3619, -inf
        %3621 = vmax.xlane.f32.xlu0 %v3620
        %v3622 = vpop.xlane.xlu0 %3621
        %v3623 = vsub.f32 %v3619, %v3622
        %v3624 = vmul.f32 %v3623, 1.442695
        %v3625 = vpow.pop %v3624
        %v3626 = vsel %vm3381, %v3625, 0.0
        %3627 = vadd.xlane.f32.xlu0 %v3626
        %v3628 = vpop.xlane.xlu0 %3627
        %v3629 = vrcp.pop %v3628
        %v3630 = vmul.f32 %v3625, %v3629
        %v3631 = vpack.c.bf16 %v3630, %v3630
        %3632 = vrot.lane.b32.xlu0 %v3569, 64
        %v3633 = vpop.permute.xlu0 %3632
        %v3635 = vsel %vm3396, %v3631, 0
        %v3638 = vsel %vm3400, %v3633, 0
        %3640 = vmatprep.subr.bf16.mxu0 0
        %3641 = vmatpush1.bf16.msra.mxu0 %v3638
        %3642 = vmatprep.subr.bf16.mxu0 0
        %3643 = vmatpush1.bf16.msra.mxu0 0
        %3644 = vmatprep.subr.bf16.mxu0 0
        %3645 = vmatpush1.bf16.msra.mxu0 0
        %3646 = vmatprep.subr.bf16.mxu0 0
        %3647 = vmatpush1.bf16.msra.mxu0 0
        %3648 = vmatprep.subr.bf16.mxu0 0
        %3649 = vmatpush1.bf16.msra.mxu0 0
        %3650 = vmatprep.subr.bf16.mxu0 0
        %3651 = vmatpush1.bf16.msra.mxu0 0
        %3652 = vmatprep.subr.bf16.mxu0 0
        %3653 = vmatpush1.bf16.msra.mxu0 0
        %3654 = vmatprep.subr.bf16.mxu0 0
        %3655 = vmatpush1.bf16.msra.mxu0 0
        %3656 = vmatprep.subr.bf16.mxu0 0
        %3657 = vmatpush1.bf16.msra.mxu0 0
        %3658 = vmatprep.subr.bf16.mxu0 0
        %3659 = vmatpush1.bf16.msra.mxu0 0
        %3660 = vmatprep.subr.bf16.mxu0 0
        %3661 = vmatpush1.bf16.msra.mxu0 0
        %3662 = vmatprep.subr.bf16.mxu0 0
        %3663 = vmatpush1.bf16.msra.mxu0 0
        %3664 = vmatprep.subr.bf16.mxu0 0
        %3665 = vmatpush1.bf16.msra.mxu0 0
        %3666 = vmatprep.subr.bf16.mxu0 0
        %3667 = vmatpush1.bf16.msra.mxu0 0
        %3668 = vmatprep.subr.bf16.mxu0 0
        %3669 = vmatpush1.bf16.msra.mxu0 0
        %3670 = vmatprep.subr.bf16.mxu0 0
        %3671 = vmatpush1.bf16.msra.mxu0 0
        %3672 = vmatprep.mubr.bf16.mxu0 0
        %3673 = vmatmul.mubr.bf16.gmra.mrb[0].mxu0 %v3635
        %v3674 = vpop.f32.mrb[0].mxu0
        %v3675 = vadd.f32 0.0, %v3674
        %v3676 = vpop.f32.mrb[0].mxu0
        %v3677 = vpop.f32.mrb[0].mxu0
        %v3678 = vpop.f32.mrb[0].mxu0
        %3679 = vdwg.mxu0
        %3680 = vrot.lane.b32.xlu0 %v3569, 112
        %v3681 = vpop.permute.xlu0 %3680
        %3682 = vrot.lane.b32.xlu0 %v3569, 80
        %v3683 = vpop.permute.xlu0 %3682
        %v3685 = vsel %vm3332, %v3681, 0
        %v3688 = vsel %vm3332, %v3683, 0
        %3690 = vmatprep.subr.bf16.mxu0 0
        %3691 = vmatpush1.bf16.xpose.msra.mxu0 %v3688
        %3692 = vmatprep.subr.bf16.mxu0 0
        %3693 = vmatpush1.bf16.xpose.msra.mxu0 0
        %3694 = vmatprep.subr.bf16.mxu0 0
        %3695 = vmatpush1.bf16.xpose.msra.mxu0 0
        %3696 = vmatprep.subr.bf16.mxu0 0
        %3697 = vmatpush1.bf16.xpose.msra.mxu0 0
        %3698 = vmatprep.subr.bf16.mxu0 0
        %3699 = vmatpush1.bf16.xpose.msra.mxu0 0
        %3700 = vmatprep.subr.bf16.mxu0 0
        %3701 = vmatpush1.bf16.xpose.msra.mxu0 0
        %3702 = vmatprep.subr.bf16.mxu0 0
        %3703 = vmatpush1.bf16.xpose.msra.mxu0 0
        %3704 = vmatprep.subr.bf16.mxu0 0
        %3705 = vmatpush1.bf16.xpose.msra.mxu0 0
        %3706 = vmatprep.subr.bf16.mxu0 0
        %3707 = vmatpush1.bf16.xpose.msra.mxu0 0
        %3708 = vmatprep.subr.bf16.mxu0 0
        %3709 = vmatpush1.bf16.xpose.msra.mxu0 0
        %3710 = vmatprep.subr.bf16.mxu0 0
        %3711 = vmatpush1.bf16.xpose.msra.mxu0 0
        %3712 = vmatprep.subr.bf16.mxu0 0
        %3713 = vmatpush1.bf16.xpose.msra.mxu0 0
        %3714 = vmatprep.subr.bf16.mxu0 0
        %3715 = vmatpush1.bf16.xpose.msra.mxu0 0
        %3716 = vmatprep.subr.bf16.mxu0 0
        %3717 = vmatpush1.bf16.xpose.msra.mxu0 0
        %3718 = vmatprep.subr.bf16.mxu0 0
        %3719 = vmatpush1.bf16.xpose.msra.mxu0 0
        %3720 = vmatprep.subr.bf16.mxu0 0
        %3721 = vmatpush1.bf16.xpose.msra.mxu0 0
        %3722 = vmatprep.mubr.bf16.mxu0 0
        %3723 = vmatmul.mubr.bf16.gmra.mrb[0].mxu0 %v3685
        %v3724 = vpop.f32.mrb[0].mxu0
        %v3725 = vadd.f32 0.0, %v3724
        %v3726 = vpop.f32.mrb[0].mxu0
        %v3727 = vpop.f32.mrb[0].mxu0
        %v3728 = vpop.f32.mrb[0].mxu0
        %3729 = vdwg.mxu0
        %v3730 = vmul.f32 %v3725, 0.25
        %v3731 = vsel %vm3566, %v3730, -1e+10
        %v3732 = vsel %vm3381, %v3731, -inf
        %3733 = vmax.xlane.f32.xlu0 %v3732
        %v3734 = vpop.xlane.xlu0 %3733
        %v3735 = vsub.f32 %v3731, %v3734
        %v3736 = vmul.f32 %v3735, 1.442695
        %v3737 = vpow.pop %v3736
        %v3738 = vsel %vm3381, %v3737, 0.0
        %3739 = vadd.xlane.f32.xlu0 %v3738
        %v3740 = vpop.xlane.xlu0 %3739
        %v3741 = vrcp.pop %v3740
        %v3742 = vmul.f32 %v3737, %v3741
        %v3743 = vpack.c.bf16 %v3742, %v3742
        %3744 = vrot.lane.b32.xlu0 %v3569, 48
        %v3745 = vpop.permute.xlu0 %3744
        %v3747 = vsel %vm3396, %v3743, 0
        %v3750 = vsel %vm3400, %v3745, 0
        %3752 = vmatprep.subr.bf16.mxu0 0
        %3753 = vmatpush1.bf16.msra.mxu0 %v3750
        %3754 = vmatprep.subr.bf16.mxu0 0
        %3755 = vmatpush1.bf16.msra.mxu0 0
        %3756 = vmatprep.subr.bf16.mxu0 0
        %3757 = vmatpush1.bf16.msra.mxu0 0
        %3758 = vmatprep.subr.bf16.mxu0 0
        %3759 = vmatpush1.bf16.msra.mxu0 0
        %3760 = vmatprep.subr.bf16.mxu0 0
        %3761 = vmatpush1.bf16.msra.mxu0 0
        %3762 = vmatprep.subr.bf16.mxu0 0
        %3763 = vmatpush1.bf16.msra.mxu0 0
        %3764 = vmatprep.subr.bf16.mxu0 0
        %3765 = vmatpush1.bf16.msra.mxu0 0
        %3766 = vmatprep.subr.bf16.mxu0 0
        %3767 = vmatpush1.bf16.msra.mxu0 0
        %3768 = vmatprep.subr.bf16.mxu0 0
        %3769 = vmatpush1.bf16.msra.mxu0 0
        %3770 = vmatprep.subr.bf16.mxu0 0
        %3771 = vmatpush1.bf16.msra.mxu0 0
        %3772 = vmatprep.subr.bf16.mxu0 0
        %3773 = vmatpush1.bf16.msra.mxu0 0
        %3774 = vmatprep.subr.bf16.mxu0 0
        %3775 = vmatpush1.bf16.msra.mxu0 0
        %3776 = vmatprep.subr.bf16.mxu0 0
        %3777 = vmatpush1.bf16.msra.mxu0 0
        %3778 = vmatprep.subr.bf16.mxu0 0
        %3779 = vmatpush1.bf16.msra.mxu0 0
        %3780 = vmatprep.subr.bf16.mxu0 0
        %3781 = vmatpush1.bf16.msra.mxu0 0
        %3782 = vmatprep.subr.bf16.mxu0 0
        %3783 = vmatpush1.bf16.msra.mxu0 0
        %3784 = vmatprep.mubr.bf16.mxu0 0
        %3785 = vmatmul.mubr.bf16.gmra.mrb[0].mxu0 %v3747
        %v3786 = vpop.f32.mrb[0].mxu0
        %v3787 = vadd.f32 0.0, %v3786
        %v3788 = vpop.f32.mrb[0].mxu0
        %v3789 = vpop.f32.mrb[0].mxu0
        %v3790 = vpop.f32.mrb[0].mxu0
        %3791 = vdwg.mxu0
        %3793 = vrot.lane.b32.xlu0 %v3787, 16
        %v3794 = vpop.permute.xlu0 %3793
        %v3796 = vsel %vm3332, %v3675, %v3794
        %v3798 = vrot.slane %v3796, 2
        %vm3800 = vcmask 1045504
        %v3801 = vsel %vm3800, %v3560, %v3798
        %v3802 = vpack.c.bf16 %v3798, %v3801
        %v3804 = vlaneseq
        %v3805 = vshrl.u32 %v3804, 7
        %v3806 = vsub.s32 0, %v3805
        %v3807 = vrot.slane %v3216, %v3806
        %v3813 = vunpack.c.l.b16 %v3212
        %v3814 = vunpack.c.l.b16 %v3213
        %v3815 = vunpack.c.l.b16 %v3214
        %v3816 = vunpack.c.l.b16 %v3215
        %v3817 = vpack.c.b16 %v3814, %v3813
        %v3818 = vpack.c.b16 %v3816, %v3815
        %v3822 = vsel %vm3275, %v3802, 0
        %3824 = vmatprep.subr.bf16.mxu0 0
        %3825 = vmatpush1.bf16.msra.mxu0 %v3817
        %3826 = vmatprep.subr.bf16.mxu0 0
        %3827 = vmatpush1.bf16.msra.mxu0 %v3818
        %3828 = vmatprep.subr.bf16.mxu0 0
        %3829 = vmatpush1.bf16.msra.mxu0 0
        %3830 = vmatprep.subr.bf16.mxu0 0
        %3831 = vmatpush1.bf16.msra.mxu0 0
        %3832 = vmatprep.subr.bf16.mxu0 0
        %3833 = vmatpush1.bf16.msra.mxu0 0
        %3834 = vmatprep.subr.bf16.mxu0 0
        %3835 = vmatpush1.bf16.msra.mxu0 0
        %3836 = vmatprep.subr.bf16.mxu0 0
        %3837 = vmatpush1.bf16.msra.mxu0 0
        %3838 = vmatprep.subr.bf16.mxu0 0
        %3839 = vmatpush1.bf16.msra.mxu0 0
        %3840 = vmatprep.subr.bf16.mxu0 0
        %3841 = vmatpush1.bf16.msra.mxu0 0
        %3842 = vmatprep.subr.bf16.mxu0 0
        %3843 = vmatpush1.bf16.msra.mxu0 0
        %3844 = vmatprep.subr.bf16.mxu0 0
        %3845 = vmatpush1.bf16.msra.mxu0 0
        %3846 = vmatprep.subr.bf16.mxu0 0
        %3847 = vmatpush1.bf16.msra.mxu0 0
        %3848 = vmatprep.subr.bf16.mxu0 0
        %3849 = vmatpush1.bf16.msra.mxu0 0
        %3850 = vmatprep.subr.bf16.mxu0 0
        %3851 = vmatpush1.bf16.msra.mxu0 0
        %3852 = vmatprep.subr.bf16.mxu0 0
        %3853 = vmatpush1.bf16.msra.mxu0 0
        %3854 = vmatprep.subr.bf16.mxu0 0
        %3855 = vmatpush1.bf16.msra.mxu0 0
        %3856 = vmatprep.mubr.bf16.mxu0 0
        %3857 = vmatmul.mubr.bf16.gmra.mrb[0].mxu0 %v3822
        %v3858 = vpop.f32.mrb[0].mxu0
        %v3859 = vadd.f32 %v3807, %v3858
        %v3860 = vpop.f32.mrb[0].mxu0
        %v3861 = vpop.f32.mrb[0].mxu0
        %v3862 = vadd.f32 %v3807, %v3861
        %v3863 = vpop.f32.mrb[0].mxu0
        %3864 = vdwg.mxu0
        %v3865 = vadd.f32 %v3252, %v3859
        %v3866 = vadd.f32 %v3253, %v3862
        %v3867 = vsel %vm3275, %v3865, 0.0
        %3868 = vadd.xlane.f32.xlu0 %v3867
        %v3869 = vpop.xlane.xlu0 %3868
        %vm3870 = vcmask 257024
        %v3871 = vsel %vm3870, %v3866, 0.0
        %3872 = vadd.xlane.f32.xlu0 %v3871
        %v3873 = vpop.xlane.xlu0 %3872
        %v3874 = vrcp.pop 32.0
        %v3875 = vmul.f32 %v3869, %v3874
        %v3876 = vmul.f32 %v3873, %v3874
        %v3877 = vsub.f32 %v3865, %v3875
        %v3878 = vsub.f32 %v3866, %v3876
        %v3879 = vmul.f32 %v3877, %v3877
        %v3880 = vmul.f32 %v3878, %v3878
        %v3881 = vsel %vm3275, %v3879, 0.0
        %3882 = vadd.xlane.f32.xlu0 %v3881
        %v3883 = vpop.xlane.xlu0 %3882
        %v3884 = vsel %vm3870, %v3880, 0.0
        %3885 = vadd.xlane.f32.xlu0 %v3884
        %v3886 = vpop.xlane.xlu0 %3885
        %v3887 = vmul.f32 %v3883, %v3874
        %v3888 = vmul.f32 %v3886, %v3874
        %v3889 = vadd.f32 %v3887, 1e-05
        %v3890 = vadd.f32 %v3888, 1e-05
        %v3891 = vrsqrt.pop %v3889
        %v3892 = vrsqrt.pop %v3890
        %v3893 = vmul.f32 %v3877, %v3891
        %v3894 = vmul.f32 %v3878, %v3892
        %v3896 = vlaneseq
        %v3897 = vshrl.u32 %v3896, 7
        %v3898 = vsub.s32 0, %v3897
        %v3899 = vrot.slane %v3217, %v3898
        %v3901 = vmul.f32 %v3893, %v3899
        %v3902 = vmul.f32 %v3894, %v3899
        %v3904 = vlaneseq
        %v3905 = vshrl.u32 %v3904, 7
        %v3906 = vsub.s32 0, %v3905
        %v3907 = vrot.slane %v3218, %v3906
        %v3909 = vadd.f32 %v3901, %v3907
        %v3910 = vadd.f32 %v3902, %v3907
        %v3911 = vpack.c.bf16 %v3910, %v3909
        %v3913 = vlaneseq
        %v3914 = vshrl.u32 %v3913, 7
        %v3915 = vsub.s32 0, %v3914
        %v3916 = vrot.slane %v3223, %v3915
        %v3922 = vunpack.c.l.b16 %v3219
        %v3923 = vunpack.c.l.b16 %v3220
        %v3924 = vunpack.c.l.b16 %v3221
        %v3925 = vunpack.c.l.b16 %v3222
        %v3926 = vpack.c.b16 %v3923, %v3922
        %v3927 = vpack.c.b16 %v3925, %v3924
        %v3931 = vsel %vm3275, %v3911, 0
        %3933 = vmatprep.subr.bf16.mxu0 0
        %3934 = vmatpush1.bf16.msra.mxu0 %v3926
        %3935 = vmatprep.subr.bf16.mxu0 0
        %3936 = vmatpush1.bf16.msra.mxu0 %v3927
        %3937 = vmatprep.subr.bf16.mxu0 0
        %3938 = vmatpush1.bf16.msra.mxu0 0
        %3939 = vmatprep.subr.bf16.mxu0 0
        %3940 = vmatpush1.bf16.msra.mxu0 0
        %3941 = vmatprep.subr.bf16.mxu0 0
        %3942 = vmatpush1.bf16.msra.mxu0 0
        %3943 = vmatprep.subr.bf16.mxu0 0
        %3944 = vmatpush1.bf16.msra.mxu0 0
        %3945 = vmatprep.subr.bf16.mxu0 0
        %3946 = vmatpush1.bf16.msra.mxu0 0
        %3947 = vmatprep.subr.bf16.mxu0 0
        %3948 = vmatpush1.bf16.msra.mxu0 0
        %3949 = vmatprep.subr.bf16.mxu0 0
        %3950 = vmatpush1.bf16.msra.mxu0 0
        %3951 = vmatprep.subr.bf16.mxu0 0
        %3952 = vmatpush1.bf16.msra.mxu0 0
        %3953 = vmatprep.subr.bf16.mxu0 0
        %3954 = vmatpush1.bf16.msra.mxu0 0
        %3955 = vmatprep.subr.bf16.mxu0 0
        %3956 = vmatpush1.bf16.msra.mxu0 0
        %3957 = vmatprep.subr.bf16.mxu0 0
        %3958 = vmatpush1.bf16.msra.mxu0 0
        %3959 = vmatprep.subr.bf16.mxu0 0
        %3960 = vmatpush1.bf16.msra.mxu0 0
        %3961 = vmatprep.subr.bf16.mxu0 0
        %3962 = vmatpush1.bf16.msra.mxu0 0
        %3963 = vmatprep.subr.bf16.mxu0 0
        %3964 = vmatpush1.bf16.msra.mxu0 0
        %3965 = vmatprep.mubr.bf16.mxu0 0
        %3966 = vmatmul.mubr.bf16.gmra.mrb[0].mxu0 %v3931
        %v3967 = vpop.f32.mrb[0].mxu0
        %v3968 = vadd.f32 %v3916, %v3967
        %v3969 = vpop.f32.mrb[0].mxu0
        %v3970 = vpop.f32.mrb[0].mxu0
        %v3971 = vadd.f32 %v3916, %v3970
        %v3972 = vpop.f32.mrb[0].mxu0
        %3973 = vdwg.mxu0
        %v3974 = vpack.c.bf16 %v3255, %v3254
        %v3976 = vlaneseq
        %v3977 = vshrl.u32 %v3976, 7
        %v3978 = vsub.s32 0, %v3977
        %v3979 = vrot.slane %v3228, %v3978
        %v3985 = vunpack.c.l.b16 %v3224
        %v3986 = vunpack.c.l.b16 %v3225
        %v3987 = vunpack.c.l.b16 %v3226
        %v3988 = vunpack.c.l.b16 %v3227
        %v3989 = vpack.c.b16 %v3986, %v3985
        %v3990 = vpack.c.b16 %v3988, %v3987
        %v3994 = vsel %vm3275, %v3974, 0
        %3996 = vmatprep.subr.bf16.mxu0 0
        %3997 = vmatpush1.bf16.msra.mxu0 %v3989
        %3998 = vmatprep.subr.bf16.mxu0 0
        %3999 = vmatpush1.bf16.msra.mxu0 %v3990
        %4000 = vmatprep.subr.bf16.mxu0 0
        %4001 = vmatpush1.bf16.msra.mxu0 0
        %4002 = vmatprep.subr.bf16.mxu0 0
        %4003 = vmatpush1.bf16.msra.mxu0 0
        %4004 = vmatprep.subr.bf16.mxu0 0
        %4005 = vmatpush1.bf16.msra.mxu0 0
        %4006 = vmatprep.subr.bf16.mxu0 0
        %4007 = vmatpush1.bf16.msra.mxu0 0
        %4008 = vmatprep.subr.bf16.mxu0 0
        %4009 = vmatpush1.bf16.msra.mxu0 0
        %4010 = vmatprep.subr.bf16.mxu0 0
        %4011 = vmatpush1.bf16.msra.mxu0 0
        %4012 = vmatprep.subr.bf16.mxu0 0
        %4013 = vmatpush1.bf16.msra.mxu0 0
        %4014 = vmatprep.subr.bf16.mxu0 0
        %4015 = vmatpush1.bf16.msra.mxu0 0
        %4016 = vmatprep.subr.bf16.mxu0 0
        %4017 = vmatpush1.bf16.msra.mxu0 0
        %4018 = vmatprep.subr.bf16.mxu0 0
        %4019 = vmatpush1.bf16.msra.mxu0 0
        %4020 = vmatprep.subr.bf16.mxu0 0
        %4021 = vmatpush1.bf16.msra.mxu0 0
        %4022 = vmatprep.subr.bf16.mxu0 0
        %4023 = vmatpush1.bf16.msra.mxu0 0
        %4024 = vmatprep.subr.bf16.mxu0 0
        %4025 = vmatpush1.bf16.msra.mxu0 0
        %4026 = vmatprep.subr.bf16.mxu0 0
        %4027 = vmatpush1.bf16.msra.mxu0 0
        %4028 = vmatprep.mubr.bf16.mxu0 0
        %4029 = vmatmul.mubr.bf16.gmra.mrb[0].mxu0 %v3994
        %v4030 = vpop.f32.mrb[0].mxu0
        %v4031 = vadd.f32 %v3979, %v4030
        %v4032 = vpop.f32.mrb[0].mxu0
        %v4033 = vpop.f32.mrb[0].mxu0
        %v4034 = vadd.f32 %v3979, %v4033
        %v4035 = vpop.f32.mrb[0].mxu0
        %4036 = vdwg.mxu0
        %vm4037 = vcmp.ne.s32.totalorder %v3201, 0
        %v4038 = vpack.c.bf16 %v3968, %v3968
        %v4039 = vpack.c.bf16 %v4031, %v4031
        %v4041 = vsel %vm3332, %v4038, 0
        %v4044 = vsel %vm3332, %v4039, 0
        %4046 = vmatprep.subr.bf16.mxu0 0
        %4047 = vmatpush1.bf16.xpose.msra.mxu0 %v4044
        %4048 = vmatprep.subr.bf16.mxu0 0
        %4049 = vmatpush1.bf16.xpose.msra.mxu0 0
        %4050 = vmatprep.subr.bf16.mxu0 0
        %4051 = vmatpush1.bf16.xpose.msra.mxu0 0
        %4052 = vmatprep.subr.bf16.mxu0 0
        %4053 = vmatpush1.bf16.xpose.msra.mxu0 0
        %4054 = vmatprep.subr.bf16.mxu0 0
        %4055 = vmatpush1.bf16.xpose.msra.mxu0 0
        %4056 = vmatprep.subr.bf16.mxu0 0
        %4057 = vmatpush1.bf16.xpose.msra.mxu0 0
        %4058 = vmatprep.subr.bf16.mxu0 0
        %4059 = vmatpush1.bf16.xpose.msra.mxu0 0
        %4060 = vmatprep.subr.bf16.mxu0 0
        %4061 = vmatpush1.bf16.xpose.msra.mxu0 0
        %4062 = vmatprep.subr.bf16.mxu0 0
        %4063 = vmatpush1.bf16.xpose.msra.mxu0 0
        %4064 = vmatprep.subr.bf16.mxu0 0
        %4065 = vmatpush1.bf16.xpose.msra.mxu0 0
        %4066 = vmatprep.subr.bf16.mxu0 0
        %4067 = vmatpush1.bf16.xpose.msra.mxu0 0
        %4068 = vmatprep.subr.bf16.mxu0 0
        %4069 = vmatpush1.bf16.xpose.msra.mxu0 0
        %4070 = vmatprep.subr.bf16.mxu0 0
        %4071 = vmatpush1.bf16.xpose.msra.mxu0 0
        %4072 = vmatprep.subr.bf16.mxu0 0
        %4073 = vmatpush1.bf16.xpose.msra.mxu0 0
        %4074 = vmatprep.subr.bf16.mxu0 0
        %4075 = vmatpush1.bf16.xpose.msra.mxu0 0
        %4076 = vmatprep.subr.bf16.mxu0 0
        %4077 = vmatpush1.bf16.xpose.msra.mxu0 0
        %4078 = vmatprep.mubr.bf16.mxu0 0
        %4079 = vmatmul.mubr.bf16.gmra.mrb[0].mxu0 %v4041
        %v4080 = vpop.f32.mrb[0].mxu0
        %v4081 = vadd.f32 0.0, %v4080
        %v4082 = vpop.f32.mrb[0].mxu0
        %v4083 = vpop.f32.mrb[0].mxu0
        %v4084 = vpop.f32.mrb[0].mxu0
        %4085 = vdwg.mxu0
        %v4086 = vmul.f32 %v4081, 0.25
        %v4087 = vsel %vm4037, 1, 0
        %v4088 = vlaneseq
        %v4089 = vshrl.u32 %v4088, 7
        %v4090 = vsub.s32 0, %v4089
        %v4091 = vrot.slane %v4087, %v4090
        %vm4092 = vcmp.eq.s32.totalorder %v4091, 1
        %v4093 = vsel %vm4092, %v4086, -1e+10
        %vm4094 = vcmask 62464
        %v4095 = vsel %vm4094, %v4093, -inf
        %4096 = vmax.xlane.f32.xlu0 %v4095
        %v4097 = vpop.xlane.xlu0 %4096
        %v4098 = vsub.f32 %v4093, %v4097
        %v4099 = vmul.f32 %v4098, 1.442695
        %v4100 = vpow.pop %v4099
        %v4101 = vsel %vm4094, %v4100, 0.0
        %4102 = vadd.xlane.f32.xlu0 %v4101
        %v4103 = vpop.xlane.xlu0 %4102
        %v4104 = vrcp.pop %v4103
        %v4105 = vmul.f32 %v4100, %v4104
        %v4106 = vpack.c.bf16 %v4105, %v4105
        %4108 = vrot.lane.b32.xlu0 %v4039, 96
        %v4109 = vpop.permute.xlu0 %4108
        %vm4110 = vcmask 64512
        %v4112 = vsel %vm4110, %v4106, 0
        %vm4114 = vcmask 1043456
        %v4116 = vsel %vm4114, %v4109, 0
        %4118 = vmatprep.subr.bf16.mxu0 0
        %4119 = vmatpush1.bf16.msra.mxu0 %v4116
        %4120 = vmatprep.subr.bf16.mxu0 0
        %4121 = vmatpush1.bf16.msra.mxu0 0
        %4122 = vmatprep.subr.bf16.mxu0 0
        %4123 = vmatpush1.bf16.msra.mxu0 0
        %4124 = vmatprep.subr.bf16.mxu0 0
        %4125 = vmatpush1.bf16.msra.mxu0 0
        %4126 = vmatprep.subr.bf16.mxu0 0
        %4127 = vmatpush1.bf16.msra.mxu0 0
        %4128 = vmatprep.subr.bf16.mxu0 0
        %4129 = vmatpush1.bf16.msra.mxu0 0
        %4130 = vmatprep.subr.bf16.mxu0 0
        %4131 = vmatpush1.bf16.msra.mxu0 0
        %4132 = vmatprep.subr.bf16.mxu0 0
        %4133 = vmatpush1.bf16.msra.mxu0 0
        %4134 = vmatprep.subr.bf16.mxu0 0
        %4135 = vmatpush1.bf16.msra.mxu0 0
        %4136 = vmatprep.subr.bf16.mxu0 0
        %4137 = vmatpush1.bf16.msra.mxu0 0
        %4138 = vmatprep.subr.bf16.mxu0 0
        %4139 = vmatpush1.bf16.msra.mxu0 0
        %4140 = vmatprep.subr.bf16.mxu0 0
        %4141 = vmatpush1.bf16.msra.mxu0 0
        %4142 = vmatprep.subr.bf16.mxu0 0
        %4143 = vmatpush1.bf16.msra.mxu0 0
        %4144 = vmatprep.subr.bf16.mxu0 0
        %4145 = vmatpush1.bf16.msra.mxu0 0
        %4146 = vmatprep.subr.bf16.mxu0 0
        %4147 = vmatpush1.bf16.msra.mxu0 0
        %4148 = vmatprep.subr.bf16.mxu0 0
        %4149 = vmatpush1.bf16.msra.mxu0 0
        %4150 = vmatprep.mubr.bf16.mxu0 0
        %4151 = vmatmul.mubr.bf16.gmra.mrb[0].mxu0 %v4112
        %v4152 = vpop.f32.mrb[0].mxu0
        %v4153 = vadd.f32 0.0, %v4152
        %v4154 = vpop.f32.mrb[0].mxu0
        %v4155 = vpop.f32.mrb[0].mxu0
        %v4156 = vpop.f32.mrb[0].mxu0
        %4157 = vdwg.mxu0
        %4159 = vrot.lane.b32.xlu0 %v4038, 112
        %v4160 = vpop.permute.xlu0 %4159
        %4161 = vrot.lane.b32.xlu0 %v4039, 112
        %v4162 = vpop.permute.xlu0 %4161
        %v4164 = vsel %vm3332, %v4160, 0
        %v4167 = vsel %vm3332, %v4162, 0
        %4169 = vmatprep.subr.bf16.mxu0 0
        %4170 = vmatpush1.bf16.xpose.msra.mxu0 %v4167
        %4171 = vmatprep.subr.bf16.mxu0 0
        %4172 = vmatpush1.bf16.xpose.msra.mxu0 0
        %4173 = vmatprep.subr.bf16.mxu0 0
        %4174 = vmatpush1.bf16.xpose.msra.mxu0 0
        %4175 = vmatprep.subr.bf16.mxu0 0
        %4176 = vmatpush1.bf16.xpose.msra.mxu0 0
        %4177 = vmatprep.subr.bf16.mxu0 0
        %4178 = vmatpush1.bf16.xpose.msra.mxu0 0
        %4179 = vmatprep.subr.bf16.mxu0 0
        %4180 = vmatpush1.bf16.xpose.msra.mxu0 0
        %4181 = vmatprep.subr.bf16.mxu0 0
        %4182 = vmatpush1.bf16.xpose.msra.mxu0 0
        %4183 = vmatprep.subr.bf16.mxu0 0
        %4184 = vmatpush1.bf16.xpose.msra.mxu0 0
        %4185 = vmatprep.subr.bf16.mxu0 0
        %4186 = vmatpush1.bf16.xpose.msra.mxu0 0
        %4187 = vmatprep.subr.bf16.mxu0 0
        %4188 = vmatpush1.bf16.xpose.msra.mxu0 0
        %4189 = vmatprep.subr.bf16.mxu0 0
        %4190 = vmatpush1.bf16.xpose.msra.mxu0 0
        %4191 = vmatprep.subr.bf16.mxu0 0
        %4192 = vmatpush1.bf16.xpose.msra.mxu0 0
        %4193 = vmatprep.subr.bf16.mxu0 0
        %4194 = vmatpush1.bf16.xpose.msra.mxu0 0
        %4195 = vmatprep.subr.bf16.mxu0 0
        %4196 = vmatpush1.bf16.xpose.msra.mxu0 0
        %4197 = vmatprep.subr.bf16.mxu0 0
        %4198 = vmatpush1.bf16.xpose.msra.mxu0 0
        %4199 = vmatprep.subr.bf16.mxu0 0
        %4200 = vmatpush1.bf16.xpose.msra.mxu0 0
        %4201 = vmatprep.mubr.bf16.mxu0 0
        %4202 = vmatmul.mubr.bf16.gmra.mrb[0].mxu0 %v4164
        %v4203 = vpop.f32.mrb[0].mxu0
        %v4204 = vadd.f32 0.0, %v4203
        %v4205 = vpop.f32.mrb[0].mxu0
        %v4206 = vpop.f32.mrb[0].mxu0
        %v4207 = vpop.f32.mrb[0].mxu0
        %4208 = vdwg.mxu0
        %v4209 = vmul.f32 %v4204, 0.25
        %v4210 = vsel %vm4092, %v4209, -1e+10
        %v4211 = vsel %vm4094, %v4210, -inf
        %4212 = vmax.xlane.f32.xlu0 %v4211
        %v4213 = vpop.xlane.xlu0 %4212
        %v4214 = vsub.f32 %v4210, %v4213
        %v4215 = vmul.f32 %v4214, 1.442695
        %v4216 = vpow.pop %v4215
        %v4217 = vsel %vm4094, %v4216, 0.0
        %4218 = vadd.xlane.f32.xlu0 %v4217
        %v4219 = vpop.xlane.xlu0 %4218
        %v4220 = vrcp.pop %v4219
        %v4221 = vmul.f32 %v4216, %v4220
        %v4222 = vpack.c.bf16 %v4221, %v4221
        %4223 = vrot.lane.b32.xlu0 %v4039, 80
        %v4224 = vpop.permute.xlu0 %4223
        %v4226 = vsel %vm4110, %v4222, 0
        %v4229 = vsel %vm4114, %v4224, 0
        %4231 = vmatprep.subr.bf16.mxu0 0
        %4232 = vmatpush1.bf16.msra.mxu0 %v4229
        %4233 = vmatprep.subr.bf16.mxu0 0
        %4234 = vmatpush1.bf16.msra.mxu0 0
        %4235 = vmatprep.subr.bf16.mxu0 0
        %4236 = vmatpush1.bf16.msra.mxu0 0
        %4237 = vmatprep.subr.bf16.mxu0 0
        %4238 = vmatpush1.bf16.msra.mxu0 0
        %4239 = vmatprep.subr.bf16.mxu0 0
        %4240 = vmatpush1.bf16.msra.mxu0 0
        %4241 = vmatprep.subr.bf16.mxu0 0
        %4242 = vmatpush1.bf16.msra.mxu0 0
        %4243 = vmatprep.subr.bf16.mxu0 0
        %4244 = vmatpush1.bf16.msra.mxu0 0
        %4245 = vmatprep.subr.bf16.mxu0 0
        %4246 = vmatpush1.bf16.msra.mxu0 0
        %4247 = vmatprep.subr.bf16.mxu0 0
        %4248 = vmatpush1.bf16.msra.mxu0 0
        %4249 = vmatprep.subr.bf16.mxu0 0
        %4250 = vmatpush1.bf16.msra.mxu0 0
        %4251 = vmatprep.subr.bf16.mxu0 0
        %4252 = vmatpush1.bf16.msra.mxu0 0
        %4253 = vmatprep.subr.bf16.mxu0 0
        %4254 = vmatpush1.bf16.msra.mxu0 0
        %4255 = vmatprep.subr.bf16.mxu0 0
        %4256 = vmatpush1.bf16.msra.mxu0 0
        %4257 = vmatprep.subr.bf16.mxu0 0
        %4258 = vmatpush1.bf16.msra.mxu0 0
        %4259 = vmatprep.subr.bf16.mxu0 0
        %4260 = vmatpush1.bf16.msra.mxu0 0
        %4261 = vmatprep.subr.bf16.mxu0 0
        %4262 = vmatpush1.bf16.msra.mxu0 0
        %4263 = vmatprep.mubr.bf16.mxu0 0
        %4264 = vmatmul.mubr.bf16.gmra.mrb[0].mxu0 %v4226
        %v4265 = vpop.f32.mrb[0].mxu0
        %v4266 = vadd.f32 0.0, %v4265
        %v4267 = vpop.f32.mrb[0].mxu0
        %v4268 = vpop.f32.mrb[0].mxu0
        %v4269 = vpop.f32.mrb[0].mxu0
        %4270 = vdwg.mxu0
        %4272 = vrot.lane.b32.xlu0 %v4266, 16
        %v4273 = vpop.permute.xlu0 %4272
        %v4275 = vsel %vm3332, %v4153, %v4273
        %v4276 = vpack.c.bf16 %v3971, %v3968
        %v4277 = vpack.c.bf16 %v4034, %v4034
        %v4279 = vrot.slane %v4276, 3
        %v4281 = vsel %vm3332, %v4279, 0
        %v4284 = vsel %vm3332, %v4277, 0
        %4286 = vmatprep.subr.bf16.mxu0 0
        %4287 = vmatpush1.bf16.xpose.msra.mxu0 %v4284
        %4288 = vmatprep.subr.bf16.mxu0 0
        %4289 = vmatpush1.bf16.xpose.msra.mxu0 0
        %4290 = vmatprep.subr.bf16.mxu0 0
        %4291 = vmatpush1.bf16.xpose.msra.mxu0 0
        %4292 = vmatprep.subr.bf16.mxu0 0
        %4293 = vmatpush1.bf16.xpose.msra.mxu0 0
        %4294 = vmatprep.subr.bf16.mxu0 0
        %4295 = vmatpush1.bf16.xpose.msra.mxu0 0
        %4296 = vmatprep.subr.bf16.mxu0 0
        %4297 = vmatpush1.bf16.xpose.msra.mxu0 0
        %4298 = vmatprep.subr.bf16.mxu0 0
        %4299 = vmatpush1.bf16.xpose.msra.mxu0 0
        %4300 = vmatprep.subr.bf16.mxu0 0
        %4301 = vmatpush1.bf16.xpose.msra.mxu0 0
        %4302 = vmatprep.subr.bf16.mxu0 0
        %4303 = vmatpush1.bf16.xpose.msra.mxu0 0
        %4304 = vmatprep.subr.bf16.mxu0 0
        %4305 = vmatpush1.bf16.xpose.msra.mxu0 0
        %4306 = vmatprep.subr.bf16.mxu0 0
        %4307 = vmatpush1.bf16.xpose.msra.mxu0 0
        %4308 = vmatprep.subr.bf16.mxu0 0
        %4309 = vmatpush1.bf16.xpose.msra.mxu0 0
        %4310 = vmatprep.subr.bf16.mxu0 0
        %4311 = vmatpush1.bf16.xpose.msra.mxu0 0
        %4312 = vmatprep.subr.bf16.mxu0 0
        %4313 = vmatpush1.bf16.xpose.msra.mxu0 0
        %4314 = vmatprep.subr.bf16.mxu0 0
        %4315 = vmatpush1.bf16.xpose.msra.mxu0 0
        %4316 = vmatprep.subr.bf16.mxu0 0
        %4317 = vmatpush1.bf16.xpose.msra.mxu0 0
        %4318 = vmatprep.mubr.bf16.mxu0 0
        %4319 = vmatmul.mubr.bf16.gmra.mrb[0].mxu0 %v4281
        %v4320 = vpop.f32.mrb[0].mxu0
        %v4321 = vadd.f32 0.0, %v4320
        %v4322 = vpop.f32.mrb[0].mxu0
        %v4323 = vpop.f32.mrb[0].mxu0
        %v4324 = vpop.f32.mrb[0].mxu0
        %4325 = vdwg.mxu0
        %v4326 = vmul.f32 %v4321, 0.25
        %v4327 = vlaneseq
        %v4328 = vshrl.u32 %v4327, 7
        %v4329 = vsub.s32 1, %v4328
        %v4330 = vrot.slane %v4087, %v4329
        %vm4331 = vcmp.eq.s32.totalorder %v4330, 1
        %v4332 = vsel %vm4331, %v4326, -1e+10
        %v4333 = vsel %vm4094, %v4332, -inf
        %4334 = vmax.xlane.f32.xlu0 %v4333
        %v4335 = vpop.xlane.xlu0 %4334
        %v4336 = vsub.f32 %v4332, %v4335
        %v4337 = vmul.f32 %v4336, 1.442695
        %v4338 = vpow.pop %v4337
        %v4339 = vsel %vm4094, %v4338, 0.0
        %4340 = vadd.xlane.f32.xlu0 %v4339
        %v4341 = vpop.xlane.xlu0 %4340
        %v4342 = vrcp.pop %v4341
        %v4343 = vmul.f32 %v4338, %v4342
        %v4344 = vpack.c.bf16 %v4343, %v4343
        %4346 = vrot.lane.b32.xlu0 %v4277, 96
        %v4347 = vpop.permute.xlu0 %4346
        %v4349 = vsel %vm4110, %v4344, 0
        %v4352 = vsel %vm4114, %v4347, 0
        %4354 = vmatprep.subr.bf16.mxu0 0
        %4355 = vmatpush1.bf16.msra.mxu0 %v4352
        %4356 = vmatprep.subr.bf16.mxu0 0
        %4357 = vmatpush1.bf16.msra.mxu0 0
        %4358 = vmatprep.subr.bf16.mxu0 0
        %4359 = vmatpush1.bf16.msra.mxu0 0
        %4360 = vmatprep.subr.bf16.mxu0 0
        %4361 = vmatpush1.bf16.msra.mxu0 0
        %4362 = vmatprep.subr.bf16.mxu0 0
        %4363 = vmatpush1.bf16.msra.mxu0 0
        %4364 = vmatprep.subr.bf16.mxu0 0
        %4365 = vmatpush1.bf16.msra.mxu0 0
        %4366 = vmatprep.subr.bf16.mxu0 0
        %4367 = vmatpush1.bf16.msra.mxu0 0
        %4368 = vmatprep.subr.bf16.mxu0 0
        %4369 = vmatpush1.bf16.msra.mxu0 0
        %4370 = vmatprep.subr.bf16.mxu0 0
        %4371 = vmatpush1.bf16.msra.mxu0 0
        %4372 = vmatprep.subr.bf16.mxu0 0
        %4373 = vmatpush1.bf16.msra.mxu0 0
        %4374 = vmatprep.subr.bf16.mxu0 0
        %4375 = vmatpush1.bf16.msra.mxu0 0
        %4376 = vmatprep.subr.bf16.mxu0 0
        %4377 = vmatpush1.bf16.msra.mxu0 0
        %4378 = vmatprep.subr.bf16.mxu0 0
        %4379 = vmatpush1.bf16.msra.mxu0 0
        %4380 = vmatprep.subr.bf16.mxu0 0
        %4381 = vmatpush1.bf16.msra.mxu0 0
        %4382 = vmatprep.subr.bf16.mxu0 0
        %4383 = vmatpush1.bf16.msra.mxu0 0
        %4384 = vmatprep.subr.bf16.mxu0 0
        %4385 = vmatpush1.bf16.msra.mxu0 0
        %4386 = vmatprep.mubr.bf16.mxu0 0
        %4387 = vmatmul.mubr.bf16.gmra.mrb[0].mxu0 %v4349
        %v4388 = vpop.f32.mrb[0].mxu0
        %v4389 = vadd.f32 0.0, %v4388
        %v4390 = vpop.f32.mrb[0].mxu0
        %v4391 = vpop.f32.mrb[0].mxu0
        %v4392 = vpop.f32.mrb[0].mxu0
        %4393 = vdwg.mxu0
        %4394 = vrot.lane.b32.xlu0 %v4279, 112
        %v4395 = vpop.permute.xlu0 %4394
        %4396 = vrot.lane.b32.xlu0 %v4277, 112
        %v4397 = vpop.permute.xlu0 %4396
        %v4399 = vsel %vm3332, %v4395, 0
        %v4402 = vsel %vm3332, %v4397, 0
        %4404 = vmatprep.subr.bf16.mxu0 0
        %4405 = vmatpush1.bf16.xpose.msra.mxu0 %v4402
        %4406 = vmatprep.subr.bf16.mxu0 0
        %4407 = vmatpush1.bf16.xpose.msra.mxu0 0
        %4408 = vmatprep.subr.bf16.mxu0 0
        %4409 = vmatpush1.bf16.xpose.msra.mxu0 0
        %4410 = vmatprep.subr.bf16.mxu0 0
        %4411 = vmatpush1.bf16.xpose.msra.mxu0 0
        %4412 = vmatprep.subr.bf16.mxu0 0
        %4413 = vmatpush1.bf16.xpose.msra.mxu0 0
        %4414 = vmatprep.subr.bf16.mxu0 0
        %4415 = vmatpush1.bf16.xpose.msra.mxu0 0
        %4416 = vmatprep.subr.bf16.mxu0 0
        %4417 = vmatpush1.bf16.xpose.msra.mxu0 0
        %4418 = vmatprep.subr.bf16.mxu0 0
        %4419 = vmatpush1.bf16.xpose.msra.mxu0 0
        %4420 = vmatprep.subr.bf16.mxu0 0
        %4421 = vmatpush1.bf16.xpose.msra.mxu0 0
        %4422 = vmatprep.subr.bf16.mxu0 0
        %4423 = vmatpush1.bf16.xpose.msra.mxu0 0
        %4424 = vmatprep.subr.bf16.mxu0 0
        %4425 = vmatpush1.bf16.xpose.msra.mxu0 0
        %4426 = vmatprep.subr.bf16.mxu0 0
        %4427 = vmatpush1.bf16.xpose.msra.mxu0 0
        %4428 = vmatprep.subr.bf16.mxu0 0
        %4429 = vmatpush1.bf16.xpose.msra.mxu0 0
        %4430 = vmatprep.subr.bf16.mxu0 0
        %4431 = vmatpush1.bf16.xpose.msra.mxu0 0
        %4432 = vmatprep.subr.bf16.mxu0 0
        %4433 = vmatpush1.bf16.xpose.msra.mxu0 0
        %4434 = vmatprep.subr.bf16.mxu0 0
        %4435 = vmatpush1.bf16.xpose.msra.mxu0 0
        %4436 = vmatprep.mubr.bf16.mxu0 0
        %4437 = vmatmul.mubr.bf16.gmra.mrb[0].mxu0 %v4399
        %v4438 = vpop.f32.mrb[0].mxu0
        %v4439 = vadd.f32 0.0, %v4438
        %v4440 = vpop.f32.mrb[0].mxu0
        %v4441 = vpop.f32.mrb[0].mxu0
        %v4442 = vpop.f32.mrb[0].mxu0
        %4443 = vdwg.mxu0
        %v4444 = vmul.f32 %v4439, 0.25
        %v4445 = vsel %vm4331, %v4444, -1e+10
        %v4446 = vsel %vm4094, %v4445, -inf
        %4447 = vmax.xlane.f32.xlu0 %v4446
        %v4448 = vpop.xlane.xlu0 %4447
        %v4449 = vsub.f32 %v4445, %v4448
        %v4450 = vmul.f32 %v4449, 1.442695
        %v4451 = vpow.pop %v4450
        %v4452 = vsel %vm4094, %v4451, 0.0
        %4453 = vadd.xlane.f32.xlu0 %v4452
        %v4454 = vpop.xlane.xlu0 %4453
        %v4455 = vrcp.pop %v4454
        %v4456 = vmul.f32 %v4451, %v4455
        %v4457 = vpack.c.bf16 %v4456, %v4456
        %4458 = vrot.lane.b32.xlu0 %v4277, 80
        %v4459 = vpop.permute.xlu0 %4458
        %v4461 = vsel %vm4110, %v4457, 0
        %v4464 = vsel %vm4114, %v4459, 0
        %4466 = vmatprep.subr.bf16.mxu0 0
        %4467 = vmatpush1.bf16.msra.mxu0 %v4464
        %4468 = vmatprep.subr.bf16.mxu0 0
        %4469 = vmatpush1.bf16.msra.mxu0 0
        %4470 = vmatprep.subr.bf16.mxu0 0
        %4471 = vmatpush1.bf16.msra.mxu0 0
        %4472 = vmatprep.subr.bf16.mxu0 0
        %4473 = vmatpush1.bf16.msra.mxu0 0
        %4474 = vmatprep.subr.bf16.mxu0 0
        %4475 = vmatpush1.bf16.msra.mxu0 0
        %4476 = vmatprep.subr.bf16.mxu0 0
        %4477 = vmatpush1.bf16.msra.mxu0 0
        %4478 = vmatprep.subr.bf16.mxu0 0
        %4479 = vmatpush1.bf16.msra.mxu0 0
        %4480 = vmatprep.subr.bf16.mxu0 0
        %4481 = vmatpush1.bf16.msra.mxu0 0
        %4482 = vmatprep.subr.bf16.mxu0 0
        %4483 = vmatpush1.bf16.msra.mxu0 0
        %4484 = vmatprep.subr.bf16.mxu0 0
        %4485 = vmatpush1.bf16.msra.mxu0 0
        %4486 = vmatprep.subr.bf16.mxu0 0
        %4487 = vmatpush1.bf16.msra.mxu0 0
        %4488 = vmatprep.subr.bf16.mxu0 0
        %4489 = vmatpush1.bf16.msra.mxu0 0
        %4490 = vmatprep.subr.bf16.mxu0 0
        %4491 = vmatpush1.bf16.msra.mxu0 0
        %4492 = vmatprep.subr.bf16.mxu0 0
        %4493 = vmatpush1.bf16.msra.mxu0 0
        %4494 = vmatprep.subr.bf16.mxu0 0
        %4495 = vmatpush1.bf16.msra.mxu0 0
        %4496 = vmatprep.subr.bf16.mxu0 0
        %4497 = vmatpush1.bf16.msra.mxu0 0
        %4498 = vmatprep.mubr.bf16.mxu0 0
        %4499 = vmatmul.mubr.bf16.gmra.mrb[0].mxu0 %v4461
        %v4500 = vpop.f32.mrb[0].mxu0
        %v4501 = vadd.f32 0.0, %v4500
        %v4502 = vpop.f32.mrb[0].mxu0
        %v4503 = vpop.f32.mrb[0].mxu0
        %v4504 = vpop.f32.mrb[0].mxu0
        %4505 = vdwg.mxu0
        %4507 = vrot.lane.b32.xlu0 %v4501, 16
        %v4508 = vpop.permute.xlu0 %4507
        %v4510 = vsel %vm3332, %v4389, %v4508
        %v4512 = vrot.slane %v4510, 2
        %v4514 = vsel %vm3800, %v4275, %v4512
        %v4515 = vpack.c.bf16 %v4512, %v4514
        %v4517 = vlaneseq
        %v4518 = vshrl.u32 %v4517, 7
        %v4519 = vsub.s32 0, %v4518
        %v4520 = vrot.slane %v3233, %v4519
        %v4526 = vunpack.c.l.b16 %v3229
        %v4527 = vunpack.c.l.b16 %v3230
        %v4528 = vunpack.c.l.b16 %v3231
        %v4529 = vunpack.c.l.b16 %v3232
        %v4530 = vpack.c.b16 %v4527, %v4526
        %v4531 = vpack.c.b16 %v4529, %v4528
        %v4535 = vsel %vm3275, %v4515, 0
        %4537 = vmatprep.subr.bf16.mxu0 0
        %4538 = vmatpush1.bf16.msra.mxu0 %v4530
        %4539 = vmatprep.subr.bf16.mxu0 0
        %4540 = vmatpush1.bf16.msra.mxu0 %v4531
        %4541 = vmatprep.subr.bf16.mxu0 0
        %4542 = vmatpush1.bf16.msra.mxu0 0
        %4543 = vmatprep.subr.bf16.mxu0 0
        %4544 = vmatpush1.bf16.msra.mxu0 0
        %4545 = vmatprep.subr.bf16.mxu0 0
        %4546 = vmatpush1.bf16.msra.mxu0 0
        %4547 = vmatprep.subr.bf16.mxu0 0
        %4548 = vmatpush1.bf16.msra.mxu0 0
        %4549 = vmatprep.subr.bf16.mxu0 0
        %4550 = vmatpush1.bf16.msra.mxu0 0
        %4551 = vmatprep.subr.bf16.mxu0 0
        %4552 = vmatpush1.bf16.msra.mxu0 0
        %4553 = vmatprep.subr.bf16.mxu0 0
        %4554 = vmatpush1.bf16.msra.mxu0 0
        %4555 = vmatprep.subr.bf16.mxu0 0
        %4556 = vmatpush1.bf16.msra.mxu0 0
        %4557 = vmatprep.subr.bf16.mxu0 0
        %4558 = vmatpush1.bf16.msra.mxu0 0
        %4559 = vmatprep.subr.bf16.mxu0 0
        %4560 = vmatpush1.bf16.msra.mxu0 0
        %4561 = vmatprep.subr.bf16.mxu0 0
        %4562 = vmatpush1.bf16.msra.mxu0 0
        %4563 = vmatprep.subr.bf16.mxu0 0
        %4564 = vmatpush1.bf16.msra.mxu0 0
        %4565 = vmatprep.subr.bf16.mxu0 0
        %4566 = vmatpush1.bf16.msra.mxu0 0
        %4567 = vmatprep.subr.bf16.mxu0 0
        %4568 = vmatpush1.bf16.msra.mxu0 0
        %4569 = vmatprep.mubr.bf16.mxu0 0
        %4570 = vmatmul.mubr.bf16.gmra.mrb[0].mxu0 %v4535
        %v4571 = vpop.f32.mrb[0].mxu0
        %v4572 = vadd.f32 %v4520, %v4571
        %v4573 = vpop.f32.mrb[0].mxu0
        %v4574 = vpop.f32.mrb[0].mxu0
        %v4575 = vadd.f32 %v4520, %v4574
        %v4576 = vpop.f32.mrb[0].mxu0
        %4577 = vdwg.mxu0
        %v4578 = vadd.f32 %v3909, %v4572
        %v4579 = vadd.f32 %v3910, %v4575
        %v4580 = vsel %vm3275, %v4578, 0.0
        %4581 = vadd.xlane.f32.xlu0 %v4580
        %v4582 = vpop.xlane.xlu0 %4581
        %v4583 = vsel %vm3870, %v4579, 0.0
        %4584 = vadd.xlane.f32.xlu0 %v4583
        %v4585 = vpop.xlane.xlu0 %4584
        %v4586 = vmul.f32 %v4582, %v3874
        %v4587 = vmul.f32 %v4585, %v3874
        %v4588 = vsub.f32 %v4578, %v4586
        %v4589 = vsub.f32 %v4579, %v4587
        %v4590 = vmul.f32 %v4588, %v4588
        %v4591 = vmul.f32 %v4589, %v4589
        %v4592 = vsel %vm3275, %v4590, 0.0
        %4593 = vadd.xlane.f32.xlu0 %v4592
        %v4594 = vpop.xlane.xlu0 %4593
        %v4595 = vsel %vm3870, %v4591, 0.0
        %4596 = vadd.xlane.f32.xlu0 %v4595
        %v4597 = vpop.xlane.xlu0 %4596
        %v4598 = vmul.f32 %v4594, %v3874
        %v4599 = vmul.f32 %v4597, %v3874
        %v4600 = vadd.f32 %v4598, 1e-05
        %v4601 = vadd.f32 %v4599, 1e-05
        %v4602 = vrsqrt.pop %v4600
        %v4603 = vrsqrt.pop %v4601
        %v4604 = vmul.f32 %v4588, %v4602
        %v4605 = vmul.f32 %v4589, %v4603
        %v4607 = vlaneseq
        %v4608 = vshrl.u32 %v4607, 7
        %v4609 = vsub.s32 0, %v4608
        %v4610 = vrot.slane %v3234, %v4609
        %v4612 = vmul.f32 %v4604, %v4610
        %v4613 = vmul.f32 %v4605, %v4610
        %v4615 = vlaneseq
        %v4616 = vshrl.u32 %v4615, 7
        %v4617 = vsub.s32 0, %v4616
        %v4618 = vrot.slane %v3235, %v4617
        %v4620 = vadd.f32 %v4612, %v4618
        %v4621 = vadd.f32 %v4613, %v4618
        %v4622 = vpack.c.bf16 %v4621, %v4620
        %v4624 = vlaneseq
        %v4625 = vshrl.u32 %v4624, 7
        %v4626 = vsub.s32 0, %v4625
        %v4627 = vrot.slane %v3240, %v4626
        %v4633 = vunpack.c.l.b16 %v3236
        %v4634 = vunpack.c.l.b16 %v3237
        %v4635 = vunpack.c.l.b16 %v3238
        %v4636 = vunpack.c.l.b16 %v3239
        %v4637 = vpack.c.b16 %v4634, %v4633
        %v4638 = vpack.c.b16 %v4636, %v4635
        %v4642 = vsel %vm3275, %v4622, 0
        %4644 = vmatprep.subr.bf16.mxu0 0
        %4645 = vmatpush1.bf16.msra.mxu0 %v4637
        %4646 = vmatprep.subr.bf16.mxu0 0
        %4647 = vmatpush1.bf16.msra.mxu0 %v4638
        %4648 = vmatprep.subr.bf16.mxu0 0
        %4649 = vmatpush1.bf16.msra.mxu0 0
        %4650 = vmatprep.subr.bf16.mxu0 0
        %4651 = vmatpush1.bf16.msra.mxu0 0
        %4652 = vmatprep.subr.bf16.mxu0 0
        %4653 = vmatpush1.bf16.msra.mxu0 0
        %4654 = vmatprep.subr.bf16.mxu0 0
        %4655 = vmatpush1.bf16.msra.mxu0 0
        %4656 = vmatprep.subr.bf16.mxu0 0
        %4657 = vmatpush1.bf16.msra.mxu0 0
        %4658 = vmatprep.subr.bf16.mxu0 0
        %4659 = vmatpush1.bf16.msra.mxu0 0
        %4660 = vmatprep.subr.bf16.mxu0 0
        %4661 = vmatpush1.bf16.msra.mxu0 0
        %4662 = vmatprep.subr.bf16.mxu0 0
        %4663 = vmatpush1.bf16.msra.mxu0 0
        %4664 = vmatprep.subr.bf16.mxu0 0
        %4665 = vmatpush1.bf16.msra.mxu0 0
        %4666 = vmatprep.subr.bf16.mxu0 0
        %4667 = vmatpush1.bf16.msra.mxu0 0
        %4668 = vmatprep.subr.bf16.mxu0 0
        %4669 = vmatpush1.bf16.msra.mxu0 0
        %4670 = vmatprep.subr.bf16.mxu0 0
        %4671 = vmatpush1.bf16.msra.mxu0 0
        %4672 = vmatprep.subr.bf16.mxu0 0
        %4673 = vmatpush1.bf16.msra.mxu0 0
        %4674 = vmatprep.subr.bf16.mxu0 0
        %4675 = vmatpush1.bf16.msra.mxu0 0
        %4676 = vmatprep.mubr.bf16.mxu0 0
        %4677 = vmatmul.mubr.bf16.gmra.mrb[0].mxu0 %v4642
        %v4678 = vpop.f32.mrb[0].mxu0
        %v4679 = vadd.f32 %v4627, %v4678
        %v4680 = vpop.f32.mrb[0].mxu0
        %v4681 = vpop.f32.mrb[0].mxu0
        %v4682 = vadd.f32 %v4627, %v4681
        %v4683 = vpop.f32.mrb[0].mxu0
        %4684 = vdwg.mxu0
        %v4685 = vmax.f32 %v4679, 0.0
        %v4686 = vmax.f32 %v4682, 0.0
        %v4687 = vpack.c.bf16 %v4686, %v4685
        %v4689 = vlaneseq
        %v4690 = vshrl.u32 %v4689, 7
        %v4691 = vsub.s32 0, %v4690
        %v4692 = vrot.slane %v3249, %v4691
        %v4702 = vunpack.c.l.b16 %v3241
        %v4703 = vunpack.c.l.b16 %v3242
        %v4704 = vunpack.c.l.b16 %v3243
        %v4705 = vunpack.c.l.b16 %v3244
        %v4706 = vunpack.c.l.b16 %v3245
        %v4707 = vunpack.c.l.b16 %v3246
        %v4708 = vunpack.c.l.b16 %v3247
        %v4709 = vunpack.c.l.b16 %v3248
        %v4710 = vpack.c.b16 %v4703, %v4702
        %v4711 = vpack.c.b16 %v4705, %v4704
        %v4712 = vpack.c.b16 %v4707, %v4706
        %v4713 = vpack.c.b16 %v4709, %v4708
        %vm4718 = vcmask 523264
        %v4720 = vsel %vm4718, %v4687, 0
        %4722 = vmatprep.subr.bf16.mxu0 0
        %4723 = vmatpush1.bf16.msra.mxu0 %v4710
        %4724 = vmatprep.subr.bf16.mxu0 0
        %4725 = vmatpush1.bf16.msra.mxu0 %v4711
        %4726 = vmatprep.subr.bf16.mxu0 0
        %4727 = vmatpush1.bf16.msra.mxu0 %v4712
        %4728 = vmatprep.subr.bf16.mxu0 0
        %4729 = vmatpush1.bf16.msra.mxu0 %v4713
        %4730 = vmatprep.subr.bf16.mxu0 0
        %4731 = vmatpush1.bf16.msra.mxu0 0
        %4732 = vmatprep.subr.bf16.mxu0 0
        %4733 = vmatpush1.bf16.msra.mxu0 0
        %4734 = vmatprep.subr.bf16.mxu0 0
        %4735 = vmatpush1.bf16.msra.mxu0 0
        %4736 = vmatprep.subr.bf16.mxu0 0
        %4737 = vmatpush1.bf16.msra.mxu0 0
        %4738 = vmatprep.subr.bf16.mxu0 0
        %4739 = vmatpush1.bf16.msra.mxu0 0
        %4740 = vmatprep.subr.bf16.mxu0 0
        %4741 = vmatpush1.bf16.msra.mxu0 0
        %4742 = vmatprep.subr.bf16.mxu0 0
        %4743 = vmatpush1.bf16.msra.mxu0 0
        %4744 = vmatprep.subr.bf16.mxu0 0
        %4745 = vmatpush1.bf16.msra.mxu0 0
        %4746 = vmatprep.subr.bf16.mxu0 0
        %4747 = vmatpush1.bf16.msra.mxu0 0
        %4748 = vmatprep.subr.bf16.mxu0 0
        %4749 = vmatpush1.bf16.msra.mxu0 0
        %4750 = vmatprep.subr.bf16.mxu0 0
        %4751 = vmatpush1.bf16.msra.mxu0 0
        %4752 = vmatprep.subr.bf16.mxu0 0
        %4753 = vmatpush1.bf16.msra.mxu0 0
        %4754 = vmatprep.mubr.bf16.mxu0 0
        %4755 = vmatmul.mubr.bf16.gmra.mrb[0].mxu0 %v4720
        %v4756 = vpop.f32.mrb[0].mxu0
        %v4757 = vadd.f32 %v4692, %v4756
        %v4758 = vpop.f32.mrb[0].mxu0
        %v4759 = vpop.f32.mrb[0].mxu0
        %v4760 = vadd.f32 %v4692, %v4759
        %v4761 = vpop.f32.mrb[0].mxu0
        %4762 = vdwg.mxu0
        %v4763 = vadd.f32 %v4620, %v4757
        %v4764 = vadd.f32 %v4621, %v4760
        %v4765 = vsel %vm3275, %v4763, 0.0
        %4766 = vadd.xlane.f32.xlu0 %v4765
        %v4767 = vpop.xlane.xlu0 %4766
        %v4768 = vsel %vm3870, %v4764, 0.0
        %4769 = vadd.xlane.f32.xlu0 %v4768
        %v4770 = vpop.xlane.xlu0 %4769
        %v4771 = vmul.f32 %v4767, %v3874
        %v4772 = vmul.f32 %v4770, %v3874
        %v4773 = vsub.f32 %v4763, %v4771
        %v4774 = vsub.f32 %v4764, %v4772
        %v4775 = vmul.f32 %v4773, %v4773
        %v4776 = vmul.f32 %v4774, %v4774
        %v4777 = vsel %vm3275, %v4775, 0.0
        %4778 = vadd.xlane.f32.xlu0 %v4777
        %v4779 = vpop.xlane.xlu0 %4778
        %v4780 = vsel %vm3870, %v4776, 0.0
        %4781 = vadd.xlane.f32.xlu0 %v4780
        %v4782 = vpop.xlane.xlu0 %4781
        %v4783 = vmul.f32 %v4779, %v3874
        %v4784 = vmul.f32 %v4782, %v3874
        %v4785 = vadd.f32 %v4783, 1e-05
        %v4786 = vadd.f32 %v4784, 1e-05
        %v4787 = vrsqrt.pop %v4785
        %v4788 = vrsqrt.pop %v4786
        %v4789 = vmul.f32 %v4773, %v4787
        %v4790 = vmul.f32 %v4774, %v4788
        %v4792 = vlaneseq
        %v4793 = vshrl.u32 %v4792, 7
        %v4794 = vsub.s32 0, %v4793
        %v4795 = vrot.slane %v3250, %v4794
        %v4797 = vmul.f32 %v4789, %v4795
        %v4798 = vmul.f32 %v4790, %v4795
        %v4800 = vlaneseq
        %v4801 = vshrl.u32 %v4800, 7
        %v4802 = vsub.s32 0, %v4801
        %v4803 = vrot.slane %v3251, %v4802
        %v4805 = vadd.f32 %v4797, %v4803
        %v4806 = vadd.f32 %v4798, %v4803
        %4807 = vst.msk [vmem:[#allocation3] sm:$0xff] %vm3275, %v4805
        %4808 = vst.msk [vmem:[#allocation3 + $0x8] sm:$0xf] %vm3870, %v4806
        %p4809 = scmp.eq.s32.totalorder %s91, 3
        // Predicated region
        $region189: #{seq2seq_forward.1} parent=183 // pred_check
          %p4810 = pneg %p4809
        $region190: #{seq2seq_forward.1} parent=183 // pred_check_branch
          %4812 = sbr.rel (%p4810) target = $region192
        $region191: #{seq2seq_forward.1} parent=183 // pred_region
          %v4813 = vsel %vm4110, %v4105, 0.0
          %4814 = vst [vmem:[%s79] sm:$0x3f] %v4813
          %v4815 = vsel %vm4110, %v4221, 0.0
          %s4816 = scalar_lea.vmem %s79, 8
          %4817 = vst [vmem:[%s4816] sm:$0x3f] %v4815
          %v4818 = vsel %vm4110, %v4343, 0.0
          %s4819 = scalar_lea.vmem %s79, 16
          %4820 = vst [vmem:[%s4819] sm:$0x3f] %v4818
          %v4821 = vsel %vm4110, %v4456, 0.0
          %s4822 = scalar_lea.vmem %s79, 24
          %4823 = vst [vmem:[%s4822] sm:$0x3f] %v4821
          %v4824 = vld [vmem:[%s73] sm:$0xf]
          %v4825 = vld [vmem:[%s73 + $0x4] sm:$0xf]
          %v4826 = vld [vmem:[%s73 + $0x8] sm:$0xf]
          %v4827 = vld [vmem:[%s73 + $0xc] sm:$0xf]
          %v4828 = vld [vmem:[%s75] sm:$0x1]
          %v4829 = vpack.c.bf16 %v4806, %v4805
          %v4831 = vlaneseq
          %v4832 = vshrl.u32 %v4831, 7
          %v4833 = vsub.s32 0, %v4832
          %v4834 = vrot.slane %v4828, %v4833
          %v4840 = vunpack.c.l.b16 %v4824
          %v4841 = vunpack.c.l.b16 %v4825
          %v4842 = vunpack.c.l.b16 %v4826
          %v4843 = vunpack.c.l.b16 %v4827
          %v4844 = vpack.c.b16 %v4841, %v4840
          %v4845 = vpack.c.b16 %v4843, %v4842
          %v4849 = vsel %vm3275, %v4829, 0
          %4851 = vmatprep.subr.bf16.mxu0 0
          %4852 = vmatpush1.bf16.msra.mxu0 %v4844
          %4853 = vmatprep.subr.bf16.mxu0 0
          %4854 = vmatpush1.bf16.msra.mxu0 %v4845
          %4855 = vmatprep.subr.bf16.mxu0 0
          %4856 = vmatpush1.bf16.msra.mxu0 0
          %4857 = vmatprep.subr.bf16.mxu0 0
          %4858 = vmatpush1.bf16.msra.mxu0 0
          %4859 = vmatprep.subr.bf16.mxu0 0
          %4860 = vmatpush1.bf16.msra.mxu0 0
          %4861 = vmatprep.subr.bf16.mxu0 0
          %4862 = vmatpush1.bf16.msra.mxu0 0
          %4863 = vmatprep.subr.bf16.mxu0 0
          %4864 = vmatpush1.bf16.msra.mxu0 0
          %4865 = vmatprep.subr.bf16.mxu0 0
          %4866 = vmatpush1.bf16.msra.mxu0 0
          %4867 = vmatprep.subr.bf16.mxu0 0
          %4868 = vmatpush1.bf16.msra.mxu0 0
          %4869 = vmatprep.subr.bf16.mxu0 0
          %4870 = vmatpush1.bf16.msra.mxu0 0
          %4871 = vmatprep.subr.bf16.mxu0 0
          %4872 = vmatpush1.bf16.msra.mxu0 0
          %4873 = vmatprep.subr.bf16.mxu0 0
          %4874 = vmatpush1.bf16.msra.mxu0 0
          %4875 = vmatprep.subr.bf16.mxu0 0
          %4876 = vmatpush1.bf16.msra.mxu0 0
          %4877 = vmatprep.subr.bf16.mxu0 0
          %4878 = vmatpush1.bf16.msra.mxu0 0
          %4879 = vmatprep.subr.bf16.mxu0 0
          %4880 = vmatpush1.bf16.msra.mxu0 0
          %4881 = vmatprep.subr.bf16.mxu0 0
          %4882 = vmatpush1.bf16.msra.mxu0 0
          %4883 = vmatprep.mubr.bf16.mxu0 0
          %4884 = vmatmul.mubr.bf16.gmra.mrb[0].mxu0 %v4849
          %v4885 = vpop.f32.mrb[0].mxu0
          %v4886 = vadd.f32 %v4834, %v4885
          %v4887 = vpop.f32.mrb[0].mxu0
          %v4888 = vpop.f32.mrb[0].mxu0
          %v4889 = vadd.f32 %v4834, %v4888
          %v4890 = vpop.f32.mrb[0].mxu0
          %4891 = vdwg.mxu0
          %v4894 = vcombine.high %v4886, %v4886
          %v4896 = vunpack.c.l.s4 1983009808
          %v4897 = vunpack.c.0.s8 %v4896
          %v4898 = vlaneseq
          %v4899 = vshrl.u32 %v4898, 7
          %v4900 = vsub.s32 %v4897, %v4899
          %v4901 = vrot.slane %v4886, %v4900
          %v4903 = vunpack.c.l.s4 1983009808
          %v4904 = vunpack.c.0.s8 %v4903
          %v4905 = vlaneseq
          %v4906 = vshrl.u32 %v4905, 7
          %v4907 = vsub.s32 %v4904, %v4906
          %v4908 = vrot.slane %v4894, %v4907
          %v4909 = vcombine.high %v4901, %v4901
          %v4910 = vcombine.high %v4908, %v4908
          %v4912 = vunpack.c.l.s4 1983009808
          %v4913 = vunpack.c.0.s8 %v4912
          %v4914 = vlaneseq
          %v4915 = vshrl.u32 %v4914, 7
          %v4916 = vsub.s32 %v4913, %v4915
          %v4917 = vrot.slane %v4889, %v4916
          %v4918 = vcombine.high %v4917, %v4917
          %v4919 = vcombine.low %v4901, %v4909
          %v4921 = vunpack.c.l.s4 1983009808
          %v4922 = vunpack.c.0.s8 %v4921
          %v4923 = vlaneseq
          %v4924 = vshrl.u32 %v4923, 7
          %v4925 = vsub.s32 %v4922, %v4924
          %v4926 = vrot.slane %v4919, %v4925
          %v4928 = vunpack.c.l.s4 1983009808
          %v4929 = vunpack.c.0.s8 %v4928
          %v4930 = vlaneseq
          %v4931 = vshrl.u32 %v4930, 7
          %v4932 = vsub.s32 %v4929, %v4931
          %v4933 = vrot.slane %v4908, %v4932
          %v4934 = vcombine.low %v4926, %v4933
          %v4935 = vcombine.low %v4910, %v4917
          %v4937 = vunpack.c.l.s4 1983009808
          %v4938 = vunpack.c.0.s8 %v4937
          %v4939 = vlaneseq
          %v4940 = vshrl.u32 %v4939, 7
          %v4941 = vsub.s32 %v4938, %v4940
          %v4942 = vrot.slane %v4935, %v4941
          %v4944 = vunpack.c.l.s4 1983009808
          %v4945 = vunpack.c.0.s8 %v4944
          %v4946 = vlaneseq
          %v4947 = vshrl.u32 %v4946, 7
          %v4948 = vsub.s32 %v4945, %v4947
          %v4949 = vrot.slane %v4918, %v4948
          %v4950 = vcombine.low %v4942, %v4949
          %4953 = vst [vmem:[%s77] sm:$0x3f] %v4934
          %4954 = vst [vmem:[%s77 + $0x8] sm:$0x3f] %v4950
        $region192: #{seq2seq_forward.1} parent=183 // pred_fallthru
          _
      $region184: #{seq2seq_forward.1} parent=171 // pred_fallthru
        _
      // Predicated region
      $region193: #{seq2seq_forward.1} parent=171 // pred_check
        %p4955 = pneg %p1230
      $region194: #{seq2seq_forward.1} parent=171 // pred_check_branch
        %4957 = sbr.rel (%p4955) target = $region196
      $region195: #{seq2seq_forward.1} parent=171 // pred_region
        _
      $region196: #{seq2seq_forward.1} parent=171 // pred_fallthru
        _
      // Predicated region
      $region197: #{seq2seq_forward.1} parent=171 // pred_check
        %p4958 = pneg %p1251
      $region198: #{seq2seq_forward.1} parent=171 // pred_check_branch
        %4960 = sbr.rel (%p4958) target = $region200
      $region199: #{seq2seq_forward.1} parent=171 // pred_region
        _
      $region200: #{seq2seq_forward.1} parent=171 // pred_fallthru
        _
      // Predicated region
      $region201: #{seq2seq_forward.1} parent=171 // pred_check
        %p4961 = pneg %p1230
      $region202: #{seq2seq_forward.1} parent=171 // pred_check_branch
        %4963 = sbr.rel (%p4961) target = $region204
      $region203: #{seq2seq_forward.1} parent=171 // pred_region
        _
      $region204: #{seq2seq_forward.1} parent=171 // pred_fallthru
        _
      // Predicated region
      $region205: #{seq2seq_forward.1} parent=171 // pred_check
        %p4964 = pneg %p1251
      $region206: #{seq2seq_forward.1} parent=171 // pred_check_branch
        %4966 = sbr.rel (%p4964) target = $region208
      $region207: #{seq2seq_forward.1} parent=171 // pred_region
        _
      $region208: #{seq2seq_forward.1} parent=171 // pred_fallthru
        _
    $region172: #{seq2seq_forward.1} parent=5 // pred_fallthru
      _
    %p4967 = scmp.le.s32.totalorder 2, %s86
    // Predicated region
    $region209: #{seq2seq_forward.1} parent=5 // pred_check
      %p4968 = pneg %p4967
    $region210: #{seq2seq_forward.1} parent=5 // pred_check_branch
      %4970 = sbr.rel (%p4968) target = $region212
    $region211: #{seq2seq_forward.1} parent=5 // pred_region
      %s4971 = ssub.s32 %s86, 2
    $region212: #{seq2seq_forward.1} parent=5 // pred_fallthru
      _
  $region6: #{seq2seq_forward.1} parent=0 // loop_footer
    %s90 = sadd.s32 1, %s86
  $region7: #{seq2seq_forward.1} parent=0 // loop_footer_branch
    %85 = sbr.rel target = $region3
  $region8: #{seq2seq_forward.1} parent=0 // loop_exit
    _

</llo_original>
